<compile_context>
chip_gen: v6e
topology: v6e:2x2x1
jax: 0.10.0
libtpu: 0.0.40
codegen_flags: <defaults>
</compile_context>

<pallas_src>
import jax
import jax.numpy as jnp
from jax import lax
from jax.experimental import pallas as pl
from jax.experimental.pallas import tpu as pltpu

NEG_SLOPE = 0.3
KW = 7
PAD = (KW - 1) // 2


def _leaky(x):
    return jnp.where(x > 0, x, NEG_SLOPE * x)


def _make_encoder_kernel(W):
    def kernel(x_ref, wf_ref, bf_ref, w2_ref, b2_ref, w3_ref, b3_ref, o_ref):
        Mb = x_ref.shape[0]          # row_block * W flattened positions
        rb = o_ref.shape[0]          # row_block
        cdt = x_ref.dtype            # matmul input dtype (bf16 or f32)

        # Per-position boundary masks, hoisted once and shared by all stages.
        # For output position w = m % W, tap k reads input position
        # j = w + (k - PAD); j outside [0, W) is the conv's zero padding.
        # Because each block is a whole number of rows (Mb = rb*W), the rows
        # wrapped by pltpu.roll at the block edges are exactly the rows with
        # j outside [0, W), so the same mask also zeroes the wrap-around.
        wpos = lax.broadcasted_iota(jnp.int32, (Mb, 1), 0) % W
        masks = []
        for k in range(KW):
            j = wpos + (k - PAD)
            masks.append((j >= 0) & (j < W))

        def im2col(xf32):
            """(Mb, C) f32 -> (Mb, KW*C) in compute dtype; tap k at lanes
            [k*C, (k+1)*C), shifted with pltpu.roll and boundary-masked."""
            cols = []
            for k in range(KW):
                s = k - PAD
                if s == 0:
                    cols.append(xf32.astype(cdt))
                else:
                    r = pltpu.roll(xf32, shift=(-s) % Mb, axis=0).astype(cdt)
                    cols.append(jnp.where(masks[k], r, jnp.zeros_like(r)))
            return jnp.concatenate(cols, axis=-1)

        x32 = x_ref[...].astype(jnp.float32)               # (Mb, 64)

        # Stage 1: fused conv1 (64->32) + conv_2 (64->16): one K=448 matmul.
        y = jnp.dot(im2col(x32), wf_ref[...],
                    preferred_element_type=jnp.float32) + bf_ref[...]
        h = _leaky(y[:, :32])                               # conv1+BN -> LeakyReLU_1
        x2 = y[:, 32:]                                      # conv_2+BN (no activation)

        # Stage 2: conv2 (32->16) -> LeakyReLU_2  == x_1 : one K=224 matmul.
        x1 = _leaky(jnp.dot(im2col(h), w2_ref[...],
                            preferred_element_type=jnp.float32) + b2_ref[...])

        # cat((x_1, x_2), dim=1) then LeakyReLU; merged into one 32-channel
        # input so conv_3 is a single K=224 matmul.
        cat = jnp.concatenate([_leaky(x1), _leaky(x2)], axis=-1)   # (Mb, 32) f32

        # Stage 3: conv_3 (32->16) -> LeakyReLU.
        out = _leaky(jnp.dot(im2col(cat), w3_ref[...],
                             preferred_element_type=jnp.float32) + b3_ref[...])

        # Lane-dense store: pack (rb*W, 16) -> (rb, W*16) with slice+concat
        # (compile-safe relayout); the final store is a single >=128-lane
        # unmasked store.
        out3 = out.reshape(rb, W, 16)
        dense = jnp.concatenate([out3[:, w, :] for w in range(W)], axis=-1)
        o_ref[...] = dense.astype(o_ref.dtype)

    return kernel


def _device_defaults():
    """VMEM budget / scoped limit / min grid steps per TPU generation."""
    vmem_cap = 128 << 20
    try:
        vmem_cap = int(pltpu.get_tpu_info().vmem_capacity_bytes)
    except Exception:
        pass
    if vmem_cap <= (64 << 20):
        # v7x-class: 64 MiB physical VMEM, 2 TensorCores/chip -> keep tiles
        # modest and give each core >=2 grid steps for DMA/compute overlap.
        return dict(vmem_budget=12 << 20, vmem_limit=32 << 20, min_grid_steps=4)
    # v5e / v6e: 128 MiB physical VMEM -> bigger tiles, larger scoped limit.
    return dict(vmem_budget=24 << 20, vmem_limit=64 << 20, min_grid_steps=2)


def _pick_row_block(R, W, *, vmem_budget_bytes, min_grid_steps):
    """Largest row tile (multiple of 8, dividing R) under a per-step VMEM
    budget; byte model includes the (Mb, 7*Cin) im2col buffers."""
    per_row = 6144 * max(W, 1)          # rough live bytes per (n,h) row
    cap = max(8, vmem_budget_bytes // per_row)
    cap = min(cap, R)
    if R >= 8 * min_grid_steps:
        cap = min(cap, R // min_grid_steps)
    for rb in range(int(cap), 7, -1):
        if R % rb == 0 and rb % 8 == 0:
            return rb
    # Fallback: one full-extent block (legal even if R % 8 != 0 because the
    # block equals the full array extent).
    return R


def encoder_compression(x_nchw, params, *, row_block=None,
                        compute_dtype=jnp.bfloat16, out_dtype=None):
    N, C, H, W = x_nchw.shape
    assert C == 64, "Encoder_Compression expects 64 input channels"
    R = N * H
    cdt = jnp.dtype(compute_dtype)
    if out_dtype is None:
        out_dtype = jnp.float32 if cdt == jnp.dtype(jnp.float32) else jnp.bfloat16
    odt = jnp.dtype(out_dtype)

    cfg = _device_defaults()
    if row_block is None:
        row_block = _pick_row_block(R, W,
                                    vmem_budget_bytes=cfg["vmem_budget"],
                                    min_grid_steps=cfg["min_grid_steps"])
    assert R % row_block == 0

    # Flat channels-last activations: row r = n*H + h, inner position w.
    x2d = jnp.transpose(x_nchw, (0, 2, 3, 1)).reshape(R * W, C).astype(cdt)

    # Folded ConvBN weights, K-stacked for the im2col matmuls:
    # row index of the stacked weight = tap*Cin + cin  (matches the lane
    # layout produced by im2col() in the kernel).
    wf = jnp.concatenate([params["w1"], params["wc2"]], axis=2)        # (7,64,48)
    wf = wf.reshape(KW * 64, 48).astype(cdt)                           # (448,48)
    bf = jnp.concatenate([params["b1"], params["bc2"]]).reshape(1, 48).astype(jnp.float32)
    w2 = params["w2"].reshape(KW * 32, 16).astype(cdt)                 # (224,16)
    b2 = params["b2"].reshape(1, 16).astype(jnp.float32)
    w3 = params["wc3"].reshape(KW * 32, 16).astype(cdt)                # (224,16)
    b3 = params["bc3"].reshape(1, 16).astype(jnp.float32)

    args = (x2d, wf, bf, w2, b2, w3, b3)

    def full_spec(a):
        nd = a.ndim
        return pl.BlockSpec(a.shape, lambda i, _nd=nd: (0,) * _nd)

    in_specs = ([pl.BlockSpec((row_block * W, C), lambda i: (i, 0))]
                + [full_spec(a) for a in args[1:]])
    out_spec = pl.BlockSpec((row_block, W * 16), lambda i: (i, 0))

    flops = 2 * R * W * (KW * 64 * 48 + KW * 32 * 16 + KW * 32 * 16)
    bytes_accessed = (int(x2d.size) * x2d.dtype.itemsize
                      + R * W * 16 * odt.itemsize
                      + sum(int(a.size) * a.dtype.itemsize for a in args[1:]))
    cost = pl.CostEstimate(flops=int(flops), transcendentals=0,
                           bytes_accessed=int(bytes_accessed))

    out = pl.pallas_call(
        _make_encoder_kernel(W),
        out_shape=jax.ShapeDtypeStruct((R, W * 16), odt),
        grid=(R // row_block,),
        in_specs=in_specs,
        out_specs=out_spec,
        compiler_params=pltpu.CompilerParams(
            dimension_semantics=("parallel",),
            vmem_limit_bytes=int(cfg["vmem_limit"])),
        cost_estimate=cost,
    )(*args)

    # (R, W*16) -> (N, H, W, 16) -> NCHW
    return jnp.transpose(out.reshape(N, H, W, 16), (0, 3, 1, 2))


def _fold_bn(w, b, gamma, beta, mean, var, eps=1e-3):
    # ConvBN: y = gamma * (conv(x) + b - mean) / sqrt(var + eps) + beta
    scale = gamma / jnp.sqrt(var + eps)
    return w * scale[None, None, :], (b - mean) * scale + beta


def make_params(key):
    # TODO(synk): BatchNorm2d is folded in inference mode (running stats);
    # training-mode batch statistics are not reproduced.
    def convbn(k, cin, cout):
        ks = jax.random.split(k, 6)
        w = 0.05 * jax.random.normal(ks[0], (KW, cin, cout), jnp.float32)
        b = 0.05 * jax.random.normal(ks[1], (cout,), jnp.float32)
        gamma = 1.0 + 0.1 * jax.random.normal(ks[2], (cout,), jnp.float32)
        beta = 0.1 * jax.random.normal(ks[3], (cout,), jnp.float32)
        mean = 0.1 * jax.random.normal(ks[4], (cout,), jnp.float32)
        var = jax.random.uniform(ks[5], (cout,), jnp.float32, minval=0.5, maxval=1.5)
        return _fold_bn(w, b, gamma, beta, mean, var)

    k1, k2, k3, k4 = jax.random.split(key, 4)
    w1, b1 = convbn(k1, 64, 32)     # conv.conv1
    w2, b2 = convbn(k2, 32, 16)     # conv.conv2
    wc2, bc2 = convbn(k3, 64, 16)   # conv_2
    wc3, bc3 = convbn(k4, 32, 16)   # conv_3
    return dict(w1=w1, b1=b1, w2=w2, b2=b2, wc2=wc2, bc2=bc2, wc3=wc3, bc3=bc3)


# ---------------- pure-JAX reference (for correctness check) ----------------
def _ref_conv1x7(x, w, b):
    y = lax.conv_general_dilated(
        x[:, None, :, :], w[None, :, :, :],
        window_strides=(1, 1), padding=((0, 0), (PAD, PAD)),
        dimension_numbers=("NHWC", "HWIO", "NHWC"))
    return y[:, 0, :, :] + b


def reference(x_nchw, p):
    N, C, H, W = x_nchw.shape
    x = jnp.transpose(x_nchw, (0, 2, 3, 1)).reshape(N * H, W, C).astype(jnp.float32)
    h = _leaky(_ref_conv1x7(x, p["w1"], p["b1"]))
    x1 = _leaky(_ref_conv1x7(h, p["w2"], p["b2"]))
    x2 = _ref_conv1x7(x, p["wc2"], p["bc2"])
    cat = _leaky(jnp.concatenate([x1, x2], axis=-1))
    out = _leaky(_ref_conv1x7(cat, p["wc3"], p["bc3"]))
    return jnp.transpose(out.reshape(N, H, W, 16), (0, 3, 1, 2))


if __name__ == "__main__":
    key = jax.random.PRNGKey(0)
    kx, kp = jax.random.split(key)
    # NCHW input, C must be 64 per the module; small spatial size.
    x = jax.random.normal(kx, (2, 64, 16, 16), jnp.float32)
    params = make_params(kp)

    y_ref = reference(x, params)

    # f32 matmul path: tight correctness anchor (catches any roll/mask or
    # weight-stacking mistake; tolerance only covers accumulation ordering).
    y32 = jax.block_until_ready(
        encoder_compression(x, params, compute_dtype=jnp.float32))
    assert y32.shape == (2, 16, 16, 16), y32.shape
    assert jnp.allclose(y32, y_ref, rtol=2e-3, atol=2e-3), \
        float(jnp.max(jnp.abs(y32 - y_ref)))

    # bf16 matmul + bf16 output path (default / performance path).
    ybf = jax.block_until_ready(encoder_compression(x, params))
    assert ybf.shape == (2, 16, 16, 16), ybf.shape
    assert jnp.allclose(ybf.astype(jnp.float32), y_ref, rtol=1e-1, atol=1e-1), \
        float(jnp.max(jnp.abs(ybf.astype(jnp.float32) - y_ref)))

    print("KERNEL_OK")
</pallas_src>

<mosaic_0001>
module attributes {stable_mosaic.version = 11 : i64} {
  func.func @kernel(%arg0: i32, %arg1: memref<256x64xf32, #tpu.memory_space<vmem>>, %arg2: memref<448x48xf32, #tpu.memory_space<vmem>>, %arg3: memref<1x48xf32, #tpu.memory_space<vmem>>, %arg4: memref<224x16xf32, #tpu.memory_space<vmem>>, %arg5: memref<1x16xf32, #tpu.memory_space<vmem>>, %arg6: memref<224x16xf32, #tpu.memory_space<vmem>>, %arg7: memref<1x16xf32, #tpu.memory_space<vmem>>, %arg8: memref<16x256xf32, #tpu.memory_space<vmem>>) attributes {dimension_semantics = [#tpu.dimension_semantics<parallel>], iteration_bounds = array<i64: 2>, scalar_prefetch = 0 : i64, scratch_operands = 0 : i64, tpu.core_type = #tpu.core_type<tc>, window_params = [{transform_indices = @transform_0, window_bounds = array<i64: 256, 64>}, {pipeline_mode = #tpu.pipeline_mode<synchronous>, transform_indices = @transform_1, window_bounds = array<i64: 448, 48>}, {pipeline_mode = #tpu.pipeline_mode<synchronous>, transform_indices = @transform_2, window_bounds = array<i64: 1, 48>}, {pipeline_mode = #tpu.pipeline_mode<synchronous>, transform_indices = @transform_3, window_bounds = array<i64: 224, 16>}, {pipeline_mode = #tpu.pipeline_mode<synchronous>, transform_indices = @transform_4, window_bounds = array<i64: 1, 16>}, {pipeline_mode = #tpu.pipeline_mode<synchronous>, transform_indices = @transform_5, window_bounds = array<i64: 224, 16>}, {pipeline_mode = #tpu.pipeline_mode<synchronous>, transform_indices = @transform_6, window_bounds = array<i64: 1, 16>}, {transform_indices = @transform_7, window_bounds = array<i64: 16, 256>}]} {
    %0 = tpu.iota {dimensions = array<i32: 0>} : vector<256x1xi32>
    %c16_i32 = arith.constant 16 : i32
    %c0_i32 = arith.constant 0 : i32
    %1 = arith.cmpi eq, %c16_i32, %c0_i32 : i32
    %c1_i32 = arith.constant 1 : i32
    %2 = arith.select %1, %c1_i32, %c16_i32 : i32
    %3 = vector.broadcast %2 : i32 to vector<256x1xi32>
    %4 = arith.remsi %0, %3 : vector<256x1xi32>
    %c0_i32_0 = arith.constant 0 : i32
    %5 = vector.broadcast %c0_i32_0 : i32 to vector<256x1xi32>
    %6 = arith.cmpi ne, %4, %5 : vector<256x1xi32>
    %c0_i32_1 = arith.constant 0 : i32
    %7 = vector.broadcast %c0_i32_1 : i32 to vector<256x1xi32>
    %8 = arith.cmpi slt, %4, %7 : vector<256x1xi32>
    %c0_i32_2 = arith.constant 0 : i32
    %9 = arith.cmpi slt, %2, %c0_i32_2 : i32
    %10 = vector.broadcast %9 : i1 to vector<256x1xi1>
    %11 = vector.broadcast %10 : vector<256x1xi1> to vector<256x1xi1>
    %12 = arith.xori %8, %11 : vector<256x1xi1>
    %13 = arith.andi %12, %6 : vector<256x1xi1>
    %14 = vector.broadcast %2 : i32 to vector<256x1xi32>
    %15 = arith.addi %4, %14 : vector<256x1xi32>
    %16 = arith.select %13, %15, %4 : vector<256x1xi1>, vector<256x1xi32>
    %c-3_i32 = arith.constant -3 : i32
    %17 = vector.broadcast %c-3_i32 : i32 to vector<256x1xi32>
    %18 = arith.addi %16, %17 : vector<256x1xi32>
    %c0_i32_3 = arith.constant 0 : i32
    %19 = vector.broadcast %c0_i32_3 : i32 to vector<256x1xi32>
    %20 = arith.cmpi sge, %18, %19 : vector<256x1xi32>
    %c16_i32_4 = arith.constant 16 : i32
    %21 = vector.broadcast %c16_i32_4 : i32 to vector<256x1xi32>
    %22 = arith.cmpi slt, %18, %21 : vector<256x1xi32>
    %23 = arith.andi %20, %22 : vector<256x1xi1>
    %c-2_i32 = arith.constant -2 : i32
    %24 = vector.broadcast %c-2_i32 : i32 to vector<256x1xi32>
    %25 = arith.addi %16, %24 : vector<256x1xi32>
    %c0_i32_5 = arith.constant 0 : i32
    %26 = vector.broadcast %c0_i32_5 : i32 to vector<256x1xi32>
    %27 = arith.cmpi sge, %25, %26 : vector<256x1xi32>
    %c16_i32_6 = arith.constant 16 : i32
    %28 = vector.broadcast %c16_i32_6 : i32 to vector<256x1xi32>
    %29 = arith.cmpi slt, %25, %28 : vector<256x1xi32>
    %30 = arith.andi %27, %29 : vector<256x1xi1>
    %c-1_i32 = arith.constant -1 : i32
    %31 = vector.broadcast %c-1_i32 : i32 to vector<256x1xi32>
    %32 = arith.addi %16, %31 : vector<256x1xi32>
    %c0_i32_7 = arith.constant 0 : i32
    %33 = vector.broadcast %c0_i32_7 : i32 to vector<256x1xi32>
    %34 = arith.cmpi sge, %32, %33 : vector<256x1xi32>
    %c16_i32_8 = arith.constant 16 : i32
    %35 = vector.broadcast %c16_i32_8 : i32 to vector<256x1xi32>
    %36 = arith.cmpi slt, %32, %35 : vector<256x1xi32>
    %37 = arith.andi %34, %36 : vector<256x1xi1>
    %c1_i32_9 = arith.constant 1 : i32
    %38 = vector.broadcast %c1_i32_9 : i32 to vector<256x1xi32>
    %39 = arith.addi %16, %38 : vector<256x1xi32>
    %c0_i32_10 = arith.constant 0 : i32
    %40 = vector.broadcast %c0_i32_10 : i32 to vector<256x1xi32>
    %41 = arith.cmpi sge, %39, %40 : vector<256x1xi32>
    %c16_i32_11 = arith.constant 16 : i32
    %42 = vector.broadcast %c16_i32_11 : i32 to vector<256x1xi32>
    %43 = arith.cmpi slt, %39, %42 : vector<256x1xi32>
    %44 = arith.andi %41, %43 : vector<256x1xi1>
    %c2_i32 = arith.constant 2 : i32
    %45 = vector.broadcast %c2_i32 : i32 to vector<256x1xi32>
    %46 = arith.addi %16, %45 : vector<256x1xi32>
    %c0_i32_12 = arith.constant 0 : i32
    %47 = vector.broadcast %c0_i32_12 : i32 to vector<256x1xi32>
    %48 = arith.cmpi sge, %46, %47 : vector<256x1xi32>
    %c16_i32_13 = arith.constant 16 : i32
    %49 = vector.broadcast %c16_i32_13 : i32 to vector<256x1xi32>
    %50 = arith.cmpi slt, %46, %49 : vector<256x1xi32>
    %51 = arith.andi %48, %50 : vector<256x1xi1>
    %c3_i32 = arith.constant 3 : i32
    %52 = vector.broadcast %c3_i32 : i32 to vector<256x1xi32>
    %53 = arith.addi %16, %52 : vector<256x1xi32>
    %c0_i32_14 = arith.constant 0 : i32
    %54 = vector.broadcast %c0_i32_14 : i32 to vector<256x1xi32>
    %55 = arith.cmpi sge, %53, %54 : vector<256x1xi32>
    %c16_i32_15 = arith.constant 16 : i32
    %56 = vector.broadcast %c16_i32_15 : i32 to vector<256x1xi32>
    %57 = arith.cmpi slt, %53, %56 : vector<256x1xi32>
    %58 = arith.andi %55, %57 : vector<256x1xi1>
    %c0 = arith.constant 0 : index
    %c0_16 = arith.constant 0 : index
    %59 = vector.load %arg1[%c0, %c0_16] : memref<256x64xf32, #tpu.memory_space<vmem>>, vector<256x64xf32>
    %c3_i32_17 = arith.constant 3 : i32
    %60 = tpu.dynamic_rotate %59 by %c3_i32_17 dim 0 : vector<256x64xf32>, i32 -> vector<256x64xf32>
    %cst = arith.constant 0.000000e+00 : f32
    %61 = vector.broadcast %cst : f32 to vector<256x64xf32>
    %62 = vector.shape_cast %23 : vector<256x1xi1> to vector<256x1xi1>
    %63 = vector.broadcast %62 : vector<256x1xi1> to vector<256x64xi1>
    %64 = arith.select %63, %60, %61 : vector<256x64xi1>, vector<256x64xf32>
    %c2_i32_18 = arith.constant 2 : i32
    %65 = tpu.dynamic_rotate %59 by %c2_i32_18 dim 0 : vector<256x64xf32>, i32 -> vector<256x64xf32>
    %cst_19 = arith.constant 0.000000e+00 : f32
    %66 = vector.broadcast %cst_19 : f32 to vector<256x64xf32>
    %67 = vector.shape_cast %30 : vector<256x1xi1> to vector<256x1xi1>
    %68 = vector.broadcast %67 : vector<256x1xi1> to vector<256x64xi1>
    %69 = arith.select %68, %65, %66 : vector<256x64xi1>, vector<256x64xf32>
    %c1_i32_20 = arith.constant 1 : i32
    %70 = tpu.dynamic_rotate %59 by %c1_i32_20 dim 0 : vector<256x64xf32>, i32 -> vector<256x64xf32>
    %cst_21 = arith.constant 0.000000e+00 : f32
    %71 = vector.broadcast %cst_21 : f32 to vector<256x64xf32>
    %72 = vector.shape_cast %37 : vector<256x1xi1> to vector<256x1xi1>
    %73 = vector.broadcast %72 : vector<256x1xi1> to vector<256x64xi1>
    %74 = arith.select %73, %70, %71 : vector<256x64xi1>, vector<256x64xf32>
    %c255_i32 = arith.constant 255 : i32
    %75 = tpu.dynamic_rotate %59 by %c255_i32 dim 0 : vector<256x64xf32>, i32 -> vector<256x64xf32>
    %cst_22 = arith.constant 0.000000e+00 : f32
    %76 = vector.broadcast %cst_22 : f32 to vector<256x64xf32>
    %77 = vector.shape_cast %44 : vector<256x1xi1> to vector<256x1xi1>
    %78 = vector.broadcast %77 : vector<256x1xi1> to vector<256x64xi1>
    %79 = arith.select %78, %75, %76 : vector<256x64xi1>, vector<256x64xf32>
    %c254_i32 = arith.constant 254 : i32
    %80 = tpu.dynamic_rotate %59 by %c254_i32 dim 0 : vector<256x64xf32>, i32 -> vector<256x64xf32>
    %cst_23 = arith.constant 0.000000e+00 : f32
    %81 = vector.broadcast %cst_23 : f32 to vector<256x64xf32>
    %82 = vector.shape_cast %51 : vector<256x1xi1> to vector<256x1xi1>
    %83 = vector.broadcast %82 : vector<256x1xi1> to vector<256x64xi1>
    %84 = arith.select %83, %80, %81 : vector<256x64xi1>, vector<256x64xf32>
    %c253_i32 = arith.constant 253 : i32
    %85 = tpu.dynamic_rotate %59 by %c253_i32 dim 0 : vector<256x64xf32>, i32 -> vector<256x64xf32>
    %cst_24 = arith.constant 0.000000e+00 : f32
    %86 = vector.broadcast %cst_24 : f32 to vector<256x64xf32>
    %87 = vector.shape_cast %58 : vector<256x1xi1> to vector<256x1xi1>
    %88 = vector.broadcast %87 : vector<256x1xi1> to vector<256x64xi1>
    %89 = arith.select %88, %85, %86 : vector<256x64xi1>, vector<256x64xf32>
    %90 = tpu.concatenate %64, %69, %74, %59, %79, %84, %89 in 1 : vector<256x64xf32>, vector<256x64xf32>, vector<256x64xf32>, vector<256x64xf32>, vector<256x64xf32>, vector<256x64xf32>, vector<256x64xf32> -> vector<256x448xf32>
    %c0_25 = arith.constant 0 : index
    %c0_26 = arith.constant 0 : index
    %91 = vector.load %arg2[%c0_25, %c0_26] : memref<448x48xf32, #tpu.memory_space<vmem>>, vector<448x48xf32>
    %cst_27 = arith.constant dense<0.000000e+00> : vector<256x48xf32>
    %92 = tpu.matmul %90, %91, %cst_27 {dimension_numbers = #tpu.dot_dimension_numbers<[1], [0], [0], [1], [0, 0, 1, 1], [], []>} : vector<256x448xf32>, vector<448x48xf32>, vector<256x48xf32> -> vector<256x48xf32>
    %c0_28 = arith.constant 0 : index
    %c0_29 = arith.constant 0 : index
    %93 = vector.load %arg3[%c0_28, %c0_29] : memref<1x48xf32, #tpu.memory_space<vmem>>, vector<1x48xf32>
    %94 = vector.broadcast %93 : vector<1x48xf32> to vector<256x48xf32>
    %95 = arith.addf %92, %94 : vector<256x48xf32>
    %96 = vector.extract_strided_slice %95 {offsets = [0, 0], sizes = [256, 32], strides = [1, 1]} : vector<256x48xf32> to vector<256x32xf32>
    %cst_30 = arith.constant 0.000000e+00 : f32
    %97 = vector.broadcast %cst_30 : f32 to vector<256x32xf32>
    %98 = arith.cmpf ogt, %96, %97 : vector<256x32xf32>
    %cst_31 = arith.constant 3.000000e-01 : f32
    %99 = vector.broadcast %cst_31 : f32 to vector<256x32xf32>
    %100 = arith.mulf %99, %96 : vector<256x32xf32>
    %101 = arith.select %98, %96, %100 : vector<256x32xi1>, vector<256x32xf32>
    %102 = vector.extract_strided_slice %95 {offsets = [0, 32], sizes = [256, 16], strides = [1, 1]} : vector<256x48xf32> to vector<256x16xf32>
    %c3_i32_32 = arith.constant 3 : i32
    %103 = tpu.dynamic_rotate %101 by %c3_i32_32 dim 0 : vector<256x32xf32>, i32 -> vector<256x32xf32>
    %cst_33 = arith.constant 0.000000e+00 : f32
    %104 = vector.broadcast %cst_33 : f32 to vector<256x32xf32>
    %105 = vector.shape_cast %23 : vector<256x1xi1> to vector<256x1xi1>
    %106 = vector.broadcast %105 : vector<256x1xi1> to vector<256x32xi1>
    %107 = arith.select %106, %103, %104 : vector<256x32xi1>, vector<256x32xf32>
    %c2_i32_34 = arith.constant 2 : i32
    %108 = tpu.dynamic_rotate %101 by %c2_i32_34 dim 0 : vector<256x32xf32>, i32 -> vector<256x32xf32>
    %cst_35 = arith.constant 0.000000e+00 : f32
    %109 = vector.broadcast %cst_35 : f32 to vector<256x32xf32>
    %110 = vector.shape_cast %30 : vector<256x1xi1> to vector<256x1xi1>
    %111 = vector.broadcast %110 : vector<256x1xi1> to vector<256x32xi1>
    %112 = arith.select %111, %108, %109 : vector<256x32xi1>, vector<256x32xf32>
    %c1_i32_36 = arith.constant 1 : i32
    %113 = tpu.dynamic_rotate %101 by %c1_i32_36 dim 0 : vector<256x32xf32>, i32 -> vector<256x32xf32>
    %cst_37 = arith.constant 0.000000e+00 : f32
    %114 = vector.broadcast %cst_37 : f32 to vector<256x32xf32>
    %115 = vector.shape_cast %37 : vector<256x1xi1> to vector<256x1xi1>
    %116 = vector.broadcast %115 : vector<256x1xi1> to vector<256x32xi1>
    %117 = arith.select %116, %113, %114 : vector<256x32xi1>, vector<256x32xf32>
    %c255_i32_38 = arith.constant 255 : i32
    %118 = tpu.dynamic_rotate %101 by %c255_i32_38 dim 0 : vector<256x32xf32>, i32 -> vector<256x32xf32>
    %cst_39 = arith.constant 0.000000e+00 : f32
    %119 = vector.broadcast %cst_39 : f32 to vector<256x32xf32>
    %120 = vector.shape_cast %44 : vector<256x1xi1> to vector<256x1xi1>
    %121 = vector.broadcast %120 : vector<256x1xi1> to vector<256x32xi1>
    %122 = arith.select %121, %118, %119 : vector<256x32xi1>, vector<256x32xf32>
    %c254_i32_40 = arith.constant 254 : i32
    %123 = tpu.dynamic_rotate %101 by %c254_i32_40 dim 0 : vector<256x32xf32>, i32 -> vector<256x32xf32>
    %cst_41 = arith.constant 0.000000e+00 : f32
    %124 = vector.broadcast %cst_41 : f32 to vector<256x32xf32>
    %125 = vector.shape_cast %51 : vector<256x1xi1> to vector<256x1xi1>
    %126 = vector.broadcast %125 : vector<256x1xi1> to vector<256x32xi1>
    %127 = arith.select %126, %123, %124 : vector<256x32xi1>, vector<256x32xf32>
    %c253_i32_42 = arith.constant 253 : i32
    %128 = tpu.dynamic_rotate %101 by %c253_i32_42 dim 0 : vector<256x32xf32>, i32 -> vector<256x32xf32>
    %cst_43 = arith.constant 0.000000e+00 : f32
    %129 = vector.broadcast %cst_43 : f32 to vector<256x32xf32>
    %130 = vector.shape_cast %58 : vector<256x1xi1> to vector<256x1xi1>
    %131 = vector.broadcast %130 : vector<256x1xi1> to vector<256x32xi1>
    %132 = arith.select %131, %128, %129 : vector<256x32xi1>, vector<256x32xf32>
    %133 = tpu.concatenate %107, %112, %117, %101, %122, %127, %132 in 1 : vector<256x32xf32>, vector<256x32xf32>, vector<256x32xf32>, vector<256x32xf32>, vector<256x32xf32>, vector<256x32xf32>, vector<256x32xf32> -> vector<256x224xf32>
    %c0_44 = arith.constant 0 : index
    %c0_45 = arith.constant 0 : index
    %134 = vector.load %arg4[%c0_44, %c0_45] : memref<224x16xf32, #tpu.memory_space<vmem>>, vector<224x16xf32>
    %cst_46 = arith.constant dense<0.000000e+00> : vector<256x16xf32>
    %135 = tpu.matmul %133, %134, %cst_46 {dimension_numbers = #tpu.dot_dimension_numbers<[1], [0], [0], [1], [0, 0, 1, 1], [], []>} : vector<256x224xf32>, vector<224x16xf32>, vector<256x16xf32> -> vector<256x16xf32>
    %c0_47 = arith.constant 0 : index
    %c0_48 = arith.constant 0 : index
    %136 = vector.load %arg5[%c0_47, %c0_48] : memref<1x16xf32, #tpu.memory_space<vmem>>, vector<1x16xf32>
    %137 = vector.broadcast %136 : vector<1x16xf32> to vector<256x16xf32>
    %138 = arith.addf %135, %137 : vector<256x16xf32>
    %cst_49 = arith.constant 0.000000e+00 : f32
    %139 = vector.broadcast %cst_49 : f32 to vector<256x16xf32>
    %140 = arith.cmpf ogt, %138, %139 : vector<256x16xf32>
    %cst_50 = arith.constant 3.000000e-01 : f32
    %141 = vector.broadcast %cst_50 : f32 to vector<256x16xf32>
    %142 = arith.mulf %141, %138 : vector<256x16xf32>
    %143 = arith.select %140, %138, %142 : vector<256x16xi1>, vector<256x16xf32>
    %cst_51 = arith.constant 0.000000e+00 : f32
    %144 = vector.broadcast %cst_51 : f32 to vector<256x16xf32>
    %145 = arith.cmpf ogt, %143, %144 : vector<256x16xf32>
    %cst_52 = arith.constant 3.000000e-01 : f32
    %146 = vector.broadcast %cst_52 : f32 to vector<256x16xf32>
    %147 = arith.mulf %146, %143 : vector<256x16xf32>
    %148 = arith.select %145, %143, %147 : vector<256x16xi1>, vector<256x16xf32>
    %cst_53 = arith.constant 0.000000e+00 : f32
    %149 = vector.broadcast %cst_53 : f32 to vector<256x16xf32>
    %150 = arith.cmpf ogt, %102, %149 : vector<256x16xf32>
    %cst_54 = arith.constant 3.000000e-01 : f32
    %151 = vector.broadcast %cst_54 : f32 to vector<256x16xf32>
    %152 = arith.mulf %151, %102 : vector<256x16xf32>
    %153 = arith.select %150, %102, %152 : vector<256x16xi1>, vector<256x16xf32>
    %154 = tpu.concatenate %148, %153 in 1 : vector<256x16xf32>, vector<256x16xf32> -> vector<256x32xf32>
    %c3_i32_55 = arith.constant 3 : i32
    %155 = tpu.dynamic_rotate %154 by %c3_i32_55 dim 0 : vector<256x32xf32>, i32 -> vector<256x32xf32>
    %cst_56 = arith.constant 0.000000e+00 : f32
    %156 = vector.broadcast %cst_56 : f32 to vector<256x32xf32>
    %157 = vector.shape_cast %23 : vector<256x1xi1> to vector<256x1xi1>
    %158 = vector.broadcast %157 : vector<256x1xi1> to vector<256x32xi1>
    %159 = arith.select %158, %155, %156 : vector<256x32xi1>, vector<256x32xf32>
    %c2_i32_57 = arith.constant 2 : i32
    %160 = tpu.dynamic_rotate %154 by %c2_i32_57 dim 0 : vector<256x32xf32>, i32 -> vector<256x32xf32>
    %cst_58 = arith.constant 0.000000e+00 : f32
    %161 = vector.broadcast %cst_58 : f32 to vector<256x32xf32>
    %162 = vector.shape_cast %30 : vector<256x1xi1> to vector<256x1xi1>
    %163 = vector.broadcast %162 : vector<256x1xi1> to vector<256x32xi1>
    %164 = arith.select %163, %160, %161 : vector<256x32xi1>, vector<256x32xf32>
    %c1_i32_59 = arith.constant 1 : i32
    %165 = tpu.dynamic_rotate %154 by %c1_i32_59 dim 0 : vector<256x32xf32>, i32 -> vector<256x32xf32>
    %cst_60 = arith.constant 0.000000e+00 : f32
    %166 = vector.broadcast %cst_60 : f32 to vector<256x32xf32>
    %167 = vector.shape_cast %37 : vector<256x1xi1> to vector<256x1xi1>
    %168 = vector.broadcast %167 : vector<256x1xi1> to vector<256x32xi1>
    %169 = arith.select %168, %165, %166 : vector<256x32xi1>, vector<256x32xf32>
    %c255_i32_61 = arith.constant 255 : i32
    %170 = tpu.dynamic_rotate %154 by %c255_i32_61 dim 0 : vector<256x32xf32>, i32 -> vector<256x32xf32>
    %cst_62 = arith.constant 0.000000e+00 : f32
    %171 = vector.broadcast %cst_62 : f32 to vector<256x32xf32>
    %172 = vector.shape_cast %44 : vector<256x1xi1> to vector<256x1xi1>
    %173 = vector.broadcast %172 : vector<256x1xi1> to vector<256x32xi1>
    %174 = arith.select %173, %170, %171 : vector<256x32xi1>, vector<256x32xf32>
    %c254_i32_63 = arith.constant 254 : i32
    %175 = tpu.dynamic_rotate %154 by %c254_i32_63 dim 0 : vector<256x32xf32>, i32 -> vector<256x32xf32>
    %cst_64 = arith.constant 0.000000e+00 : f32
    %176 = vector.broadcast %cst_64 : f32 to vector<256x32xf32>
    %177 = vector.shape_cast %51 : vector<256x1xi1> to vector<256x1xi1>
    %178 = vector.broadcast %177 : vector<256x1xi1> to vector<256x32xi1>
    %179 = arith.select %178, %175, %176 : vector<256x32xi1>, vector<256x32xf32>
    %c253_i32_65 = arith.constant 253 : i32
    %180 = tpu.dynamic_rotate %154 by %c253_i32_65 dim 0 : vector<256x32xf32>, i32 -> vector<256x32xf32>
    %cst_66 = arith.constant 0.000000e+00 : f32
    %181 = vector.broadcast %cst_66 : f32 to vector<256x32xf32>
    %182 = vector.shape_cast %58 : vector<256x1xi1> to vector<256x1xi1>
    %183 = vector.broadcast %182 : vector<256x1xi1> to vector<256x32xi1>
    %184 = arith.select %183, %180, %181 : vector<256x32xi1>, vector<256x32xf32>
    %185 = tpu.concatenate %159, %164, %169, %154, %174, %179, %184 in 1 : vector<256x32xf32>, vector<256x32xf32>, vector<256x32xf32>, vector<256x32xf32>, vector<256x32xf32>, vector<256x32xf32>, vector<256x32xf32> -> vector<256x224xf32>
    %c0_67 = arith.constant 0 : index
    %c0_68 = arith.constant 0 : index
    %186 = vector.load %arg6[%c0_67, %c0_68] : memref<224x16xf32, #tpu.memory_space<vmem>>, vector<224x16xf32>
    %cst_69 = arith.constant dense<0.000000e+00> : vector<256x16xf32>
    %187 = tpu.matmul %185, %186, %cst_69 {dimension_numbers = #tpu.dot_dimension_numbers<[1], [0], [0], [1], [0, 0, 1, 1], [], []>} : vector<256x224xf32>, vector<224x16xf32>, vector<256x16xf32> -> vector<256x16xf32>
    %c0_70 = arith.constant 0 : index
    %c0_71 = arith.constant 0 : index
    %188 = vector.load %arg7[%c0_70, %c0_71] : memref<1x16xf32, #tpu.memory_space<vmem>>, vector<1x16xf32>
    %189 = vector.broadcast %188 : vector<1x16xf32> to vector<256x16xf32>
    %190 = arith.addf %187, %189 : vector<256x16xf32>
    %cst_72 = arith.constant 0.000000e+00 : f32
    %191 = vector.broadcast %cst_72 : f32 to vector<256x16xf32>
    %192 = arith.cmpf ogt, %190, %191 : vector<256x16xf32>
    %cst_73 = arith.constant 3.000000e-01 : f32
    %193 = vector.broadcast %cst_73 : f32 to vector<256x16xf32>
    %194 = arith.mulf %193, %190 : vector<256x16xf32>
    %195 = arith.select %192, %190, %194 : vector<256x16xi1>, vector<256x16xf32>
    %196 = vector.shape_cast %195 : vector<256x16xf32> to vector<16x16x16xf32>
    %197 = vector.extract_strided_slice %196 {offsets = [0, 0, 0], sizes = [16, 1, 16], strides = [1, 1, 1]} : vector<16x16x16xf32> to vector<16x1x16xf32>
    %198 = vector.shape_cast %197 : vector<16x1x16xf32> to vector<16x16xf32>
    %199 = vector.extract_strided_slice %196 {offsets = [0, 1, 0], sizes = [16, 1, 16], strides = [1, 1, 1]} : vector<16x16x16xf32> to vector<16x1x16xf32>
    %200 = vector.shape_cast %199 : vector<16x1x16xf32> to vector<16x16xf32>
    %201 = vector.extract_strided_slice %196 {offsets = [0, 2, 0], sizes = [16, 1, 16], strides = [1, 1, 1]} : vector<16x16x16xf32> to vector<16x1x16xf32>
    %202 = vector.shape_cast %201 : vector<16x1x16xf32> to vector<16x16xf32>
    %203 = vector.extract_strided_slice %196 {offsets = [0, 3, 0], sizes = [16, 1, 16], strides = [1, 1, 1]} : vector<16x16x16xf32> to vector<16x1x16xf32>
    %204 = vector.shape_cast %203 : vector<16x1x16xf32> to vector<16x16xf32>
    %205 = vector.extract_strided_slice %196 {offsets = [0, 4, 0], sizes = [16, 1, 16], strides = [1, 1, 1]} : vector<16x16x16xf32> to vector<16x1x16xf32>
    %206 = vector.shape_cast %205 : vector<16x1x16xf32> to vector<16x16xf32>
    %207 = vector.extract_strided_slice %196 {offsets = [0, 5, 0], sizes = [16, 1, 16], strides = [1, 1, 1]} : vector<16x16x16xf32> to vector<16x1x16xf32>
    %208 = vector.shape_cast %207 : vector<16x1x16xf32> to vector<16x16xf32>
    %209 = vector.extract_strided_slice %196 {offsets = [0, 6, 0], sizes = [16, 1, 16], strides = [1, 1, 1]} : vector<16x16x16xf32> to vector<16x1x16xf32>
    %210 = vector.shape_cast %209 : vector<16x1x16xf32> to vector<16x16xf32>
    %211 = vector.extract_strided_slice %196 {offsets = [0, 7, 0], sizes = [16, 1, 16], strides = [1, 1, 1]} : vector<16x16x16xf32> to vector<16x1x16xf32>
    %212 = vector.shape_cast %211 : vector<16x1x16xf32> to vector<16x16xf32>
    %213 = vector.extract_strided_slice %196 {offsets = [0, 8, 0], sizes = [16, 1, 16], strides = [1, 1, 1]} : vector<16x16x16xf32> to vector<16x1x16xf32>
    %214 = vector.shape_cast %213 : vector<16x1x16xf32> to vector<16x16xf32>
    %215 = vector.extract_strided_slice %196 {offsets = [0, 9, 0], sizes = [16, 1, 16], strides = [1, 1, 1]} : vector<16x16x16xf32> to vector<16x1x16xf32>
    %216 = vector.shape_cast %215 : vector<16x1x16xf32> to vector<16x16xf32>
    %217 = vector.extract_strided_slice %196 {offsets = [0, 10, 0], sizes = [16, 1, 16], strides = [1, 1, 1]} : vector<16x16x16xf32> to vector<16x1x16xf32>
    %218 = vector.shape_cast %217 : vector<16x1x16xf32> to vector<16x16xf32>
    %219 = vector.extract_strided_slice %196 {offsets = [0, 11, 0], sizes = [16, 1, 16], strides = [1, 1, 1]} : vector<16x16x16xf32> to vector<16x1x16xf32>
    %220 = vector.shape_cast %219 : vector<16x1x16xf32> to vector<16x16xf32>
    %221 = vector.extract_strided_slice %196 {offsets = [0, 12, 0], sizes = [16, 1, 16], strides = [1, 1, 1]} : vector<16x16x16xf32> to vector<16x1x16xf32>
    %222 = vector.shape_cast %221 : vector<16x1x16xf32> to vector<16x16xf32>
    %223 = vector.extract_strided_slice %196 {offsets = [0, 13, 0], sizes = [16, 1, 16], strides = [1, 1, 1]} : vector<16x16x16xf32> to vector<16x1x16xf32>
    %224 = vector.shape_cast %223 : vector<16x1x16xf32> to vector<16x16xf32>
    %225 = vector.extract_strided_slice %196 {offsets = [0, 14, 0], sizes = [16, 1, 16], strides = [1, 1, 1]} : vector<16x16x16xf32> to vector<16x1x16xf32>
    %226 = vector.shape_cast %225 : vector<16x1x16xf32> to vector<16x16xf32>
    %227 = vector.extract_strided_slice %196 {offsets = [0, 15, 0], sizes = [16, 1, 16], strides = [1, 1, 1]} : vector<16x16x16xf32> to vector<16x1x16xf32>
    %228 = vector.shape_cast %227 : vector<16x1x16xf32> to vector<16x16xf32>
    %229 = tpu.concatenate %198, %200, %202, %204, %206, %208, %210, %212, %214, %216, %218, %220, %222, %224, %226, %228 in 1 : vector<16x16xf32>, vector<16x16xf32>, vector<16x16xf32>, vector<16x16xf32>, vector<16x16xf32>, vector<16x16xf32>, vector<16x16xf32>, vector<16x16xf32>, vector<16x16xf32>, vector<16x16xf32>, vector<16x16xf32>, vector<16x16xf32>, vector<16x16xf32>, vector<16x16xf32>, vector<16x16xf32>, vector<16x16xf32> -> vector<16x256xf32>
    %c0_74 = arith.constant 0 : index
    %c0_75 = arith.constant 0 : index
    %230 = vector.load %arg8[%c0_74, %c0_75] : memref<16x256xf32, #tpu.memory_space<vmem>>, vector<16x256xf32>
    tpu.vector_store %arg8[%c0_74, %c0_75], %229 {strides = array<i32>} : memref<16x256xf32, #tpu.memory_space<vmem>>, vector<16x256xf32>,
    return
  }
  func.func @transform_0(%arg0: i32) -> (i32, i32) {
    %c0_i32 = arith.constant 0 : i32
    %c0_i32_0 = arith.constant 0 : i32
    return %arg0, %c0_i32 : i32, i32
  }
  func.func @transform_1(%arg0: i32) -> (i32, i32) {
    %c0_i32 = arith.constant 0 : i32
    %c0_i32_0 = arith.constant 0 : i32
    %c0_i32_1 = arith.constant 0 : i32
    return %c0_i32, %c0_i32_0 : i32, i32
  }
  func.func @transform_2(%arg0: i32) -> (i32, i32) {
    %c0_i32 = arith.constant 0 : i32
    %c0_i32_0 = arith.constant 0 : i32
    %c0_i32_1 = arith.constant 0 : i32
    return %c0_i32, %c0_i32_0 : i32, i32
  }
  func.func @transform_3(%arg0: i32) -> (i32, i32) {
    %c0_i32 = arith.constant 0 : i32
    %c0_i32_0 = arith.constant 0 : i32
    %c0_i32_1 = arith.constant 0 : i32
    return %c0_i32, %c0_i32_0 : i32, i32
  }
  func.func @transform_4(%arg0: i32) -> (i32, i32) {
    %c0_i32 = arith.constant 0 : i32
    %c0_i32_0 = arith.constant 0 : i32
    %c0_i32_1 = arith.constant 0 : i32
    return %c0_i32, %c0_i32_0 : i32, i32
  }
  func.func @transform_5(%arg0: i32) -> (i32, i32) {
    %c0_i32 = arith.constant 0 : i32
    %c0_i32_0 = arith.constant 0 : i32
    %c0_i32_1 = arith.constant 0 : i32
    return %c0_i32, %c0_i32_0 : i32, i32
  }
  func.func @transform_6(%arg0: i32) -> (i32, i32) {
    %c0_i32 = arith.constant 0 : i32
    %c0_i32_0 = arith.constant 0 : i32
    %c0_i32_1 = arith.constant 0 : i32
    return %c0_i32, %c0_i32_0 : i32, i32
  }
  func.func @transform_7(%arg0: i32) -> (i32, i32) {
    %c0_i32 = arith.constant 0 : i32
    %c0_i32_0 = arith.constant 0 : i32
    return %arg0, %c0_i32 : i32, i32
  }
}

</mosaic_0001>

<llo_original>
// kernel: tpu_custom_call.1
$region0: #{tpu_custom_call.1}
  #allocation0 [shape = 'u32[]', space=smem, size = 0x4, offset = 0x4, fixed_abs, tag = 'smem constant byte address 0x4 - core index']
  #allocation1 [shape = 'u32[144,128]{1,0:T(1,128)}', space=vmem, size = 0x12000, scoped, tag = 'internal scratch']
  %s0 = inlined_call_operand.vmem [shape: f32[512,64], index: 0, kind: input, shape index: {}]
  %s1 = inlined_call_operand.vmem [shape: f32[448,48], index: 1, kind: input, shape index: {}]
  %s2 = inlined_call_operand.vmem [shape: f32[1,48], index: 2, kind: input, shape index: {}]
  %s3 = inlined_call_operand.vmem [shape: f32[224,16], index: 3, kind: input, shape index: {}]
  %s4 = inlined_call_operand.vmem [shape: f32[1,16], index: 4, kind: input, shape index: {}]
  %s5 = inlined_call_operand.vmem [shape: f32[224,16], index: 5, kind: input, shape index: {}]
  %s6 = inlined_call_operand.vmem [shape: f32[1,16], index: 6, kind: input, shape index: {}]
  %s7 = inlined_call_operand.hbm [shape: f32[32,256], index: 7, kind: output, shape index: {}]
  %s8 = sld [smem:[#allocation0]]
  $region61: #{tpu_custom_call.1} parent=0
    _
  %s10 = ssub.s32 1, %s8
  %s11 = scalar_select 0, %s10, %s8
  $region1: #{tpu_custom_call.1} parent=0
    #allocation2 [shape = 'u8[32768]{0}', space=vmem, size = 0x8000, scoped, tag = 'output window, operand 0']
    #allocation3 [shape = 's32[2]{0}', space=sflag, size = 0x8, scoped, tag = 'scoped memory for tpu_custom_call.1']
    %12 = vsyncpa [#allocation3], 0
    %s13 = scalar_lea.sflag [#allocation3], 1
    %14 = vsyncpa %s13, 0
    loop: start=0, step=1, limit=4
    $region2: #{tpu_custom_call.1} parent=1 // loop_pre_header
      _
    $region3: #{tpu_custom_call.1} parent=1 // loop_header
      %s16 = sphi 0, %s20
      %p17 = scmp.ge.s32.totalorder %s16, 4
      %s26 = sphi 0, %s28
      %s29 = sphi 0, %s26
      %s30 = sphi 0, %s29
      %s46 = sphi 0, %s30
      %s50 = sphi 0, %s50
      %s52 = sphi 0, %s50
      %s53 = sphi 0, %s52
      %s67 = sphi 0, %s53
      %s71 = sphi 0, %s71
      %s73 = sphi 0, %s71
      %s74 = sphi 0, %s73
      %s88 = sphi 0, %s74
      %s92 = sphi 0, %s92
      %s94 = sphi 0, %s92
      %s95 = sphi 0, %s94
      %s109 = sphi 0, %s95
      %s113 = sphi 0, %s113
      %s115 = sphi 0, %s113
      %s116 = sphi 0, %s115
      %s130 = sphi 0, %s116
      %s134 = sphi 0, %s134
      %s136 = sphi 0, %s134
      %s137 = sphi 0, %s136
      %s151 = sphi 0, %s137
      %s155 = sphi 0, %s155
      %s157 = sphi 0, %s155
      %s158 = sphi 0, %s157
      %s172 = sphi 0, %s158
      %s178 = sphi 0, %s180
      %s181 = sphi 0, %s178
      %s182 = sphi 0, %s181
      %s198 = sphi 0, %s182
    $region4: #{tpu_custom_call.1} parent=1 // loop_header_branch
      %19 = sbr.rel (%p17) target = $region8
    $region5: #{tpu_custom_call.1} parent=1 // loop_body
      %s21 = ssub.s32 %s16, 1
      %s22 = ssub.s32 %s16, 2
      %s23 = sadd.s32 %s16, 1
      %s24 = ssub.s32 %s16, %s23
      %p25 = scmp.eq.s32.totalorder %s24, 0
      %s27 = sadd.s32 %s26, 1
      %s28 = scalar_select %p25, %s26, %s27
      %p31 = pneg %p25
      %p32 = scmp.eq.s32.totalorder %s16, 1
      %p33 = por %p31, %p32
      %p34 = scmp.ne.s32.totalorder %s26, %s29
      %p35 = scmp.eq.s32.totalorder %s16, 0
      %p36 = por %p34, %p35
      %p37 = scmp.ne.s32.totalorder %s26, %s29
      %p38 = scmp.eq.s32.totalorder %s21, 1
      %p39 = por %p37, %p38
      %p40 = scmp.ne.s32.totalorder %s29, %s30
      %p41 = scmp.eq.s32.totalorder %s21, 0
      %p42 = por %p40, %p41
      %p43 = scmp.ne.s32.totalorder %s29, %s30
      %p44 = scmp.eq.s32.totalorder %s22, 1
      %p45 = por %p43, %p44
      %p47 = scmp.ne.s32.totalorder %s30, %s46
      %p48 = scmp.eq.s32.totalorder %s22, 0
      %p49 = por %p47, %p48
      %s51 = sadd.s32 %s50, 1
      %p54 = scmp.eq.s32.totalorder %s16, 1
      %p55 = scmp.ne.s32.totalorder %s50, %s52
      %p56 = scmp.eq.s32.totalorder %s16, 0
      %p57 = por %p55, %p56
      %p58 = scmp.ne.s32.totalorder %s50, %s52
      %p59 = scmp.eq.s32.totalorder %s21, 1
      %p60 = por %p58, %p59
      %p61 = scmp.ne.s32.totalorder %s52, %s53
      %p62 = scmp.eq.s32.totalorder %s21, 0
      %p63 = por %p61, %p62
      %p64 = scmp.ne.s32.totalorder %s52, %s53
      %p65 = scmp.eq.s32.totalorder %s22, 1
      %p66 = por %p64, %p65
      %p68 = scmp.ne.s32.totalorder %s53, %s67
      %p69 = scmp.eq.s32.totalorder %s22, 0
      %p70 = por %p68, %p69
      %s72 = sadd.s32 %s71, 1
      %p75 = scmp.eq.s32.totalorder %s16, 1
      %p76 = scmp.ne.s32.totalorder %s71, %s73
      %p77 = scmp.eq.s32.totalorder %s16, 0
      %p78 = por %p76, %p77
      %p79 = scmp.ne.s32.totalorder %s71, %s73
      %p80 = scmp.eq.s32.totalorder %s21, 1
      %p81 = por %p79, %p80
      %p82 = scmp.ne.s32.totalorder %s73, %s74
      %p83 = scmp.eq.s32.totalorder %s21, 0
      %p84 = por %p82, %p83
      %p85 = scmp.ne.s32.totalorder %s73, %s74
      %p86 = scmp.eq.s32.totalorder %s22, 1
      %p87 = por %p85, %p86
      %p89 = scmp.ne.s32.totalorder %s74, %s88
      %p90 = scmp.eq.s32.totalorder %s22, 0
      %p91 = por %p89, %p90
      %s93 = sadd.s32 %s92, 1
      %p96 = scmp.eq.s32.totalorder %s16, 1
      %p97 = scmp.ne.s32.totalorder %s92, %s94
      %p98 = scmp.eq.s32.totalorder %s16, 0
      %p99 = por %p97, %p98
      %p100 = scmp.ne.s32.totalorder %s92, %s94
      %p101 = scmp.eq.s32.totalorder %s21, 1
      %p102 = por %p100, %p101
      %p103 = scmp.ne.s32.totalorder %s94, %s95
      %p104 = scmp.eq.s32.totalorder %s21, 0
      %p105 = por %p103, %p104
      %p106 = scmp.ne.s32.totalorder %s94, %s95
      %p107 = scmp.eq.s32.totalorder %s22, 1
      %p108 = por %p106, %p107
      %p110 = scmp.ne.s32.totalorder %s95, %s109
      %p111 = scmp.eq.s32.totalorder %s22, 0
      %p112 = por %p110, %p111
      %s114 = sadd.s32 %s113, 1
      %p117 = scmp.eq.s32.totalorder %s16, 1
      %p118 = scmp.ne.s32.totalorder %s113, %s115
      %p119 = scmp.eq.s32.totalorder %s16, 0
      %p120 = por %p118, %p119
      %p121 = scmp.ne.s32.totalorder %s113, %s115
      %p122 = scmp.eq.s32.totalorder %s21, 1
      %p123 = por %p121, %p122
      %p124 = scmp.ne.s32.totalorder %s115, %s116
      %p125 = scmp.eq.s32.totalorder %s21, 0
      %p126 = por %p124, %p125
      %p127 = scmp.ne.s32.totalorder %s115, %s116
      %p128 = scmp.eq.s32.totalorder %s22, 1
      %p129 = por %p127, %p128
      %p131 = scmp.ne.s32.totalorder %s116, %s130
      %p132 = scmp.eq.s32.totalorder %s22, 0
      %p133 = por %p131, %p132
      %s135 = sadd.s32 %s134, 1
      %p138 = scmp.eq.s32.totalorder %s16, 1
      %p139 = scmp.ne.s32.totalorder %s134, %s136
      %p140 = scmp.eq.s32.totalorder %s16, 0
      %p141 = por %p139, %p140
      %p142 = scmp.ne.s32.totalorder %s134, %s136
      %p143 = scmp.eq.s32.totalorder %s21, 1
      %p144 = por %p142, %p143
      %p145 = scmp.ne.s32.totalorder %s136, %s137
      %p146 = scmp.eq.s32.totalorder %s21, 0
      %p147 = por %p145, %p146
      %p148 = scmp.ne.s32.totalorder %s136, %s137
      %p149 = scmp.eq.s32.totalorder %s22, 1
      %p150 = por %p148, %p149
      %p152 = scmp.ne.s32.totalorder %s137, %s151
      %p153 = scmp.eq.s32.totalorder %s22, 0
      %p154 = por %p152, %p153
      %s156 = sadd.s32 %s155, 1
      %p159 = scmp.eq.s32.totalorder %s16, 1
      %p160 = scmp.ne.s32.totalorder %s155, %s157
      %p161 = scmp.eq.s32.totalorder %s16, 0
      %p162 = por %p160, %p161
      %p163 = scmp.ne.s32.totalorder %s155, %s157
      %p164 = scmp.eq.s32.totalorder %s21, 1
      %p165 = por %p163, %p164
      %p166 = scmp.ne.s32.totalorder %s157, %s158
      %p167 = scmp.eq.s32.totalorder %s21, 0
      %p168 = por %p166, %p167
      %p169 = scmp.ne.s32.totalorder %s157, %s158
      %p170 = scmp.eq.s32.totalorder %s22, 1
      %p171 = por %p169, %p170
      %p173 = scmp.ne.s32.totalorder %s158, %s172
      %p174 = scmp.eq.s32.totalorder %s22, 0
      %p175 = por %p173, %p174
      %s176 = ssub.s32 %s16, %s23
      %p177 = scmp.eq.s32.totalorder %s176, 0
      %s179 = sadd.s32 %s178, 1
      %s180 = scalar_select %p177, %s178, %s179
      %p183 = pneg %p177
      %p184 = scmp.eq.s32.totalorder %s16, 1
      %p185 = por %p183, %p184
      %p186 = scmp.ne.s32.totalorder %s178, %s181
      %p187 = scmp.eq.s32.totalorder %s16, 0
      %p188 = por %p186, %p187
      %p189 = scmp.ne.s32.totalorder %s178, %s181
      %p190 = scmp.eq.s32.totalorder %s21, 1
      %p191 = por %p189, %p190
      %p192 = scmp.ne.s32.totalorder %s181, %s182
      %p193 = scmp.eq.s32.totalorder %s21, 0
      %p194 = por %p192, %p193
      %p195 = scmp.ne.s32.totalorder %s181, %s182
      %p196 = scmp.eq.s32.totalorder %s22, 1
      %p197 = por %p195, %p196
      %p199 = scmp.ne.s32.totalorder %s182, %s198
      %p200 = scmp.eq.s32.totalorder %s22, 0
      %p201 = por %p199, %p200
      %p202 = scmp.le.s32.totalorder 1, %s16
      %p203 = scmp.lt.s32.totalorder %s16, 3
      %p204 = pnand %p202, %p203
      %p205 = pneg %p204
      // Predicated region
      $region9: #{tpu_custom_call.1} parent=5 // pred_check
        _
      $region10: #{tpu_custom_call.1} parent=5 // pred_check_branch
        %207 = sbr.rel (%p204) target = $region12
      $region11: #{tpu_custom_call.1} parent=5 // pred_region
        %s208 = ssub.s32 %s16, 1
        // Predicated region
        $region13: #{tpu_custom_call.1} parent=11 // pred_check
          %p209 = pneg %p63
        $region14: #{tpu_custom_call.1} parent=11 // pred_check_branch
          %211 = sbr.rel (%p209) target = $region16
        $region15: #{tpu_custom_call.1} parent=11 // pred_region
          _
        $region16: #{tpu_custom_call.1} parent=11 // pred_fallthru
          _
        // Predicated region
        $region17: #{tpu_custom_call.1} parent=11 // pred_check
          %p212 = pneg %p84
        $region18: #{tpu_custom_call.1} parent=11 // pred_check_branch
          %214 = sbr.rel (%p212) target = $region20
        $region19: #{tpu_custom_call.1} parent=11 // pred_region
          _
        $region20: #{tpu_custom_call.1} parent=11 // pred_fallthru
          _
        // Predicated region
        $region21: #{tpu_custom_call.1} parent=11 // pred_check
          %p215 = pneg %p105
        $region22: #{tpu_custom_call.1} parent=11 // pred_check_branch
          %217 = sbr.rel (%p215) target = $region24
        $region23: #{tpu_custom_call.1} parent=11 // pred_region
          _
        $region24: #{tpu_custom_call.1} parent=11 // pred_fallthru
          _
        // Predicated region
        $region25: #{tpu_custom_call.1} parent=11 // pred_check
          %p218 = pneg %p126
        $region26: #{tpu_custom_call.1} parent=11 // pred_check_branch
          %220 = sbr.rel (%p218) target = $region28
        $region27: #{tpu_custom_call.1} parent=11 // pred_region
          _
        $region28: #{tpu_custom_call.1} parent=11 // pred_fallthru
          _
        // Predicated region
        $region29: #{tpu_custom_call.1} parent=11 // pred_check
          %p221 = pneg %p147
        $region30: #{tpu_custom_call.1} parent=11 // pred_check_branch
          %223 = sbr.rel (%p221) target = $region32
        $region31: #{tpu_custom_call.1} parent=11 // pred_region
          _
        $region32: #{tpu_custom_call.1} parent=11 // pred_fallthru
          _
        // Predicated region
        $region33: #{tpu_custom_call.1} parent=11 // pred_check
          %p224 = pneg %p168
        $region34: #{tpu_custom_call.1} parent=11 // pred_check_branch
          %226 = sbr.rel (%p224) target = $region36
        $region35: #{tpu_custom_call.1} parent=11 // pred_region
          _
        $region36: #{tpu_custom_call.1} parent=11 // pred_fallthru
          _
      $region12: #{tpu_custom_call.1} parent=5 // pred_fallthru
        _
      %p227 = scmp.lt.s32.totalorder %s16, 2
      // Predicated region
      $region37: #{tpu_custom_call.1} parent=5 // pred_check
        %p228 = pneg %p227
      $region38: #{tpu_custom_call.1} parent=5 // pred_check_branch
        %230 = sbr.rel (%p228) target = $region40
      $region39: #{tpu_custom_call.1} parent=5 // pred_region
        // Predicated region
        $region41: #{tpu_custom_call.1} parent=39 // pred_check
          %p231 = pneg %p36
        $region42: #{tpu_custom_call.1} parent=39 // pred_check_branch
          %233 = sbr.rel (%p231) target = $region44
        $region43: #{tpu_custom_call.1} parent=39 // pred_region
          %s234 = smul.u32 32, %s16
          %p235 = scmp.lt.s32.totalorder %s234, 63
          %s236 = scalar_select %p235, %s234, 63
          %s237 = smul.addr %s236, 8
          %s238 = scalar_lea.vmem %s0, %s237
          %s239 = smul.u32 32, %s16
        $region44: #{tpu_custom_call.1} parent=39 // pred_fallthru
          _
      $region40: #{tpu_custom_call.1} parent=5 // pred_fallthru
        _
      %p240 = scmp.le.s32.totalorder 1, %s16
      %p241 = scmp.lt.s32.totalorder %s16, 3
      %p242 = pnand %p240, %p241
      %p243 = pneg %p242
      // Predicated region
      $region45: #{tpu_custom_call.1} parent=5 // pred_check
        _
      $region46: #{tpu_custom_call.1} parent=5 // pred_check_branch
        %245 = sbr.rel (%p242) target = $region48
      $region47: #{tpu_custom_call.1} parent=5 // pred_region
        %s246 = ssub.s32 %s16, 1
        %s247 = smul.u32 32, %s21
        %p248 = scmp.lt.s32.totalorder %s247, 63
        %s249 = scalar_select %p248, %s247, 63
        %s250 = smul.addr %s249, 8
        %s251 = scalar_lea.vmem %s0, %s250
        %p252 = pneg %p42
        %p253 = pneg %p39
        %p254 = pneg %p63
        %p255 = pneg %p60
        %p256 = pneg %p84
        %p257 = pneg %p81
        %p258 = pneg %p105
        %p259 = pneg %p102
        %p260 = pneg %p126
        %p261 = pneg %p123
        %p262 = pneg %p147
        %p263 = pneg %p144
        %p264 = pneg %p168
        %p265 = pneg %p165
        %p266 = pneg %p194
        %p267 = pneg %p191
        %s268 = sand.u32 %s181, 1
        %s269 = scalar_lea.sflag [#allocation3], %s268
        %s270 = sand.u32 %s181, 1
        %s271 = smul.addr %s270, 32
        %s272 = scalar_lea.vmem [#allocation2], %s271
        %s273 = smul.u32 32, %s21
        %p274 = scmp.lt.s32.totalorder %s273, 63
        %s275 = scalar_select %p274, %s273, 63
        %s276 = smul.addr %s275, 8
        %s277 = scalar_lea.vmem %s0, %s276
        %s278 = smul.u32 32, %s21
        %s279 = smul.u32 2, %s21
        %v280 = vlaneseq
        %v281 = vshrl.u32 %v280, 7
        %v282 = vadd.s32 %v281, 8
        %v283 = vadd.s32 %v281, 16
        %v284 = vadd.s32 %v281, 24
        %v285 = vadd.s32 %v281, 32
        %v286 = vadd.s32 %v281, 40
        %v287 = vadd.s32 %v281, 48
        %v288 = vadd.s32 %v281, 56
        %v289 = vadd.s32 %v281, 64
        %v290 = vadd.s32 %v281, 72
        %v291 = vadd.s32 %v281, 80
        %v292 = vadd.s32 %v281, 88
        %v293 = vadd.s32 %v281, 96
        %v294 = vadd.s32 %v281, 104
        %v295 = vadd.s32 %v281, 112
        %v296 = vadd.s32 %v281, 120
        %v297 = vadd.s32 %v281, 128
        %v298 = vadd.s32 %v281, 136
        %v299 = vadd.s32 %v281, 144
        %v300 = vadd.s32 %v281, 152
        %v301 = vadd.s32 %v281, 160
        %v302 = vadd.s32 %v281, 168
        %v303 = vadd.s32 %v281, 176
        %v304 = vadd.s32 %v281, 184
        %v305 = vadd.s32 %v281, 192
        %v306 = vadd.s32 %v281, 200
        %v307 = vadd.s32 %v281, 208
        %v308 = vadd.s32 %v281, 216
        %v309 = vadd.s32 %v281, 224
        %v310 = vadd.s32 %v281, 232
        %v311 = vadd.s32 %v281, 240
        %v312 = vadd.s32 %v281, 248
        %vm313 = vcmp.lt.s32.totalorder %v281, 0
        %v314 = vsub.s32 0, %v281
        %v315 = vsel %vm313, %v314, %v281
        %v316 = vshrl.u32 %v315, 4
        %v317 = vand.u32 %v315, 15
        %v318 = vsub.s32 0, %v317
        %v319 = vsel %vm313, %v318, %v317
        %vm320 = vcmp.lt.s32.totalorder %v282, 0
        %v321 = vsub.s32 0, %v282
        %v322 = vsel %vm320, %v321, %v282
        %v323 = vshrl.u32 %v322, 4
        %v324 = vand.u32 %v322, 15
        %v325 = vsub.s32 0, %v324
        %v326 = vsel %vm320, %v325, %v324
        %vm327 = vcmp.lt.s32.totalorder %v283, 0
        %v328 = vsub.s32 0, %v283
        %v329 = vsel %vm327, %v328, %v283
        %v330 = vshrl.u32 %v329, 4
        %v331 = vand.u32 %v329, 15
        %v332 = vsub.s32 0, %v331
        %v333 = vsel %vm327, %v332, %v331
        %vm334 = vcmp.lt.s32.totalorder %v284, 0
        %v335 = vsub.s32 0, %v284
        %v336 = vsel %vm334, %v335, %v284
        %v337 = vshrl.u32 %v336, 4
        %v338 = vand.u32 %v336, 15
        %v339 = vsub.s32 0, %v338
        %v340 = vsel %vm334, %v339, %v338
        %vm341 = vcmp.lt.s32.totalorder %v285, 0
        %v342 = vsub.s32 0, %v285
        %v343 = vsel %vm341, %v342, %v285
        %v344 = vshrl.u32 %v343, 4
        %v345 = vand.u32 %v343, 15
        %v346 = vsub.s32 0, %v345
        %v347 = vsel %vm341, %v346, %v345
        %vm348 = vcmp.lt.s32.totalorder %v286, 0
        %v349 = vsub.s32 0, %v286
        %v350 = vsel %vm348, %v349, %v286
        %v351 = vshrl.u32 %v350, 4
        %v352 = vand.u32 %v350, 15
        %v353 = vsub.s32 0, %v352
        %v354 = vsel %vm348, %v353, %v352
        %vm355 = vcmp.lt.s32.totalorder %v287, 0
        %v356 = vsub.s32 0, %v287
        %v357 = vsel %vm355, %v356, %v287
        %v358 = vshrl.u32 %v357, 4
        %v359 = vand.u32 %v357, 15
        %v360 = vsub.s32 0, %v359
        %v361 = vsel %vm355, %v360, %v359
        %vm362 = vcmp.lt.s32.totalorder %v288, 0
        %v363 = vsub.s32 0, %v288
        %v364 = vsel %vm362, %v363, %v288
        %v365 = vshrl.u32 %v364, 4
        %v366 = vand.u32 %v364, 15
        %v367 = vsub.s32 0, %v366
        %v368 = vsel %vm362, %v367, %v366
        %vm369 = vcmp.lt.s32.totalorder %v289, 0
        %v370 = vsub.s32 0, %v289
        %v371 = vsel %vm369, %v370, %v289
        %v372 = vshrl.u32 %v371, 4
        %v373 = vand.u32 %v371, 15
        %v374 = vsub.s32 0, %v373
        %v375 = vsel %vm369, %v374, %v373
        %vm376 = vcmp.lt.s32.totalorder %v290, 0
        %v377 = vsub.s32 0, %v290
        %v378 = vsel %vm376, %v377, %v290
        %v379 = vshrl.u32 %v378, 4
        %v380 = vand.u32 %v378, 15
        %v381 = vsub.s32 0, %v380
        %v382 = vsel %vm376, %v381, %v380
        %vm383 = vcmp.lt.s32.totalorder %v291, 0
        %v384 = vsub.s32 0, %v291
        %v385 = vsel %vm383, %v384, %v291
        %v386 = vshrl.u32 %v385, 4
        %v387 = vand.u32 %v385, 15
        %v388 = vsub.s32 0, %v387
        %v389 = vsel %vm383, %v388, %v387
        %vm390 = vcmp.lt.s32.totalorder %v292, 0
        %v391 = vsub.s32 0, %v292
        %v392 = vsel %vm390, %v391, %v292
        %v393 = vshrl.u32 %v392, 4
        %v394 = vand.u32 %v392, 15
        %v395 = vsub.s32 0, %v394
        %v396 = vsel %vm390, %v395, %v394
        %vm397 = vcmp.lt.s32.totalorder %v293, 0
        %v398 = vsub.s32 0, %v293
        %v399 = vsel %vm397, %v398, %v293
        %v400 = vshrl.u32 %v399, 4
        %v401 = vand.u32 %v399, 15
        %v402 = vsub.s32 0, %v401
        %v403 = vsel %vm397, %v402, %v401
        %vm404 = vcmp.lt.s32.totalorder %v294, 0
        %v405 = vsub.s32 0, %v294
        %v406 = vsel %vm404, %v405, %v294
        %v407 = vshrl.u32 %v406, 4
        %v408 = vand.u32 %v406, 15
        %v409 = vsub.s32 0, %v408
        %v410 = vsel %vm404, %v409, %v408
        %vm411 = vcmp.lt.s32.totalorder %v295, 0
        %v412 = vsub.s32 0, %v295
        %v413 = vsel %vm411, %v412, %v295
        %v414 = vshrl.u32 %v413, 4
        %v415 = vand.u32 %v413, 15
        %v416 = vsub.s32 0, %v415
        %v417 = vsel %vm411, %v416, %v415
        %vm418 = vcmp.lt.s32.totalorder %v296, 0
        %v419 = vsub.s32 0, %v296
        %v420 = vsel %vm418, %v419, %v296
        %v421 = vshrl.u32 %v420, 4
        %v422 = vand.u32 %v420, 15
        %v423 = vsub.s32 0, %v422
        %v424 = vsel %vm418, %v423, %v422
        %vm425 = vcmp.lt.s32.totalorder %v297, 0
        %v426 = vsub.s32 0, %v297
        %v427 = vsel %vm425, %v426, %v297
        %v428 = vshrl.u32 %v427, 4
        %v429 = vand.u32 %v427, 15
        %v430 = vsub.s32 0, %v429
        %v431 = vsel %vm425, %v430, %v429
        %vm432 = vcmp.lt.s32.totalorder %v298, 0
        %v433 = vsub.s32 0, %v298
        %v434 = vsel %vm432, %v433, %v298
        %v435 = vshrl.u32 %v434, 4
        %v436 = vand.u32 %v434, 15
        %v437 = vsub.s32 0, %v436
        %v438 = vsel %vm432, %v437, %v436
        %vm439 = vcmp.lt.s32.totalorder %v299, 0
        %v440 = vsub.s32 0, %v299
        %v441 = vsel %vm439, %v440, %v299
        %v442 = vshrl.u32 %v441, 4
        %v443 = vand.u32 %v441, 15
        %v444 = vsub.s32 0, %v443
        %v445 = vsel %vm439, %v444, %v443
        %vm446 = vcmp.lt.s32.totalorder %v300, 0
        %v447 = vsub.s32 0, %v300
        %v448 = vsel %vm446, %v447, %v300
        %v449 = vshrl.u32 %v448, 4
        %v450 = vand.u32 %v448, 15
        %v451 = vsub.s32 0, %v450
        %v452 = vsel %vm446, %v451, %v450
        %vm453 = vcmp.lt.s32.totalorder %v301, 0
        %v454 = vsub.s32 0, %v301
        %v455 = vsel %vm453, %v454, %v301
        %v456 = vshrl.u32 %v455, 4
        %v457 = vand.u32 %v455, 15
        %v458 = vsub.s32 0, %v457
        %v459 = vsel %vm453, %v458, %v457
        %vm460 = vcmp.lt.s32.totalorder %v302, 0
        %v461 = vsub.s32 0, %v302
        %v462 = vsel %vm460, %v461, %v302
        %v463 = vshrl.u32 %v462, 4
        %v464 = vand.u32 %v462, 15
        %v465 = vsub.s32 0, %v464
        %v466 = vsel %vm460, %v465, %v464
        %vm467 = vcmp.lt.s32.totalorder %v303, 0
        %v468 = vsub.s32 0, %v303
        %v469 = vsel %vm467, %v468, %v303
        %v470 = vshrl.u32 %v469, 4
        %v471 = vand.u32 %v469, 15
        %v472 = vsub.s32 0, %v471
        %v473 = vsel %vm467, %v472, %v471
        %vm474 = vcmp.lt.s32.totalorder %v304, 0
        %v475 = vsub.s32 0, %v304
        %v476 = vsel %vm474, %v475, %v304
        %v477 = vshrl.u32 %v476, 4
        %v478 = vand.u32 %v476, 15
        %v479 = vsub.s32 0, %v478
        %v480 = vsel %vm474, %v479, %v478
        %vm481 = vcmp.lt.s32.totalorder %v305, 0
        %v482 = vsub.s32 0, %v305
        %v483 = vsel %vm481, %v482, %v305
        %v484 = vshrl.u32 %v483, 4
        %v485 = vand.u32 %v483, 15
        %v486 = vsub.s32 0, %v485
        %v487 = vsel %vm481, %v486, %v485
        %vm488 = vcmp.lt.s32.totalorder %v306, 0
        %v489 = vsub.s32 0, %v306
        %v490 = vsel %vm488, %v489, %v306
        %v491 = vshrl.u32 %v490, 4
        %v492 = vand.u32 %v490, 15
        %v493 = vsub.s32 0, %v492
        %v494 = vsel %vm488, %v493, %v492
        %vm495 = vcmp.lt.s32.totalorder %v307, 0
        %v496 = vsub.s32 0, %v307
        %v497 = vsel %vm495, %v496, %v307
        %v498 = vshrl.u32 %v497, 4
        %v499 = vand.u32 %v497, 15
        %v500 = vsub.s32 0, %v499
        %v501 = vsel %vm495, %v500, %v499
        %vm502 = vcmp.lt.s32.totalorder %v308, 0
        %v503 = vsub.s32 0, %v308
        %v504 = vsel %vm502, %v503, %v308
        %v505 = vshrl.u32 %v504, 4
        %v506 = vand.u32 %v504, 15
        %v507 = vsub.s32 0, %v506
        %v508 = vsel %vm502, %v507, %v506
        %vm509 = vcmp.lt.s32.totalorder %v309, 0
        %v510 = vsub.s32 0, %v309
        %v511 = vsel %vm509, %v510, %v309
        %v512 = vshrl.u32 %v511, 4
        %v513 = vand.u32 %v511, 15
        %v514 = vsub.s32 0, %v513
        %v515 = vsel %vm509, %v514, %v513
        %vm516 = vcmp.lt.s32.totalorder %v310, 0
        %v517 = vsub.s32 0, %v310
        %v518 = vsel %vm516, %v517, %v310
        %v519 = vshrl.u32 %v518, 4
        %v520 = vand.u32 %v518, 15
        %v521 = vsub.s32 0, %v520
        %v522 = vsel %vm516, %v521, %v520
        %vm523 = vcmp.lt.s32.totalorder %v311, 0
        %v524 = vsub.s32 0, %v311
        %v525 = vsel %vm523, %v524, %v311
        %v526 = vshrl.u32 %v525, 4
        %v527 = vand.u32 %v525, 15
        %v528 = vsub.s32 0, %v527
        %v529 = vsel %vm523, %v528, %v527
        %vm530 = vcmp.lt.s32.totalorder %v312, 0
        %v531 = vsub.s32 0, %v312
        %v532 = vsel %vm530, %v531, %v312
        %v533 = vshrl.u32 %v532, 4
        %v534 = vand.u32 %v532, 15
        %v535 = vsub.s32 0, %v534
        %v536 = vsel %vm530, %v535, %v534
        %vm537 = vcmp.ne.s32.totalorder %v319, 0
        %vm538 = vcmp.ne.s32.totalorder %v326, 0
        %vm539 = vcmp.ne.s32.totalorder %v333, 0
        %vm540 = vcmp.ne.s32.totalorder %v340, 0
        %vm541 = vcmp.ne.s32.totalorder %v347, 0
        %vm542 = vcmp.ne.s32.totalorder %v354, 0
        %vm543 = vcmp.ne.s32.totalorder %v361, 0
        %vm544 = vcmp.ne.s32.totalorder %v368, 0
        %vm545 = vcmp.ne.s32.totalorder %v375, 0
        %vm546 = vcmp.ne.s32.totalorder %v382, 0
        %vm547 = vcmp.ne.s32.totalorder %v389, 0
        %vm548 = vcmp.ne.s32.totalorder %v396, 0
        %vm549 = vcmp.ne.s32.totalorder %v403, 0
        %vm550 = vcmp.ne.s32.totalorder %v410, 0
        %vm551 = vcmp.ne.s32.totalorder %v417, 0
        %vm552 = vcmp.ne.s32.totalorder %v424, 0
        %vm553 = vcmp.ne.s32.totalorder %v431, 0
        %vm554 = vcmp.ne.s32.totalorder %v438, 0
        %vm555 = vcmp.ne.s32.totalorder %v445, 0
        %vm556 = vcmp.ne.s32.totalorder %v452, 0
        %vm557 = vcmp.ne.s32.totalorder %v459, 0
        %vm558 = vcmp.ne.s32.totalorder %v466, 0
        %vm559 = vcmp.ne.s32.totalorder %v473, 0
        %vm560 = vcmp.ne.s32.totalorder %v480, 0
        %vm561 = vcmp.ne.s32.totalorder %v487, 0
        %vm562 = vcmp.ne.s32.totalorder %v494, 0
        %vm563 = vcmp.ne.s32.totalorder %v501, 0
        %vm564 = vcmp.ne.s32.totalorder %v508, 0
        %vm565 = vcmp.ne.s32.totalorder %v515, 0
        %vm566 = vcmp.ne.s32.totalorder %v522, 0
        %vm567 = vcmp.ne.s32.totalorder %v529, 0
        %vm568 = vcmp.ne.s32.totalorder %v536, 0
        %vm569 = vcmp.lt.s32.totalorder %v319, 0
        %vm570 = vcmp.lt.s32.totalorder %v326, 0
        %vm571 = vcmp.lt.s32.totalorder %v333, 0
        %vm572 = vcmp.lt.s32.totalorder %v340, 0
        %vm573 = vcmp.lt.s32.totalorder %v347, 0
        %vm574 = vcmp.lt.s32.totalorder %v354, 0
        %vm575 = vcmp.lt.s32.totalorder %v361, 0
        %vm576 = vcmp.lt.s32.totalorder %v368, 0
        %vm577 = vcmp.lt.s32.totalorder %v375, 0
        %vm578 = vcmp.lt.s32.totalorder %v382, 0
        %vm579 = vcmp.lt.s32.totalorder %v389, 0
        %vm580 = vcmp.lt.s32.totalorder %v396, 0
        %vm581 = vcmp.lt.s32.totalorder %v403, 0
        %vm582 = vcmp.lt.s32.totalorder %v410, 0
        %vm583 = vcmp.lt.s32.totalorder %v417, 0
        %vm584 = vcmp.lt.s32.totalorder %v424, 0
        %vm585 = vcmp.lt.s32.totalorder %v431, 0
        %vm586 = vcmp.lt.s32.totalorder %v438, 0
        %vm587 = vcmp.lt.s32.totalorder %v445, 0
        %vm588 = vcmp.lt.s32.totalorder %v452, 0
        %vm589 = vcmp.lt.s32.totalorder %v459, 0
        %vm590 = vcmp.lt.s32.totalorder %v466, 0
        %vm591 = vcmp.lt.s32.totalorder %v473, 0
        %vm592 = vcmp.lt.s32.totalorder %v480, 0
        %vm593 = vcmp.lt.s32.totalorder %v487, 0
        %vm594 = vcmp.lt.s32.totalorder %v494, 0
        %vm595 = vcmp.lt.s32.totalorder %v501, 0
        %vm596 = vcmp.lt.s32.totalorder %v508, 0
        %vm597 = vcmp.lt.s32.totalorder %v515, 0
        %vm598 = vcmp.lt.s32.totalorder %v522, 0
        %vm599 = vcmp.lt.s32.totalorder %v529, 0
        %vm600 = vcmp.lt.s32.totalorder %v536, 0
        %vm601 = vmand %vm569, %vm537
        %vm602 = vmand %vm570, %vm538
        %vm603 = vmand %vm571, %vm539
        %vm604 = vmand %vm572, %vm540
        %vm605 = vmand %vm573, %vm541
        %vm606 = vmand %vm574, %vm542
        %vm607 = vmand %vm575, %vm543
        %vm608 = vmand %vm576, %vm544
        %vm609 = vmand %vm577, %vm545
        %vm610 = vmand %vm578, %vm546
        %vm611 = vmand %vm579, %vm547
        %vm612 = vmand %vm580, %vm548
        %vm613 = vmand %vm581, %vm549
        %vm614 = vmand %vm582, %vm550
        %vm615 = vmand %vm583, %vm551
        %vm616 = vmand %vm584, %vm552
        %vm617 = vmand %vm585, %vm553
        %vm618 = vmand %vm586, %vm554
        %vm619 = vmand %vm587, %vm555
        %vm620 = vmand %vm588, %vm556
        %vm621 = vmand %vm589, %vm557
        %vm622 = vmand %vm590, %vm558
        %vm623 = vmand %vm591, %vm559
        %vm624 = vmand %vm592, %vm560
        %vm625 = vmand %vm593, %vm561
        %vm626 = vmand %vm594, %vm562
        %vm627 = vmand %vm595, %vm563
        %vm628 = vmand %vm596, %vm564
        %vm629 = vmand %vm597, %vm565
        %vm630 = vmand %vm598, %vm566
        %vm631 = vmand %vm599, %vm567
        %vm632 = vmand %vm600, %vm568
        %v633 = vadd.s32 %v319, 16
        %v634 = vadd.s32 %v326, 16
        %v635 = vadd.s32 %v333, 16
        %v636 = vadd.s32 %v340, 16
        %v637 = vadd.s32 %v347, 16
        %v638 = vadd.s32 %v354, 16
        %v639 = vadd.s32 %v361, 16
        %v640 = vadd.s32 %v368, 16
        %v641 = vadd.s32 %v375, 16
        %v642 = vadd.s32 %v382, 16
        %v643 = vadd.s32 %v389, 16
        %v644 = vadd.s32 %v396, 16
        %v645 = vadd.s32 %v403, 16
        %v646 = vadd.s32 %v410, 16
        %v647 = vadd.s32 %v417, 16
        %v648 = vadd.s32 %v424, 16
        %v649 = vadd.s32 %v431, 16
        %v650 = vadd.s32 %v438, 16
        %v651 = vadd.s32 %v445, 16
        %v652 = vadd.s32 %v452, 16
        %v653 = vadd.s32 %v459, 16
        %v654 = vadd.s32 %v466, 16
        %v655 = vadd.s32 %v473, 16
        %v656 = vadd.s32 %v480, 16
        %v657 = vadd.s32 %v487, 16
        %v658 = vadd.s32 %v494, 16
        %v659 = vadd.s32 %v501, 16
        %v660 = vadd.s32 %v508, 16
        %v661 = vadd.s32 %v515, 16
        %v662 = vadd.s32 %v522, 16
        %v663 = vadd.s32 %v529, 16
        %v664 = vadd.s32 %v536, 16
        %v665 = vsel %vm601, %v633, %v319
        %v666 = vsel %vm602, %v634, %v326
        %v667 = vsel %vm603, %v635, %v333
        %v668 = vsel %vm604, %v636, %v340
        %v669 = vsel %vm605, %v637, %v347
        %v670 = vsel %vm606, %v638, %v354
        %v671 = vsel %vm607, %v639, %v361
        %v672 = vsel %vm608, %v640, %v368
        %v673 = vsel %vm609, %v641, %v375
        %v674 = vsel %vm610, %v642, %v382
        %v675 = vsel %vm611, %v643, %v389
        %v676 = vsel %vm612, %v644, %v396
        %v677 = vsel %vm613, %v645, %v403
        %v678 = vsel %vm614, %v646, %v410
        %v679 = vsel %vm615, %v647, %v417
        %v680 = vsel %vm616, %v648, %v424
        %v681 = vsel %vm617, %v649, %v431
        %v682 = vsel %vm618, %v650, %v438
        %v683 = vsel %vm619, %v651, %v445
        %v684 = vsel %vm620, %v652, %v452
        %v685 = vsel %vm621, %v653, %v459
        %v686 = vsel %vm622, %v654, %v466
        %v687 = vsel %vm623, %v655, %v473
        %v688 = vsel %vm624, %v656, %v480
        %v689 = vsel %vm625, %v657, %v487
        %v690 = vsel %vm626, %v658, %v494
        %v691 = vsel %vm627, %v659, %v501
        %v692 = vsel %vm628, %v660, %v508
        %v693 = vsel %vm629, %v661, %v515
        %v694 = vsel %vm630, %v662, %v522
        %v695 = vsel %vm631, %v663, %v529
        %v696 = vsel %vm632, %v664, %v536
        %v697 = vadd.s32 %v665, 4294967293
        %v698 = vadd.s32 %v666, 4294967293
        %v699 = vadd.s32 %v667, 4294967293
        %v700 = vadd.s32 %v668, 4294967293
        %v701 = vadd.s32 %v669, 4294967293
        %v702 = vadd.s32 %v670, 4294967293
        %v703 = vadd.s32 %v671, 4294967293
        %v704 = vadd.s32 %v672, 4294967293
        %v705 = vadd.s32 %v673, 4294967293
        %v706 = vadd.s32 %v674, 4294967293
        %v707 = vadd.s32 %v675, 4294967293
        %v708 = vadd.s32 %v676, 4294967293
        %v709 = vadd.s32 %v677, 4294967293
        %v710 = vadd.s32 %v678, 4294967293
        %v711 = vadd.s32 %v679, 4294967293
        %v712 = vadd.s32 %v680, 4294967293
        %v713 = vadd.s32 %v681, 4294967293
        %v714 = vadd.s32 %v682, 4294967293
        %v715 = vadd.s32 %v683, 4294967293
        %v716 = vadd.s32 %v684, 4294967293
        %v717 = vadd.s32 %v685, 4294967293
        %v718 = vadd.s32 %v686, 4294967293
        %v719 = vadd.s32 %v687, 4294967293
        %v720 = vadd.s32 %v688, 4294967293
        %v721 = vadd.s32 %v689, 4294967293
        %v722 = vadd.s32 %v690, 4294967293
        %v723 = vadd.s32 %v691, 4294967293
        %v724 = vadd.s32 %v692, 4294967293
        %v725 = vadd.s32 %v693, 4294967293
        %v726 = vadd.s32 %v694, 4294967293
        %v727 = vadd.s32 %v695, 4294967293
        %v728 = vadd.s32 %v696, 4294967293
        %vm729 = vcmp.ge.s32.totalorder %v697, 0
        %vm730 = vcmp.ge.s32.totalorder %v698, 0
        %vm731 = vcmp.ge.s32.totalorder %v699, 0
        %vm732 = vcmp.ge.s32.totalorder %v700, 0
        %vm733 = vcmp.ge.s32.totalorder %v701, 0
        %vm734 = vcmp.ge.s32.totalorder %v702, 0
        %vm735 = vcmp.ge.s32.totalorder %v703, 0
        %vm736 = vcmp.ge.s32.totalorder %v704, 0
        %vm737 = vcmp.ge.s32.totalorder %v705, 0
        %vm738 = vcmp.ge.s32.totalorder %v706, 0
        %vm739 = vcmp.ge.s32.totalorder %v707, 0
        %vm740 = vcmp.ge.s32.totalorder %v708, 0
        %vm741 = vcmp.ge.s32.totalorder %v709, 0
        %vm742 = vcmp.ge.s32.totalorder %v710, 0
        %vm743 = vcmp.ge.s32.totalorder %v711, 0
        %vm744 = vcmp.ge.s32.totalorder %v712, 0
        %vm745 = vcmp.ge.s32.totalorder %v713, 0
        %vm746 = vcmp.ge.s32.totalorder %v714, 0
        %vm747 = vcmp.ge.s32.totalorder %v715, 0
        %vm748 = vcmp.ge.s32.totalorder %v716, 0
        %vm749 = vcmp.ge.s32.totalorder %v717, 0
        %vm750 = vcmp.ge.s32.totalorder %v718, 0
        %vm751 = vcmp.ge.s32.totalorder %v719, 0
        %vm752 = vcmp.ge.s32.totalorder %v720, 0
        %vm753 = vcmp.ge.s32.totalorder %v721, 0
        %vm754 = vcmp.ge.s32.totalorder %v722, 0
        %vm755 = vcmp.ge.s32.totalorder %v723, 0
        %vm756 = vcmp.ge.s32.totalorder %v724, 0
        %vm757 = vcmp.ge.s32.totalorder %v725, 0
        %vm758 = vcmp.ge.s32.totalorder %v726, 0
        %vm759 = vcmp.ge.s32.totalorder %v727, 0
        %vm760 = vcmp.ge.s32.totalorder %v728, 0
        %vm761 = vcmp.lt.s32.totalorder %v697, 16
        %vm762 = vcmp.lt.s32.totalorder %v698, 16
        %vm763 = vcmp.lt.s32.totalorder %v699, 16
        %vm764 = vcmp.lt.s32.totalorder %v700, 16
        %vm765 = vcmp.lt.s32.totalorder %v701, 16
        %vm766 = vcmp.lt.s32.totalorder %v702, 16
        %vm767 = vcmp.lt.s32.totalorder %v703, 16
        %vm768 = vcmp.lt.s32.totalorder %v704, 16
        %vm769 = vcmp.lt.s32.totalorder %v705, 16
        %vm770 = vcmp.lt.s32.totalorder %v706, 16
        %vm771 = vcmp.lt.s32.totalorder %v707, 16
        %vm772 = vcmp.lt.s32.totalorder %v708, 16
        %vm773 = vcmp.lt.s32.totalorder %v709, 16
        %vm774 = vcmp.lt.s32.totalorder %v710, 16
        %vm775 = vcmp.lt.s32.totalorder %v711, 16
        %vm776 = vcmp.lt.s32.totalorder %v712, 16
        %vm777 = vcmp.lt.s32.totalorder %v713, 16
        %vm778 = vcmp.lt.s32.totalorder %v714, 16
        %vm779 = vcmp.lt.s32.totalorder %v715, 16
        %vm780 = vcmp.lt.s32.totalorder %v716, 16
        %vm781 = vcmp.lt.s32.totalorder %v717, 16
        %vm782 = vcmp.lt.s32.totalorder %v718, 16
        %vm783 = vcmp.lt.s32.totalorder %v719, 16
        %vm784 = vcmp.lt.s32.totalorder %v720, 16
        %vm785 = vcmp.lt.s32.totalorder %v721, 16
        %vm786 = vcmp.lt.s32.totalorder %v722, 16
        %vm787 = vcmp.lt.s32.totalorder %v723, 16
        %vm788 = vcmp.lt.s32.totalorder %v724, 16
        %vm789 = vcmp.lt.s32.totalorder %v725, 16
        %vm790 = vcmp.lt.s32.totalorder %v726, 16
        %vm791 = vcmp.lt.s32.totalorder %v727, 16
        %vm792 = vcmp.lt.s32.totalorder %v728, 16
        %vm793 = vmand %vm729, %vm761
        %vm794 = vmand %vm730, %vm762
        %vm795 = vmand %vm731, %vm763
        %vm796 = vmand %vm732, %vm764
        %vm797 = vmand %vm733, %vm765
        %vm798 = vmand %vm734, %vm766
        %vm799 = vmand %vm735, %vm767
        %vm800 = vmand %vm736, %vm768
        %vm801 = vmand %vm737, %vm769
        %vm802 = vmand %vm738, %vm770
        %vm803 = vmand %vm739, %vm771
        %vm804 = vmand %vm740, %vm772
        %vm805 = vmand %vm741, %vm773
        %vm806 = vmand %vm742, %vm774
        %vm807 = vmand %vm743, %vm775
        %vm808 = vmand %vm744, %vm776
        %vm809 = vmand %vm745, %vm777
        %vm810 = vmand %vm746, %vm778
        %vm811 = vmand %vm747, %vm779
        %vm812 = vmand %vm748, %vm780
        %vm813 = vmand %vm749, %vm781
        %vm814 = vmand %vm750, %vm782
        %vm815 = vmand %vm751, %vm783
        %vm816 = vmand %vm752, %vm784
        %vm817 = vmand %vm753, %vm785
        %vm818 = vmand %vm754, %vm786
        %vm819 = vmand %vm755, %vm787
        %vm820 = vmand %vm756, %vm788
        %vm821 = vmand %vm757, %vm789
        %vm822 = vmand %vm758, %vm790
        %vm823 = vmand %vm759, %vm791
        %vm824 = vmand %vm760, %vm792
        %v825 = vadd.s32 %v665, 4294967294
        %v826 = vadd.s32 %v666, 4294967294
        %v827 = vadd.s32 %v667, 4294967294
        %v828 = vadd.s32 %v668, 4294967294
        %v829 = vadd.s32 %v669, 4294967294
        %v830 = vadd.s32 %v670, 4294967294
        %v831 = vadd.s32 %v671, 4294967294
        %v832 = vadd.s32 %v672, 4294967294
        %v833 = vadd.s32 %v673, 4294967294
        %v834 = vadd.s32 %v674, 4294967294
        %v835 = vadd.s32 %v675, 4294967294
        %v836 = vadd.s32 %v676, 4294967294
        %v837 = vadd.s32 %v677, 4294967294
        %v838 = vadd.s32 %v678, 4294967294
        %v839 = vadd.s32 %v679, 4294967294
        %v840 = vadd.s32 %v680, 4294967294
        %v841 = vadd.s32 %v681, 4294967294
        %v842 = vadd.s32 %v682, 4294967294
        %v843 = vadd.s32 %v683, 4294967294
        %v844 = vadd.s32 %v684, 4294967294
        %v845 = vadd.s32 %v685, 4294967294
        %v846 = vadd.s32 %v686, 4294967294
        %v847 = vadd.s32 %v687, 4294967294
        %v848 = vadd.s32 %v688, 4294967294
        %v849 = vadd.s32 %v689, 4294967294
        %v850 = vadd.s32 %v690, 4294967294
        %v851 = vadd.s32 %v691, 4294967294
        %v852 = vadd.s32 %v692, 4294967294
        %v853 = vadd.s32 %v693, 4294967294
        %v854 = vadd.s32 %v694, 4294967294
        %v855 = vadd.s32 %v695, 4294967294
        %v856 = vadd.s32 %v696, 4294967294
        %vm857 = vcmp.ge.s32.totalorder %v825, 0
        %vm858 = vcmp.ge.s32.totalorder %v826, 0
        %vm859 = vcmp.ge.s32.totalorder %v827, 0
        %vm860 = vcmp.ge.s32.totalorder %v828, 0
        %vm861 = vcmp.ge.s32.totalorder %v829, 0
        %vm862 = vcmp.ge.s32.totalorder %v830, 0
        %vm863 = vcmp.ge.s32.totalorder %v831, 0
        %vm864 = vcmp.ge.s32.totalorder %v832, 0
        %vm865 = vcmp.ge.s32.totalorder %v833, 0
        %vm866 = vcmp.ge.s32.totalorder %v834, 0
        %vm867 = vcmp.ge.s32.totalorder %v835, 0
        %vm868 = vcmp.ge.s32.totalorder %v836, 0
        %vm869 = vcmp.ge.s32.totalorder %v837, 0
        %vm870 = vcmp.ge.s32.totalorder %v838, 0
        %vm871 = vcmp.ge.s32.totalorder %v839, 0
        %vm872 = vcmp.ge.s32.totalorder %v840, 0
        %vm873 = vcmp.ge.s32.totalorder %v841, 0
        %vm874 = vcmp.ge.s32.totalorder %v842, 0
        %vm875 = vcmp.ge.s32.totalorder %v843, 0
        %vm876 = vcmp.ge.s32.totalorder %v844, 0
        %vm877 = vcmp.ge.s32.totalorder %v845, 0
        %vm878 = vcmp.ge.s32.totalorder %v846, 0
        %vm879 = vcmp.ge.s32.totalorder %v847, 0
        %vm880 = vcmp.ge.s32.totalorder %v848, 0
        %vm881 = vcmp.ge.s32.totalorder %v849, 0
        %vm882 = vcmp.ge.s32.totalorder %v850, 0
        %vm883 = vcmp.ge.s32.totalorder %v851, 0
        %vm884 = vcmp.ge.s32.totalorder %v852, 0
        %vm885 = vcmp.ge.s32.totalorder %v853, 0
        %vm886 = vcmp.ge.s32.totalorder %v854, 0
        %vm887 = vcmp.ge.s32.totalorder %v855, 0
        %vm888 = vcmp.ge.s32.totalorder %v856, 0
        %vm889 = vcmp.lt.s32.totalorder %v825, 16
        %vm890 = vcmp.lt.s32.totalorder %v826, 16
        %vm891 = vcmp.lt.s32.totalorder %v827, 16
        %vm892 = vcmp.lt.s32.totalorder %v828, 16
        %vm893 = vcmp.lt.s32.totalorder %v829, 16
        %vm894 = vcmp.lt.s32.totalorder %v830, 16
        %vm895 = vcmp.lt.s32.totalorder %v831, 16
        %vm896 = vcmp.lt.s32.totalorder %v832, 16
        %vm897 = vcmp.lt.s32.totalorder %v833, 16
        %vm898 = vcmp.lt.s32.totalorder %v834, 16
        %vm899 = vcmp.lt.s32.totalorder %v835, 16
        %vm900 = vcmp.lt.s32.totalorder %v836, 16
        %vm901 = vcmp.lt.s32.totalorder %v837, 16
        %vm902 = vcmp.lt.s32.totalorder %v838, 16
        %vm903 = vcmp.lt.s32.totalorder %v839, 16
        %vm904 = vcmp.lt.s32.totalorder %v840, 16
        %vm905 = vcmp.lt.s32.totalorder %v841, 16
        %vm906 = vcmp.lt.s32.totalorder %v842, 16
        %vm907 = vcmp.lt.s32.totalorder %v843, 16
        %vm908 = vcmp.lt.s32.totalorder %v844, 16
        %vm909 = vcmp.lt.s32.totalorder %v845, 16
        %vm910 = vcmp.lt.s32.totalorder %v846, 16
        %vm911 = vcmp.lt.s32.totalorder %v847, 16
        %vm912 = vcmp.lt.s32.totalorder %v848, 16
        %vm913 = vcmp.lt.s32.totalorder %v849, 16
        %vm914 = vcmp.lt.s32.totalorder %v850, 16
        %vm915 = vcmp.lt.s32.totalorder %v851, 16
        %vm916 = vcmp.lt.s32.totalorder %v852, 16
        %vm917 = vcmp.lt.s32.totalorder %v853, 16
        %vm918 = vcmp.lt.s32.totalorder %v854, 16
        %vm919 = vcmp.lt.s32.totalorder %v855, 16
        %vm920 = vcmp.lt.s32.totalorder %v856, 16
        %vm921 = vmand %vm857, %vm889
        %vm922 = vmand %vm858, %vm890
        %vm923 = vmand %vm859, %vm891
        %vm924 = vmand %vm860, %vm892
        %vm925 = vmand %vm861, %vm893
        %vm926 = vmand %vm862, %vm894
        %vm927 = vmand %vm863, %vm895
        %vm928 = vmand %vm864, %vm896
        %vm929 = vmand %vm865, %vm897
        %vm930 = vmand %vm866, %vm898
        %vm931 = vmand %vm867, %vm899
        %vm932 = vmand %vm868, %vm900
        %vm933 = vmand %vm869, %vm901
        %vm934 = vmand %vm870, %vm902
        %vm935 = vmand %vm871, %vm903
        %vm936 = vmand %vm872, %vm904
        %vm937 = vmand %vm873, %vm905
        %vm938 = vmand %vm874, %vm906
        %vm939 = vmand %vm875, %vm907
        %vm940 = vmand %vm876, %vm908
        %vm941 = vmand %vm877, %vm909
        %vm942 = vmand %vm878, %vm910
        %vm943 = vmand %vm879, %vm911
        %vm944 = vmand %vm880, %vm912
        %vm945 = vmand %vm881, %vm913
        %vm946 = vmand %vm882, %vm914
        %vm947 = vmand %vm883, %vm915
        %vm948 = vmand %vm884, %vm916
        %vm949 = vmand %vm885, %vm917
        %vm950 = vmand %vm886, %vm918
        %vm951 = vmand %vm887, %vm919
        %vm952 = vmand %vm888, %vm920
        %v953 = vadd.s32 %v665, 4294967295
        %v954 = vadd.s32 %v666, 4294967295
        %v955 = vadd.s32 %v667, 4294967295
        %v956 = vadd.s32 %v668, 4294967295
        %v957 = vadd.s32 %v669, 4294967295
        %v958 = vadd.s32 %v670, 4294967295
        %v959 = vadd.s32 %v671, 4294967295
        %v960 = vadd.s32 %v672, 4294967295
        %v961 = vadd.s32 %v673, 4294967295
        %v962 = vadd.s32 %v674, 4294967295
        %v963 = vadd.s32 %v675, 4294967295
        %v964 = vadd.s32 %v676, 4294967295
        %v965 = vadd.s32 %v677, 4294967295
        %v966 = vadd.s32 %v678, 4294967295
        %v967 = vadd.s32 %v679, 4294967295
        %v968 = vadd.s32 %v680, 4294967295
        %v969 = vadd.s32 %v681, 4294967295
        %v970 = vadd.s32 %v682, 4294967295
        %v971 = vadd.s32 %v683, 4294967295
        %v972 = vadd.s32 %v684, 4294967295
        %v973 = vadd.s32 %v685, 4294967295
        %v974 = vadd.s32 %v686, 4294967295
        %v975 = vadd.s32 %v687, 4294967295
        %v976 = vadd.s32 %v688, 4294967295
        %v977 = vadd.s32 %v689, 4294967295
        %v978 = vadd.s32 %v690, 4294967295
        %v979 = vadd.s32 %v691, 4294967295
        %v980 = vadd.s32 %v692, 4294967295
        %v981 = vadd.s32 %v693, 4294967295
        %v982 = vadd.s32 %v694, 4294967295
        %v983 = vadd.s32 %v695, 4294967295
        %v984 = vadd.s32 %v696, 4294967295
        %vm985 = vcmp.ge.s32.totalorder %v953, 0
        %vm986 = vcmp.ge.s32.totalorder %v954, 0
        %vm987 = vcmp.ge.s32.totalorder %v955, 0
        %vm988 = vcmp.ge.s32.totalorder %v956, 0
        %vm989 = vcmp.ge.s32.totalorder %v957, 0
        %vm990 = vcmp.ge.s32.totalorder %v958, 0
        %vm991 = vcmp.ge.s32.totalorder %v959, 0
        %vm992 = vcmp.ge.s32.totalorder %v960, 0
        %vm993 = vcmp.ge.s32.totalorder %v961, 0
        %vm994 = vcmp.ge.s32.totalorder %v962, 0
        %vm995 = vcmp.ge.s32.totalorder %v963, 0
        %vm996 = vcmp.ge.s32.totalorder %v964, 0
        %vm997 = vcmp.ge.s32.totalorder %v965, 0
        %vm998 = vcmp.ge.s32.totalorder %v966, 0
        %vm999 = vcmp.ge.s32.totalorder %v967, 0
        %vm1000 = vcmp.ge.s32.totalorder %v968, 0
        %vm1001 = vcmp.ge.s32.totalorder %v969, 0
        %vm1002 = vcmp.ge.s32.totalorder %v970, 0
        %vm1003 = vcmp.ge.s32.totalorder %v971, 0
        %vm1004 = vcmp.ge.s32.totalorder %v972, 0
        %vm1005 = vcmp.ge.s32.totalorder %v973, 0
        %vm1006 = vcmp.ge.s32.totalorder %v974, 0
        %vm1007 = vcmp.ge.s32.totalorder %v975, 0
        %vm1008 = vcmp.ge.s32.totalorder %v976, 0
        %vm1009 = vcmp.ge.s32.totalorder %v977, 0
        %vm1010 = vcmp.ge.s32.totalorder %v978, 0
        %vm1011 = vcmp.ge.s32.totalorder %v979, 0
        %vm1012 = vcmp.ge.s32.totalorder %v980, 0
        %vm1013 = vcmp.ge.s32.totalorder %v981, 0
        %vm1014 = vcmp.ge.s32.totalorder %v982, 0
        %vm1015 = vcmp.ge.s32.totalorder %v983, 0
        %vm1016 = vcmp.ge.s32.totalorder %v984, 0
        %vm1017 = vcmp.lt.s32.totalorder %v953, 16
        %vm1018 = vcmp.lt.s32.totalorder %v954, 16
        %vm1019 = vcmp.lt.s32.totalorder %v955, 16
        %vm1020 = vcmp.lt.s32.totalorder %v956, 16
        %vm1021 = vcmp.lt.s32.totalorder %v957, 16
        %vm1022 = vcmp.lt.s32.totalorder %v958, 16
        %vm1023 = vcmp.lt.s32.totalorder %v959, 16
        %vm1024 = vcmp.lt.s32.totalorder %v960, 16
        %vm1025 = vcmp.lt.s32.totalorder %v961, 16
        %vm1026 = vcmp.lt.s32.totalorder %v962, 16
        %vm1027 = vcmp.lt.s32.totalorder %v963, 16
        %vm1028 = vcmp.lt.s32.totalorder %v964, 16
        %vm1029 = vcmp.lt.s32.totalorder %v965, 16
        %vm1030 = vcmp.lt.s32.totalorder %v966, 16
        %vm1031 = vcmp.lt.s32.totalorder %v967, 16
        %vm1032 = vcmp.lt.s32.totalorder %v968, 16
        %vm1033 = vcmp.lt.s32.totalorder %v969, 16
        %vm1034 = vcmp.lt.s32.totalorder %v970, 16
        %vm1035 = vcmp.lt.s32.totalorder %v971, 16
        %vm1036 = vcmp.lt.s32.totalorder %v972, 16
        %vm1037 = vcmp.lt.s32.totalorder %v973, 16
        %vm1038 = vcmp.lt.s32.totalorder %v974, 16
        %vm1039 = vcmp.lt.s32.totalorder %v975, 16
        %vm1040 = vcmp.lt.s32.totalorder %v976, 16
        %vm1041 = vcmp.lt.s32.totalorder %v977, 16
        %vm1042 = vcmp.lt.s32.totalorder %v978, 16
        %vm1043 = vcmp.lt.s32.totalorder %v979, 16
        %vm1044 = vcmp.lt.s32.totalorder %v980, 16
        %vm1045 = vcmp.lt.s32.totalorder %v981, 16
        %vm1046 = vcmp.lt.s32.totalorder %v982, 16
        %vm1047 = vcmp.lt.s32.totalorder %v983, 16
        %vm1048 = vcmp.lt.s32.totalorder %v984, 16
        %vm1049 = vmand %vm985, %vm1017
        %vm1050 = vmand %vm986, %vm1018
        %vm1051 = vmand %vm987, %vm1019
        %vm1052 = vmand %vm988, %vm1020
        %vm1053 = vmand %vm989, %vm1021
        %vm1054 = vmand %vm990, %vm1022
        %vm1055 = vmand %vm991, %vm1023
        %vm1056 = vmand %vm992, %vm1024
        %vm1057 = vmand %vm993, %vm1025
        %vm1058 = vmand %vm994, %vm1026
        %vm1059 = vmand %vm995, %vm1027
        %vm1060 = vmand %vm996, %vm1028
        %vm1061 = vmand %vm997, %vm1029
        %vm1062 = vmand %vm998, %vm1030
        %vm1063 = vmand %vm999, %vm1031
        %vm1064 = vmand %vm1000, %vm1032
        %vm1065 = vmand %vm1001, %vm1033
        %vm1066 = vmand %vm1002, %vm1034
        %vm1067 = vmand %vm1003, %vm1035
        %vm1068 = vmand %vm1004, %vm1036
        %vm1069 = vmand %vm1005, %vm1037
        %vm1070 = vmand %vm1006, %vm1038
        %vm1071 = vmand %vm1007, %vm1039
        %vm1072 = vmand %vm1008, %vm1040
        %vm1073 = vmand %vm1009, %vm1041
        %vm1074 = vmand %vm1010, %vm1042
        %vm1075 = vmand %vm1011, %vm1043
        %vm1076 = vmand %vm1012, %vm1044
        %vm1077 = vmand %vm1013, %vm1045
        %vm1078 = vmand %vm1014, %vm1046
        %vm1079 = vmand %vm1015, %vm1047
        %vm1080 = vmand %vm1016, %vm1048
        %v1081 = vadd.s32 %v665, 1
        %v1082 = vadd.s32 %v666, 1
        %v1083 = vadd.s32 %v667, 1
        %v1084 = vadd.s32 %v668, 1
        %v1085 = vadd.s32 %v669, 1
        %v1086 = vadd.s32 %v670, 1
        %v1087 = vadd.s32 %v671, 1
        %v1088 = vadd.s32 %v672, 1
        %v1089 = vadd.s32 %v673, 1
        %v1090 = vadd.s32 %v674, 1
        %v1091 = vadd.s32 %v675, 1
        %v1092 = vadd.s32 %v676, 1
        %v1093 = vadd.s32 %v677, 1
        %v1094 = vadd.s32 %v678, 1
        %v1095 = vadd.s32 %v679, 1
        %v1096 = vadd.s32 %v680, 1
        %v1097 = vadd.s32 %v681, 1
        %v1098 = vadd.s32 %v682, 1
        %v1099 = vadd.s32 %v683, 1
        %v1100 = vadd.s32 %v684, 1
        %v1101 = vadd.s32 %v685, 1
        %v1102 = vadd.s32 %v686, 1
        %v1103 = vadd.s32 %v687, 1
        %v1104 = vadd.s32 %v688, 1
        %v1105 = vadd.s32 %v689, 1
        %v1106 = vadd.s32 %v690, 1
        %v1107 = vadd.s32 %v691, 1
        %v1108 = vadd.s32 %v692, 1
        %v1109 = vadd.s32 %v693, 1
        %v1110 = vadd.s32 %v694, 1
        %v1111 = vadd.s32 %v695, 1
        %v1112 = vadd.s32 %v696, 1
        %vm1113 = vcmp.ge.s32.totalorder %v1081, 0
        %vm1114 = vcmp.ge.s32.totalorder %v1082, 0
        %vm1115 = vcmp.ge.s32.totalorder %v1083, 0
        %vm1116 = vcmp.ge.s32.totalorder %v1084, 0
        %vm1117 = vcmp.ge.s32.totalorder %v1085, 0
        %vm1118 = vcmp.ge.s32.totalorder %v1086, 0
        %vm1119 = vcmp.ge.s32.totalorder %v1087, 0
        %vm1120 = vcmp.ge.s32.totalorder %v1088, 0
        %vm1121 = vcmp.ge.s32.totalorder %v1089, 0
        %vm1122 = vcmp.ge.s32.totalorder %v1090, 0
        %vm1123 = vcmp.ge.s32.totalorder %v1091, 0
        %vm1124 = vcmp.ge.s32.totalorder %v1092, 0
        %vm1125 = vcmp.ge.s32.totalorder %v1093, 0
        %vm1126 = vcmp.ge.s32.totalorder %v1094, 0
        %vm1127 = vcmp.ge.s32.totalorder %v1095, 0
        %vm1128 = vcmp.ge.s32.totalorder %v1096, 0
        %vm1129 = vcmp.ge.s32.totalorder %v1097, 0
        %vm1130 = vcmp.ge.s32.totalorder %v1098, 0
        %vm1131 = vcmp.ge.s32.totalorder %v1099, 0
        %vm1132 = vcmp.ge.s32.totalorder %v1100, 0
        %vm1133 = vcmp.ge.s32.totalorder %v1101, 0
        %vm1134 = vcmp.ge.s32.totalorder %v1102, 0
        %vm1135 = vcmp.ge.s32.totalorder %v1103, 0
        %vm1136 = vcmp.ge.s32.totalorder %v1104, 0
        %vm1137 = vcmp.ge.s32.totalorder %v1105, 0
        %vm1138 = vcmp.ge.s32.totalorder %v1106, 0
        %vm1139 = vcmp.ge.s32.totalorder %v1107, 0
        %vm1140 = vcmp.ge.s32.totalorder %v1108, 0
        %vm1141 = vcmp.ge.s32.totalorder %v1109, 0
        %vm1142 = vcmp.ge.s32.totalorder %v1110, 0
        %vm1143 = vcmp.ge.s32.totalorder %v1111, 0
        %vm1144 = vcmp.ge.s32.totalorder %v1112, 0
        %vm1145 = vcmp.lt.s32.totalorder %v1081, 16
        %vm1146 = vcmp.lt.s32.totalorder %v1082, 16
        %vm1147 = vcmp.lt.s32.totalorder %v1083, 16
        %vm1148 = vcmp.lt.s32.totalorder %v1084, 16
        %vm1149 = vcmp.lt.s32.totalorder %v1085, 16
        %vm1150 = vcmp.lt.s32.totalorder %v1086, 16
        %vm1151 = vcmp.lt.s32.totalorder %v1087, 16
        %vm1152 = vcmp.lt.s32.totalorder %v1088, 16
        %vm1153 = vcmp.lt.s32.totalorder %v1089, 16
        %vm1154 = vcmp.lt.s32.totalorder %v1090, 16
        %vm1155 = vcmp.lt.s32.totalorder %v1091, 16
        %vm1156 = vcmp.lt.s32.totalorder %v1092, 16
        %vm1157 = vcmp.lt.s32.totalorder %v1093, 16
        %vm1158 = vcmp.lt.s32.totalorder %v1094, 16
        %vm1159 = vcmp.lt.s32.totalorder %v1095, 16
        %vm1160 = vcmp.lt.s32.totalorder %v1096, 16
        %vm1161 = vcmp.lt.s32.totalorder %v1097, 16
        %vm1162 = vcmp.lt.s32.totalorder %v1098, 16
        %vm1163 = vcmp.lt.s32.totalorder %v1099, 16
        %vm1164 = vcmp.lt.s32.totalorder %v1100, 16
        %vm1165 = vcmp.lt.s32.totalorder %v1101, 16
        %vm1166 = vcmp.lt.s32.totalorder %v1102, 16
        %vm1167 = vcmp.lt.s32.totalorder %v1103, 16
        %vm1168 = vcmp.lt.s32.totalorder %v1104, 16
        %vm1169 = vcmp.lt.s32.totalorder %v1105, 16
        %vm1170 = vcmp.lt.s32.totalorder %v1106, 16
        %vm1171 = vcmp.lt.s32.totalorder %v1107, 16
        %vm1172 = vcmp.lt.s32.totalorder %v1108, 16
        %vm1173 = vcmp.lt.s32.totalorder %v1109, 16
        %vm1174 = vcmp.lt.s32.totalorder %v1110, 16
        %vm1175 = vcmp.lt.s32.totalorder %v1111, 16
        %vm1176 = vcmp.lt.s32.totalorder %v1112, 16
        %vm1177 = vmand %vm1113, %vm1145
        %vm1178 = vmand %vm1114, %vm1146
        %vm1179 = vmand %vm1115, %vm1147
        %vm1180 = vmand %vm1116, %vm1148
        %vm1181 = vmand %vm1117, %vm1149
        %vm1182 = vmand %vm1118, %vm1150
        %vm1183 = vmand %vm1119, %vm1151
        %vm1184 = vmand %vm1120, %vm1152
        %vm1185 = vmand %vm1121, %vm1153
        %vm1186 = vmand %vm1122, %vm1154
        %vm1187 = vmand %vm1123, %vm1155
        %vm1188 = vmand %vm1124, %vm1156
        %vm1189 = vmand %vm1125, %vm1157
        %vm1190 = vmand %vm1126, %vm1158
        %vm1191 = vmand %vm1127, %vm1159
        %vm1192 = vmand %vm1128, %vm1160
        %vm1193 = vmand %vm1129, %vm1161
        %vm1194 = vmand %vm1130, %vm1162
        %vm1195 = vmand %vm1131, %vm1163
        %vm1196 = vmand %vm1132, %vm1164
        %vm1197 = vmand %vm1133, %vm1165
        %vm1198 = vmand %vm1134, %vm1166
        %vm1199 = vmand %vm1135, %vm1167
        %vm1200 = vmand %vm1136, %vm1168
        %vm1201 = vmand %vm1137, %vm1169
        %vm1202 = vmand %vm1138, %vm1170
        %vm1203 = vmand %vm1139, %vm1171
        %vm1204 = vmand %vm1140, %vm1172
        %vm1205 = vmand %vm1141, %vm1173
        %vm1206 = vmand %vm1142, %vm1174
        %vm1207 = vmand %vm1143, %vm1175
        %vm1208 = vmand %vm1144, %vm1176
        %v1209 = vadd.s32 %v665, 2
        %v1210 = vadd.s32 %v666, 2
        %v1211 = vadd.s32 %v667, 2
        %v1212 = vadd.s32 %v668, 2
        %v1213 = vadd.s32 %v669, 2
        %v1214 = vadd.s32 %v670, 2
        %v1215 = vadd.s32 %v671, 2
        %v1216 = vadd.s32 %v672, 2
        %v1217 = vadd.s32 %v673, 2
        %v1218 = vadd.s32 %v674, 2
        %v1219 = vadd.s32 %v675, 2
        %v1220 = vadd.s32 %v676, 2
        %v1221 = vadd.s32 %v677, 2
        %v1222 = vadd.s32 %v678, 2
        %v1223 = vadd.s32 %v679, 2
        %v1224 = vadd.s32 %v680, 2
        %v1225 = vadd.s32 %v681, 2
        %v1226 = vadd.s32 %v682, 2
        %v1227 = vadd.s32 %v683, 2
        %v1228 = vadd.s32 %v684, 2
        %v1229 = vadd.s32 %v685, 2
        %v1230 = vadd.s32 %v686, 2
        %v1231 = vadd.s32 %v687, 2
        %v1232 = vadd.s32 %v688, 2
        %v1233 = vadd.s32 %v689, 2
        %v1234 = vadd.s32 %v690, 2
        %v1235 = vadd.s32 %v691, 2
        %v1236 = vadd.s32 %v692, 2
        %v1237 = vadd.s32 %v693, 2
        %v1238 = vadd.s32 %v694, 2
        %v1239 = vadd.s32 %v695, 2
        %v1240 = vadd.s32 %v696, 2
        %vm1241 = vcmp.ge.s32.totalorder %v1209, 0
        %vm1242 = vcmp.ge.s32.totalorder %v1210, 0
        %vm1243 = vcmp.ge.s32.totalorder %v1211, 0
        %vm1244 = vcmp.ge.s32.totalorder %v1212, 0
        %vm1245 = vcmp.ge.s32.totalorder %v1213, 0
        %vm1246 = vcmp.ge.s32.totalorder %v1214, 0
        %vm1247 = vcmp.ge.s32.totalorder %v1215, 0
        %vm1248 = vcmp.ge.s32.totalorder %v1216, 0
        %vm1249 = vcmp.ge.s32.totalorder %v1217, 0
        %vm1250 = vcmp.ge.s32.totalorder %v1218, 0
        %vm1251 = vcmp.ge.s32.totalorder %v1219, 0
        %vm1252 = vcmp.ge.s32.totalorder %v1220, 0
        %vm1253 = vcmp.ge.s32.totalorder %v1221, 0
        %vm1254 = vcmp.ge.s32.totalorder %v1222, 0
        %vm1255 = vcmp.ge.s32.totalorder %v1223, 0
        %vm1256 = vcmp.ge.s32.totalorder %v1224, 0
        %vm1257 = vcmp.ge.s32.totalorder %v1225, 0
        %vm1258 = vcmp.ge.s32.totalorder %v1226, 0
        %vm1259 = vcmp.ge.s32.totalorder %v1227, 0
        %vm1260 = vcmp.ge.s32.totalorder %v1228, 0
        %vm1261 = vcmp.ge.s32.totalorder %v1229, 0
        %vm1262 = vcmp.ge.s32.totalorder %v1230, 0
        %vm1263 = vcmp.ge.s32.totalorder %v1231, 0
        %vm1264 = vcmp.ge.s32.totalorder %v1232, 0
        %vm1265 = vcmp.ge.s32.totalorder %v1233, 0
        %vm1266 = vcmp.ge.s32.totalorder %v1234, 0
        %vm1267 = vcmp.ge.s32.totalorder %v1235, 0
        %vm1268 = vcmp.ge.s32.totalorder %v1236, 0
        %vm1269 = vcmp.ge.s32.totalorder %v1237, 0
        %vm1270 = vcmp.ge.s32.totalorder %v1238, 0
        %vm1271 = vcmp.ge.s32.totalorder %v1239, 0
        %vm1272 = vcmp.ge.s32.totalorder %v1240, 0
        %vm1273 = vcmp.lt.s32.totalorder %v1209, 16
        %vm1274 = vcmp.lt.s32.totalorder %v1210, 16
        %vm1275 = vcmp.lt.s32.totalorder %v1211, 16
        %vm1276 = vcmp.lt.s32.totalorder %v1212, 16
        %vm1277 = vcmp.lt.s32.totalorder %v1213, 16
        %vm1278 = vcmp.lt.s32.totalorder %v1214, 16
        %vm1279 = vcmp.lt.s32.totalorder %v1215, 16
        %vm1280 = vcmp.lt.s32.totalorder %v1216, 16
        %vm1281 = vcmp.lt.s32.totalorder %v1217, 16
        %vm1282 = vcmp.lt.s32.totalorder %v1218, 16
        %vm1283 = vcmp.lt.s32.totalorder %v1219, 16
        %vm1284 = vcmp.lt.s32.totalorder %v1220, 16
        %vm1285 = vcmp.lt.s32.totalorder %v1221, 16
        %vm1286 = vcmp.lt.s32.totalorder %v1222, 16
        %vm1287 = vcmp.lt.s32.totalorder %v1223, 16
        %vm1288 = vcmp.lt.s32.totalorder %v1224, 16
        %vm1289 = vcmp.lt.s32.totalorder %v1225, 16
        %vm1290 = vcmp.lt.s32.totalorder %v1226, 16
        %vm1291 = vcmp.lt.s32.totalorder %v1227, 16
        %vm1292 = vcmp.lt.s32.totalorder %v1228, 16
        %vm1293 = vcmp.lt.s32.totalorder %v1229, 16
        %vm1294 = vcmp.lt.s32.totalorder %v1230, 16
        %vm1295 = vcmp.lt.s32.totalorder %v1231, 16
        %vm1296 = vcmp.lt.s32.totalorder %v1232, 16
        %vm1297 = vcmp.lt.s32.totalorder %v1233, 16
        %vm1298 = vcmp.lt.s32.totalorder %v1234, 16
        %vm1299 = vcmp.lt.s32.totalorder %v1235, 16
        %vm1300 = vcmp.lt.s32.totalorder %v1236, 16
        %vm1301 = vcmp.lt.s32.totalorder %v1237, 16
        %vm1302 = vcmp.lt.s32.totalorder %v1238, 16
        %vm1303 = vcmp.lt.s32.totalorder %v1239, 16
        %vm1304 = vcmp.lt.s32.totalorder %v1240, 16
        %vm1305 = vmand %vm1241, %vm1273
        %vm1306 = vmand %vm1242, %vm1274
        %vm1307 = vmand %vm1243, %vm1275
        %vm1308 = vmand %vm1244, %vm1276
        %vm1309 = vmand %vm1245, %vm1277
        %vm1310 = vmand %vm1246, %vm1278
        %vm1311 = vmand %vm1247, %vm1279
        %vm1312 = vmand %vm1248, %vm1280
        %vm1313 = vmand %vm1249, %vm1281
        %vm1314 = vmand %vm1250, %vm1282
        %vm1315 = vmand %vm1251, %vm1283
        %vm1316 = vmand %vm1252, %vm1284
        %vm1317 = vmand %vm1253, %vm1285
        %vm1318 = vmand %vm1254, %vm1286
        %vm1319 = vmand %vm1255, %vm1287
        %vm1320 = vmand %vm1256, %vm1288
        %vm1321 = vmand %vm1257, %vm1289
        %vm1322 = vmand %vm1258, %vm1290
        %vm1323 = vmand %vm1259, %vm1291
        %vm1324 = vmand %vm1260, %vm1292
        %vm1325 = vmand %vm1261, %vm1293
        %vm1326 = vmand %vm1262, %vm1294
        %vm1327 = vmand %vm1263, %vm1295
        %vm1328 = vmand %vm1264, %vm1296
        %vm1329 = vmand %vm1265, %vm1297
        %vm1330 = vmand %vm1266, %vm1298
        %vm1331 = vmand %vm1267, %vm1299
        %vm1332 = vmand %vm1268, %vm1300
        %vm1333 = vmand %vm1269, %vm1301
        %vm1334 = vmand %vm1270, %vm1302
        %vm1335 = vmand %vm1271, %vm1303
        %vm1336 = vmand %vm1272, %vm1304
        %v1337 = vadd.s32 %v665, 3
        %v1338 = vadd.s32 %v666, 3
        %v1339 = vadd.s32 %v667, 3
        %v1340 = vadd.s32 %v668, 3
        %v1341 = vadd.s32 %v669, 3
        %v1342 = vadd.s32 %v670, 3
        %v1343 = vadd.s32 %v671, 3
        %v1344 = vadd.s32 %v672, 3
        %v1345 = vadd.s32 %v673, 3
        %v1346 = vadd.s32 %v674, 3
        %v1347 = vadd.s32 %v675, 3
        %v1348 = vadd.s32 %v676, 3
        %v1349 = vadd.s32 %v677, 3
        %v1350 = vadd.s32 %v678, 3
        %v1351 = vadd.s32 %v679, 3
        %v1352 = vadd.s32 %v680, 3
        %v1353 = vadd.s32 %v681, 3
        %v1354 = vadd.s32 %v682, 3
        %v1355 = vadd.s32 %v683, 3
        %v1356 = vadd.s32 %v684, 3
        %v1357 = vadd.s32 %v685, 3
        %v1358 = vadd.s32 %v686, 3
        %v1359 = vadd.s32 %v687, 3
        %v1360 = vadd.s32 %v688, 3
        %v1361 = vadd.s32 %v689, 3
        %v1362 = vadd.s32 %v690, 3
        %v1363 = vadd.s32 %v691, 3
        %v1364 = vadd.s32 %v692, 3
        %v1365 = vadd.s32 %v693, 3
        %v1366 = vadd.s32 %v694, 3
        %v1367 = vadd.s32 %v695, 3
        %v1368 = vadd.s32 %v696, 3
        %vm1369 = vcmp.ge.s32.totalorder %v1337, 0
        %vm1370 = vcmp.ge.s32.totalorder %v1338, 0
        %vm1371 = vcmp.ge.s32.totalorder %v1339, 0
        %vm1372 = vcmp.ge.s32.totalorder %v1340, 0
        %vm1373 = vcmp.ge.s32.totalorder %v1341, 0
        %vm1374 = vcmp.ge.s32.totalorder %v1342, 0
        %vm1375 = vcmp.ge.s32.totalorder %v1343, 0
        %vm1376 = vcmp.ge.s32.totalorder %v1344, 0
        %vm1377 = vcmp.ge.s32.totalorder %v1345, 0
        %vm1378 = vcmp.ge.s32.totalorder %v1346, 0
        %vm1379 = vcmp.ge.s32.totalorder %v1347, 0
        %vm1380 = vcmp.ge.s32.totalorder %v1348, 0
        %vm1381 = vcmp.ge.s32.totalorder %v1349, 0
        %vm1382 = vcmp.ge.s32.totalorder %v1350, 0
        %vm1383 = vcmp.ge.s32.totalorder %v1351, 0
        %vm1384 = vcmp.ge.s32.totalorder %v1352, 0
        %vm1385 = vcmp.ge.s32.totalorder %v1353, 0
        %vm1386 = vcmp.ge.s32.totalorder %v1354, 0
        %vm1387 = vcmp.ge.s32.totalorder %v1355, 0
        %vm1388 = vcmp.ge.s32.totalorder %v1356, 0
        %vm1389 = vcmp.ge.s32.totalorder %v1357, 0
        %vm1390 = vcmp.ge.s32.totalorder %v1358, 0
        %vm1391 = vcmp.ge.s32.totalorder %v1359, 0
        %vm1392 = vcmp.ge.s32.totalorder %v1360, 0
        %vm1393 = vcmp.ge.s32.totalorder %v1361, 0
        %vm1394 = vcmp.ge.s32.totalorder %v1362, 0
        %vm1395 = vcmp.ge.s32.totalorder %v1363, 0
        %vm1396 = vcmp.ge.s32.totalorder %v1364, 0
        %vm1397 = vcmp.ge.s32.totalorder %v1365, 0
        %vm1398 = vcmp.ge.s32.totalorder %v1366, 0
        %vm1399 = vcmp.ge.s32.totalorder %v1367, 0
        %vm1400 = vcmp.ge.s32.totalorder %v1368, 0
        %vm1401 = vcmp.lt.s32.totalorder %v1337, 16
        %vm1402 = vcmp.lt.s32.totalorder %v1338, 16
        %vm1403 = vcmp.lt.s32.totalorder %v1339, 16
        %vm1404 = vcmp.lt.s32.totalorder %v1340, 16
        %vm1405 = vcmp.lt.s32.totalorder %v1341, 16
        %vm1406 = vcmp.lt.s32.totalorder %v1342, 16
        %vm1407 = vcmp.lt.s32.totalorder %v1343, 16
        %vm1408 = vcmp.lt.s32.totalorder %v1344, 16
        %vm1409 = vcmp.lt.s32.totalorder %v1345, 16
        %vm1410 = vcmp.lt.s32.totalorder %v1346, 16
        %vm1411 = vcmp.lt.s32.totalorder %v1347, 16
        %vm1412 = vcmp.lt.s32.totalorder %v1348, 16
        %vm1413 = vcmp.lt.s32.totalorder %v1349, 16
        %vm1414 = vcmp.lt.s32.totalorder %v1350, 16
        %vm1415 = vcmp.lt.s32.totalorder %v1351, 16
        %vm1416 = vcmp.lt.s32.totalorder %v1352, 16
        %vm1417 = vcmp.lt.s32.totalorder %v1353, 16
        %vm1418 = vcmp.lt.s32.totalorder %v1354, 16
        %vm1419 = vcmp.lt.s32.totalorder %v1355, 16
        %vm1420 = vcmp.lt.s32.totalorder %v1356, 16
        %vm1421 = vcmp.lt.s32.totalorder %v1357, 16
        %vm1422 = vcmp.lt.s32.totalorder %v1358, 16
        %vm1423 = vcmp.lt.s32.totalorder %v1359, 16
        %vm1424 = vcmp.lt.s32.totalorder %v1360, 16
        %vm1425 = vcmp.lt.s32.totalorder %v1361, 16
        %vm1426 = vcmp.lt.s32.totalorder %v1362, 16
        %vm1427 = vcmp.lt.s32.totalorder %v1363, 16
        %vm1428 = vcmp.lt.s32.totalorder %v1364, 16
        %vm1429 = vcmp.lt.s32.totalorder %v1365, 16
        %vm1430 = vcmp.lt.s32.totalorder %v1366, 16
        %vm1431 = vcmp.lt.s32.totalorder %v1367, 16
        %vm1432 = vcmp.lt.s32.totalorder %v1368, 16
        %vm1433 = vmand %vm1369, %vm1401
        %vm1434 = vmand %vm1370, %vm1402
        %vm1435 = vmand %vm1371, %vm1403
        %vm1436 = vmand %vm1372, %vm1404
        %vm1437 = vmand %vm1373, %vm1405
        %vm1438 = vmand %vm1374, %vm1406
        %vm1439 = vmand %vm1375, %vm1407
        %vm1440 = vmand %vm1376, %vm1408
        %vm1441 = vmand %vm1377, %vm1409
        %vm1442 = vmand %vm1378, %vm1410
        %vm1443 = vmand %vm1379, %vm1411
        %vm1444 = vmand %vm1380, %vm1412
        %vm1445 = vmand %vm1381, %vm1413
        %vm1446 = vmand %vm1382, %vm1414
        %vm1447 = vmand %vm1383, %vm1415
        %vm1448 = vmand %vm1384, %vm1416
        %vm1449 = vmand %vm1385, %vm1417
        %vm1450 = vmand %vm1386, %vm1418
        %vm1451 = vmand %vm1387, %vm1419
        %vm1452 = vmand %vm1388, %vm1420
        %vm1453 = vmand %vm1389, %vm1421
        %vm1454 = vmand %vm1390, %vm1422
        %vm1455 = vmand %vm1391, %vm1423
        %vm1456 = vmand %vm1392, %vm1424
        %vm1457 = vmand %vm1393, %vm1425
        %vm1458 = vmand %vm1394, %vm1426
        %vm1459 = vmand %vm1395, %vm1427
        %vm1460 = vmand %vm1396, %vm1428
        %vm1461 = vmand %vm1397, %vm1429
        %vm1462 = vmand %vm1398, %vm1430
        %vm1463 = vmand %vm1399, %vm1431
        %vm1464 = vmand %vm1400, %vm1432
        %v1465 = vld [vmem:[%s277] sm:$0xff]
        %v1466 = vld [vmem:[%s277 + $0x8] sm:$0xff]
        %v1467 = vld [vmem:[%s277 + $0x10] sm:$0xff]
        %v1468 = vld [vmem:[%s277 + $0x18] sm:$0xff]
        %v1469 = vld [vmem:[%s277 + $0x20] sm:$0xff]
        %v1470 = vld [vmem:[%s277 + $0x28] sm:$0xff]
        %v1471 = vld [vmem:[%s277 + $0x30] sm:$0xff]
        %v1472 = vld [vmem:[%s277 + $0x38] sm:$0xff]
        %v1473 = vld [vmem:[%s277 + $0x40] sm:$0xff]
        %v1474 = vld [vmem:[%s277 + $0x48] sm:$0xff]
        %v1475 = vld [vmem:[%s277 + $0x50] sm:$0xff]
        %v1476 = vld [vmem:[%s277 + $0x58] sm:$0xff]
        %v1477 = vld [vmem:[%s277 + $0x60] sm:$0xff]
        %v1478 = vld [vmem:[%s277 + $0x68] sm:$0xff]
        %v1479 = vld [vmem:[%s277 + $0x70] sm:$0xff]
        %v1480 = vld [vmem:[%s277 + $0x78] sm:$0xff]
        %v1481 = vld [vmem:[%s277 + $0x80] sm:$0xff]
        %v1482 = vld [vmem:[%s277 + $0x88] sm:$0xff]
        %v1483 = vld [vmem:[%s277 + $0x90] sm:$0xff]
        %v1484 = vld [vmem:[%s277 + $0x98] sm:$0xff]
        %v1485 = vld [vmem:[%s277 + $0xa0] sm:$0xff]
        %v1486 = vld [vmem:[%s277 + $0xa8] sm:$0xff]
        %v1487 = vld [vmem:[%s277 + $0xb0] sm:$0xff]
        %v1488 = vld [vmem:[%s277 + $0xb8] sm:$0xff]
        %v1489 = vld [vmem:[%s277 + $0xc0] sm:$0xff]
        %v1490 = vld [vmem:[%s277 + $0xc8] sm:$0xff]
        %v1491 = vld [vmem:[%s277 + $0xd0] sm:$0xff]
        %v1492 = vld [vmem:[%s277 + $0xd8] sm:$0xff]
        %v1493 = vld [vmem:[%s277 + $0xe0] sm:$0xff]
        %v1494 = vld [vmem:[%s277 + $0xe8] sm:$0xff]
        %v1495 = vld [vmem:[%s277 + $0xf0] sm:$0xff]
        %v1496 = vld [vmem:[%s277 + $0xf8] sm:$0xff]
        %v1497 = vrot.slane %v1465, 5
        %v1498 = vrot.slane %v1466, 5
        %v1499 = vrot.slane %v1467, 5
        %v1500 = vrot.slane %v1468, 5
        %v1501 = vrot.slane %v1469, 5
        %v1502 = vrot.slane %v1470, 5
        %v1503 = vrot.slane %v1471, 5
        %v1504 = vrot.slane %v1472, 5
        %v1505 = vrot.slane %v1473, 5
        %v1506 = vrot.slane %v1474, 5
        %v1507 = vrot.slane %v1475, 5
        %v1508 = vrot.slane %v1476, 5
        %v1509 = vrot.slane %v1477, 5
        %v1510 = vrot.slane %v1478, 5
        %v1511 = vrot.slane %v1479, 5
        %v1512 = vrot.slane %v1480, 5
        %v1513 = vrot.slane %v1481, 5
        %v1514 = vrot.slane %v1482, 5
        %v1515 = vrot.slane %v1483, 5
        %v1516 = vrot.slane %v1484, 5
        %v1517 = vrot.slane %v1485, 5
        %v1518 = vrot.slane %v1486, 5
        %v1519 = vrot.slane %v1487, 5
        %v1520 = vrot.slane %v1488, 5
        %v1521 = vrot.slane %v1489, 5
        %v1522 = vrot.slane %v1490, 5
        %v1523 = vrot.slane %v1491, 5
        %v1524 = vrot.slane %v1492, 5
        %v1525 = vrot.slane %v1493, 5
        %v1526 = vrot.slane %v1494, 5
        %v1527 = vrot.slane %v1495, 5
        %v1528 = vrot.slane %v1496, 5
        %vm1529 = vcmp.lt.s32.totalorder %v281, 3
        %v1530 = vsel %vm1529, %v1527, %v1528
        %v1531 = vsel %vm1529, %v1526, %v1527
        %v1532 = vsel %vm1529, %v1525, %v1526
        %v1533 = vsel %vm1529, %v1524, %v1525
        %v1534 = vsel %vm1529, %v1523, %v1524
        %v1535 = vsel %vm1529, %v1522, %v1523
        %v1536 = vsel %vm1529, %v1521, %v1522
        %v1537 = vsel %vm1529, %v1520, %v1521
        %v1538 = vsel %vm1529, %v1519, %v1520
        %v1539 = vsel %vm1529, %v1518, %v1519
        %v1540 = vsel %vm1529, %v1517, %v1518
        %v1541 = vsel %vm1529, %v1516, %v1517
        %v1542 = vsel %vm1529, %v1515, %v1516
        %v1543 = vsel %vm1529, %v1514, %v1515
        %v1544 = vsel %vm1529, %v1513, %v1514
        %v1545 = vsel %vm1529, %v1512, %v1513
        %v1546 = vsel %vm1529, %v1511, %v1512
        %v1547 = vsel %vm1529, %v1510, %v1511
        %v1548 = vsel %vm1529, %v1509, %v1510
        %v1549 = vsel %vm1529, %v1508, %v1509
        %v1550 = vsel %vm1529, %v1507, %v1508
        %v1551 = vsel %vm1529, %v1506, %v1507
        %v1552 = vsel %vm1529, %v1505, %v1506
        %v1553 = vsel %vm1529, %v1504, %v1505
        %v1554 = vsel %vm1529, %v1503, %v1504
        %v1555 = vsel %vm1529, %v1502, %v1503
        %v1556 = vsel %vm1529, %v1501, %v1502
        %v1557 = vsel %vm1529, %v1500, %v1501
        %v1558 = vsel %vm1529, %v1499, %v1500
        %v1559 = vsel %vm1529, %v1498, %v1499
        %v1560 = vsel %vm1529, %v1497, %v1498
        %v1561 = vsel %vm1529, %v1528, %v1497
        %v1562 = vsel %vm793, 1, 0
        %v1563 = vsel %vm794, 1, 0
        %v1564 = vsel %vm795, 1, 0
        %v1565 = vsel %vm796, 1, 0
        %v1566 = vsel %vm797, 1, 0
        %v1567 = vsel %vm798, 1, 0
        %v1568 = vsel %vm799, 1, 0
        %v1569 = vsel %vm800, 1, 0
        %v1570 = vsel %vm801, 1, 0
        %v1571 = vsel %vm802, 1, 0
        %v1572 = vsel %vm803, 1, 0
        %v1573 = vsel %vm804, 1, 0
        %v1574 = vsel %vm805, 1, 0
        %v1575 = vsel %vm806, 1, 0
        %v1576 = vsel %vm807, 1, 0
        %v1577 = vsel %vm808, 1, 0
        %v1578 = vsel %vm809, 1, 0
        %v1579 = vsel %vm810, 1, 0
        %v1580 = vsel %vm811, 1, 0
        %v1581 = vsel %vm812, 1, 0
        %v1582 = vsel %vm813, 1, 0
        %v1583 = vsel %vm814, 1, 0
        %v1584 = vsel %vm815, 1, 0
        %v1585 = vsel %vm816, 1, 0
        %v1586 = vsel %vm817, 1, 0
        %v1587 = vsel %vm818, 1, 0
        %v1588 = vsel %vm819, 1, 0
        %v1589 = vsel %vm820, 1, 0
        %v1590 = vsel %vm821, 1, 0
        %v1591 = vsel %vm822, 1, 0
        %v1592 = vsel %vm823, 1, 0
        %v1593 = vsel %vm824, 1, 0
        %vm1594 = vcmp.eq.s32.totalorder %v1562, 1
        %vm1595 = vcmp.eq.s32.totalorder %v1563, 1
        %vm1596 = vcmp.eq.s32.totalorder %v1564, 1
        %vm1597 = vcmp.eq.s32.totalorder %v1565, 1
        %vm1598 = vcmp.eq.s32.totalorder %v1566, 1
        %vm1599 = vcmp.eq.s32.totalorder %v1567, 1
        %vm1600 = vcmp.eq.s32.totalorder %v1568, 1
        %vm1601 = vcmp.eq.s32.totalorder %v1569, 1
        %vm1602 = vcmp.eq.s32.totalorder %v1570, 1
        %vm1603 = vcmp.eq.s32.totalorder %v1571, 1
        %vm1604 = vcmp.eq.s32.totalorder %v1572, 1
        %vm1605 = vcmp.eq.s32.totalorder %v1573, 1
        %vm1606 = vcmp.eq.s32.totalorder %v1574, 1
        %vm1607 = vcmp.eq.s32.totalorder %v1575, 1
        %vm1608 = vcmp.eq.s32.totalorder %v1576, 1
        %vm1609 = vcmp.eq.s32.totalorder %v1577, 1
        %vm1610 = vcmp.eq.s32.totalorder %v1578, 1
        %vm1611 = vcmp.eq.s32.totalorder %v1579, 1
        %vm1612 = vcmp.eq.s32.totalorder %v1580, 1
        %vm1613 = vcmp.eq.s32.totalorder %v1581, 1
        %vm1614 = vcmp.eq.s32.totalorder %v1582, 1
        %vm1615 = vcmp.eq.s32.totalorder %v1583, 1
        %vm1616 = vcmp.eq.s32.totalorder %v1584, 1
        %vm1617 = vcmp.eq.s32.totalorder %v1585, 1
        %vm1618 = vcmp.eq.s32.totalorder %v1586, 1
        %vm1619 = vcmp.eq.s32.totalorder %v1587, 1
        %vm1620 = vcmp.eq.s32.totalorder %v1588, 1
        %vm1621 = vcmp.eq.s32.totalorder %v1589, 1
        %vm1622 = vcmp.eq.s32.totalorder %v1590, 1
        %vm1623 = vcmp.eq.s32.totalorder %v1591, 1
        %vm1624 = vcmp.eq.s32.totalorder %v1592, 1
        %vm1625 = vcmp.eq.s32.totalorder %v1593, 1
        %v1626 = vsel %vm1594, %v1561, 0.0
        %v1627 = vsel %vm1595, %v1560, 0.0
        %v1628 = vsel %vm1596, %v1559, 0.0
        %v1629 = vsel %vm1597, %v1558, 0.0
        %v1630 = vsel %vm1598, %v1557, 0.0
        %v1631 = vsel %vm1599, %v1556, 0.0
        %v1632 = vsel %vm1600, %v1555, 0.0
        %v1633 = vsel %vm1601, %v1554, 0.0
        %v1634 = vsel %vm1602, %v1553, 0.0
        %v1635 = vsel %vm1603, %v1552, 0.0
        %v1636 = vsel %vm1604, %v1551, 0.0
        %v1637 = vsel %vm1605, %v1550, 0.0
        %v1638 = vsel %vm1606, %v1549, 0.0
        %v1639 = vsel %vm1607, %v1548, 0.0
        %v1640 = vsel %vm1608, %v1547, 0.0
        %v1641 = vsel %vm1609, %v1546, 0.0
        %v1642 = vsel %vm1610, %v1545, 0.0
        %v1643 = vsel %vm1611, %v1544, 0.0
        %v1644 = vsel %vm1612, %v1543, 0.0
        %v1645 = vsel %vm1613, %v1542, 0.0
        %v1646 = vsel %vm1614, %v1541, 0.0
        %v1647 = vsel %vm1615, %v1540, 0.0
        %v1648 = vsel %vm1616, %v1539, 0.0
        %v1649 = vsel %vm1617, %v1538, 0.0
        %v1650 = vsel %vm1618, %v1537, 0.0
        %v1651 = vsel %vm1619, %v1536, 0.0
        %v1652 = vsel %vm1620, %v1535, 0.0
        %v1653 = vsel %vm1621, %v1534, 0.0
        %v1654 = vsel %vm1622, %v1533, 0.0
        %v1655 = vsel %vm1623, %v1532, 0.0
        %v1656 = vsel %vm1624, %v1531, 0.0
        %v1657 = vsel %vm1625, %v1530, 0.0
        %v1658 = vrot.slane %v1465, 6
        %v1659 = vrot.slane %v1466, 6
        %v1660 = vrot.slane %v1467, 6
        %v1661 = vrot.slane %v1468, 6
        %v1662 = vrot.slane %v1469, 6
        %v1663 = vrot.slane %v1470, 6
        %v1664 = vrot.slane %v1471, 6
        %v1665 = vrot.slane %v1472, 6
        %v1666 = vrot.slane %v1473, 6
        %v1667 = vrot.slane %v1474, 6
        %v1668 = vrot.slane %v1475, 6
        %v1669 = vrot.slane %v1476, 6
        %v1670 = vrot.slane %v1477, 6
        %v1671 = vrot.slane %v1478, 6
        %v1672 = vrot.slane %v1479, 6
        %v1673 = vrot.slane %v1480, 6
        %v1674 = vrot.slane %v1481, 6
        %v1675 = vrot.slane %v1482, 6
        %v1676 = vrot.slane %v1483, 6
        %v1677 = vrot.slane %v1484, 6
        %v1678 = vrot.slane %v1485, 6
        %v1679 = vrot.slane %v1486, 6
        %v1680 = vrot.slane %v1487, 6
        %v1681 = vrot.slane %v1488, 6
        %v1682 = vrot.slane %v1489, 6
        %v1683 = vrot.slane %v1490, 6
        %v1684 = vrot.slane %v1491, 6
        %v1685 = vrot.slane %v1492, 6
        %v1686 = vrot.slane %v1493, 6
        %v1687 = vrot.slane %v1494, 6
        %v1688 = vrot.slane %v1495, 6
        %v1689 = vrot.slane %v1496, 6
        %vm1690 = vcmp.lt.s32.totalorder %v281, 2
        %v1691 = vsel %vm1690, %v1688, %v1689
        %v1692 = vsel %vm1690, %v1687, %v1688
        %v1693 = vsel %vm1690, %v1686, %v1687
        %v1694 = vsel %vm1690, %v1685, %v1686
        %v1695 = vsel %vm1690, %v1684, %v1685
        %v1696 = vsel %vm1690, %v1683, %v1684
        %v1697 = vsel %vm1690, %v1682, %v1683
        %v1698 = vsel %vm1690, %v1681, %v1682
        %v1699 = vsel %vm1690, %v1680, %v1681
        %v1700 = vsel %vm1690, %v1679, %v1680
        %v1701 = vsel %vm1690, %v1678, %v1679
        %v1702 = vsel %vm1690, %v1677, %v1678
        %v1703 = vsel %vm1690, %v1676, %v1677
        %v1704 = vsel %vm1690, %v1675, %v1676
        %v1705 = vsel %vm1690, %v1674, %v1675
        %v1706 = vsel %vm1690, %v1673, %v1674
        %v1707 = vsel %vm1690, %v1672, %v1673
        %v1708 = vsel %vm1690, %v1671, %v1672
        %v1709 = vsel %vm1690, %v1670, %v1671
        %v1710 = vsel %vm1690, %v1669, %v1670
        %v1711 = vsel %vm1690, %v1668, %v1669
        %v1712 = vsel %vm1690, %v1667, %v1668
        %v1713 = vsel %vm1690, %v1666, %v1667
        %v1714 = vsel %vm1690, %v1665, %v1666
        %v1715 = vsel %vm1690, %v1664, %v1665
        %v1716 = vsel %vm1690, %v1663, %v1664
        %v1717 = vsel %vm1690, %v1662, %v1663
        %v1718 = vsel %vm1690, %v1661, %v1662
        %v1719 = vsel %vm1690, %v1660, %v1661
        %v1720 = vsel %vm1690, %v1659, %v1660
        %v1721 = vsel %vm1690, %v1658, %v1659
        %v1722 = vsel %vm1690, %v1689, %v1658
        %v1723 = vsel %vm921, 1, 0
        %v1724 = vsel %vm922, 1, 0
        %v1725 = vsel %vm923, 1, 0
        %v1726 = vsel %vm924, 1, 0
        %v1727 = vsel %vm925, 1, 0
        %v1728 = vsel %vm926, 1, 0
        %v1729 = vsel %vm927, 1, 0
        %v1730 = vsel %vm928, 1, 0
        %v1731 = vsel %vm929, 1, 0
        %v1732 = vsel %vm930, 1, 0
        %v1733 = vsel %vm931, 1, 0
        %v1734 = vsel %vm932, 1, 0
        %v1735 = vsel %vm933, 1, 0
        %v1736 = vsel %vm934, 1, 0
        %v1737 = vsel %vm935, 1, 0
        %v1738 = vsel %vm936, 1, 0
        %v1739 = vsel %vm937, 1, 0
        %v1740 = vsel %vm938, 1, 0
        %v1741 = vsel %vm939, 1, 0
        %v1742 = vsel %vm940, 1, 0
        %v1743 = vsel %vm941, 1, 0
        %v1744 = vsel %vm942, 1, 0
        %v1745 = vsel %vm943, 1, 0
        %v1746 = vsel %vm944, 1, 0
        %v1747 = vsel %vm945, 1, 0
        %v1748 = vsel %vm946, 1, 0
        %v1749 = vsel %vm947, 1, 0
        %v1750 = vsel %vm948, 1, 0
        %v1751 = vsel %vm949, 1, 0
        %v1752 = vsel %vm950, 1, 0
        %v1753 = vsel %vm951, 1, 0
        %v1754 = vsel %vm952, 1, 0
        %vm1755 = vcmp.eq.s32.totalorder %v1723, 1
        %vm1756 = vcmp.eq.s32.totalorder %v1724, 1
        %vm1757 = vcmp.eq.s32.totalorder %v1725, 1
        %vm1758 = vcmp.eq.s32.totalorder %v1726, 1
        %vm1759 = vcmp.eq.s32.totalorder %v1727, 1
        %vm1760 = vcmp.eq.s32.totalorder %v1728, 1
        %vm1761 = vcmp.eq.s32.totalorder %v1729, 1
        %vm1762 = vcmp.eq.s32.totalorder %v1730, 1
        %vm1763 = vcmp.eq.s32.totalorder %v1731, 1
        %vm1764 = vcmp.eq.s32.totalorder %v1732, 1
        %vm1765 = vcmp.eq.s32.totalorder %v1733, 1
        %vm1766 = vcmp.eq.s32.totalorder %v1734, 1
        %vm1767 = vcmp.eq.s32.totalorder %v1735, 1
        %vm1768 = vcmp.eq.s32.totalorder %v1736, 1
        %vm1769 = vcmp.eq.s32.totalorder %v1737, 1
        %vm1770 = vcmp.eq.s32.totalorder %v1738, 1
        %vm1771 = vcmp.eq.s32.totalorder %v1739, 1
        %vm1772 = vcmp.eq.s32.totalorder %v1740, 1
        %vm1773 = vcmp.eq.s32.totalorder %v1741, 1
        %vm1774 = vcmp.eq.s32.totalorder %v1742, 1
        %vm1775 = vcmp.eq.s32.totalorder %v1743, 1
        %vm1776 = vcmp.eq.s32.totalorder %v1744, 1
        %vm1777 = vcmp.eq.s32.totalorder %v1745, 1
        %vm1778 = vcmp.eq.s32.totalorder %v1746, 1
        %vm1779 = vcmp.eq.s32.totalorder %v1747, 1
        %vm1780 = vcmp.eq.s32.totalorder %v1748, 1
        %vm1781 = vcmp.eq.s32.totalorder %v1749, 1
        %vm1782 = vcmp.eq.s32.totalorder %v1750, 1
        %vm1783 = vcmp.eq.s32.totalorder %v1751, 1
        %vm1784 = vcmp.eq.s32.totalorder %v1752, 1
        %vm1785 = vcmp.eq.s32.totalorder %v1753, 1
        %vm1786 = vcmp.eq.s32.totalorder %v1754, 1
        %v1787 = vsel %vm1755, %v1722, 0.0
        %v1788 = vsel %vm1756, %v1721, 0.0
        %v1789 = vsel %vm1757, %v1720, 0.0
        %v1790 = vsel %vm1758, %v1719, 0.0
        %v1791 = vsel %vm1759, %v1718, 0.0
        %v1792 = vsel %vm1760, %v1717, 0.0
        %v1793 = vsel %vm1761, %v1716, 0.0
        %v1794 = vsel %vm1762, %v1715, 0.0
        %v1795 = vsel %vm1763, %v1714, 0.0
        %v1796 = vsel %vm1764, %v1713, 0.0
        %v1797 = vsel %vm1765, %v1712, 0.0
        %v1798 = vsel %vm1766, %v1711, 0.0
        %v1799 = vsel %vm1767, %v1710, 0.0
        %v1800 = vsel %vm1768, %v1709, 0.0
        %v1801 = vsel %vm1769, %v1708, 0.0
        %v1802 = vsel %vm1770, %v1707, 0.0
        %v1803 = vsel %vm1771, %v1706, 0.0
        %v1804 = vsel %vm1772, %v1705, 0.0
        %v1805 = vsel %vm1773, %v1704, 0.0
        %v1806 = vsel %vm1774, %v1703, 0.0
        %v1807 = vsel %vm1775, %v1702, 0.0
        %v1808 = vsel %vm1776, %v1701, 0.0
        %v1809 = vsel %vm1777, %v1700, 0.0
        %v1810 = vsel %vm1778, %v1699, 0.0
        %v1811 = vsel %vm1779, %v1698, 0.0
        %v1812 = vsel %vm1780, %v1697, 0.0
        %v1813 = vsel %vm1781, %v1696, 0.0
        %v1814 = vsel %vm1782, %v1695, 0.0
        %v1815 = vsel %vm1783, %v1694, 0.0
        %v1816 = vsel %vm1784, %v1693, 0.0
        %v1817 = vsel %vm1785, %v1692, 0.0
        %v1818 = vsel %vm1786, %v1691, 0.0
        %v1819 = vrot.slane %v1465, 7
        %v1820 = vrot.slane %v1466, 7
        %v1821 = vrot.slane %v1467, 7
        %v1822 = vrot.slane %v1468, 7
        %v1823 = vrot.slane %v1469, 7
        %v1824 = vrot.slane %v1470, 7
        %v1825 = vrot.slane %v1471, 7
        %v1826 = vrot.slane %v1472, 7
        %v1827 = vrot.slane %v1473, 7
        %v1828 = vrot.slane %v1474, 7
        %v1829 = vrot.slane %v1475, 7
        %v1830 = vrot.slane %v1476, 7
        %v1831 = vrot.slane %v1477, 7
        %v1832 = vrot.slane %v1478, 7
        %v1833 = vrot.slane %v1479, 7
        %v1834 = vrot.slane %v1480, 7
        %v1835 = vrot.slane %v1481, 7
        %v1836 = vrot.slane %v1482, 7
        %v1837 = vrot.slane %v1483, 7
        %v1838 = vrot.slane %v1484, 7
        %v1839 = vrot.slane %v1485, 7
        %v1840 = vrot.slane %v1486, 7
        %v1841 = vrot.slane %v1487, 7
        %v1842 = vrot.slane %v1488, 7
        %v1843 = vrot.slane %v1489, 7
        %v1844 = vrot.slane %v1490, 7
        %v1845 = vrot.slane %v1491, 7
        %v1846 = vrot.slane %v1492, 7
        %v1847 = vrot.slane %v1493, 7
        %v1848 = vrot.slane %v1494, 7
        %v1849 = vrot.slane %v1495, 7
        %v1850 = vrot.slane %v1496, 7
        %vm1851 = vcmp.lt.s32.totalorder %v281, 1
        %v1852 = vsel %vm1851, %v1849, %v1850
        %v1853 = vsel %vm1851, %v1848, %v1849
        %v1854 = vsel %vm1851, %v1847, %v1848
        %v1855 = vsel %vm1851, %v1846, %v1847
        %v1856 = vsel %vm1851, %v1845, %v1846
        %v1857 = vsel %vm1851, %v1844, %v1845
        %v1858 = vsel %vm1851, %v1843, %v1844
        %v1859 = vsel %vm1851, %v1842, %v1843
        %v1860 = vsel %vm1851, %v1841, %v1842
        %v1861 = vsel %vm1851, %v1840, %v1841
        %v1862 = vsel %vm1851, %v1839, %v1840
        %v1863 = vsel %vm1851, %v1838, %v1839
        %v1864 = vsel %vm1851, %v1837, %v1838
        %v1865 = vsel %vm1851, %v1836, %v1837
        %v1866 = vsel %vm1851, %v1835, %v1836
        %v1867 = vsel %vm1851, %v1834, %v1835
        %v1868 = vsel %vm1851, %v1833, %v1834
        %v1869 = vsel %vm1851, %v1832, %v1833
        %v1870 = vsel %vm1851, %v1831, %v1832
        %v1871 = vsel %vm1851, %v1830, %v1831
        %v1872 = vsel %vm1851, %v1829, %v1830
        %v1873 = vsel %vm1851, %v1828, %v1829
        %v1874 = vsel %vm1851, %v1827, %v1828
        %v1875 = vsel %vm1851, %v1826, %v1827
        %v1876 = vsel %vm1851, %v1825, %v1826
        %v1877 = vsel %vm1851, %v1824, %v1825
        %v1878 = vsel %vm1851, %v1823, %v1824
        %v1879 = vsel %vm1851, %v1822, %v1823
        %v1880 = vsel %vm1851, %v1821, %v1822
        %v1881 = vsel %vm1851, %v1820, %v1821
        %v1882 = vsel %vm1851, %v1819, %v1820
        %v1883 = vsel %vm1851, %v1850, %v1819
        %v1884 = vsel %vm1049, 1, 0
        %v1885 = vsel %vm1050, 1, 0
        %v1886 = vsel %vm1051, 1, 0
        %v1887 = vsel %vm1052, 1, 0
        %v1888 = vsel %vm1053, 1, 0
        %v1889 = vsel %vm1054, 1, 0
        %v1890 = vsel %vm1055, 1, 0
        %v1891 = vsel %vm1056, 1, 0
        %v1892 = vsel %vm1057, 1, 0
        %v1893 = vsel %vm1058, 1, 0
        %v1894 = vsel %vm1059, 1, 0
        %v1895 = vsel %vm1060, 1, 0
        %v1896 = vsel %vm1061, 1, 0
        %v1897 = vsel %vm1062, 1, 0
        %v1898 = vsel %vm1063, 1, 0
        %v1899 = vsel %vm1064, 1, 0
        %v1900 = vsel %vm1065, 1, 0
        %v1901 = vsel %vm1066, 1, 0
        %v1902 = vsel %vm1067, 1, 0
        %v1903 = vsel %vm1068, 1, 0
        %v1904 = vsel %vm1069, 1, 0
        %v1905 = vsel %vm1070, 1, 0
        %v1906 = vsel %vm1071, 1, 0
        %v1907 = vsel %vm1072, 1, 0
        %v1908 = vsel %vm1073, 1, 0
        %v1909 = vsel %vm1074, 1, 0
        %v1910 = vsel %vm1075, 1, 0
        %v1911 = vsel %vm1076, 1, 0
        %v1912 = vsel %vm1077, 1, 0
        %v1913 = vsel %vm1078, 1, 0
        %v1914 = vsel %vm1079, 1, 0
        %v1915 = vsel %vm1080, 1, 0
        %vm1916 = vcmp.eq.s32.totalorder %v1884, 1
        %vm1917 = vcmp.eq.s32.totalorder %v1885, 1
        %vm1918 = vcmp.eq.s32.totalorder %v1886, 1
        %vm1919 = vcmp.eq.s32.totalorder %v1887, 1
        %vm1920 = vcmp.eq.s32.totalorder %v1888, 1
        %vm1921 = vcmp.eq.s32.totalorder %v1889, 1
        %vm1922 = vcmp.eq.s32.totalorder %v1890, 1
        %vm1923 = vcmp.eq.s32.totalorder %v1891, 1
        %vm1924 = vcmp.eq.s32.totalorder %v1892, 1
        %vm1925 = vcmp.eq.s32.totalorder %v1893, 1
        %vm1926 = vcmp.eq.s32.totalorder %v1894, 1
        %vm1927 = vcmp.eq.s32.totalorder %v1895, 1
        %vm1928 = vcmp.eq.s32.totalorder %v1896, 1
        %vm1929 = vcmp.eq.s32.totalorder %v1897, 1
        %vm1930 = vcmp.eq.s32.totalorder %v1898, 1
        %vm1931 = vcmp.eq.s32.totalorder %v1899, 1
        %vm1932 = vcmp.eq.s32.totalorder %v1900, 1
        %vm1933 = vcmp.eq.s32.totalorder %v1901, 1
        %vm1934 = vcmp.eq.s32.totalorder %v1902, 1
        %vm1935 = vcmp.eq.s32.totalorder %v1903, 1
        %vm1936 = vcmp.eq.s32.totalorder %v1904, 1
        %vm1937 = vcmp.eq.s32.totalorder %v1905, 1
        %vm1938 = vcmp.eq.s32.totalorder %v1906, 1
        %vm1939 = vcmp.eq.s32.totalorder %v1907, 1
        %vm1940 = vcmp.eq.s32.totalorder %v1908, 1
        %vm1941 = vcmp.eq.s32.totalorder %v1909, 1
        %vm1942 = vcmp.eq.s32.totalorder %v1910, 1
        %vm1943 = vcmp.eq.s32.totalorder %v1911, 1
        %vm1944 = vcmp.eq.s32.totalorder %v1912, 1
        %vm1945 = vcmp.eq.s32.totalorder %v1913, 1
        %vm1946 = vcmp.eq.s32.totalorder %v1914, 1
        %vm1947 = vcmp.eq.s32.totalorder %v1915, 1
        %v1948 = vsel %vm1916, %v1883, 0.0
        %v1949 = vsel %vm1917, %v1882, 0.0
        %v1950 = vsel %vm1918, %v1881, 0.0
        %v1951 = vsel %vm1919, %v1880, 0.0
        %v1952 = vsel %vm1920, %v1879, 0.0
        %v1953 = vsel %vm1921, %v1878, 0.0
        %v1954 = vsel %vm1922, %v1877, 0.0
        %v1955 = vsel %vm1923, %v1876, 0.0
        %v1956 = vsel %vm1924, %v1875, 0.0
        %v1957 = vsel %vm1925, %v1874, 0.0
        %v1958 = vsel %vm1926, %v1873, 0.0
        %v1959 = vsel %vm1927, %v1872, 0.0
        %v1960 = vsel %vm1928, %v1871, 0.0
        %v1961 = vsel %vm1929, %v1870, 0.0
        %v1962 = vsel %vm1930, %v1869, 0.0
        %v1963 = vsel %vm1931, %v1868, 0.0
        %v1964 = vsel %vm1932, %v1867, 0.0
        %v1965 = vsel %vm1933, %v1866, 0.0
        %v1966 = vsel %vm1934, %v1865, 0.0
        %v1967 = vsel %vm1935, %v1864, 0.0
        %v1968 = vsel %vm1936, %v1863, 0.0
        %v1969 = vsel %vm1937, %v1862, 0.0
        %v1970 = vsel %vm1938, %v1861, 0.0
        %v1971 = vsel %vm1939, %v1860, 0.0
        %v1972 = vsel %vm1940, %v1859, 0.0
        %v1973 = vsel %vm1941, %v1858, 0.0
        %v1974 = vsel %vm1942, %v1857, 0.0
        %v1975 = vsel %vm1943, %v1856, 0.0
        %v1976 = vsel %vm1944, %v1855, 0.0
        %v1977 = vsel %vm1945, %v1854, 0.0
        %v1978 = vsel %vm1946, %v1853, 0.0
        %v1979 = vsel %vm1947, %v1852, 0.0
        %v1980 = vrot.slane %v1465, 1
        %v1981 = vrot.slane %v1466, 1
        %v1982 = vrot.slane %v1467, 1
        %v1983 = vrot.slane %v1468, 1
        %v1984 = vrot.slane %v1469, 1
        %v1985 = vrot.slane %v1470, 1
        %v1986 = vrot.slane %v1471, 1
        %v1987 = vrot.slane %v1472, 1
        %v1988 = vrot.slane %v1473, 1
        %v1989 = vrot.slane %v1474, 1
        %v1990 = vrot.slane %v1475, 1
        %v1991 = vrot.slane %v1476, 1
        %v1992 = vrot.slane %v1477, 1
        %v1993 = vrot.slane %v1478, 1
        %v1994 = vrot.slane %v1479, 1
        %v1995 = vrot.slane %v1480, 1
        %v1996 = vrot.slane %v1481, 1
        %v1997 = vrot.slane %v1482, 1
        %v1998 = vrot.slane %v1483, 1
        %v1999 = vrot.slane %v1484, 1
        %v2000 = vrot.slane %v1485, 1
        %v2001 = vrot.slane %v1486, 1
        %v2002 = vrot.slane %v1487, 1
        %v2003 = vrot.slane %v1488, 1
        %v2004 = vrot.slane %v1489, 1
        %v2005 = vrot.slane %v1490, 1
        %v2006 = vrot.slane %v1491, 1
        %v2007 = vrot.slane %v1492, 1
        %v2008 = vrot.slane %v1493, 1
        %v2009 = vrot.slane %v1494, 1
        %v2010 = vrot.slane %v1495, 1
        %v2011 = vrot.slane %v1496, 1
        %vm2012 = vcmp.lt.s32.totalorder %v281, 7
        %v2013 = vsel %vm2012, %v2010, %v2011
        %v2014 = vsel %vm2012, %v2009, %v2010
        %v2015 = vsel %vm2012, %v2008, %v2009
        %v2016 = vsel %vm2012, %v2007, %v2008
        %v2017 = vsel %vm2012, %v2006, %v2007
        %v2018 = vsel %vm2012, %v2005, %v2006
        %v2019 = vsel %vm2012, %v2004, %v2005
        %v2020 = vsel %vm2012, %v2003, %v2004
        %v2021 = vsel %vm2012, %v2002, %v2003
        %v2022 = vsel %vm2012, %v2001, %v2002
        %v2023 = vsel %vm2012, %v2000, %v2001
        %v2024 = vsel %vm2012, %v1999, %v2000
        %v2025 = vsel %vm2012, %v1998, %v1999
        %v2026 = vsel %vm2012, %v1997, %v1998
        %v2027 = vsel %vm2012, %v1996, %v1997
        %v2028 = vsel %vm2012, %v1995, %v1996
        %v2029 = vsel %vm2012, %v1994, %v1995
        %v2030 = vsel %vm2012, %v1993, %v1994
        %v2031 = vsel %vm2012, %v1992, %v1993
        %v2032 = vsel %vm2012, %v1991, %v1992
        %v2033 = vsel %vm2012, %v1990, %v1991
        %v2034 = vsel %vm2012, %v1989, %v1990
        %v2035 = vsel %vm2012, %v1988, %v1989
        %v2036 = vsel %vm2012, %v1987, %v1988
        %v2037 = vsel %vm2012, %v1986, %v1987
        %v2038 = vsel %vm2012, %v1985, %v1986
        %v2039 = vsel %vm2012, %v1984, %v1985
        %v2040 = vsel %vm2012, %v1983, %v1984
        %v2041 = vsel %vm2012, %v1982, %v1983
        %v2042 = vsel %vm2012, %v1981, %v1982
        %v2043 = vsel %vm2012, %v1980, %v1981
        %v2044 = vsel %vm2012, %v2011, %v1980
        %v2045 = vsel %vm1177, 1, 0
        %v2046 = vsel %vm1178, 1, 0
        %v2047 = vsel %vm1179, 1, 0
        %v2048 = vsel %vm1180, 1, 0
        %v2049 = vsel %vm1181, 1, 0
        %v2050 = vsel %vm1182, 1, 0
        %v2051 = vsel %vm1183, 1, 0
        %v2052 = vsel %vm1184, 1, 0
        %v2053 = vsel %vm1185, 1, 0
        %v2054 = vsel %vm1186, 1, 0
        %v2055 = vsel %vm1187, 1, 0
        %v2056 = vsel %vm1188, 1, 0
        %v2057 = vsel %vm1189, 1, 0
        %v2058 = vsel %vm1190, 1, 0
        %v2059 = vsel %vm1191, 1, 0
        %v2060 = vsel %vm1192, 1, 0
        %v2061 = vsel %vm1193, 1, 0
        %v2062 = vsel %vm1194, 1, 0
        %v2063 = vsel %vm1195, 1, 0
        %v2064 = vsel %vm1196, 1, 0
        %v2065 = vsel %vm1197, 1, 0
        %v2066 = vsel %vm1198, 1, 0
        %v2067 = vsel %vm1199, 1, 0
        %v2068 = vsel %vm1200, 1, 0
        %v2069 = vsel %vm1201, 1, 0
        %v2070 = vsel %vm1202, 1, 0
        %v2071 = vsel %vm1203, 1, 0
        %v2072 = vsel %vm1204, 1, 0
        %v2073 = vsel %vm1205, 1, 0
        %v2074 = vsel %vm1206, 1, 0
        %v2075 = vsel %vm1207, 1, 0
        %v2076 = vsel %vm1208, 1, 0
        %vm2077 = vcmp.eq.s32.totalorder %v2045, 1
        %vm2078 = vcmp.eq.s32.totalorder %v2046, 1
        %vm2079 = vcmp.eq.s32.totalorder %v2047, 1
        %vm2080 = vcmp.eq.s32.totalorder %v2048, 1
        %vm2081 = vcmp.eq.s32.totalorder %v2049, 1
        %vm2082 = vcmp.eq.s32.totalorder %v2050, 1
        %vm2083 = vcmp.eq.s32.totalorder %v2051, 1
        %vm2084 = vcmp.eq.s32.totalorder %v2052, 1
        %vm2085 = vcmp.eq.s32.totalorder %v2053, 1
        %vm2086 = vcmp.eq.s32.totalorder %v2054, 1
        %vm2087 = vcmp.eq.s32.totalorder %v2055, 1
        %vm2088 = vcmp.eq.s32.totalorder %v2056, 1
        %vm2089 = vcmp.eq.s32.totalorder %v2057, 1
        %vm2090 = vcmp.eq.s32.totalorder %v2058, 1
        %vm2091 = vcmp.eq.s32.totalorder %v2059, 1
        %vm2092 = vcmp.eq.s32.totalorder %v2060, 1
        %vm2093 = vcmp.eq.s32.totalorder %v2061, 1
        %vm2094 = vcmp.eq.s32.totalorder %v2062, 1
        %vm2095 = vcmp.eq.s32.totalorder %v2063, 1
        %vm2096 = vcmp.eq.s32.totalorder %v2064, 1
        %vm2097 = vcmp.eq.s32.totalorder %v2065, 1
        %vm2098 = vcmp.eq.s32.totalorder %v2066, 1
        %vm2099 = vcmp.eq.s32.totalorder %v2067, 1
        %vm2100 = vcmp.eq.s32.totalorder %v2068, 1
        %vm2101 = vcmp.eq.s32.totalorder %v2069, 1
        %vm2102 = vcmp.eq.s32.totalorder %v2070, 1
        %vm2103 = vcmp.eq.s32.totalorder %v2071, 1
        %vm2104 = vcmp.eq.s32.totalorder %v2072, 1
        %vm2105 = vcmp.eq.s32.totalorder %v2073, 1
        %vm2106 = vcmp.eq.s32.totalorder %v2074, 1
        %vm2107 = vcmp.eq.s32.totalorder %v2075, 1
        %vm2108 = vcmp.eq.s32.totalorder %v2076, 1
        %v2109 = vsel %vm2077, %v2043, 0.0
        %v2110 = vsel %vm2078, %v2042, 0.0
        %v2111 = vsel %vm2079, %v2041, 0.0
        %v2112 = vsel %vm2080, %v2040, 0.0
        %v2113 = vsel %vm2081, %v2039, 0.0
        %v2114 = vsel %vm2082, %v2038, 0.0
        %v2115 = vsel %vm2083, %v2037, 0.0
        %v2116 = vsel %vm2084, %v2036, 0.0
        %v2117 = vsel %vm2085, %v2035, 0.0
        %v2118 = vsel %vm2086, %v2034, 0.0
        %v2119 = vsel %vm2087, %v2033, 0.0
        %v2120 = vsel %vm2088, %v2032, 0.0
        %v2121 = vsel %vm2089, %v2031, 0.0
        %v2122 = vsel %vm2090, %v2030, 0.0
        %v2123 = vsel %vm2091, %v2029, 0.0
        %v2124 = vsel %vm2092, %v2028, 0.0
        %v2125 = vsel %vm2093, %v2027, 0.0
        %v2126 = vsel %vm2094, %v2026, 0.0
        %v2127 = vsel %vm2095, %v2025, 0.0
        %v2128 = vsel %vm2096, %v2024, 0.0
        %v2129 = vsel %vm2097, %v2023, 0.0
        %v2130 = vsel %vm2098, %v2022, 0.0
        %v2131 = vsel %vm2099, %v2021, 0.0
        %v2132 = vsel %vm2100, %v2020, 0.0
        %v2133 = vsel %vm2101, %v2019, 0.0
        %v2134 = vsel %vm2102, %v2018, 0.0
        %v2135 = vsel %vm2103, %v2017, 0.0
        %v2136 = vsel %vm2104, %v2016, 0.0
        %v2137 = vsel %vm2105, %v2015, 0.0
        %v2138 = vsel %vm2106, %v2014, 0.0
        %v2139 = vsel %vm2107, %v2013, 0.0
        %v2140 = vsel %vm2108, %v2044, 0.0
        %v2141 = vrot.slane %v1465, 2
        %v2142 = vrot.slane %v1466, 2
        %v2143 = vrot.slane %v1467, 2
        %v2144 = vrot.slane %v1468, 2
        %v2145 = vrot.slane %v1469, 2
        %v2146 = vrot.slane %v1470, 2
        %v2147 = vrot.slane %v1471, 2
        %v2148 = vrot.slane %v1472, 2
        %v2149 = vrot.slane %v1473, 2
        %v2150 = vrot.slane %v1474, 2
        %v2151 = vrot.slane %v1475, 2
        %v2152 = vrot.slane %v1476, 2
        %v2153 = vrot.slane %v1477, 2
        %v2154 = vrot.slane %v1478, 2
        %v2155 = vrot.slane %v1479, 2
        %v2156 = vrot.slane %v1480, 2
        %v2157 = vrot.slane %v1481, 2
        %v2158 = vrot.slane %v1482, 2
        %v2159 = vrot.slane %v1483, 2
        %v2160 = vrot.slane %v1484, 2
        %v2161 = vrot.slane %v1485, 2
        %v2162 = vrot.slane %v1486, 2
        %v2163 = vrot.slane %v1487, 2
        %v2164 = vrot.slane %v1488, 2
        %v2165 = vrot.slane %v1489, 2
        %v2166 = vrot.slane %v1490, 2
        %v2167 = vrot.slane %v1491, 2
        %v2168 = vrot.slane %v1492, 2
        %v2169 = vrot.slane %v1493, 2
        %v2170 = vrot.slane %v1494, 2
        %v2171 = vrot.slane %v1495, 2
        %v2172 = vrot.slane %v1496, 2
        %vm2173 = vcmp.lt.s32.totalorder %v281, 6
        %v2174 = vsel %vm2173, %v2171, %v2172
        %v2175 = vsel %vm2173, %v2170, %v2171
        %v2176 = vsel %vm2173, %v2169, %v2170
        %v2177 = vsel %vm2173, %v2168, %v2169
        %v2178 = vsel %vm2173, %v2167, %v2168
        %v2179 = vsel %vm2173, %v2166, %v2167
        %v2180 = vsel %vm2173, %v2165, %v2166
        %v2181 = vsel %vm2173, %v2164, %v2165
        %v2182 = vsel %vm2173, %v2163, %v2164
        %v2183 = vsel %vm2173, %v2162, %v2163
        %v2184 = vsel %vm2173, %v2161, %v2162
        %v2185 = vsel %vm2173, %v2160, %v2161
        %v2186 = vsel %vm2173, %v2159, %v2160
        %v2187 = vsel %vm2173, %v2158, %v2159
        %v2188 = vsel %vm2173, %v2157, %v2158
        %v2189 = vsel %vm2173, %v2156, %v2157
        %v2190 = vsel %vm2173, %v2155, %v2156
        %v2191 = vsel %vm2173, %v2154, %v2155
        %v2192 = vsel %vm2173, %v2153, %v2154
        %v2193 = vsel %vm2173, %v2152, %v2153
        %v2194 = vsel %vm2173, %v2151, %v2152
        %v2195 = vsel %vm2173, %v2150, %v2151
        %v2196 = vsel %vm2173, %v2149, %v2150
        %v2197 = vsel %vm2173, %v2148, %v2149
        %v2198 = vsel %vm2173, %v2147, %v2148
        %v2199 = vsel %vm2173, %v2146, %v2147
        %v2200 = vsel %vm2173, %v2145, %v2146
        %v2201 = vsel %vm2173, %v2144, %v2145
        %v2202 = vsel %vm2173, %v2143, %v2144
        %v2203 = vsel %vm2173, %v2142, %v2143
        %v2204 = vsel %vm2173, %v2141, %v2142
        %v2205 = vsel %vm2173, %v2172, %v2141
        %v2206 = vsel %vm1305, 1, 0
        %v2207 = vsel %vm1306, 1, 0
        %v2208 = vsel %vm1307, 1, 0
        %v2209 = vsel %vm1308, 1, 0
        %v2210 = vsel %vm1309, 1, 0
        %v2211 = vsel %vm1310, 1, 0
        %v2212 = vsel %vm1311, 1, 0
        %v2213 = vsel %vm1312, 1, 0
        %v2214 = vsel %vm1313, 1, 0
        %v2215 = vsel %vm1314, 1, 0
        %v2216 = vsel %vm1315, 1, 0
        %v2217 = vsel %vm1316, 1, 0
        %v2218 = vsel %vm1317, 1, 0
        %v2219 = vsel %vm1318, 1, 0
        %v2220 = vsel %vm1319, 1, 0
        %v2221 = vsel %vm1320, 1, 0
        %v2222 = vsel %vm1321, 1, 0
        %v2223 = vsel %vm1322, 1, 0
        %v2224 = vsel %vm1323, 1, 0
        %v2225 = vsel %vm1324, 1, 0
        %v2226 = vsel %vm1325, 1, 0
        %v2227 = vsel %vm1326, 1, 0
        %v2228 = vsel %vm1327, 1, 0
        %v2229 = vsel %vm1328, 1, 0
        %v2230 = vsel %vm1329, 1, 0
        %v2231 = vsel %vm1330, 1, 0
        %v2232 = vsel %vm1331, 1, 0
        %v2233 = vsel %vm1332, 1, 0
        %v2234 = vsel %vm1333, 1, 0
        %v2235 = vsel %vm1334, 1, 0
        %v2236 = vsel %vm1335, 1, 0
        %v2237 = vsel %vm1336, 1, 0
        %vm2238 = vcmp.eq.s32.totalorder %v2206, 1
        %vm2239 = vcmp.eq.s32.totalorder %v2207, 1
        %vm2240 = vcmp.eq.s32.totalorder %v2208, 1
        %vm2241 = vcmp.eq.s32.totalorder %v2209, 1
        %vm2242 = vcmp.eq.s32.totalorder %v2210, 1
        %vm2243 = vcmp.eq.s32.totalorder %v2211, 1
        %vm2244 = vcmp.eq.s32.totalorder %v2212, 1
        %vm2245 = vcmp.eq.s32.totalorder %v2213, 1
        %vm2246 = vcmp.eq.s32.totalorder %v2214, 1
        %vm2247 = vcmp.eq.s32.totalorder %v2215, 1
        %vm2248 = vcmp.eq.s32.totalorder %v2216, 1
        %vm2249 = vcmp.eq.s32.totalorder %v2217, 1
        %vm2250 = vcmp.eq.s32.totalorder %v2218, 1
        %vm2251 = vcmp.eq.s32.totalorder %v2219, 1
        %vm2252 = vcmp.eq.s32.totalorder %v2220, 1
        %vm2253 = vcmp.eq.s32.totalorder %v2221, 1
        %vm2254 = vcmp.eq.s32.totalorder %v2222, 1
        %vm2255 = vcmp.eq.s32.totalorder %v2223, 1
        %vm2256 = vcmp.eq.s32.totalorder %v2224, 1
        %vm2257 = vcmp.eq.s32.totalorder %v2225, 1
        %vm2258 = vcmp.eq.s32.totalorder %v2226, 1
        %vm2259 = vcmp.eq.s32.totalorder %v2227, 1
        %vm2260 = vcmp.eq.s32.totalorder %v2228, 1
        %vm2261 = vcmp.eq.s32.totalorder %v2229, 1
        %vm2262 = vcmp.eq.s32.totalorder %v2230, 1
        %vm2263 = vcmp.eq.s32.totalorder %v2231, 1
        %vm2264 = vcmp.eq.s32.totalorder %v2232, 1
        %vm2265 = vcmp.eq.s32.totalorder %v2233, 1
        %vm2266 = vcmp.eq.s32.totalorder %v2234, 1
        %vm2267 = vcmp.eq.s32.totalorder %v2235, 1
        %vm2268 = vcmp.eq.s32.totalorder %v2236, 1
        %vm2269 = vcmp.eq.s32.totalorder %v2237, 1
        %v2270 = vsel %vm2238, %v2204, 0.0
        %v2271 = vsel %vm2239, %v2203, 0.0
        %v2272 = vsel %vm2240, %v2202, 0.0
        %v2273 = vsel %vm2241, %v2201, 0.0
        %v2274 = vsel %vm2242, %v2200, 0.0
        %v2275 = vsel %vm2243, %v2199, 0.0
        %v2276 = vsel %vm2244, %v2198, 0.0
        %v2277 = vsel %vm2245, %v2197, 0.0
        %v2278 = vsel %vm2246, %v2196, 0.0
        %v2279 = vsel %vm2247, %v2195, 0.0
        %v2280 = vsel %vm2248, %v2194, 0.0
        %v2281 = vsel %vm2249, %v2193, 0.0
        %v2282 = vsel %vm2250, %v2192, 0.0
        %v2283 = vsel %vm2251, %v2191, 0.0
        %v2284 = vsel %vm2252, %v2190, 0.0
        %v2285 = vsel %vm2253, %v2189, 0.0
        %v2286 = vsel %vm2254, %v2188, 0.0
        %v2287 = vsel %vm2255, %v2187, 0.0
        %v2288 = vsel %vm2256, %v2186, 0.0
        %v2289 = vsel %vm2257, %v2185, 0.0
        %v2290 = vsel %vm2258, %v2184, 0.0
        %v2291 = vsel %vm2259, %v2183, 0.0
        %v2292 = vsel %vm2260, %v2182, 0.0
        %v2293 = vsel %vm2261, %v2181, 0.0
        %v2294 = vsel %vm2262, %v2180, 0.0
        %v2295 = vsel %vm2263, %v2179, 0.0
        %v2296 = vsel %vm2264, %v2178, 0.0
        %v2297 = vsel %vm2265, %v2177, 0.0
        %v2298 = vsel %vm2266, %v2176, 0.0
        %v2299 = vsel %vm2267, %v2175, 0.0
        %v2300 = vsel %vm2268, %v2174, 0.0
        %v2301 = vsel %vm2269, %v2205, 0.0
        %v2302 = vrot.slane %v1465, 3
        %v2303 = vrot.slane %v1466, 3
        %v2304 = vrot.slane %v1467, 3
        %v2305 = vrot.slane %v1468, 3
        %v2306 = vrot.slane %v1469, 3
        %v2307 = vrot.slane %v1470, 3
        %v2308 = vrot.slane %v1471, 3
        %v2309 = vrot.slane %v1472, 3
        %v2310 = vrot.slane %v1473, 3
        %v2311 = vrot.slane %v1474, 3
        %v2312 = vrot.slane %v1475, 3
        %v2313 = vrot.slane %v1476, 3
        %v2314 = vrot.slane %v1477, 3
        %v2315 = vrot.slane %v1478, 3
        %v2316 = vrot.slane %v1479, 3
        %v2317 = vrot.slane %v1480, 3
        %v2318 = vrot.slane %v1481, 3
        %v2319 = vrot.slane %v1482, 3
        %v2320 = vrot.slane %v1483, 3
        %v2321 = vrot.slane %v1484, 3
        %v2322 = vrot.slane %v1485, 3
        %v2323 = vrot.slane %v1486, 3
        %v2324 = vrot.slane %v1487, 3
        %v2325 = vrot.slane %v1488, 3
        %v2326 = vrot.slane %v1489, 3
        %v2327 = vrot.slane %v1490, 3
        %v2328 = vrot.slane %v1491, 3
        %v2329 = vrot.slane %v1492, 3
        %v2330 = vrot.slane %v1493, 3
        %v2331 = vrot.slane %v1494, 3
        %v2332 = vrot.slane %v1495, 3
        %v2333 = vrot.slane %v1496, 3
        %vm2334 = vcmp.lt.s32.totalorder %v281, 5
        %v2335 = vsel %vm2334, %v2332, %v2333
        %v2336 = vsel %vm2334, %v2331, %v2332
        %v2337 = vsel %vm2334, %v2330, %v2331
        %v2338 = vsel %vm2334, %v2329, %v2330
        %v2339 = vsel %vm2334, %v2328, %v2329
        %v2340 = vsel %vm2334, %v2327, %v2328
        %v2341 = vsel %vm2334, %v2326, %v2327
        %v2342 = vsel %vm2334, %v2325, %v2326
        %v2343 = vsel %vm2334, %v2324, %v2325
        %v2344 = vsel %vm2334, %v2323, %v2324
        %v2345 = vsel %vm2334, %v2322, %v2323
        %v2346 = vsel %vm2334, %v2321, %v2322
        %v2347 = vsel %vm2334, %v2320, %v2321
        %v2348 = vsel %vm2334, %v2319, %v2320
        %v2349 = vsel %vm2334, %v2318, %v2319
        %v2350 = vsel %vm2334, %v2317, %v2318
        %v2351 = vsel %vm2334, %v2316, %v2317
        %v2352 = vsel %vm2334, %v2315, %v2316
        %v2353 = vsel %vm2334, %v2314, %v2315
        %v2354 = vsel %vm2334, %v2313, %v2314
        %v2355 = vsel %vm2334, %v2312, %v2313
        %v2356 = vsel %vm2334, %v2311, %v2312
        %v2357 = vsel %vm2334, %v2310, %v2311
        %v2358 = vsel %vm2334, %v2309, %v2310
        %v2359 = vsel %vm2334, %v2308, %v2309
        %v2360 = vsel %vm2334, %v2307, %v2308
        %v2361 = vsel %vm2334, %v2306, %v2307
        %v2362 = vsel %vm2334, %v2305, %v2306
        %v2363 = vsel %vm2334, %v2304, %v2305
        %v2364 = vsel %vm2334, %v2303, %v2304
        %v2365 = vsel %vm2334, %v2302, %v2303
        %v2366 = vsel %vm2334, %v2333, %v2302
        %v2367 = vsel %vm1433, 1, 0
        %v2368 = vsel %vm1434, 1, 0
        %v2369 = vsel %vm1435, 1, 0
        %v2370 = vsel %vm1436, 1, 0
        %v2371 = vsel %vm1437, 1, 0
        %v2372 = vsel %vm1438, 1, 0
        %v2373 = vsel %vm1439, 1, 0
        %v2374 = vsel %vm1440, 1, 0
        %v2375 = vsel %vm1441, 1, 0
        %v2376 = vsel %vm1442, 1, 0
        %v2377 = vsel %vm1443, 1, 0
        %v2378 = vsel %vm1444, 1, 0
        %v2379 = vsel %vm1445, 1, 0
        %v2380 = vsel %vm1446, 1, 0
        %v2381 = vsel %vm1447, 1, 0
        %v2382 = vsel %vm1448, 1, 0
        %v2383 = vsel %vm1449, 1, 0
        %v2384 = vsel %vm1450, 1, 0
        %v2385 = vsel %vm1451, 1, 0
        %v2386 = vsel %vm1452, 1, 0
        %v2387 = vsel %vm1453, 1, 0
        %v2388 = vsel %vm1454, 1, 0
        %v2389 = vsel %vm1455, 1, 0
        %v2390 = vsel %vm1456, 1, 0
        %v2391 = vsel %vm1457, 1, 0
        %v2392 = vsel %vm1458, 1, 0
        %v2393 = vsel %vm1459, 1, 0
        %v2394 = vsel %vm1460, 1, 0
        %v2395 = vsel %vm1461, 1, 0
        %v2396 = vsel %vm1462, 1, 0
        %v2397 = vsel %vm1463, 1, 0
        %v2398 = vsel %vm1464, 1, 0
        %vm2399 = vcmp.eq.s32.totalorder %v2367, 1
        %vm2400 = vcmp.eq.s32.totalorder %v2368, 1
        %vm2401 = vcmp.eq.s32.totalorder %v2369, 1
        %vm2402 = vcmp.eq.s32.totalorder %v2370, 1
        %vm2403 = vcmp.eq.s32.totalorder %v2371, 1
        %vm2404 = vcmp.eq.s32.totalorder %v2372, 1
        %vm2405 = vcmp.eq.s32.totalorder %v2373, 1
        %vm2406 = vcmp.eq.s32.totalorder %v2374, 1
        %vm2407 = vcmp.eq.s32.totalorder %v2375, 1
        %vm2408 = vcmp.eq.s32.totalorder %v2376, 1
        %vm2409 = vcmp.eq.s32.totalorder %v2377, 1
        %vm2410 = vcmp.eq.s32.totalorder %v2378, 1
        %vm2411 = vcmp.eq.s32.totalorder %v2379, 1
        %vm2412 = vcmp.eq.s32.totalorder %v2380, 1
        %vm2413 = vcmp.eq.s32.totalorder %v2381, 1
        %vm2414 = vcmp.eq.s32.totalorder %v2382, 1
        %vm2415 = vcmp.eq.s32.totalorder %v2383, 1
        %vm2416 = vcmp.eq.s32.totalorder %v2384, 1
        %vm2417 = vcmp.eq.s32.totalorder %v2385, 1
        %vm2418 = vcmp.eq.s32.totalorder %v2386, 1
        %vm2419 = vcmp.eq.s32.totalorder %v2387, 1
        %vm2420 = vcmp.eq.s32.totalorder %v2388, 1
        %vm2421 = vcmp.eq.s32.totalorder %v2389, 1
        %vm2422 = vcmp.eq.s32.totalorder %v2390, 1
        %vm2423 = vcmp.eq.s32.totalorder %v2391, 1
        %vm2424 = vcmp.eq.s32.totalorder %v2392, 1
        %vm2425 = vcmp.eq.s32.totalorder %v2393, 1
        %vm2426 = vcmp.eq.s32.totalorder %v2394, 1
        %vm2427 = vcmp.eq.s32.totalorder %v2395, 1
        %vm2428 = vcmp.eq.s32.totalorder %v2396, 1
        %vm2429 = vcmp.eq.s32.totalorder %v2397, 1
        %vm2430 = vcmp.eq.s32.totalorder %v2398, 1
        %v2431 = vsel %vm2399, %v2365, 0.0
        %v2432 = vsel %vm2400, %v2364, 0.0
        %v2433 = vsel %vm2401, %v2363, 0.0
        %v2434 = vsel %vm2402, %v2362, 0.0
        %v2435 = vsel %vm2403, %v2361, 0.0
        %v2436 = vsel %vm2404, %v2360, 0.0
        %v2437 = vsel %vm2405, %v2359, 0.0
        %v2438 = vsel %vm2406, %v2358, 0.0
        %v2439 = vsel %vm2407, %v2357, 0.0
        %v2440 = vsel %vm2408, %v2356, 0.0
        %v2441 = vsel %vm2409, %v2355, 0.0
        %v2442 = vsel %vm2410, %v2354, 0.0
        %v2443 = vsel %vm2411, %v2353, 0.0
        %v2444 = vsel %vm2412, %v2352, 0.0
        %v2445 = vsel %vm2413, %v2351, 0.0
        %v2446 = vsel %vm2414, %v2350, 0.0
        %v2447 = vsel %vm2415, %v2349, 0.0
        %v2448 = vsel %vm2416, %v2348, 0.0
        %v2449 = vsel %vm2417, %v2347, 0.0
        %v2450 = vsel %vm2418, %v2346, 0.0
        %v2451 = vsel %vm2419, %v2345, 0.0
        %v2452 = vsel %vm2420, %v2344, 0.0
        %v2453 = vsel %vm2421, %v2343, 0.0
        %v2454 = vsel %vm2422, %v2342, 0.0
        %v2455 = vsel %vm2423, %v2341, 0.0
        %v2456 = vsel %vm2424, %v2340, 0.0
        %v2457 = vsel %vm2425, %v2339, 0.0
        %v2458 = vsel %vm2426, %v2338, 0.0
        %v2459 = vsel %vm2427, %v2337, 0.0
        %v2460 = vsel %vm2428, %v2336, 0.0
        %v2461 = vsel %vm2429, %v2335, 0.0
        %v2462 = vsel %vm2430, %v2366, 0.0
        %2495 = vrot.lane.b32.xlu0 %v1787, 64
        %v2496 = vpop.permute.xlu0 %2495
        %2497 = vrot.lane.b32.xlu0 %v1788, 64
        %v2498 = vpop.permute.xlu0 %2497
        %2499 = vrot.lane.b32.xlu0 %v1789, 64
        %v2500 = vpop.permute.xlu0 %2499
        %2501 = vrot.lane.b32.xlu0 %v1790, 64
        %v2502 = vpop.permute.xlu0 %2501
        %2503 = vrot.lane.b32.xlu0 %v1791, 64
        %v2504 = vpop.permute.xlu0 %2503
        %2505 = vrot.lane.b32.xlu0 %v1792, 64
        %v2506 = vpop.permute.xlu0 %2505
        %2507 = vrot.lane.b32.xlu0 %v1793, 64
        %v2508 = vpop.permute.xlu0 %2507
        %2509 = vrot.lane.b32.xlu0 %v1794, 64
        %v2510 = vpop.permute.xlu0 %2509
        %2511 = vrot.lane.b32.xlu0 %v1795, 64
        %v2512 = vpop.permute.xlu0 %2511
        %2513 = vrot.lane.b32.xlu0 %v1796, 64
        %v2514 = vpop.permute.xlu0 %2513
        %2515 = vrot.lane.b32.xlu0 %v1797, 64
        %v2516 = vpop.permute.xlu0 %2515
        %2517 = vrot.lane.b32.xlu0 %v1798, 64
        %v2518 = vpop.permute.xlu0 %2517
        %2519 = vrot.lane.b32.xlu0 %v1799, 64
        %v2520 = vpop.permute.xlu0 %2519
        %2521 = vrot.lane.b32.xlu0 %v1800, 64
        %v2522 = vpop.permute.xlu0 %2521
        %2523 = vrot.lane.b32.xlu0 %v1801, 64
        %v2524 = vpop.permute.xlu0 %2523
        %2525 = vrot.lane.b32.xlu0 %v1802, 64
        %v2526 = vpop.permute.xlu0 %2525
        %2527 = vrot.lane.b32.xlu0 %v1803, 64
        %v2528 = vpop.permute.xlu0 %2527
        %2529 = vrot.lane.b32.xlu0 %v1804, 64
        %v2530 = vpop.permute.xlu0 %2529
        %2531 = vrot.lane.b32.xlu0 %v1805, 64
        %v2532 = vpop.permute.xlu0 %2531
        %2533 = vrot.lane.b32.xlu0 %v1806, 64
        %v2534 = vpop.permute.xlu0 %2533
        %2535 = vrot.lane.b32.xlu0 %v1807, 64
        %v2536 = vpop.permute.xlu0 %2535
        %2537 = vrot.lane.b32.xlu0 %v1808, 64
        %v2538 = vpop.permute.xlu0 %2537
        %2539 = vrot.lane.b32.xlu0 %v1809, 64
        %v2540 = vpop.permute.xlu0 %2539
        %2541 = vrot.lane.b32.xlu0 %v1810, 64
        %v2542 = vpop.permute.xlu0 %2541
        %2543 = vrot.lane.b32.xlu0 %v1811, 64
        %v2544 = vpop.permute.xlu0 %2543
        %2545 = vrot.lane.b32.xlu0 %v1812, 64
        %v2546 = vpop.permute.xlu0 %2545
        %2547 = vrot.lane.b32.xlu0 %v1813, 64
        %v2548 = vpop.permute.xlu0 %2547
        %2549 = vrot.lane.b32.xlu0 %v1814, 64
        %v2550 = vpop.permute.xlu0 %2549
        %2551 = vrot.lane.b32.xlu0 %v1815, 64
        %v2552 = vpop.permute.xlu0 %2551
        %2553 = vrot.lane.b32.xlu0 %v1816, 64
        %v2554 = vpop.permute.xlu0 %2553
        %2555 = vrot.lane.b32.xlu0 %v1817, 64
        %v2556 = vpop.permute.xlu0 %2555
        %2557 = vrot.lane.b32.xlu0 %v1818, 64
        %v2558 = vpop.permute.xlu0 %2557
        %2623 = vrot.lane.b32.xlu0 %v1465, 64
        %v2624 = vpop.permute.xlu0 %2623
        %2625 = vrot.lane.b32.xlu0 %v1466, 64
        %v2626 = vpop.permute.xlu0 %2625
        %2627 = vrot.lane.b32.xlu0 %v1467, 64
        %v2628 = vpop.permute.xlu0 %2627
        %2629 = vrot.lane.b32.xlu0 %v1468, 64
        %v2630 = vpop.permute.xlu0 %2629
        %2631 = vrot.lane.b32.xlu0 %v1469, 64
        %v2632 = vpop.permute.xlu0 %2631
        %2633 = vrot.lane.b32.xlu0 %v1470, 64
        %v2634 = vpop.permute.xlu0 %2633
        %2635 = vrot.lane.b32.xlu0 %v1471, 64
        %v2636 = vpop.permute.xlu0 %2635
        %2637 = vrot.lane.b32.xlu0 %v1472, 64
        %v2638 = vpop.permute.xlu0 %2637
        %2639 = vrot.lane.b32.xlu0 %v1473, 64
        %v2640 = vpop.permute.xlu0 %2639
        %2641 = vrot.lane.b32.xlu0 %v1474, 64
        %v2642 = vpop.permute.xlu0 %2641
        %2643 = vrot.lane.b32.xlu0 %v1475, 64
        %v2644 = vpop.permute.xlu0 %2643
        %2645 = vrot.lane.b32.xlu0 %v1476, 64
        %v2646 = vpop.permute.xlu0 %2645
        %2647 = vrot.lane.b32.xlu0 %v1477, 64
        %v2648 = vpop.permute.xlu0 %2647
        %2649 = vrot.lane.b32.xlu0 %v1478, 64
        %v2650 = vpop.permute.xlu0 %2649
        %2651 = vrot.lane.b32.xlu0 %v1479, 64
        %v2652 = vpop.permute.xlu0 %2651
        %2653 = vrot.lane.b32.xlu0 %v1480, 64
        %v2654 = vpop.permute.xlu0 %2653
        %2655 = vrot.lane.b32.xlu0 %v1481, 64
        %v2656 = vpop.permute.xlu0 %2655
        %2657 = vrot.lane.b32.xlu0 %v1482, 64
        %v2658 = vpop.permute.xlu0 %2657
        %2659 = vrot.lane.b32.xlu0 %v1483, 64
        %v2660 = vpop.permute.xlu0 %2659
        %2661 = vrot.lane.b32.xlu0 %v1484, 64
        %v2662 = vpop.permute.xlu0 %2661
        %2663 = vrot.lane.b32.xlu0 %v1485, 64
        %v2664 = vpop.permute.xlu0 %2663
        %2665 = vrot.lane.b32.xlu0 %v1486, 64
        %v2666 = vpop.permute.xlu0 %2665
        %2667 = vrot.lane.b32.xlu0 %v1487, 64
        %v2668 = vpop.permute.xlu0 %2667
        %2669 = vrot.lane.b32.xlu0 %v1488, 64
        %v2670 = vpop.permute.xlu0 %2669
        %2671 = vrot.lane.b32.xlu0 %v1489, 64
        %v2672 = vpop.permute.xlu0 %2671
        %2673 = vrot.lane.b32.xlu0 %v1490, 64
        %v2674 = vpop.permute.xlu0 %2673
        %2675 = vrot.lane.b32.xlu0 %v1491, 64
        %v2676 = vpop.permute.xlu0 %2675
        %2677 = vrot.lane.b32.xlu0 %v1492, 64
        %v2678 = vpop.permute.xlu0 %2677
        %2679 = vrot.lane.b32.xlu0 %v1493, 64
        %v2680 = vpop.permute.xlu0 %2679
        %2681 = vrot.lane.b32.xlu0 %v1494, 64
        %v2682 = vpop.permute.xlu0 %2681
        %2683 = vrot.lane.b32.xlu0 %v1495, 64
        %v2684 = vpop.permute.xlu0 %2683
        %2685 = vrot.lane.b32.xlu0 %v1496, 64
        %v2686 = vpop.permute.xlu0 %2685
        %2751 = vrot.lane.b32.xlu0 %v2270, 64
        %v2752 = vpop.permute.xlu0 %2751
        %2753 = vrot.lane.b32.xlu0 %v2271, 64
        %v2754 = vpop.permute.xlu0 %2753
        %2755 = vrot.lane.b32.xlu0 %v2272, 64
        %v2756 = vpop.permute.xlu0 %2755
        %2757 = vrot.lane.b32.xlu0 %v2273, 64
        %v2758 = vpop.permute.xlu0 %2757
        %2759 = vrot.lane.b32.xlu0 %v2274, 64
        %v2760 = vpop.permute.xlu0 %2759
        %2761 = vrot.lane.b32.xlu0 %v2275, 64
        %v2762 = vpop.permute.xlu0 %2761
        %2763 = vrot.lane.b32.xlu0 %v2276, 64
        %v2764 = vpop.permute.xlu0 %2763
        %2765 = vrot.lane.b32.xlu0 %v2277, 64
        %v2766 = vpop.permute.xlu0 %2765
        %2767 = vrot.lane.b32.xlu0 %v2278, 64
        %v2768 = vpop.permute.xlu0 %2767
        %2769 = vrot.lane.b32.xlu0 %v2279, 64
        %v2770 = vpop.permute.xlu0 %2769
        %2771 = vrot.lane.b32.xlu0 %v2280, 64
        %v2772 = vpop.permute.xlu0 %2771
        %2773 = vrot.lane.b32.xlu0 %v2281, 64
        %v2774 = vpop.permute.xlu0 %2773
        %2775 = vrot.lane.b32.xlu0 %v2282, 64
        %v2776 = vpop.permute.xlu0 %2775
        %2777 = vrot.lane.b32.xlu0 %v2283, 64
        %v2778 = vpop.permute.xlu0 %2777
        %2779 = vrot.lane.b32.xlu0 %v2284, 64
        %v2780 = vpop.permute.xlu0 %2779
        %2781 = vrot.lane.b32.xlu0 %v2285, 64
        %v2782 = vpop.permute.xlu0 %2781
        %2783 = vrot.lane.b32.xlu0 %v2286, 64
        %v2784 = vpop.permute.xlu0 %2783
        %2785 = vrot.lane.b32.xlu0 %v2287, 64
        %v2786 = vpop.permute.xlu0 %2785
        %2787 = vrot.lane.b32.xlu0 %v2288, 64
        %v2788 = vpop.permute.xlu0 %2787
        %2789 = vrot.lane.b32.xlu0 %v2289, 64
        %v2790 = vpop.permute.xlu0 %2789
        %2791 = vrot.lane.b32.xlu0 %v2290, 64
        %v2792 = vpop.permute.xlu0 %2791
        %2793 = vrot.lane.b32.xlu0 %v2291, 64
        %v2794 = vpop.permute.xlu0 %2793
        %2795 = vrot.lane.b32.xlu0 %v2292, 64
        %v2796 = vpop.permute.xlu0 %2795
        %2797 = vrot.lane.b32.xlu0 %v2293, 64
        %v2798 = vpop.permute.xlu0 %2797
        %2799 = vrot.lane.b32.xlu0 %v2294, 64
        %v2800 = vpop.permute.xlu0 %2799
        %2801 = vrot.lane.b32.xlu0 %v2295, 64
        %v2802 = vpop.permute.xlu0 %2801
        %2803 = vrot.lane.b32.xlu0 %v2296, 64
        %v2804 = vpop.permute.xlu0 %2803
        %2805 = vrot.lane.b32.xlu0 %v2297, 64
        %v2806 = vpop.permute.xlu0 %2805
        %2807 = vrot.lane.b32.xlu0 %v2298, 64
        %v2808 = vpop.permute.xlu0 %2807
        %2809 = vrot.lane.b32.xlu0 %v2299, 64
        %v2810 = vpop.permute.xlu0 %2809
        %2811 = vrot.lane.b32.xlu0 %v2300, 64
        %v2812 = vpop.permute.xlu0 %2811
        %2813 = vrot.lane.b32.xlu0 %v2301, 64
        %v2814 = vpop.permute.xlu0 %2813
        %vm2847 = vcmask 523264
        %v2848 = vsel %vm2847, %v1626, %v2496
        %v2849 = vsel %vm2847, %v1627, %v2498
        %v2850 = vsel %vm2847, %v1628, %v2500
        %v2851 = vsel %vm2847, %v1629, %v2502
        %v2852 = vsel %vm2847, %v1630, %v2504
        %v2853 = vsel %vm2847, %v1631, %v2506
        %v2854 = vsel %vm2847, %v1632, %v2508
        %v2855 = vsel %vm2847, %v1633, %v2510
        %v2856 = vsel %vm2847, %v1634, %v2512
        %v2857 = vsel %vm2847, %v1635, %v2514
        %v2858 = vsel %vm2847, %v1636, %v2516
        %v2859 = vsel %vm2847, %v1637, %v2518
        %v2860 = vsel %vm2847, %v1638, %v2520
        %v2861 = vsel %vm2847, %v1639, %v2522
        %v2862 = vsel %vm2847, %v1640, %v2524
        %v2863 = vsel %vm2847, %v1641, %v2526
        %v2864 = vsel %vm2847, %v1642, %v2528
        %v2865 = vsel %vm2847, %v1643, %v2530
        %v2866 = vsel %vm2847, %v1644, %v2532
        %v2867 = vsel %vm2847, %v1645, %v2534
        %v2868 = vsel %vm2847, %v1646, %v2536
        %v2869 = vsel %vm2847, %v1647, %v2538
        %v2870 = vsel %vm2847, %v1648, %v2540
        %v2871 = vsel %vm2847, %v1649, %v2542
        %v2872 = vsel %vm2847, %v1650, %v2544
        %v2873 = vsel %vm2847, %v1651, %v2546
        %v2874 = vsel %vm2847, %v1652, %v2548
        %v2875 = vsel %vm2847, %v1653, %v2550
        %v2876 = vsel %vm2847, %v1654, %v2552
        %v2877 = vsel %vm2847, %v1655, %v2554
        %v2878 = vsel %vm2847, %v1656, %v2556
        %v2879 = vsel %vm2847, %v1657, %v2558
        %v2880 = vsel %vm2847, %v1948, %v2624
        %v2881 = vsel %vm2847, %v1949, %v2626
        %v2882 = vsel %vm2847, %v1950, %v2628
        %v2883 = vsel %vm2847, %v1951, %v2630
        %v2884 = vsel %vm2847, %v1952, %v2632
        %v2885 = vsel %vm2847, %v1953, %v2634
        %v2886 = vsel %vm2847, %v1954, %v2636
        %v2887 = vsel %vm2847, %v1955, %v2638
        %v2888 = vsel %vm2847, %v1956, %v2640
        %v2889 = vsel %vm2847, %v1957, %v2642
        %v2890 = vsel %vm2847, %v1958, %v2644
        %v2891 = vsel %vm2847, %v1959, %v2646
        %v2892 = vsel %vm2847, %v1960, %v2648
        %v2893 = vsel %vm2847, %v1961, %v2650
        %v2894 = vsel %vm2847, %v1962, %v2652
        %v2895 = vsel %vm2847, %v1963, %v2654
        %v2896 = vsel %vm2847, %v1964, %v2656
        %v2897 = vsel %vm2847, %v1965, %v2658
        %v2898 = vsel %vm2847, %v1966, %v2660
        %v2899 = vsel %vm2847, %v1967, %v2662
        %v2900 = vsel %vm2847, %v1968, %v2664
        %v2901 = vsel %vm2847, %v1969, %v2666
        %v2902 = vsel %vm2847, %v1970, %v2668
        %v2903 = vsel %vm2847, %v1971, %v2670
        %v2904 = vsel %vm2847, %v1972, %v2672
        %v2905 = vsel %vm2847, %v1973, %v2674
        %v2906 = vsel %vm2847, %v1974, %v2676
        %v2907 = vsel %vm2847, %v1975, %v2678
        %v2908 = vsel %vm2847, %v1976, %v2680
        %v2909 = vsel %vm2847, %v1977, %v2682
        %v2910 = vsel %vm2847, %v1978, %v2684
        %v2911 = vsel %vm2847, %v1979, %v2686
        %v2912 = vsel %vm2847, %v2109, %v2752
        %v2913 = vsel %vm2847, %v2110, %v2754
        %v2914 = vsel %vm2847, %v2111, %v2756
        %v2915 = vsel %vm2847, %v2112, %v2758
        %v2916 = vsel %vm2847, %v2113, %v2760
        %v2917 = vsel %vm2847, %v2114, %v2762
        %v2918 = vsel %vm2847, %v2115, %v2764
        %v2919 = vsel %vm2847, %v2116, %v2766
        %v2920 = vsel %vm2847, %v2117, %v2768
        %v2921 = vsel %vm2847, %v2118, %v2770
        %v2922 = vsel %vm2847, %v2119, %v2772
        %v2923 = vsel %vm2847, %v2120, %v2774
        %v2924 = vsel %vm2847, %v2121, %v2776
        %v2925 = vsel %vm2847, %v2122, %v2778
        %v2926 = vsel %vm2847, %v2123, %v2780
        %v2927 = vsel %vm2847, %v2124, %v2782
        %v2928 = vsel %vm2847, %v2125, %v2784
        %v2929 = vsel %vm2847, %v2126, %v2786
        %v2930 = vsel %vm2847, %v2127, %v2788
        %v2931 = vsel %vm2847, %v2128, %v2790
        %v2932 = vsel %vm2847, %v2129, %v2792
        %v2933 = vsel %vm2847, %v2130, %v2794
        %v2934 = vsel %vm2847, %v2131, %v2796
        %v2935 = vsel %vm2847, %v2132, %v2798
        %v2936 = vsel %vm2847, %v2133, %v2800
        %v2937 = vsel %vm2847, %v2134, %v2802
        %v2938 = vsel %vm2847, %v2135, %v2804
        %v2939 = vsel %vm2847, %v2136, %v2806
        %v2940 = vsel %vm2847, %v2137, %v2808
        %v2941 = vsel %vm2847, %v2138, %v2810
        %v2942 = vsel %vm2847, %v2139, %v2812
        %v2943 = vsel %vm2847, %v2140, %v2814
        %v2944 = vld [vmem:[%s1] sm:$0xff]
        %v2945 = vld [vmem:[%s1 + $0x8] sm:$0xff]
        %v2946 = vld [vmem:[%s1 + $0x10] sm:$0xff]
        %v2947 = vld [vmem:[%s1 + $0x18] sm:$0xff]
        %v2948 = vld [vmem:[%s1 + $0x20] sm:$0xff]
        %v2949 = vld [vmem:[%s1 + $0x28] sm:$0xff]
        %v2950 = vld [vmem:[%s1 + $0x30] sm:$0xff]
        %v2951 = vld [vmem:[%s1 + $0x38] sm:$0xff]
        %v2952 = vld [vmem:[%s1 + $0x40] sm:$0xff]
        %v2953 = vld [vmem:[%s1 + $0x48] sm:$0xff]
        %v2954 = vld [vmem:[%s1 + $0x50] sm:$0xff]
        %v2955 = vld [vmem:[%s1 + $0x58] sm:$0xff]
        %v2956 = vld [vmem:[%s1 + $0x60] sm:$0xff]
        %v2957 = vld [vmem:[%s1 + $0x68] sm:$0xff]
        %v2958 = vld [vmem:[%s1 + $0x70] sm:$0xff]
        %v2959 = vld [vmem:[%s1 + $0x78] sm:$0xff]
        %v2960 = vld [vmem:[%s1 + $0x80] sm:$0xff]
        %v2961 = vld [vmem:[%s1 + $0x88] sm:$0xff]
        %v2962 = vld [vmem:[%s1 + $0x90] sm:$0xff]
        %v2963 = vld [vmem:[%s1 + $0x98] sm:$0xff]
        %v2964 = vld [vmem:[%s1 + $0xa0] sm:$0xff]
        %v2965 = vld [vmem:[%s1 + $0xa8] sm:$0xff]
        %v2966 = vld [vmem:[%s1 + $0xb0] sm:$0xff]
        %v2967 = vld [vmem:[%s1 + $0xb8] sm:$0xff]
        %v2968 = vld [vmem:[%s1 + $0xc0] sm:$0xff]
        %v2969 = vld [vmem:[%s1 + $0xc8] sm:$0xff]
        %v2970 = vld [vmem:[%s1 + $0xd0] sm:$0xff]
        %v2971 = vld [vmem:[%s1 + $0xd8] sm:$0xff]
        %v2972 = vld [vmem:[%s1 + $0xe0] sm:$0xff]
        %v2973 = vld [vmem:[%s1 + $0xe8] sm:$0xff]
        %v2974 = vld [vmem:[%s1 + $0xf0] sm:$0xff]
        %v2975 = vld [vmem:[%s1 + $0xf8] sm:$0xff]
        %v2976 = vld [vmem:[%s1 + $0x100] sm:$0xff]
        %v2977 = vld [vmem:[%s1 + $0x108] sm:$0xff]
        %v2978 = vld [vmem:[%s1 + $0x110] sm:$0xff]
        %v2979 = vld [vmem:[%s1 + $0x118] sm:$0xff]
        %v2980 = vld [vmem:[%s1 + $0x120] sm:$0xff]
        %v2981 = vld [vmem:[%s1 + $0x128] sm:$0xff]
        %v2982 = vld [vmem:[%s1 + $0x130] sm:$0xff]
        %v2983 = vld [vmem:[%s1 + $0x138] sm:$0xff]
        %v2984 = vld [vmem:[%s1 + $0x140] sm:$0xff]
        %v2985 = vld [vmem:[%s1 + $0x148] sm:$0xff]
        %v2986 = vld [vmem:[%s1 + $0x150] sm:$0xff]
        %v2987 = vld [vmem:[%s1 + $0x158] sm:$0xff]
        %v2988 = vld [vmem:[%s1 + $0x160] sm:$0xff]
        %v2989 = vld [vmem:[%s1 + $0x168] sm:$0xff]
        %v2990 = vld [vmem:[%s1 + $0x170] sm:$0xff]
        %v2991 = vld [vmem:[%s1 + $0x178] sm:$0xff]
        %v2992 = vld [vmem:[%s1 + $0x180] sm:$0xff]
        %v2993 = vld [vmem:[%s1 + $0x188] sm:$0xff]
        %v2994 = vld [vmem:[%s1 + $0x190] sm:$0xff]
        %v2995 = vld [vmem:[%s1 + $0x198] sm:$0xff]
        %v2996 = vld [vmem:[%s1 + $0x1a0] sm:$0xff]
        %v2997 = vld [vmem:[%s1 + $0x1a8] sm:$0xff]
        %v2998 = vld [vmem:[%s1 + $0x1b0] sm:$0xff]
        %v2999 = vld [vmem:[%s1 + $0x1b8] sm:$0xff]
        %v3000 = vld [vmem:[%s2] sm:$0x1]
        %v3002 = vlaneseq
        %v3003 = vshrl.u32 %v3002, 7
        %v3004 = vsub.s32 0, %v3003
        %v3005 = vrot.slane %v3000, %v3004
        %v3008 = vsel %vm2847, %v2431, 0
        %v3011 = vsel %vm2847, %v2432, 0
        %v3014 = vsel %vm2847, %v2433, 0
        %v3017 = vsel %vm2847, %v2434, 0
        %v3020 = vsel %vm2847, %v2435, 0
        %v3023 = vsel %vm2847, %v2436, 0
        %v3026 = vsel %vm2847, %v2437, 0
        %v3029 = vsel %vm2847, %v2438, 0
        %v3032 = vsel %vm2847, %v2439, 0
        %v3035 = vsel %vm2847, %v2440, 0
        %v3038 = vsel %vm2847, %v2441, 0
        %v3041 = vsel %vm2847, %v2442, 0
        %v3044 = vsel %vm2847, %v2443, 0
        %v3047 = vsel %vm2847, %v2444, 0
        %v3050 = vsel %vm2847, %v2445, 0
        %v3053 = vsel %vm2847, %v2446, 0
        %v3056 = vsel %vm2847, %v2447, 0
        %v3059 = vsel %vm2847, %v2448, 0
        %v3062 = vsel %vm2847, %v2449, 0
        %v3065 = vsel %vm2847, %v2450, 0
        %v3068 = vsel %vm2847, %v2451, 0
        %v3071 = vsel %vm2847, %v2452, 0
        %v3074 = vsel %vm2847, %v2453, 0
        %v3077 = vsel %vm2847, %v2454, 0
        %v3080 = vsel %vm2847, %v2455, 0
        %v3083 = vsel %vm2847, %v2456, 0
        %v3086 = vsel %vm2847, %v2457, 0
        %v3089 = vsel %vm2847, %v2458, 0
        %v3092 = vsel %vm2847, %v2459, 0
        %v3095 = vsel %vm2847, %v2460, 0
        %v3098 = vsel %vm2847, %v2461, 0
        %v3101 = vsel %vm2847, %v2462, 0
        %3103 = vmatprep.subr.mxu0 0.0
        %3104 = vmatpush1.msra.mxu0 %v2959
        %3105 = vmatprep.subr.mxu0 0.0
        %3106 = vmatpush1.msra.mxu0 %v2958
        %3107 = vmatprep.subr.mxu0 0.0
        %3108 = vmatpush1.msra.mxu0 %v2957
        %3109 = vmatprep.subr.mxu0 0.0
        %3110 = vmatpush1.msra.mxu0 %v2956
        %3111 = vmatprep.subr.mxu0 0.0
        %3112 = vmatpush1.msra.mxu0 %v2955
        %3113 = vmatprep.subr.mxu0 0.0
        %3114 = vmatpush1.msra.mxu0 %v2954
        %3115 = vmatprep.subr.mxu0 0.0
        %3116 = vmatpush1.msra.mxu0 %v2953
        %3117 = vmatprep.subr.mxu0 0.0
        %3118 = vmatpush1.msra.mxu0 %v2952
        %3119 = vmatprep.subr.mxu0 0.0
        %3120 = vmatpush1.msra.mxu0 %v2951
        %3121 = vmatprep.subr.mxu0 0.0
        %3122 = vmatpush1.msra.mxu0 %v2950
        %3123 = vmatprep.subr.mxu0 0.0
        %3124 = vmatpush1.msra.mxu0 %v2949
        %3125 = vmatprep.subr.mxu0 0.0
        %3126 = vmatpush1.msra.mxu0 %v2948
        %3127 = vmatprep.subr.mxu0 0.0
        %3128 = vmatpush1.msra.mxu0 %v2947
        %3129 = vmatprep.subr.mxu0 0.0
        %3130 = vmatpush1.msra.mxu0 %v2946
        %3131 = vmatprep.subr.mxu0 0.0
        %3132 = vmatpush1.msra.mxu0 %v2945
        %3133 = vmatprep.subr.mxu0 0.0
        %3134 = vmatpush1.msra.mxu0 %v2944
        %3135 = vmatprep.subr.mxu0 0.0
        %3136 = vmatpush2.msra.mxu0 %v2975
        %3137 = vmatprep.subr.mxu0 0.0
        %3138 = vmatpush2.msra.mxu0 %v2974
        %3139 = vmatprep.subr.mxu0 0.0
        %3140 = vmatpush2.msra.mxu0 %v2973
        %3141 = vmatprep.subr.mxu0 0.0
        %3142 = vmatpush2.msra.mxu0 %v2972
        %3143 = vmatprep.subr.mxu0 0.0
        %3144 = vmatpush2.msra.mxu0 %v2971
        %3145 = vmatprep.subr.mxu0 0.0
        %3146 = vmatpush2.msra.mxu0 %v2970
        %3147 = vmatprep.subr.mxu0 0.0
        %3148 = vmatpush2.msra.mxu0 %v2969
        %3149 = vmatprep.subr.mxu0 0.0
        %3150 = vmatpush2.msra.mxu0 %v2968
        %3151 = vmatprep.subr.mxu0 0.0
        %3152 = vmatpush2.msra.mxu0 %v2967
        %3153 = vmatprep.subr.mxu0 0.0
        %3154 = vmatpush2.msra.mxu0 %v2966
        %3155 = vmatprep.subr.mxu0 0.0
        %3156 = vmatpush2.msra.mxu0 %v2965
        %3157 = vmatprep.subr.mxu0 0.0
        %3158 = vmatpush2.msra.mxu0 %v2964
        %3159 = vmatprep.subr.mxu0 0.0
        %3160 = vmatpush2.msra.mxu0 %v2963
        %3161 = vmatprep.subr.mxu0 0.0
        %3162 = vmatpush2.msra.mxu0 %v2962
        %3163 = vmatprep.subr.mxu0 0.0
        %3164 = vmatpush2.msra.mxu0 %v2961
        %3165 = vmatprep.subr.mxu0 0.0
        %3166 = vmatpush2.msra.mxu0 %v2960
        %3167 = vmatprep.mubr.f32.mxu0 %v2880
        %3168 = vmatmul.mubr.f32.gmra.mxu0 %v2848
        %v3169 = vpop.f32.mrf.mxu0
        %v3170 = vadd.f32 %v3005, %v3169
        %v3171 = vpop.f32.mrf.mxu0
        %3172 = vmatprep.mubr.f32.mxu0 %v2881
        %3173 = vmatmul.mubr.f32.gmra.mxu0 %v2849
        %v3174 = vpop.f32.mrf.mxu0
        %v3175 = vadd.f32 %v3005, %v3174
        %v3176 = vpop.f32.mrf.mxu0
        %3177 = vmatprep.mubr.f32.mxu0 %v2882
        %3178 = vmatmul.mubr.f32.gmra.mxu0 %v2850
        %v3179 = vpop.f32.mrf.mxu0
        %v3180 = vadd.f32 %v3005, %v3179
        %v3181 = vpop.f32.mrf.mxu0
        %3182 = vmatprep.mubr.f32.mxu0 %v2883
        %3183 = vmatmul.mubr.f32.gmra.mxu0 %v2851
        %v3184 = vpop.f32.mrf.mxu0
        %v3185 = vadd.f32 %v3005, %v3184
        %v3186 = vpop.f32.mrf.mxu0
        %3187 = vmatprep.mubr.f32.mxu0 %v2884
        %3188 = vmatmul.mubr.f32.gmra.mxu0 %v2852
        %v3189 = vpop.f32.mrf.mxu0
        %v3190 = vadd.f32 %v3005, %v3189
        %v3191 = vpop.f32.mrf.mxu0
        %3192 = vmatprep.mubr.f32.mxu0 %v2885
        %3193 = vmatmul.mubr.f32.gmra.mxu0 %v2853
        %v3194 = vpop.f32.mrf.mxu0
        %v3195 = vadd.f32 %v3005, %v3194
        %v3196 = vpop.f32.mrf.mxu0
        %3197 = vmatprep.mubr.f32.mxu0 %v2886
        %3198 = vmatmul.mubr.f32.gmra.mxu0 %v2854
        %v3199 = vpop.f32.mrf.mxu0
        %v3200 = vadd.f32 %v3005, %v3199
        %v3201 = vpop.f32.mrf.mxu0
        %3202 = vmatprep.mubr.f32.mxu0 %v2887
        %3203 = vmatmul.mubr.f32.gmra.mxu0 %v2855
        %v3204 = vpop.f32.mrf.mxu0
        %v3205 = vadd.f32 %v3005, %v3204
        %v3206 = vpop.f32.mrf.mxu0
        %3207 = vmatprep.mubr.f32.mxu0 %v2888
        %3208 = vmatmul.mubr.f32.gmra.mxu0 %v2856
        %v3209 = vpop.f32.mrf.mxu0
        %v3210 = vadd.f32 %v3005, %v3209
        %v3211 = vpop.f32.mrf.mxu0
        %3212 = vmatprep.mubr.f32.mxu0 %v2889
        %3213 = vmatmul.mubr.f32.gmra.mxu0 %v2857
        %v3214 = vpop.f32.mrf.mxu0
        %v3215 = vadd.f32 %v3005, %v3214
        %v3216 = vpop.f32.mrf.mxu0
        %3217 = vmatprep.mubr.f32.mxu0 %v2890
        %3218 = vmatmul.mubr.f32.gmra.mxu0 %v2858
        %v3219 = vpop.f32.mrf.mxu0
        %v3220 = vadd.f32 %v3005, %v3219
        %v3221 = vpop.f32.mrf.mxu0
        %3222 = vmatprep.mubr.f32.mxu0 %v2891
        %3223 = vmatmul.mubr.f32.gmra.mxu0 %v2859
        %v3224 = vpop.f32.mrf.mxu0
        %v3225 = vadd.f32 %v3005, %v3224
        %v3226 = vpop.f32.mrf.mxu0
        %3227 = vmatprep.mubr.f32.mxu0 %v2892
        %3228 = vmatmul.mubr.f32.gmra.mxu0 %v2860
        %v3229 = vpop.f32.mrf.mxu0
        %v3230 = vadd.f32 %v3005, %v3229
        %v3231 = vpop.f32.mrf.mxu0
        %3232 = vmatprep.mubr.f32.mxu0 %v2893
        %3233 = vmatmul.mubr.f32.gmra.mxu0 %v2861
        %v3234 = vpop.f32.mrf.mxu0
        %v3235 = vadd.f32 %v3005, %v3234
        %v3236 = vpop.f32.mrf.mxu0
        %3237 = vmatprep.mubr.f32.mxu0 %v2894
        %3238 = vmatmul.mubr.f32.gmra.mxu0 %v2862
        %v3239 = vpop.f32.mrf.mxu0
        %v3240 = vadd.f32 %v3005, %v3239
        %v3241 = vpop.f32.mrf.mxu0
        %3242 = vmatprep.mubr.f32.mxu0 %v2895
        %3243 = vmatmul.mubr.f32.gmra.mxu0 %v2863
        %v3244 = vpop.f32.mrf.mxu0
        %v3245 = vadd.f32 %v3005, %v3244
        %v3246 = vpop.f32.mrf.mxu0
        %3247 = vmatprep.mubr.f32.mxu0 %v2896
        %3248 = vmatmul.mubr.f32.gmra.mxu0 %v2864
        %v3249 = vpop.f32.mrf.mxu0
        %v3250 = vadd.f32 %v3005, %v3249
        %v3251 = vpop.f32.mrf.mxu0
        %3252 = vmatprep.mubr.f32.mxu0 %v2897
        %3253 = vmatmul.mubr.f32.gmra.mxu0 %v2865
        %v3254 = vpop.f32.mrf.mxu0
        %v3255 = vadd.f32 %v3005, %v3254
        %v3256 = vpop.f32.mrf.mxu0
        %3257 = vmatprep.mubr.f32.mxu0 %v2898
        %3258 = vmatmul.mubr.f32.gmra.mxu0 %v2866
        %v3259 = vpop.f32.mrf.mxu0
        %v3260 = vadd.f32 %v3005, %v3259
        %v3261 = vpop.f32.mrf.mxu0
        %3262 = vmatprep.mubr.f32.mxu0 %v2899
        %3263 = vmatmul.mubr.f32.gmra.mxu0 %v2867
        %v3264 = vpop.f32.mrf.mxu0
        %v3265 = vadd.f32 %v3005, %v3264
        %v3266 = vpop.f32.mrf.mxu0
        %3267 = vmatprep.mubr.f32.mxu0 %v2900
        %3268 = vmatmul.mubr.f32.gmra.mxu0 %v2868
        %v3269 = vpop.f32.mrf.mxu0
        %v3270 = vadd.f32 %v3005, %v3269
        %v3271 = vpop.f32.mrf.mxu0
        %3272 = vmatprep.mubr.f32.mxu0 %v2901
        %3273 = vmatmul.mubr.f32.gmra.mxu0 %v2869
        %v3274 = vpop.f32.mrf.mxu0
        %v3275 = vadd.f32 %v3005, %v3274
        %v3276 = vpop.f32.mrf.mxu0
        %3277 = vmatprep.mubr.f32.mxu0 %v2902
        %3278 = vmatmul.mubr.f32.gmra.mxu0 %v2870
        %v3279 = vpop.f32.mrf.mxu0
        %v3280 = vadd.f32 %v3005, %v3279
        %v3281 = vpop.f32.mrf.mxu0
        %3282 = vmatprep.mubr.f32.mxu0 %v2903
        %3283 = vmatmul.mubr.f32.gmra.mxu0 %v2871
        %v3284 = vpop.f32.mrf.mxu0
        %v3285 = vadd.f32 %v3005, %v3284
        %v3286 = vpop.f32.mrf.mxu0
        %3287 = vmatprep.mubr.f32.mxu0 %v2904
        %3288 = vmatmul.mubr.f32.gmra.mxu0 %v2872
        %v3289 = vpop.f32.mrf.mxu0
        %v3290 = vadd.f32 %v3005, %v3289
        %v3291 = vpop.f32.mrf.mxu0
        %3292 = vmatprep.mubr.f32.mxu0 %v2905
        %3293 = vmatmul.mubr.f32.gmra.mxu0 %v2873
        %v3294 = vpop.f32.mrf.mxu0
        %v3295 = vadd.f32 %v3005, %v3294
        %v3296 = vpop.f32.mrf.mxu0
        %3297 = vmatprep.mubr.f32.mxu0 %v2906
        %3298 = vmatmul.mubr.f32.gmra.mxu0 %v2874
        %v3299 = vpop.f32.mrf.mxu0
        %v3300 = vadd.f32 %v3005, %v3299
        %v3301 = vpop.f32.mrf.mxu0
        %3302 = vmatprep.mubr.f32.mxu0 %v2907
        %3303 = vmatmul.mubr.f32.gmra.mxu0 %v2875
        %v3304 = vpop.f32.mrf.mxu0
        %v3305 = vadd.f32 %v3005, %v3304
        %v3306 = vpop.f32.mrf.mxu0
        %3307 = vmatprep.mubr.f32.mxu0 %v2908
        %3308 = vmatmul.mubr.f32.gmra.mxu0 %v2876
        %v3309 = vpop.f32.mrf.mxu0
        %v3310 = vadd.f32 %v3005, %v3309
        %v3311 = vpop.f32.mrf.mxu0
        %3312 = vmatprep.mubr.f32.mxu0 %v2909
        %3313 = vmatmul.mubr.f32.gmra.mxu0 %v2877
        %v3314 = vpop.f32.mrf.mxu0
        %v3315 = vadd.f32 %v3005, %v3314
        %v3316 = vpop.f32.mrf.mxu0
        %3317 = vmatprep.mubr.f32.mxu0 %v2910
        %3318 = vmatmul.mubr.f32.gmra.mxu0 %v2878
        %v3319 = vpop.f32.mrf.mxu0
        %v3320 = vadd.f32 %v3005, %v3319
        %v3321 = vpop.f32.mrf.mxu0
        %3322 = vmatprep.mubr.f32.mxu0 %v2911
        %3323 = vmatmul.mubr.f32.gmra.mxu0 %v2879
        %v3324 = vpop.f32.mrf.mxu0
        %v3325 = vadd.f32 %v3005, %v3324
        %v3326 = vpop.f32.mrf.mxu0
        %3327 = vdwg.mxu0
        %3328 = vmatprep.subr.mxu0 0.0
        %3329 = vmatpush1.msra.mxu0 %v2991
        %3330 = vmatprep.subr.mxu0 0.0
        %3331 = vmatpush1.msra.mxu0 %v2990
        %3332 = vmatprep.subr.mxu0 0.0
        %3333 = vmatpush1.msra.mxu0 %v2989
        %3334 = vmatprep.subr.mxu0 0.0
        %3335 = vmatpush1.msra.mxu0 %v2988
        %3336 = vmatprep.subr.mxu0 0.0
        %3337 = vmatpush1.msra.mxu0 %v2987
        %3338 = vmatprep.subr.mxu0 0.0
        %3339 = vmatpush1.msra.mxu0 %v2986
        %3340 = vmatprep.subr.mxu0 0.0
        %3341 = vmatpush1.msra.mxu0 %v2985
        %3342 = vmatprep.subr.mxu0 0.0
        %3343 = vmatpush1.msra.mxu0 %v2984
        %3344 = vmatprep.subr.mxu0 0.0
        %3345 = vmatpush1.msra.mxu0 %v2983
        %3346 = vmatprep.subr.mxu0 0.0
        %3347 = vmatpush1.msra.mxu0 %v2982
        %3348 = vmatprep.subr.mxu0 0.0
        %3349 = vmatpush1.msra.mxu0 %v2981
        %3350 = vmatprep.subr.mxu0 0.0
        %3351 = vmatpush1.msra.mxu0 %v2980
        %3352 = vmatprep.subr.mxu0 0.0
        %3353 = vmatpush1.msra.mxu0 %v2979
        %3354 = vmatprep.subr.mxu0 0.0
        %3355 = vmatpush1.msra.mxu0 %v2978
        %3356 = vmatprep.subr.mxu0 0.0
        %3357 = vmatpush1.msra.mxu0 %v2977
        %3358 = vmatprep.subr.mxu0 0.0
        %3359 = vmatpush1.msra.mxu0 %v2976
        %3360 = vmatprep.subr.mxu0 0.0
        %3361 = vmatpush2.msra.mxu0 0.0
        %3362 = vmatprep.subr.mxu0 0.0
        %3363 = vmatpush2.msra.mxu0 0.0
        %3364 = vmatprep.subr.mxu0 0.0
        %3365 = vmatpush2.msra.mxu0 0.0
        %3366 = vmatprep.subr.mxu0 0.0
        %3367 = vmatpush2.msra.mxu0 0.0
        %3368 = vmatprep.subr.mxu0 0.0
        %3369 = vmatpush2.msra.mxu0 0.0
        %3370 = vmatprep.subr.mxu0 0.0
        %3371 = vmatpush2.msra.mxu0 0.0
        %3372 = vmatprep.subr.mxu0 0.0
        %3373 = vmatpush2.msra.mxu0 0.0
        %3374 = vmatprep.subr.mxu0 0.0
        %3375 = vmatpush2.msra.mxu0 0.0
        %3376 = vmatprep.subr.mxu0 0.0
        %3377 = vmatpush2.msra.mxu0 %v2999
        %3378 = vmatprep.subr.mxu0 0.0
        %3379 = vmatpush2.msra.mxu0 %v2998
        %3380 = vmatprep.subr.mxu0 0.0
        %3381 = vmatpush2.msra.mxu0 %v2997
        %3382 = vmatprep.subr.mxu0 0.0
        %3383 = vmatpush2.msra.mxu0 %v2996
        %3384 = vmatprep.subr.mxu0 0.0
        %3385 = vmatpush2.msra.mxu0 %v2995
        %3386 = vmatprep.subr.mxu0 0.0
        %3387 = vmatpush2.msra.mxu0 %v2994
        %3388 = vmatprep.subr.mxu0 0.0
        %3389 = vmatpush2.msra.mxu0 %v2993
        %3390 = vmatprep.subr.mxu0 0.0
        %3391 = vmatpush2.msra.mxu0 %v2992
        %3392 = vmatprep.mubr.f32.mxu0 %v3008
        %3393 = vmatmul.mubr.f32.gmra.mxu0 %v2912
        %v3394 = vpop.f32.mrf.mxu0
        %v3395 = vadd.f32 %v3170, %v3394
        %v3396 = vpop.f32.mrf.mxu0
        %3397 = vmatprep.mubr.f32.mxu0 %v3011
        %3398 = vmatmul.mubr.f32.gmra.mxu0 %v2913
        %v3399 = vpop.f32.mrf.mxu0
        %v3400 = vadd.f32 %v3175, %v3399
        %v3401 = vpop.f32.mrf.mxu0
        %3402 = vmatprep.mubr.f32.mxu0 %v3014
        %3403 = vmatmul.mubr.f32.gmra.mxu0 %v2914
        %v3404 = vpop.f32.mrf.mxu0
        %v3405 = vadd.f32 %v3180, %v3404
        %v3406 = vpop.f32.mrf.mxu0
        %3407 = vmatprep.mubr.f32.mxu0 %v3017
        %3408 = vmatmul.mubr.f32.gmra.mxu0 %v2915
        %v3409 = vpop.f32.mrf.mxu0
        %v3410 = vadd.f32 %v3185, %v3409
        %v3411 = vpop.f32.mrf.mxu0
        %3412 = vmatprep.mubr.f32.mxu0 %v3020
        %3413 = vmatmul.mubr.f32.gmra.mxu0 %v2916
        %v3414 = vpop.f32.mrf.mxu0
        %v3415 = vadd.f32 %v3190, %v3414
        %v3416 = vpop.f32.mrf.mxu0
        %3417 = vmatprep.mubr.f32.mxu0 %v3023
        %3418 = vmatmul.mubr.f32.gmra.mxu0 %v2917
        %v3419 = vpop.f32.mrf.mxu0
        %v3420 = vadd.f32 %v3195, %v3419
        %v3421 = vpop.f32.mrf.mxu0
        %3422 = vmatprep.mubr.f32.mxu0 %v3026
        %3423 = vmatmul.mubr.f32.gmra.mxu0 %v2918
        %v3424 = vpop.f32.mrf.mxu0
        %v3425 = vadd.f32 %v3200, %v3424
        %v3426 = vpop.f32.mrf.mxu0
        %3427 = vmatprep.mubr.f32.mxu0 %v3029
        %3428 = vmatmul.mubr.f32.gmra.mxu0 %v2919
        %v3429 = vpop.f32.mrf.mxu0
        %v3430 = vadd.f32 %v3205, %v3429
        %v3431 = vpop.f32.mrf.mxu0
        %3432 = vmatprep.mubr.f32.mxu0 %v3032
        %3433 = vmatmul.mubr.f32.gmra.mxu0 %v2920
        %v3434 = vpop.f32.mrf.mxu0
        %v3435 = vadd.f32 %v3210, %v3434
        %v3436 = vpop.f32.mrf.mxu0
        %3437 = vmatprep.mubr.f32.mxu0 %v3035
        %3438 = vmatmul.mubr.f32.gmra.mxu0 %v2921
        %v3439 = vpop.f32.mrf.mxu0
        %v3440 = vadd.f32 %v3215, %v3439
        %v3441 = vpop.f32.mrf.mxu0
        %3442 = vmatprep.mubr.f32.mxu0 %v3038
        %3443 = vmatmul.mubr.f32.gmra.mxu0 %v2922
        %v3444 = vpop.f32.mrf.mxu0
        %v3445 = vadd.f32 %v3220, %v3444
        %v3446 = vpop.f32.mrf.mxu0
        %3447 = vmatprep.mubr.f32.mxu0 %v3041
        %3448 = vmatmul.mubr.f32.gmra.mxu0 %v2923
        %v3449 = vpop.f32.mrf.mxu0
        %v3450 = vadd.f32 %v3225, %v3449
        %v3451 = vpop.f32.mrf.mxu0
        %3452 = vmatprep.mubr.f32.mxu0 %v3044
        %3453 = vmatmul.mubr.f32.gmra.mxu0 %v2924
        %v3454 = vpop.f32.mrf.mxu0
        %v3455 = vadd.f32 %v3230, %v3454
        %v3456 = vpop.f32.mrf.mxu0
        %3457 = vmatprep.mubr.f32.mxu0 %v3047
        %3458 = vmatmul.mubr.f32.gmra.mxu0 %v2925
        %v3459 = vpop.f32.mrf.mxu0
        %v3460 = vadd.f32 %v3235, %v3459
        %v3461 = vpop.f32.mrf.mxu0
        %3462 = vmatprep.mubr.f32.mxu0 %v3050
        %3463 = vmatmul.mubr.f32.gmra.mxu0 %v2926
        %v3464 = vpop.f32.mrf.mxu0
        %v3465 = vadd.f32 %v3240, %v3464
        %v3466 = vpop.f32.mrf.mxu0
        %3467 = vmatprep.mubr.f32.mxu0 %v3053
        %3468 = vmatmul.mubr.f32.gmra.mxu0 %v2927
        %v3469 = vpop.f32.mrf.mxu0
        %v3470 = vadd.f32 %v3245, %v3469
        %v3471 = vpop.f32.mrf.mxu0
        %3472 = vmatprep.mubr.f32.mxu0 %v3056
        %3473 = vmatmul.mubr.f32.gmra.mxu0 %v2928
        %v3474 = vpop.f32.mrf.mxu0
        %v3475 = vadd.f32 %v3250, %v3474
        %v3476 = vpop.f32.mrf.mxu0
        %3477 = vmatprep.mubr.f32.mxu0 %v3059
        %3478 = vmatmul.mubr.f32.gmra.mxu0 %v2929
        %v3479 = vpop.f32.mrf.mxu0
        %v3480 = vadd.f32 %v3255, %v3479
        %v3481 = vpop.f32.mrf.mxu0
        %3482 = vmatprep.mubr.f32.mxu0 %v3062
        %3483 = vmatmul.mubr.f32.gmra.mxu0 %v2930
        %v3484 = vpop.f32.mrf.mxu0
        %v3485 = vadd.f32 %v3260, %v3484
        %v3486 = vpop.f32.mrf.mxu0
        %3487 = vmatprep.mubr.f32.mxu0 %v3065
        %3488 = vmatmul.mubr.f32.gmra.mxu0 %v2931
        %v3489 = vpop.f32.mrf.mxu0
        %v3490 = vadd.f32 %v3265, %v3489
        %v3491 = vpop.f32.mrf.mxu0
        %3492 = vmatprep.mubr.f32.mxu0 %v3068
        %3493 = vmatmul.mubr.f32.gmra.mxu0 %v2932
        %v3494 = vpop.f32.mrf.mxu0
        %v3495 = vadd.f32 %v3270, %v3494
        %v3496 = vpop.f32.mrf.mxu0
        %3497 = vmatprep.mubr.f32.mxu0 %v3071
        %3498 = vmatmul.mubr.f32.gmra.mxu0 %v2933
        %v3499 = vpop.f32.mrf.mxu0
        %v3500 = vadd.f32 %v3275, %v3499
        %v3501 = vpop.f32.mrf.mxu0
        %3502 = vmatprep.mubr.f32.mxu0 %v3074
        %3503 = vmatmul.mubr.f32.gmra.mxu0 %v2934
        %v3504 = vpop.f32.mrf.mxu0
        %v3505 = vadd.f32 %v3280, %v3504
        %v3506 = vpop.f32.mrf.mxu0
        %3507 = vmatprep.mubr.f32.mxu0 %v3077
        %3508 = vmatmul.mubr.f32.gmra.mxu0 %v2935
        %v3509 = vpop.f32.mrf.mxu0
        %v3510 = vadd.f32 %v3285, %v3509
        %v3511 = vpop.f32.mrf.mxu0
        %3512 = vmatprep.mubr.f32.mxu0 %v3080
        %3513 = vmatmul.mubr.f32.gmra.mxu0 %v2936
        %v3514 = vpop.f32.mrf.mxu0
        %v3515 = vadd.f32 %v3290, %v3514
        %v3516 = vpop.f32.mrf.mxu0
        %3517 = vmatprep.mubr.f32.mxu0 %v3083
        %3518 = vmatmul.mubr.f32.gmra.mxu0 %v2937
        %v3519 = vpop.f32.mrf.mxu0
        %v3520 = vadd.f32 %v3295, %v3519
        %v3521 = vpop.f32.mrf.mxu0
        %3522 = vmatprep.mubr.f32.mxu0 %v3086
        %3523 = vmatmul.mubr.f32.gmra.mxu0 %v2938
        %v3524 = vpop.f32.mrf.mxu0
        %v3525 = vadd.f32 %v3300, %v3524
        %v3526 = vpop.f32.mrf.mxu0
        %3527 = vmatprep.mubr.f32.mxu0 %v3089
        %3528 = vmatmul.mubr.f32.gmra.mxu0 %v2939
        %v3529 = vpop.f32.mrf.mxu0
        %v3530 = vadd.f32 %v3305, %v3529
        %v3531 = vpop.f32.mrf.mxu0
        %3532 = vmatprep.mubr.f32.mxu0 %v3092
        %3533 = vmatmul.mubr.f32.gmra.mxu0 %v2940
        %v3534 = vpop.f32.mrf.mxu0
        %v3535 = vadd.f32 %v3310, %v3534
        %v3536 = vpop.f32.mrf.mxu0
        %3537 = vmatprep.mubr.f32.mxu0 %v3095
        %3538 = vmatmul.mubr.f32.gmra.mxu0 %v2941
        %v3539 = vpop.f32.mrf.mxu0
        %v3540 = vadd.f32 %v3315, %v3539
        %v3541 = vpop.f32.mrf.mxu0
        %3542 = vmatprep.mubr.f32.mxu0 %v3098
        %3543 = vmatmul.mubr.f32.gmra.mxu0 %v2942
        %v3544 = vpop.f32.mrf.mxu0
        %v3545 = vadd.f32 %v3320, %v3544
        %v3546 = vpop.f32.mrf.mxu0
        %3547 = vmatprep.mubr.f32.mxu0 %v3101
        %3548 = vmatmul.mubr.f32.gmra.mxu0 %v2943
        %v3549 = vpop.f32.mrf.mxu0
        %v3550 = vadd.f32 %v3325, %v3549
        %v3551 = vpop.f32.mrf.mxu0
        %3552 = vdwg.mxu0
        %vm3553 = vcmp.gt.f32.partialorder %v3395, 0.0
        %vm3554 = vcmp.gt.f32.partialorder %v3400, 0.0
        %vm3555 = vcmp.gt.f32.partialorder %v3405, 0.0
        %vm3556 = vcmp.gt.f32.partialorder %v3410, 0.0
        %vm3557 = vcmp.gt.f32.partialorder %v3415, 0.0
        %vm3558 = vcmp.gt.f32.partialorder %v3420, 0.0
        %vm3559 = vcmp.gt.f32.partialorder %v3425, 0.0
        %vm3560 = vcmp.gt.f32.partialorder %v3430, 0.0
        %vm3561 = vcmp.gt.f32.partialorder %v3435, 0.0
        %vm3562 = vcmp.gt.f32.partialorder %v3440, 0.0
        %vm3563 = vcmp.gt.f32.partialorder %v3445, 0.0
        %vm3564 = vcmp.gt.f32.partialorder %v3450, 0.0
        %vm3565 = vcmp.gt.f32.partialorder %v3455, 0.0
        %vm3566 = vcmp.gt.f32.partialorder %v3460, 0.0
        %vm3567 = vcmp.gt.f32.partialorder %v3465, 0.0
        %vm3568 = vcmp.gt.f32.partialorder %v3470, 0.0
        %vm3569 = vcmp.gt.f32.partialorder %v3475, 0.0
        %vm3570 = vcmp.gt.f32.partialorder %v3480, 0.0
        %vm3571 = vcmp.gt.f32.partialorder %v3485, 0.0
        %vm3572 = vcmp.gt.f32.partialorder %v3490, 0.0
        %vm3573 = vcmp.gt.f32.partialorder %v3495, 0.0
        %vm3574 = vcmp.gt.f32.partialorder %v3500, 0.0
        %vm3575 = vcmp.gt.f32.partialorder %v3505, 0.0
        %vm3576 = vcmp.gt.f32.partialorder %v3510, 0.0
        %vm3577 = vcmp.gt.f32.partialorder %v3515, 0.0
        %vm3578 = vcmp.gt.f32.partialorder %v3520, 0.0
        %vm3579 = vcmp.gt.f32.partialorder %v3525, 0.0
        %vm3580 = vcmp.gt.f32.partialorder %v3530, 0.0
        %vm3581 = vcmp.gt.f32.partialorder %v3535, 0.0
        %vm3582 = vcmp.gt.f32.partialorder %v3540, 0.0
        %vm3583 = vcmp.gt.f32.partialorder %v3545, 0.0
        %vm3584 = vcmp.gt.f32.partialorder %v3550, 0.0
        %v3585 = vmul.f32 %v3395, 0.3
        %v3586 = vmul.f32 %v3400, 0.3
        %v3587 = vmul.f32 %v3405, 0.3
        %v3588 = vmul.f32 %v3410, 0.3
        %v3589 = vmul.f32 %v3415, 0.3
        %v3590 = vmul.f32 %v3420, 0.3
        %v3591 = vmul.f32 %v3425, 0.3
        %v3592 = vmul.f32 %v3430, 0.3
        %v3593 = vmul.f32 %v3435, 0.3
        %v3594 = vmul.f32 %v3440, 0.3
        %v3595 = vmul.f32 %v3445, 0.3
        %v3596 = vmul.f32 %v3450, 0.3
        %v3597 = vmul.f32 %v3455, 0.3
        %v3598 = vmul.f32 %v3460, 0.3
        %v3599 = vmul.f32 %v3465, 0.3
        %v3600 = vmul.f32 %v3470, 0.3
        %v3601 = vmul.f32 %v3475, 0.3
        %v3602 = vmul.f32 %v3480, 0.3
        %v3603 = vmul.f32 %v3485, 0.3
        %v3604 = vmul.f32 %v3490, 0.3
        %v3605 = vmul.f32 %v3495, 0.3
        %v3606 = vmul.f32 %v3500, 0.3
        %v3607 = vmul.f32 %v3505, 0.3
        %v3608 = vmul.f32 %v3510, 0.3
        %v3609 = vmul.f32 %v3515, 0.3
        %v3610 = vmul.f32 %v3520, 0.3
        %v3611 = vmul.f32 %v3525, 0.3
        %v3612 = vmul.f32 %v3530, 0.3
        %v3613 = vmul.f32 %v3535, 0.3
        %v3614 = vmul.f32 %v3540, 0.3
        %v3615 = vmul.f32 %v3545, 0.3
        %v3616 = vmul.f32 %v3550, 0.3
        %v3617 = vsel %vm3553, %v3395, %v3585
        %v3618 = vsel %vm3554, %v3400, %v3586
        %v3619 = vsel %vm3555, %v3405, %v3587
        %v3620 = vsel %vm3556, %v3410, %v3588
        %v3621 = vsel %vm3557, %v3415, %v3589
        %v3622 = vsel %vm3558, %v3420, %v3590
        %v3623 = vsel %vm3559, %v3425, %v3591
        %v3624 = vsel %vm3560, %v3430, %v3592
        %v3625 = vsel %vm3561, %v3435, %v3593
        %v3626 = vsel %vm3562, %v3440, %v3594
        %v3627 = vsel %vm3563, %v3445, %v3595
        %v3628 = vsel %vm3564, %v3450, %v3596
        %v3629 = vsel %vm3565, %v3455, %v3597
        %v3630 = vsel %vm3566, %v3460, %v3598
        %v3631 = vsel %vm3567, %v3465, %v3599
        %v3632 = vsel %vm3568, %v3470, %v3600
        %v3633 = vsel %vm3569, %v3475, %v3601
        %v3634 = vsel %vm3570, %v3480, %v3602
        %v3635 = vsel %vm3571, %v3485, %v3603
        %v3636 = vsel %vm3572, %v3490, %v3604
        %v3637 = vsel %vm3573, %v3495, %v3605
        %v3638 = vsel %vm3574, %v3500, %v3606
        %v3639 = vsel %vm3575, %v3505, %v3607
        %v3640 = vsel %vm3576, %v3510, %v3608
        %v3641 = vsel %vm3577, %v3515, %v3609
        %v3642 = vsel %vm3578, %v3520, %v3610
        %v3643 = vsel %vm3579, %v3525, %v3611
        %v3644 = vsel %vm3580, %v3530, %v3612
        %v3645 = vsel %vm3581, %v3535, %v3613
        %v3646 = vsel %vm3582, %v3540, %v3614
        %v3647 = vsel %vm3583, %v3545, %v3615
        %v3648 = vsel %vm3584, %v3550, %v3616
        %v3649 = vrot.slane %v3617, 5
        %v3650 = vrot.slane %v3618, 5
        %v3651 = vrot.slane %v3619, 5
        %v3652 = vrot.slane %v3620, 5
        %v3653 = vrot.slane %v3621, 5
        %v3654 = vrot.slane %v3622, 5
        %v3655 = vrot.slane %v3623, 5
        %v3656 = vrot.slane %v3624, 5
        %v3657 = vrot.slane %v3625, 5
        %v3658 = vrot.slane %v3626, 5
        %v3659 = vrot.slane %v3627, 5
        %v3660 = vrot.slane %v3628, 5
        %v3661 = vrot.slane %v3629, 5
        %v3662 = vrot.slane %v3630, 5
        %v3663 = vrot.slane %v3631, 5
        %v3664 = vrot.slane %v3632, 5
        %v3665 = vrot.slane %v3633, 5
        %v3666 = vrot.slane %v3634, 5
        %v3667 = vrot.slane %v3635, 5
        %v3668 = vrot.slane %v3636, 5
        %v3669 = vrot.slane %v3637, 5
        %v3670 = vrot.slane %v3638, 5
        %v3671 = vrot.slane %v3639, 5
        %v3672 = vrot.slane %v3640, 5
        %v3673 = vrot.slane %v3641, 5
        %v3674 = vrot.slane %v3642, 5
        %v3675 = vrot.slane %v3643, 5
        %v3676 = vrot.slane %v3644, 5
        %v3677 = vrot.slane %v3645, 5
        %v3678 = vrot.slane %v3646, 5
        %v3679 = vrot.slane %v3647, 5
        %v3680 = vrot.slane %v3648, 5
        %v3681 = vsel %vm1529, %v3679, %v3680
        %v3682 = vsel %vm1529, %v3678, %v3679
        %v3683 = vsel %vm1529, %v3677, %v3678
        %v3684 = vsel %vm1529, %v3676, %v3677
        %v3685 = vsel %vm1529, %v3675, %v3676
        %v3686 = vsel %vm1529, %v3674, %v3675
        %v3687 = vsel %vm1529, %v3673, %v3674
        %v3688 = vsel %vm1529, %v3672, %v3673
        %v3689 = vsel %vm1529, %v3671, %v3672
        %v3690 = vsel %vm1529, %v3670, %v3671
        %v3691 = vsel %vm1529, %v3669, %v3670
        %v3692 = vsel %vm1529, %v3668, %v3669
        %v3693 = vsel %vm1529, %v3667, %v3668
        %v3694 = vsel %vm1529, %v3666, %v3667
        %v3695 = vsel %vm1529, %v3665, %v3666
        %v3696 = vsel %vm1529, %v3664, %v3665
        %v3697 = vsel %vm1529, %v3663, %v3664
        %v3698 = vsel %vm1529, %v3662, %v3663
        %v3699 = vsel %vm1529, %v3661, %v3662
        %v3700 = vsel %vm1529, %v3660, %v3661
        %v3701 = vsel %vm1529, %v3659, %v3660
        %v3702 = vsel %vm1529, %v3658, %v3659
        %v3703 = vsel %vm1529, %v3657, %v3658
        %v3704 = vsel %vm1529, %v3656, %v3657
        %v3705 = vsel %vm1529, %v3655, %v3656
        %v3706 = vsel %vm1529, %v3654, %v3655
        %v3707 = vsel %vm1529, %v3653, %v3654
        %v3708 = vsel %vm1529, %v3652, %v3653
        %v3709 = vsel %vm1529, %v3651, %v3652
        %v3710 = vsel %vm1529, %v3650, %v3651
        %v3711 = vsel %vm1529, %v3649, %v3650
        %v3712 = vsel %vm1529, %v3680, %v3649
        %v3713 = vsel %vm1594, %v3712, 0.0
        %v3714 = vsel %vm1595, %v3711, 0.0
        %v3715 = vsel %vm1596, %v3710, 0.0
        %v3716 = vsel %vm1597, %v3709, 0.0
        %v3717 = vsel %vm1598, %v3708, 0.0
        %v3718 = vsel %vm1599, %v3707, 0.0
        %v3719 = vsel %vm1600, %v3706, 0.0
        %v3720 = vsel %vm1601, %v3705, 0.0
        %v3721 = vsel %vm1602, %v3704, 0.0
        %v3722 = vsel %vm1603, %v3703, 0.0
        %v3723 = vsel %vm1604, %v3702, 0.0
        %v3724 = vsel %vm1605, %v3701, 0.0
        %v3725 = vsel %vm1606, %v3700, 0.0
        %v3726 = vsel %vm1607, %v3699, 0.0
        %v3727 = vsel %vm1608, %v3698, 0.0
        %v3728 = vsel %vm1609, %v3697, 0.0
        %v3729 = vsel %vm1610, %v3696, 0.0
        %v3730 = vsel %vm1611, %v3695, 0.0
        %v3731 = vsel %vm1612, %v3694, 0.0
        %v3732 = vsel %vm1613, %v3693, 0.0
        %v3733 = vsel %vm1614, %v3692, 0.0
        %v3734 = vsel %vm1615, %v3691, 0.0
        %v3735 = vsel %vm1616, %v3690, 0.0
        %v3736 = vsel %vm1617, %v3689, 0.0
        %v3737 = vsel %vm1618, %v3688, 0.0
        %v3738 = vsel %vm1619, %v3687, 0.0
        %v3739 = vsel %vm1620, %v3686, 0.0
        %v3740 = vsel %vm1621, %v3685, 0.0
        %v3741 = vsel %vm1622, %v3684, 0.0
        %v3742 = vsel %vm1623, %v3683, 0.0
        %v3743 = vsel %vm1624, %v3682, 0.0
        %v3744 = vsel %vm1625, %v3681, 0.0
        %v3745 = vrot.slane %v3617, 6
        %v3746 = vrot.slane %v3618, 6
        %v3747 = vrot.slane %v3619, 6
        %v3748 = vrot.slane %v3620, 6
        %v3749 = vrot.slane %v3621, 6
        %v3750 = vrot.slane %v3622, 6
        %v3751 = vrot.slane %v3623, 6
        %v3752 = vrot.slane %v3624, 6
        %v3753 = vrot.slane %v3625, 6
        %v3754 = vrot.slane %v3626, 6
        %v3755 = vrot.slane %v3627, 6
        %v3756 = vrot.slane %v3628, 6
        %v3757 = vrot.slane %v3629, 6
        %v3758 = vrot.slane %v3630, 6
        %v3759 = vrot.slane %v3631, 6
        %v3760 = vrot.slane %v3632, 6
        %v3761 = vrot.slane %v3633, 6
        %v3762 = vrot.slane %v3634, 6
        %v3763 = vrot.slane %v3635, 6
        %v3764 = vrot.slane %v3636, 6
        %v3765 = vrot.slane %v3637, 6
        %v3766 = vrot.slane %v3638, 6
        %v3767 = vrot.slane %v3639, 6
        %v3768 = vrot.slane %v3640, 6
        %v3769 = vrot.slane %v3641, 6
        %v3770 = vrot.slane %v3642, 6
        %v3771 = vrot.slane %v3643, 6
        %v3772 = vrot.slane %v3644, 6
        %v3773 = vrot.slane %v3645, 6
        %v3774 = vrot.slane %v3646, 6
        %v3775 = vrot.slane %v3647, 6
        %v3776 = vrot.slane %v3648, 6
        %v3777 = vsel %vm1690, %v3775, %v3776
        %v3778 = vsel %vm1690, %v3774, %v3775
        %v3779 = vsel %vm1690, %v3773, %v3774
        %v3780 = vsel %vm1690, %v3772, %v3773
        %v3781 = vsel %vm1690, %v3771, %v3772
        %v3782 = vsel %vm1690, %v3770, %v3771
        %v3783 = vsel %vm1690, %v3769, %v3770
        %v3784 = vsel %vm1690, %v3768, %v3769
        %v3785 = vsel %vm1690, %v3767, %v3768
        %v3786 = vsel %vm1690, %v3766, %v3767
        %v3787 = vsel %vm1690, %v3765, %v3766
        %v3788 = vsel %vm1690, %v3764, %v3765
        %v3789 = vsel %vm1690, %v3763, %v3764
        %v3790 = vsel %vm1690, %v3762, %v3763
        %v3791 = vsel %vm1690, %v3761, %v3762
        %v3792 = vsel %vm1690, %v3760, %v3761
        %v3793 = vsel %vm1690, %v3759, %v3760
        %v3794 = vsel %vm1690, %v3758, %v3759
        %v3795 = vsel %vm1690, %v3757, %v3758
        %v3796 = vsel %vm1690, %v3756, %v3757
        %v3797 = vsel %vm1690, %v3755, %v3756
        %v3798 = vsel %vm1690, %v3754, %v3755
        %v3799 = vsel %vm1690, %v3753, %v3754
        %v3800 = vsel %vm1690, %v3752, %v3753
        %v3801 = vsel %vm1690, %v3751, %v3752
        %v3802 = vsel %vm1690, %v3750, %v3751
        %v3803 = vsel %vm1690, %v3749, %v3750
        %v3804 = vsel %vm1690, %v3748, %v3749
        %v3805 = vsel %vm1690, %v3747, %v3748
        %v3806 = vsel %vm1690, %v3746, %v3747
        %v3807 = vsel %vm1690, %v3745, %v3746
        %v3808 = vsel %vm1690, %v3776, %v3745
        %v3809 = vsel %vm1755, %v3808, 0.0
        %v3810 = vsel %vm1756, %v3807, 0.0
        %v3811 = vsel %vm1757, %v3806, 0.0
        %v3812 = vsel %vm1758, %v3805, 0.0
        %v3813 = vsel %vm1759, %v3804, 0.0
        %v3814 = vsel %vm1760, %v3803, 0.0
        %v3815 = vsel %vm1761, %v3802, 0.0
        %v3816 = vsel %vm1762, %v3801, 0.0
        %v3817 = vsel %vm1763, %v3800, 0.0
        %v3818 = vsel %vm1764, %v3799, 0.0
        %v3819 = vsel %vm1765, %v3798, 0.0
        %v3820 = vsel %vm1766, %v3797, 0.0
        %v3821 = vsel %vm1767, %v3796, 0.0
        %v3822 = vsel %vm1768, %v3795, 0.0
        %v3823 = vsel %vm1769, %v3794, 0.0
        %v3824 = vsel %vm1770, %v3793, 0.0
        %v3825 = vsel %vm1771, %v3792, 0.0
        %v3826 = vsel %vm1772, %v3791, 0.0
        %v3827 = vsel %vm1773, %v3790, 0.0
        %v3828 = vsel %vm1774, %v3789, 0.0
        %v3829 = vsel %vm1775, %v3788, 0.0
        %v3830 = vsel %vm1776, %v3787, 0.0
        %v3831 = vsel %vm1777, %v3786, 0.0
        %v3832 = vsel %vm1778, %v3785, 0.0
        %v3833 = vsel %vm1779, %v3784, 0.0
        %v3834 = vsel %vm1780, %v3783, 0.0
        %v3835 = vsel %vm1781, %v3782, 0.0
        %v3836 = vsel %vm1782, %v3781, 0.0
        %v3837 = vsel %vm1783, %v3780, 0.0
        %v3838 = vsel %vm1784, %v3779, 0.0
        %v3839 = vsel %vm1785, %v3778, 0.0
        %v3840 = vsel %vm1786, %v3777, 0.0
        %v3841 = vrot.slane %v3617, 7
        %v3842 = vrot.slane %v3618, 7
        %v3843 = vrot.slane %v3619, 7
        %v3844 = vrot.slane %v3620, 7
        %v3845 = vrot.slane %v3621, 7
        %v3846 = vrot.slane %v3622, 7
        %v3847 = vrot.slane %v3623, 7
        %v3848 = vrot.slane %v3624, 7
        %v3849 = vrot.slane %v3625, 7
        %v3850 = vrot.slane %v3626, 7
        %v3851 = vrot.slane %v3627, 7
        %v3852 = vrot.slane %v3628, 7
        %v3853 = vrot.slane %v3629, 7
        %v3854 = vrot.slane %v3630, 7
        %v3855 = vrot.slane %v3631, 7
        %v3856 = vrot.slane %v3632, 7
        %v3857 = vrot.slane %v3633, 7
        %v3858 = vrot.slane %v3634, 7
        %v3859 = vrot.slane %v3635, 7
        %v3860 = vrot.slane %v3636, 7
        %v3861 = vrot.slane %v3637, 7
        %v3862 = vrot.slane %v3638, 7
        %v3863 = vrot.slane %v3639, 7
        %v3864 = vrot.slane %v3640, 7
        %v3865 = vrot.slane %v3641, 7
        %v3866 = vrot.slane %v3642, 7
        %v3867 = vrot.slane %v3643, 7
        %v3868 = vrot.slane %v3644, 7
        %v3869 = vrot.slane %v3645, 7
        %v3870 = vrot.slane %v3646, 7
        %v3871 = vrot.slane %v3647, 7
        %v3872 = vrot.slane %v3648, 7
        %v3873 = vsel %vm1851, %v3871, %v3872
        %v3874 = vsel %vm1851, %v3870, %v3871
        %v3875 = vsel %vm1851, %v3869, %v3870
        %v3876 = vsel %vm1851, %v3868, %v3869
        %v3877 = vsel %vm1851, %v3867, %v3868
        %v3878 = vsel %vm1851, %v3866, %v3867
        %v3879 = vsel %vm1851, %v3865, %v3866
        %v3880 = vsel %vm1851, %v3864, %v3865
        %v3881 = vsel %vm1851, %v3863, %v3864
        %v3882 = vsel %vm1851, %v3862, %v3863
        %v3883 = vsel %vm1851, %v3861, %v3862
        %v3884 = vsel %vm1851, %v3860, %v3861
        %v3885 = vsel %vm1851, %v3859, %v3860
        %v3886 = vsel %vm1851, %v3858, %v3859
        %v3887 = vsel %vm1851, %v3857, %v3858
        %v3888 = vsel %vm1851, %v3856, %v3857
        %v3889 = vsel %vm1851, %v3855, %v3856
        %v3890 = vsel %vm1851, %v3854, %v3855
        %v3891 = vsel %vm1851, %v3853, %v3854
        %v3892 = vsel %vm1851, %v3852, %v3853
        %v3893 = vsel %vm1851, %v3851, %v3852
        %v3894 = vsel %vm1851, %v3850, %v3851
        %v3895 = vsel %vm1851, %v3849, %v3850
        %v3896 = vsel %vm1851, %v3848, %v3849
        %v3897 = vsel %vm1851, %v3847, %v3848
        %v3898 = vsel %vm1851, %v3846, %v3847
        %v3899 = vsel %vm1851, %v3845, %v3846
        %v3900 = vsel %vm1851, %v3844, %v3845
        %v3901 = vsel %vm1851, %v3843, %v3844
        %v3902 = vsel %vm1851, %v3842, %v3843
        %v3903 = vsel %vm1851, %v3841, %v3842
        %v3904 = vsel %vm1851, %v3872, %v3841
        %v3905 = vsel %vm1916, %v3904, 0.0
        %v3906 = vsel %vm1917, %v3903, 0.0
        %v3907 = vsel %vm1918, %v3902, 0.0
        %v3908 = vsel %vm1919, %v3901, 0.0
        %v3909 = vsel %vm1920, %v3900, 0.0
        %v3910 = vsel %vm1921, %v3899, 0.0
        %v3911 = vsel %vm1922, %v3898, 0.0
        %v3912 = vsel %vm1923, %v3897, 0.0
        %v3913 = vsel %vm1924, %v3896, 0.0
        %v3914 = vsel %vm1925, %v3895, 0.0
        %v3915 = vsel %vm1926, %v3894, 0.0
        %v3916 = vsel %vm1927, %v3893, 0.0
        %v3917 = vsel %vm1928, %v3892, 0.0
        %v3918 = vsel %vm1929, %v3891, 0.0
        %v3919 = vsel %vm1930, %v3890, 0.0
        %v3920 = vsel %vm1931, %v3889, 0.0
        %v3921 = vsel %vm1932, %v3888, 0.0
        %v3922 = vsel %vm1933, %v3887, 0.0
        %v3923 = vsel %vm1934, %v3886, 0.0
        %v3924 = vsel %vm1935, %v3885, 0.0
        %v3925 = vsel %vm1936, %v3884, 0.0
        %v3926 = vsel %vm1937, %v3883, 0.0
        %v3927 = vsel %vm1938, %v3882, 0.0
        %v3928 = vsel %vm1939, %v3881, 0.0
        %v3929 = vsel %vm1940, %v3880, 0.0
        %v3930 = vsel %vm1941, %v3879, 0.0
        %v3931 = vsel %vm1942, %v3878, 0.0
        %v3932 = vsel %vm1943, %v3877, 0.0
        %v3933 = vsel %vm1944, %v3876, 0.0
        %v3934 = vsel %vm1945, %v3875, 0.0
        %v3935 = vsel %vm1946, %v3874, 0.0
        %v3936 = vsel %vm1947, %v3873, 0.0
        %v3937 = vrot.slane %v3617, 1
        %v3938 = vrot.slane %v3618, 1
        %v3939 = vrot.slane %v3619, 1
        %v3940 = vrot.slane %v3620, 1
        %v3941 = vrot.slane %v3621, 1
        %v3942 = vrot.slane %v3622, 1
        %v3943 = vrot.slane %v3623, 1
        %v3944 = vrot.slane %v3624, 1
        %v3945 = vrot.slane %v3625, 1
        %v3946 = vrot.slane %v3626, 1
        %v3947 = vrot.slane %v3627, 1
        %v3948 = vrot.slane %v3628, 1
        %v3949 = vrot.slane %v3629, 1
        %v3950 = vrot.slane %v3630, 1
        %v3951 = vrot.slane %v3631, 1
        %v3952 = vrot.slane %v3632, 1
        %v3953 = vrot.slane %v3633, 1
        %v3954 = vrot.slane %v3634, 1
        %v3955 = vrot.slane %v3635, 1
        %v3956 = vrot.slane %v3636, 1
        %v3957 = vrot.slane %v3637, 1
        %v3958 = vrot.slane %v3638, 1
        %v3959 = vrot.slane %v3639, 1
        %v3960 = vrot.slane %v3640, 1
        %v3961 = vrot.slane %v3641, 1
        %v3962 = vrot.slane %v3642, 1
        %v3963 = vrot.slane %v3643, 1
        %v3964 = vrot.slane %v3644, 1
        %v3965 = vrot.slane %v3645, 1
        %v3966 = vrot.slane %v3646, 1
        %v3967 = vrot.slane %v3647, 1
        %v3968 = vrot.slane %v3648, 1
        %v3969 = vsel %vm2012, %v3967, %v3968
        %v3970 = vsel %vm2012, %v3966, %v3967
        %v3971 = vsel %vm2012, %v3965, %v3966
        %v3972 = vsel %vm2012, %v3964, %v3965
        %v3973 = vsel %vm2012, %v3963, %v3964
        %v3974 = vsel %vm2012, %v3962, %v3963
        %v3975 = vsel %vm2012, %v3961, %v3962
        %v3976 = vsel %vm2012, %v3960, %v3961
        %v3977 = vsel %vm2012, %v3959, %v3960
        %v3978 = vsel %vm2012, %v3958, %v3959
        %v3979 = vsel %vm2012, %v3957, %v3958
        %v3980 = vsel %vm2012, %v3956, %v3957
        %v3981 = vsel %vm2012, %v3955, %v3956
        %v3982 = vsel %vm2012, %v3954, %v3955
        %v3983 = vsel %vm2012, %v3953, %v3954
        %v3984 = vsel %vm2012, %v3952, %v3953
        %v3985 = vsel %vm2012, %v3951, %v3952
        %v3986 = vsel %vm2012, %v3950, %v3951
        %v3987 = vsel %vm2012, %v3949, %v3950
        %v3988 = vsel %vm2012, %v3948, %v3949
        %v3989 = vsel %vm2012, %v3947, %v3948
        %v3990 = vsel %vm2012, %v3946, %v3947
        %v3991 = vsel %vm2012, %v3945, %v3946
        %v3992 = vsel %vm2012, %v3944, %v3945
        %v3993 = vsel %vm2012, %v3943, %v3944
        %v3994 = vsel %vm2012, %v3942, %v3943
        %v3995 = vsel %vm2012, %v3941, %v3942
        %v3996 = vsel %vm2012, %v3940, %v3941
        %v3997 = vsel %vm2012, %v3939, %v3940
        %v3998 = vsel %vm2012, %v3938, %v3939
        %v3999 = vsel %vm2012, %v3937, %v3938
        %v4000 = vsel %vm2012, %v3968, %v3937
        %v4001 = vsel %vm2077, %v3999, 0.0
        %v4002 = vsel %vm2078, %v3998, 0.0
        %v4003 = vsel %vm2079, %v3997, 0.0
        %v4004 = vsel %vm2080, %v3996, 0.0
        %v4005 = vsel %vm2081, %v3995, 0.0
        %v4006 = vsel %vm2082, %v3994, 0.0
        %v4007 = vsel %vm2083, %v3993, 0.0
        %v4008 = vsel %vm2084, %v3992, 0.0
        %v4009 = vsel %vm2085, %v3991, 0.0
        %v4010 = vsel %vm2086, %v3990, 0.0
        %v4011 = vsel %vm2087, %v3989, 0.0
        %v4012 = vsel %vm2088, %v3988, 0.0
        %v4013 = vsel %vm2089, %v3987, 0.0
        %v4014 = vsel %vm2090, %v3986, 0.0
        %v4015 = vsel %vm2091, %v3985, 0.0
        %v4016 = vsel %vm2092, %v3984, 0.0
        %v4017 = vsel %vm2093, %v3983, 0.0
        %v4018 = vsel %vm2094, %v3982, 0.0
        %v4019 = vsel %vm2095, %v3981, 0.0
        %v4020 = vsel %vm2096, %v3980, 0.0
        %v4021 = vsel %vm2097, %v3979, 0.0
        %v4022 = vsel %vm2098, %v3978, 0.0
        %v4023 = vsel %vm2099, %v3977, 0.0
        %v4024 = vsel %vm2100, %v3976, 0.0
        %v4025 = vsel %vm2101, %v3975, 0.0
        %v4026 = vsel %vm2102, %v3974, 0.0
        %v4027 = vsel %vm2103, %v3973, 0.0
        %v4028 = vsel %vm2104, %v3972, 0.0
        %v4029 = vsel %vm2105, %v3971, 0.0
        %v4030 = vsel %vm2106, %v3970, 0.0
        %v4031 = vsel %vm2107, %v3969, 0.0
        %v4032 = vsel %vm2108, %v4000, 0.0
        %v4033 = vrot.slane %v3617, 2
        %v4034 = vrot.slane %v3618, 2
        %v4035 = vrot.slane %v3619, 2
        %v4036 = vrot.slane %v3620, 2
        %v4037 = vrot.slane %v3621, 2
        %v4038 = vrot.slane %v3622, 2
        %v4039 = vrot.slane %v3623, 2
        %v4040 = vrot.slane %v3624, 2
        %v4041 = vrot.slane %v3625, 2
        %v4042 = vrot.slane %v3626, 2
        %v4043 = vrot.slane %v3627, 2
        %v4044 = vrot.slane %v3628, 2
        %v4045 = vrot.slane %v3629, 2
        %v4046 = vrot.slane %v3630, 2
        %v4047 = vrot.slane %v3631, 2
        %v4048 = vrot.slane %v3632, 2
        %v4049 = vrot.slane %v3633, 2
        %v4050 = vrot.slane %v3634, 2
        %v4051 = vrot.slane %v3635, 2
        %v4052 = vrot.slane %v3636, 2
        %v4053 = vrot.slane %v3637, 2
        %v4054 = vrot.slane %v3638, 2
        %v4055 = vrot.slane %v3639, 2
        %v4056 = vrot.slane %v3640, 2
        %v4057 = vrot.slane %v3641, 2
        %v4058 = vrot.slane %v3642, 2
        %v4059 = vrot.slane %v3643, 2
        %v4060 = vrot.slane %v3644, 2
        %v4061 = vrot.slane %v3645, 2
        %v4062 = vrot.slane %v3646, 2
        %v4063 = vrot.slane %v3647, 2
        %v4064 = vrot.slane %v3648, 2
        %v4065 = vsel %vm2173, %v4063, %v4064
        %v4066 = vsel %vm2173, %v4062, %v4063
        %v4067 = vsel %vm2173, %v4061, %v4062
        %v4068 = vsel %vm2173, %v4060, %v4061
        %v4069 = vsel %vm2173, %v4059, %v4060
        %v4070 = vsel %vm2173, %v4058, %v4059
        %v4071 = vsel %vm2173, %v4057, %v4058
        %v4072 = vsel %vm2173, %v4056, %v4057
        %v4073 = vsel %vm2173, %v4055, %v4056
        %v4074 = vsel %vm2173, %v4054, %v4055
        %v4075 = vsel %vm2173, %v4053, %v4054
        %v4076 = vsel %vm2173, %v4052, %v4053
        %v4077 = vsel %vm2173, %v4051, %v4052
        %v4078 = vsel %vm2173, %v4050, %v4051
        %v4079 = vsel %vm2173, %v4049, %v4050
        %v4080 = vsel %vm2173, %v4048, %v4049
        %v4081 = vsel %vm2173, %v4047, %v4048
        %v4082 = vsel %vm2173, %v4046, %v4047
        %v4083 = vsel %vm2173, %v4045, %v4046
        %v4084 = vsel %vm2173, %v4044, %v4045
        %v4085 = vsel %vm2173, %v4043, %v4044
        %v4086 = vsel %vm2173, %v4042, %v4043
        %v4087 = vsel %vm2173, %v4041, %v4042
        %v4088 = vsel %vm2173, %v4040, %v4041
        %v4089 = vsel %vm2173, %v4039, %v4040
        %v4090 = vsel %vm2173, %v4038, %v4039
        %v4091 = vsel %vm2173, %v4037, %v4038
        %v4092 = vsel %vm2173, %v4036, %v4037
        %v4093 = vsel %vm2173, %v4035, %v4036
        %v4094 = vsel %vm2173, %v4034, %v4035
        %v4095 = vsel %vm2173, %v4033, %v4034
        %v4096 = vsel %vm2173, %v4064, %v4033
        %v4097 = vsel %vm2238, %v4095, 0.0
        %v4098 = vsel %vm2239, %v4094, 0.0
        %v4099 = vsel %vm2240, %v4093, 0.0
        %v4100 = vsel %vm2241, %v4092, 0.0
        %v4101 = vsel %vm2242, %v4091, 0.0
        %v4102 = vsel %vm2243, %v4090, 0.0
        %v4103 = vsel %vm2244, %v4089, 0.0
        %v4104 = vsel %vm2245, %v4088, 0.0
        %v4105 = vsel %vm2246, %v4087, 0.0
        %v4106 = vsel %vm2247, %v4086, 0.0
        %v4107 = vsel %vm2248, %v4085, 0.0
        %v4108 = vsel %vm2249, %v4084, 0.0
        %v4109 = vsel %vm2250, %v4083, 0.0
        %v4110 = vsel %vm2251, %v4082, 0.0
        %v4111 = vsel %vm2252, %v4081, 0.0
        %v4112 = vsel %vm2253, %v4080, 0.0
        %v4113 = vsel %vm2254, %v4079, 0.0
        %v4114 = vsel %vm2255, %v4078, 0.0
        %v4115 = vsel %vm2256, %v4077, 0.0
        %v4116 = vsel %vm2257, %v4076, 0.0
        %v4117 = vsel %vm2258, %v4075, 0.0
        %v4118 = vsel %vm2259, %v4074, 0.0
        %v4119 = vsel %vm2260, %v4073, 0.0
        %v4120 = vsel %vm2261, %v4072, 0.0
        %v4121 = vsel %vm2262, %v4071, 0.0
        %v4122 = vsel %vm2263, %v4070, 0.0
        %v4123 = vsel %vm2264, %v4069, 0.0
        %v4124 = vsel %vm2265, %v4068, 0.0
        %v4125 = vsel %vm2266, %v4067, 0.0
        %v4126 = vsel %vm2267, %v4066, 0.0
        %v4127 = vsel %vm2268, %v4065, 0.0
        %v4128 = vsel %vm2269, %v4096, 0.0
        %v4129 = vrot.slane %v3617, 3
        %v4130 = vrot.slane %v3618, 3
        %v4131 = vrot.slane %v3619, 3
        %v4132 = vrot.slane %v3620, 3
        %v4133 = vrot.slane %v3621, 3
        %v4134 = vrot.slane %v3622, 3
        %v4135 = vrot.slane %v3623, 3
        %v4136 = vrot.slane %v3624, 3
        %v4137 = vrot.slane %v3625, 3
        %v4138 = vrot.slane %v3626, 3
        %v4139 = vrot.slane %v3627, 3
        %v4140 = vrot.slane %v3628, 3
        %v4141 = vrot.slane %v3629, 3
        %v4142 = vrot.slane %v3630, 3
        %v4143 = vrot.slane %v3631, 3
        %v4144 = vrot.slane %v3632, 3
        %v4145 = vrot.slane %v3633, 3
        %v4146 = vrot.slane %v3634, 3
        %v4147 = vrot.slane %v3635, 3
        %v4148 = vrot.slane %v3636, 3
        %v4149 = vrot.slane %v3637, 3
        %v4150 = vrot.slane %v3638, 3
        %v4151 = vrot.slane %v3639, 3
        %v4152 = vrot.slane %v3640, 3
        %v4153 = vrot.slane %v3641, 3
        %v4154 = vrot.slane %v3642, 3
        %v4155 = vrot.slane %v3643, 3
        %v4156 = vrot.slane %v3644, 3
        %v4157 = vrot.slane %v3645, 3
        %v4158 = vrot.slane %v3646, 3
        %v4159 = vrot.slane %v3647, 3
        %v4160 = vrot.slane %v3648, 3
        %v4161 = vsel %vm2334, %v4159, %v4160
        %v4162 = vsel %vm2334, %v4158, %v4159
        %v4163 = vsel %vm2334, %v4157, %v4158
        %v4164 = vsel %vm2334, %v4156, %v4157
        %v4165 = vsel %vm2334, %v4155, %v4156
        %v4166 = vsel %vm2334, %v4154, %v4155
        %v4167 = vsel %vm2334, %v4153, %v4154
        %v4168 = vsel %vm2334, %v4152, %v4153
        %v4169 = vsel %vm2334, %v4151, %v4152
        %v4170 = vsel %vm2334, %v4150, %v4151
        %v4171 = vsel %vm2334, %v4149, %v4150
        %v4172 = vsel %vm2334, %v4148, %v4149
        %v4173 = vsel %vm2334, %v4147, %v4148
        %v4174 = vsel %vm2334, %v4146, %v4147
        %v4175 = vsel %vm2334, %v4145, %v4146
        %v4176 = vsel %vm2334, %v4144, %v4145
        %v4177 = vsel %vm2334, %v4143, %v4144
        %v4178 = vsel %vm2334, %v4142, %v4143
        %v4179 = vsel %vm2334, %v4141, %v4142
        %v4180 = vsel %vm2334, %v4140, %v4141
        %v4181 = vsel %vm2334, %v4139, %v4140
        %v4182 = vsel %vm2334, %v4138, %v4139
        %v4183 = vsel %vm2334, %v4137, %v4138
        %v4184 = vsel %vm2334, %v4136, %v4137
        %v4185 = vsel %vm2334, %v4135, %v4136
        %v4186 = vsel %vm2334, %v4134, %v4135
        %v4187 = vsel %vm2334, %v4133, %v4134
        %v4188 = vsel %vm2334, %v4132, %v4133
        %v4189 = vsel %vm2334, %v4131, %v4132
        %v4190 = vsel %vm2334, %v4130, %v4131
        %v4191 = vsel %vm2334, %v4129, %v4130
        %v4192 = vsel %vm2334, %v4160, %v4129
        %v4193 = vsel %vm2399, %v4191, 0.0
        %v4194 = vsel %vm2400, %v4190, 0.0
        %v4195 = vsel %vm2401, %v4189, 0.0
        %v4196 = vsel %vm2402, %v4188, 0.0
        %v4197 = vsel %vm2403, %v4187, 0.0
        %v4198 = vsel %vm2404, %v4186, 0.0
        %v4199 = vsel %vm2405, %v4185, 0.0
        %v4200 = vsel %vm2406, %v4184, 0.0
        %v4201 = vsel %vm2407, %v4183, 0.0
        %v4202 = vsel %vm2408, %v4182, 0.0
        %v4203 = vsel %vm2409, %v4181, 0.0
        %v4204 = vsel %vm2410, %v4180, 0.0
        %v4205 = vsel %vm2411, %v4179, 0.0
        %v4206 = vsel %vm2412, %v4178, 0.0
        %v4207 = vsel %vm2413, %v4177, 0.0
        %v4208 = vsel %vm2414, %v4176, 0.0
        %v4209 = vsel %vm2415, %v4175, 0.0
        %v4210 = vsel %vm2416, %v4174, 0.0
        %v4211 = vsel %vm2417, %v4173, 0.0
        %v4212 = vsel %vm2418, %v4172, 0.0
        %v4213 = vsel %vm2419, %v4171, 0.0
        %v4214 = vsel %vm2420, %v4170, 0.0
        %v4215 = vsel %vm2421, %v4169, 0.0
        %v4216 = vsel %vm2422, %v4168, 0.0
        %v4217 = vsel %vm2423, %v4167, 0.0
        %v4218 = vsel %vm2424, %v4166, 0.0
        %v4219 = vsel %vm2425, %v4165, 0.0
        %v4220 = vsel %vm2426, %v4164, 0.0
        %v4221 = vsel %vm2427, %v4163, 0.0
        %v4222 = vsel %vm2428, %v4162, 0.0
        %v4223 = vsel %vm2429, %v4161, 0.0
        %v4224 = vsel %vm2430, %v4192, 0.0
        %4257 = vrot.lane.b32.xlu0 %v3809, 32
        %v4258 = vpop.permute.xlu0 %4257
        %4259 = vrot.lane.b32.xlu0 %v3810, 32
        %v4260 = vpop.permute.xlu0 %4259
        %4261 = vrot.lane.b32.xlu0 %v3811, 32
        %v4262 = vpop.permute.xlu0 %4261
        %4263 = vrot.lane.b32.xlu0 %v3812, 32
        %v4264 = vpop.permute.xlu0 %4263
        %4265 = vrot.lane.b32.xlu0 %v3813, 32
        %v4266 = vpop.permute.xlu0 %4265
        %4267 = vrot.lane.b32.xlu0 %v3814, 32
        %v4268 = vpop.permute.xlu0 %4267
        %4269 = vrot.lane.b32.xlu0 %v3815, 32
        %v4270 = vpop.permute.xlu0 %4269
        %4271 = vrot.lane.b32.xlu0 %v3816, 32
        %v4272 = vpop.permute.xlu0 %4271
        %4273 = vrot.lane.b32.xlu0 %v3817, 32
        %v4274 = vpop.permute.xlu0 %4273
        %4275 = vrot.lane.b32.xlu0 %v3818, 32
        %v4276 = vpop.permute.xlu0 %4275
        %4277 = vrot.lane.b32.xlu0 %v3819, 32
        %v4278 = vpop.permute.xlu0 %4277
        %4279 = vrot.lane.b32.xlu0 %v3820, 32
        %v4280 = vpop.permute.xlu0 %4279
        %4281 = vrot.lane.b32.xlu0 %v3821, 32
        %v4282 = vpop.permute.xlu0 %4281
        %4283 = vrot.lane.b32.xlu0 %v3822, 32
        %v4284 = vpop.permute.xlu0 %4283
        %4285 = vrot.lane.b32.xlu0 %v3823, 32
        %v4286 = vpop.permute.xlu0 %4285
        %4287 = vrot.lane.b32.xlu0 %v3824, 32
        %v4288 = vpop.permute.xlu0 %4287
        %4289 = vrot.lane.b32.xlu0 %v3825, 32
        %v4290 = vpop.permute.xlu0 %4289
        %4291 = vrot.lane.b32.xlu0 %v3826, 32
        %v4292 = vpop.permute.xlu0 %4291
        %4293 = vrot.lane.b32.xlu0 %v3827, 32
        %v4294 = vpop.permute.xlu0 %4293
        %4295 = vrot.lane.b32.xlu0 %v3828, 32
        %v4296 = vpop.permute.xlu0 %4295
        %4297 = vrot.lane.b32.xlu0 %v3829, 32
        %v4298 = vpop.permute.xlu0 %4297
        %4299 = vrot.lane.b32.xlu0 %v3830, 32
        %v4300 = vpop.permute.xlu0 %4299
        %4301 = vrot.lane.b32.xlu0 %v3831, 32
        %v4302 = vpop.permute.xlu0 %4301
        %4303 = vrot.lane.b32.xlu0 %v3832, 32
        %v4304 = vpop.permute.xlu0 %4303
        %4305 = vrot.lane.b32.xlu0 %v3833, 32
        %v4306 = vpop.permute.xlu0 %4305
        %4307 = vrot.lane.b32.xlu0 %v3834, 32
        %v4308 = vpop.permute.xlu0 %4307
        %4309 = vrot.lane.b32.xlu0 %v3835, 32
        %v4310 = vpop.permute.xlu0 %4309
        %4311 = vrot.lane.b32.xlu0 %v3836, 32
        %v4312 = vpop.permute.xlu0 %4311
        %4313 = vrot.lane.b32.xlu0 %v3837, 32
        %v4314 = vpop.permute.xlu0 %4313
        %4315 = vrot.lane.b32.xlu0 %v3838, 32
        %v4316 = vpop.permute.xlu0 %4315
        %4317 = vrot.lane.b32.xlu0 %v3839, 32
        %v4318 = vpop.permute.xlu0 %4317
        %4319 = vrot.lane.b32.xlu0 %v3840, 32
        %v4320 = vpop.permute.xlu0 %4319
        %4385 = vrot.lane.b32.xlu0 %v3905, 64
        %v4386 = vpop.permute.xlu0 %4385
        %4387 = vrot.lane.b32.xlu0 %v3906, 64
        %v4388 = vpop.permute.xlu0 %4387
        %4389 = vrot.lane.b32.xlu0 %v3907, 64
        %v4390 = vpop.permute.xlu0 %4389
        %4391 = vrot.lane.b32.xlu0 %v3908, 64
        %v4392 = vpop.permute.xlu0 %4391
        %4393 = vrot.lane.b32.xlu0 %v3909, 64
        %v4394 = vpop.permute.xlu0 %4393
        %4395 = vrot.lane.b32.xlu0 %v3910, 64
        %v4396 = vpop.permute.xlu0 %4395
        %4397 = vrot.lane.b32.xlu0 %v3911, 64
        %v4398 = vpop.permute.xlu0 %4397
        %4399 = vrot.lane.b32.xlu0 %v3912, 64
        %v4400 = vpop.permute.xlu0 %4399
        %4401 = vrot.lane.b32.xlu0 %v3913, 64
        %v4402 = vpop.permute.xlu0 %4401
        %4403 = vrot.lane.b32.xlu0 %v3914, 64
        %v4404 = vpop.permute.xlu0 %4403
        %4405 = vrot.lane.b32.xlu0 %v3915, 64
        %v4406 = vpop.permute.xlu0 %4405
        %4407 = vrot.lane.b32.xlu0 %v3916, 64
        %v4408 = vpop.permute.xlu0 %4407
        %4409 = vrot.lane.b32.xlu0 %v3917, 64
        %v4410 = vpop.permute.xlu0 %4409
        %4411 = vrot.lane.b32.xlu0 %v3918, 64
        %v4412 = vpop.permute.xlu0 %4411
        %4413 = vrot.lane.b32.xlu0 %v3919, 64
        %v4414 = vpop.permute.xlu0 %4413
        %4415 = vrot.lane.b32.xlu0 %v3920, 64
        %v4416 = vpop.permute.xlu0 %4415
        %4417 = vrot.lane.b32.xlu0 %v3921, 64
        %v4418 = vpop.permute.xlu0 %4417
        %4419 = vrot.lane.b32.xlu0 %v3922, 64
        %v4420 = vpop.permute.xlu0 %4419
        %4421 = vrot.lane.b32.xlu0 %v3923, 64
        %v4422 = vpop.permute.xlu0 %4421
        %4423 = vrot.lane.b32.xlu0 %v3924, 64
        %v4424 = vpop.permute.xlu0 %4423
        %4425 = vrot.lane.b32.xlu0 %v3925, 64
        %v4426 = vpop.permute.xlu0 %4425
        %4427 = vrot.lane.b32.xlu0 %v3926, 64
        %v4428 = vpop.permute.xlu0 %4427
        %4429 = vrot.lane.b32.xlu0 %v3927, 64
        %v4430 = vpop.permute.xlu0 %4429
        %4431 = vrot.lane.b32.xlu0 %v3928, 64
        %v4432 = vpop.permute.xlu0 %4431
        %4433 = vrot.lane.b32.xlu0 %v3929, 64
        %v4434 = vpop.permute.xlu0 %4433
        %4435 = vrot.lane.b32.xlu0 %v3930, 64
        %v4436 = vpop.permute.xlu0 %4435
        %4437 = vrot.lane.b32.xlu0 %v3931, 64
        %v4438 = vpop.permute.xlu0 %4437
        %4439 = vrot.lane.b32.xlu0 %v3932, 64
        %v4440 = vpop.permute.xlu0 %4439
        %4441 = vrot.lane.b32.xlu0 %v3933, 64
        %v4442 = vpop.permute.xlu0 %4441
        %4443 = vrot.lane.b32.xlu0 %v3934, 64
        %v4444 = vpop.permute.xlu0 %4443
        %4445 = vrot.lane.b32.xlu0 %v3935, 64
        %v4446 = vpop.permute.xlu0 %4445
        %4447 = vrot.lane.b32.xlu0 %v3936, 64
        %v4448 = vpop.permute.xlu0 %4447
        %4513 = vrot.lane.b32.xlu0 %v3617, 96
        %v4514 = vpop.permute.xlu0 %4513
        %4515 = vrot.lane.b32.xlu0 %v3618, 96
        %v4516 = vpop.permute.xlu0 %4515
        %4517 = vrot.lane.b32.xlu0 %v3619, 96
        %v4518 = vpop.permute.xlu0 %4517
        %4519 = vrot.lane.b32.xlu0 %v3620, 96
        %v4520 = vpop.permute.xlu0 %4519
        %4521 = vrot.lane.b32.xlu0 %v3621, 96
        %v4522 = vpop.permute.xlu0 %4521
        %4523 = vrot.lane.b32.xlu0 %v3622, 96
        %v4524 = vpop.permute.xlu0 %4523
        %4525 = vrot.lane.b32.xlu0 %v3623, 96
        %v4526 = vpop.permute.xlu0 %4525
        %4527 = vrot.lane.b32.xlu0 %v3624, 96
        %v4528 = vpop.permute.xlu0 %4527
        %4529 = vrot.lane.b32.xlu0 %v3625, 96
        %v4530 = vpop.permute.xlu0 %4529
        %4531 = vrot.lane.b32.xlu0 %v3626, 96
        %v4532 = vpop.permute.xlu0 %4531
        %4533 = vrot.lane.b32.xlu0 %v3627, 96
        %v4534 = vpop.permute.xlu0 %4533
        %4535 = vrot.lane.b32.xlu0 %v3628, 96
        %v4536 = vpop.permute.xlu0 %4535
        %4537 = vrot.lane.b32.xlu0 %v3629, 96
        %v4538 = vpop.permute.xlu0 %4537
        %4539 = vrot.lane.b32.xlu0 %v3630, 96
        %v4540 = vpop.permute.xlu0 %4539
        %4541 = vrot.lane.b32.xlu0 %v3631, 96
        %v4542 = vpop.permute.xlu0 %4541
        %4543 = vrot.lane.b32.xlu0 %v3632, 96
        %v4544 = vpop.permute.xlu0 %4543
        %4545 = vrot.lane.b32.xlu0 %v3633, 96
        %v4546 = vpop.permute.xlu0 %4545
        %4547 = vrot.lane.b32.xlu0 %v3634, 96
        %v4548 = vpop.permute.xlu0 %4547
        %4549 = vrot.lane.b32.xlu0 %v3635, 96
        %v4550 = vpop.permute.xlu0 %4549
        %4551 = vrot.lane.b32.xlu0 %v3636, 96
        %v4552 = vpop.permute.xlu0 %4551
        %4553 = vrot.lane.b32.xlu0 %v3637, 96
        %v4554 = vpop.permute.xlu0 %4553
        %4555 = vrot.lane.b32.xlu0 %v3638, 96
        %v4556 = vpop.permute.xlu0 %4555
        %4557 = vrot.lane.b32.xlu0 %v3639, 96
        %v4558 = vpop.permute.xlu0 %4557
        %4559 = vrot.lane.b32.xlu0 %v3640, 96
        %v4560 = vpop.permute.xlu0 %4559
        %4561 = vrot.lane.b32.xlu0 %v3641, 96
        %v4562 = vpop.permute.xlu0 %4561
        %4563 = vrot.lane.b32.xlu0 %v3642, 96
        %v4564 = vpop.permute.xlu0 %4563
        %4565 = vrot.lane.b32.xlu0 %v3643, 96
        %v4566 = vpop.permute.xlu0 %4565
        %4567 = vrot.lane.b32.xlu0 %v3644, 96
        %v4568 = vpop.permute.xlu0 %4567
        %4569 = vrot.lane.b32.xlu0 %v3645, 96
        %v4570 = vpop.permute.xlu0 %4569
        %4571 = vrot.lane.b32.xlu0 %v3646, 96
        %v4572 = vpop.permute.xlu0 %4571
        %4573 = vrot.lane.b32.xlu0 %v3647, 96
        %v4574 = vpop.permute.xlu0 %4573
        %4575 = vrot.lane.b32.xlu0 %v3648, 96
        %v4576 = vpop.permute.xlu0 %4575
        %4641 = vrot.lane.b32.xlu0 %v4097, 32
        %v4642 = vpop.permute.xlu0 %4641
        %4643 = vrot.lane.b32.xlu0 %v4098, 32
        %v4644 = vpop.permute.xlu0 %4643
        %4645 = vrot.lane.b32.xlu0 %v4099, 32
        %v4646 = vpop.permute.xlu0 %4645
        %4647 = vrot.lane.b32.xlu0 %v4100, 32
        %v4648 = vpop.permute.xlu0 %4647
        %4649 = vrot.lane.b32.xlu0 %v4101, 32
        %v4650 = vpop.permute.xlu0 %4649
        %4651 = vrot.lane.b32.xlu0 %v4102, 32
        %v4652 = vpop.permute.xlu0 %4651
        %4653 = vrot.lane.b32.xlu0 %v4103, 32
        %v4654 = vpop.permute.xlu0 %4653
        %4655 = vrot.lane.b32.xlu0 %v4104, 32
        %v4656 = vpop.permute.xlu0 %4655
        %4657 = vrot.lane.b32.xlu0 %v4105, 32
        %v4658 = vpop.permute.xlu0 %4657
        %4659 = vrot.lane.b32.xlu0 %v4106, 32
        %v4660 = vpop.permute.xlu0 %4659
        %4661 = vrot.lane.b32.xlu0 %v4107, 32
        %v4662 = vpop.permute.xlu0 %4661
        %4663 = vrot.lane.b32.xlu0 %v4108, 32
        %v4664 = vpop.permute.xlu0 %4663
        %4665 = vrot.lane.b32.xlu0 %v4109, 32
        %v4666 = vpop.permute.xlu0 %4665
        %4667 = vrot.lane.b32.xlu0 %v4110, 32
        %v4668 = vpop.permute.xlu0 %4667
        %4669 = vrot.lane.b32.xlu0 %v4111, 32
        %v4670 = vpop.permute.xlu0 %4669
        %4671 = vrot.lane.b32.xlu0 %v4112, 32
        %v4672 = vpop.permute.xlu0 %4671
        %4673 = vrot.lane.b32.xlu0 %v4113, 32
        %v4674 = vpop.permute.xlu0 %4673
        %4675 = vrot.lane.b32.xlu0 %v4114, 32
        %v4676 = vpop.permute.xlu0 %4675
        %4677 = vrot.lane.b32.xlu0 %v4115, 32
        %v4678 = vpop.permute.xlu0 %4677
        %4679 = vrot.lane.b32.xlu0 %v4116, 32
        %v4680 = vpop.permute.xlu0 %4679
        %4681 = vrot.lane.b32.xlu0 %v4117, 32
        %v4682 = vpop.permute.xlu0 %4681
        %4683 = vrot.lane.b32.xlu0 %v4118, 32
        %v4684 = vpop.permute.xlu0 %4683
        %4685 = vrot.lane.b32.xlu0 %v4119, 32
        %v4686 = vpop.permute.xlu0 %4685
        %4687 = vrot.lane.b32.xlu0 %v4120, 32
        %v4688 = vpop.permute.xlu0 %4687
        %4689 = vrot.lane.b32.xlu0 %v4121, 32
        %v4690 = vpop.permute.xlu0 %4689
        %4691 = vrot.lane.b32.xlu0 %v4122, 32
        %v4692 = vpop.permute.xlu0 %4691
        %4693 = vrot.lane.b32.xlu0 %v4123, 32
        %v4694 = vpop.permute.xlu0 %4693
        %4695 = vrot.lane.b32.xlu0 %v4124, 32
        %v4696 = vpop.permute.xlu0 %4695
        %4697 = vrot.lane.b32.xlu0 %v4125, 32
        %v4698 = vpop.permute.xlu0 %4697
        %4699 = vrot.lane.b32.xlu0 %v4126, 32
        %v4700 = vpop.permute.xlu0 %4699
        %4701 = vrot.lane.b32.xlu0 %v4127, 32
        %v4702 = vpop.permute.xlu0 %4701
        %4703 = vrot.lane.b32.xlu0 %v4128, 32
        %v4704 = vpop.permute.xlu0 %4703
        %4769 = vrot.lane.b32.xlu0 %v4193, 64
        %v4770 = vpop.permute.xlu0 %4769
        %4771 = vrot.lane.b32.xlu0 %v4194, 64
        %v4772 = vpop.permute.xlu0 %4771
        %4773 = vrot.lane.b32.xlu0 %v4195, 64
        %v4774 = vpop.permute.xlu0 %4773
        %4775 = vrot.lane.b32.xlu0 %v4196, 64
        %v4776 = vpop.permute.xlu0 %4775
        %4777 = vrot.lane.b32.xlu0 %v4197, 64
        %v4778 = vpop.permute.xlu0 %4777
        %4779 = vrot.lane.b32.xlu0 %v4198, 64
        %v4780 = vpop.permute.xlu0 %4779
        %4781 = vrot.lane.b32.xlu0 %v4199, 64
        %v4782 = vpop.permute.xlu0 %4781
        %4783 = vrot.lane.b32.xlu0 %v4200, 64
        %v4784 = vpop.permute.xlu0 %4783
        %4785 = vrot.lane.b32.xlu0 %v4201, 64
        %v4786 = vpop.permute.xlu0 %4785
        %4787 = vrot.lane.b32.xlu0 %v4202, 64
        %v4788 = vpop.permute.xlu0 %4787
        %4789 = vrot.lane.b32.xlu0 %v4203, 64
        %v4790 = vpop.permute.xlu0 %4789
        %4791 = vrot.lane.b32.xlu0 %v4204, 64
        %v4792 = vpop.permute.xlu0 %4791
        %4793 = vrot.lane.b32.xlu0 %v4205, 64
        %v4794 = vpop.permute.xlu0 %4793
        %4795 = vrot.lane.b32.xlu0 %v4206, 64
        %v4796 = vpop.permute.xlu0 %4795
        %4797 = vrot.lane.b32.xlu0 %v4207, 64
        %v4798 = vpop.permute.xlu0 %4797
        %4799 = vrot.lane.b32.xlu0 %v4208, 64
        %v4800 = vpop.permute.xlu0 %4799
        %4801 = vrot.lane.b32.xlu0 %v4209, 64
        %v4802 = vpop.permute.xlu0 %4801
        %4803 = vrot.lane.b32.xlu0 %v4210, 64
        %v4804 = vpop.permute.xlu0 %4803
        %4805 = vrot.lane.b32.xlu0 %v4211, 64
        %v4806 = vpop.permute.xlu0 %4805
        %4807 = vrot.lane.b32.xlu0 %v4212, 64
        %v4808 = vpop.permute.xlu0 %4807
        %4809 = vrot.lane.b32.xlu0 %v4213, 64
        %v4810 = vpop.permute.xlu0 %4809
        %4811 = vrot.lane.b32.xlu0 %v4214, 64
        %v4812 = vpop.permute.xlu0 %4811
        %4813 = vrot.lane.b32.xlu0 %v4215, 64
        %v4814 = vpop.permute.xlu0 %4813
        %4815 = vrot.lane.b32.xlu0 %v4216, 64
        %v4816 = vpop.permute.xlu0 %4815
        %4817 = vrot.lane.b32.xlu0 %v4217, 64
        %v4818 = vpop.permute.xlu0 %4817
        %4819 = vrot.lane.b32.xlu0 %v4218, 64
        %v4820 = vpop.permute.xlu0 %4819
        %4821 = vrot.lane.b32.xlu0 %v4219, 64
        %v4822 = vpop.permute.xlu0 %4821
        %4823 = vrot.lane.b32.xlu0 %v4220, 64
        %v4824 = vpop.permute.xlu0 %4823
        %4825 = vrot.lane.b32.xlu0 %v4221, 64
        %v4826 = vpop.permute.xlu0 %4825
        %4827 = vrot.lane.b32.xlu0 %v4222, 64
        %v4828 = vpop.permute.xlu0 %4827
        %4829 = vrot.lane.b32.xlu0 %v4223, 64
        %v4830 = vpop.permute.xlu0 %4829
        %4831 = vrot.lane.b32.xlu0 %v4224, 64
        %v4832 = vpop.permute.xlu0 %4831
        %vm4865 = vcmask 261120
        %v4866 = vsel %vm4865, %v3713, %v4258
        %v4867 = vsel %vm4865, %v3714, %v4260
        %v4868 = vsel %vm4865, %v3715, %v4262
        %v4869 = vsel %vm4865, %v3716, %v4264
        %v4870 = vsel %vm4865, %v3717, %v4266
        %v4871 = vsel %vm4865, %v3718, %v4268
        %v4872 = vsel %vm4865, %v3719, %v4270
        %v4873 = vsel %vm4865, %v3720, %v4272
        %v4874 = vsel %vm4865, %v3721, %v4274
        %v4875 = vsel %vm4865, %v3722, %v4276
        %v4876 = vsel %vm4865, %v3723, %v4278
        %v4877 = vsel %vm4865, %v3724, %v4280
        %v4878 = vsel %vm4865, %v3725, %v4282
        %v4879 = vsel %vm4865, %v3726, %v4284
        %v4880 = vsel %vm4865, %v3727, %v4286
        %v4881 = vsel %vm4865, %v3728, %v4288
        %v4882 = vsel %vm4865, %v3729, %v4290
        %v4883 = vsel %vm4865, %v3730, %v4292
        %v4884 = vsel %vm4865, %v3731, %v4294
        %v4885 = vsel %vm4865, %v3732, %v4296
        %v4886 = vsel %vm4865, %v3733, %v4298
        %v4887 = vsel %vm4865, %v3734, %v4300
        %v4888 = vsel %vm4865, %v3735, %v4302
        %v4889 = vsel %vm4865, %v3736, %v4304
        %v4890 = vsel %vm4865, %v3737, %v4306
        %v4891 = vsel %vm4865, %v3738, %v4308
        %v4892 = vsel %vm4865, %v3739, %v4310
        %v4893 = vsel %vm4865, %v3740, %v4312
        %v4894 = vsel %vm4865, %v3741, %v4314
        %v4895 = vsel %vm4865, %v3742, %v4316
        %v4896 = vsel %vm4865, %v3743, %v4318
        %v4897 = vsel %vm4865, %v3744, %v4320
        %v4898 = vsel %vm2847, %v4866, %v4386
        %v4899 = vsel %vm2847, %v4867, %v4388
        %v4900 = vsel %vm2847, %v4868, %v4390
        %v4901 = vsel %vm2847, %v4869, %v4392
        %v4902 = vsel %vm2847, %v4870, %v4394
        %v4903 = vsel %vm2847, %v4871, %v4396
        %v4904 = vsel %vm2847, %v4872, %v4398
        %v4905 = vsel %vm2847, %v4873, %v4400
        %v4906 = vsel %vm2847, %v4874, %v4402
        %v4907 = vsel %vm2847, %v4875, %v4404
        %v4908 = vsel %vm2847, %v4876, %v4406
        %v4909 = vsel %vm2847, %v4877, %v4408
        %v4910 = vsel %vm2847, %v4878, %v4410
        %v4911 = vsel %vm2847, %v4879, %v4412
        %v4912 = vsel %vm2847, %v4880, %v4414
        %v4913 = vsel %vm2847, %v4881, %v4416
        %v4914 = vsel %vm2847, %v4882, %v4418
        %v4915 = vsel %vm2847, %v4883, %v4420
        %v4916 = vsel %vm2847, %v4884, %v4422
        %v4917 = vsel %vm2847, %v4885, %v4424
        %v4918 = vsel %vm2847, %v4886, %v4426
        %v4919 = vsel %vm2847, %v4887, %v4428
        %v4920 = vsel %vm2847, %v4888, %v4430
        %v4921 = vsel %vm2847, %v4889, %v4432
        %v4922 = vsel %vm2847, %v4890, %v4434
        %v4923 = vsel %vm2847, %v4891, %v4436
        %v4924 = vsel %vm2847, %v4892, %v4438
        %v4925 = vsel %vm2847, %v4893, %v4440
        %v4926 = vsel %vm2847, %v4894, %v4442
        %v4927 = vsel %vm2847, %v4895, %v4444
        %v4928 = vsel %vm2847, %v4896, %v4446
        %v4929 = vsel %vm2847, %v4897, %v4448
        %vm4930 = vcmask 785408
        %v4931 = vsel %vm4930, %v4898, %v4514
        %v4932 = vsel %vm4930, %v4899, %v4516
        %v4933 = vsel %vm4930, %v4900, %v4518
        %v4934 = vsel %vm4930, %v4901, %v4520
        %v4935 = vsel %vm4930, %v4902, %v4522
        %v4936 = vsel %vm4930, %v4903, %v4524
        %v4937 = vsel %vm4930, %v4904, %v4526
        %v4938 = vsel %vm4930, %v4905, %v4528
        %v4939 = vsel %vm4930, %v4906, %v4530
        %v4940 = vsel %vm4930, %v4907, %v4532
        %v4941 = vsel %vm4930, %v4908, %v4534
        %v4942 = vsel %vm4930, %v4909, %v4536
        %v4943 = vsel %vm4930, %v4910, %v4538
        %v4944 = vsel %vm4930, %v4911, %v4540
        %v4945 = vsel %vm4930, %v4912, %v4542
        %v4946 = vsel %vm4930, %v4913, %v4544
        %v4947 = vsel %vm4930, %v4914, %v4546
        %v4948 = vsel %vm4930, %v4915, %v4548
        %v4949 = vsel %vm4930, %v4916, %v4550
        %v4950 = vsel %vm4930, %v4917, %v4552
        %v4951 = vsel %vm4930, %v4918, %v4554
        %v4952 = vsel %vm4930, %v4919, %v4556
        %v4953 = vsel %vm4930, %v4920, %v4558
        %v4954 = vsel %vm4930, %v4921, %v4560
        %v4955 = vsel %vm4930, %v4922, %v4562
        %v4956 = vsel %vm4930, %v4923, %v4564
        %v4957 = vsel %vm4930, %v4924, %v4566
        %v4958 = vsel %vm4930, %v4925, %v4568
        %v4959 = vsel %vm4930, %v4926, %v4570
        %v4960 = vsel %vm4930, %v4927, %v4572
        %v4961 = vsel %vm4930, %v4928, %v4574
        %v4962 = vsel %vm4930, %v4929, %v4576
        %v4963 = vsel %vm4865, %v4001, %v4642
        %v4964 = vsel %vm4865, %v4002, %v4644
        %v4965 = vsel %vm4865, %v4003, %v4646
        %v4966 = vsel %vm4865, %v4004, %v4648
        %v4967 = vsel %vm4865, %v4005, %v4650
        %v4968 = vsel %vm4865, %v4006, %v4652
        %v4969 = vsel %vm4865, %v4007, %v4654
        %v4970 = vsel %vm4865, %v4008, %v4656
        %v4971 = vsel %vm4865, %v4009, %v4658
        %v4972 = vsel %vm4865, %v4010, %v4660
        %v4973 = vsel %vm4865, %v4011, %v4662
        %v4974 = vsel %vm4865, %v4012, %v4664
        %v4975 = vsel %vm4865, %v4013, %v4666
        %v4976 = vsel %vm4865, %v4014, %v4668
        %v4977 = vsel %vm4865, %v4015, %v4670
        %v4978 = vsel %vm4865, %v4016, %v4672
        %v4979 = vsel %vm4865, %v4017, %v4674
        %v4980 = vsel %vm4865, %v4018, %v4676
        %v4981 = vsel %vm4865, %v4019, %v4678
        %v4982 = vsel %vm4865, %v4020, %v4680
        %v4983 = vsel %vm4865, %v4021, %v4682
        %v4984 = vsel %vm4865, %v4022, %v4684
        %v4985 = vsel %vm4865, %v4023, %v4686
        %v4986 = vsel %vm4865, %v4024, %v4688
        %v4987 = vsel %vm4865, %v4025, %v4690
        %v4988 = vsel %vm4865, %v4026, %v4692
        %v4989 = vsel %vm4865, %v4027, %v4694
        %v4990 = vsel %vm4865, %v4028, %v4696
        %v4991 = vsel %vm4865, %v4029, %v4698
        %v4992 = vsel %vm4865, %v4030, %v4700
        %v4993 = vsel %vm4865, %v4031, %v4702
        %v4994 = vsel %vm4865, %v4032, %v4704
        %v4995 = vsel %vm2847, %v4963, %v4770
        %v4996 = vsel %vm2847, %v4964, %v4772
        %v4997 = vsel %vm2847, %v4965, %v4774
        %v4998 = vsel %vm2847, %v4966, %v4776
        %v4999 = vsel %vm2847, %v4967, %v4778
        %v5000 = vsel %vm2847, %v4968, %v4780
        %v5001 = vsel %vm2847, %v4969, %v4782
        %v5002 = vsel %vm2847, %v4970, %v4784
        %v5003 = vsel %vm2847, %v4971, %v4786
        %v5004 = vsel %vm2847, %v4972, %v4788
        %v5005 = vsel %vm2847, %v4973, %v4790
        %v5006 = vsel %vm2847, %v4974, %v4792
        %v5007 = vsel %vm2847, %v4975, %v4794
        %v5008 = vsel %vm2847, %v4976, %v4796
        %v5009 = vsel %vm2847, %v4977, %v4798
        %v5010 = vsel %vm2847, %v4978, %v4800
        %v5011 = vsel %vm2847, %v4979, %v4802
        %v5012 = vsel %vm2847, %v4980, %v4804
        %v5013 = vsel %vm2847, %v4981, %v4806
        %v5014 = vsel %vm2847, %v4982, %v4808
        %v5015 = vsel %vm2847, %v4983, %v4810
        %v5016 = vsel %vm2847, %v4984, %v4812
        %v5017 = vsel %vm2847, %v4985, %v4814
        %v5018 = vsel %vm2847, %v4986, %v4816
        %v5019 = vsel %vm2847, %v4987, %v4818
        %v5020 = vsel %vm2847, %v4988, %v4820
        %v5021 = vsel %vm2847, %v4989, %v4822
        %v5022 = vsel %vm2847, %v4990, %v4824
        %v5023 = vsel %vm2847, %v4991, %v4826
        %v5024 = vsel %vm2847, %v4992, %v4828
        %v5025 = vsel %vm2847, %v4993, %v4830
        %v5026 = vsel %vm2847, %v4994, %v4832
        %v5027 = vld [vmem:[%s3] sm:$0xff]
        %v5028 = vld [vmem:[%s3 + $0x8] sm:$0xff]
        %v5029 = vld [vmem:[%s3 + $0x10] sm:$0xff]
        %v5030 = vld [vmem:[%s3 + $0x18] sm:$0xff]
        %v5031 = vld [vmem:[%s3 + $0x20] sm:$0xff]
        %v5032 = vld [vmem:[%s3 + $0x28] sm:$0xff]
        %v5033 = vld [vmem:[%s3 + $0x30] sm:$0xff]
        %v5034 = vld [vmem:[%s3 + $0x38] sm:$0xff]
        %v5035 = vld [vmem:[%s3 + $0x40] sm:$0xff]
        %v5036 = vld [vmem:[%s3 + $0x48] sm:$0xff]
        %v5037 = vld [vmem:[%s3 + $0x50] sm:$0xff]
        %v5038 = vld [vmem:[%s3 + $0x58] sm:$0xff]
        %v5039 = vld [vmem:[%s3 + $0x60] sm:$0xff]
        %v5040 = vld [vmem:[%s3 + $0x68] sm:$0xff]
        %v5041 = vld [vmem:[%s3 + $0x70] sm:$0xff]
        %v5042 = vld [vmem:[%s3 + $0x78] sm:$0xff]
        %v5043 = vld [vmem:[%s3 + $0x80] sm:$0xff]
        %v5044 = vld [vmem:[%s3 + $0x88] sm:$0xff]
        %v5045 = vld [vmem:[%s3 + $0x90] sm:$0xff]
        %v5046 = vld [vmem:[%s3 + $0x98] sm:$0xff]
        %v5047 = vld [vmem:[%s3 + $0xa0] sm:$0xff]
        %v5048 = vld [vmem:[%s3 + $0xa8] sm:$0xff]
        %v5049 = vld [vmem:[%s3 + $0xb0] sm:$0xff]
        %v5050 = vld [vmem:[%s3 + $0xb8] sm:$0xff]
        %v5051 = vld [vmem:[%s3 + $0xc0] sm:$0xff]
        %v5052 = vld [vmem:[%s3 + $0xc8] sm:$0xff]
        %v5053 = vld [vmem:[%s3 + $0xd0] sm:$0xff]
        %v5054 = vld [vmem:[%s3 + $0xd8] sm:$0xff]
        %v5055 = vld [vmem:[%s4] sm:$0x1]
        %v5057 = vlaneseq
        %v5058 = vshrl.u32 %v5057, 7
        %v5059 = vsub.s32 0, %v5058
        %v5060 = vrot.slane %v5055, %v5059
        %v5063 = vsel %vm4930, %v4995, 0
        %v5066 = vsel %vm4930, %v4996, 0
        %v5069 = vsel %vm4930, %v4997, 0
        %v5072 = vsel %vm4930, %v4998, 0
        %v5075 = vsel %vm4930, %v4999, 0
        %v5078 = vsel %vm4930, %v5000, 0
        %v5081 = vsel %vm4930, %v5001, 0
        %v5084 = vsel %vm4930, %v5002, 0
        %v5087 = vsel %vm4930, %v5003, 0
        %v5090 = vsel %vm4930, %v5004, 0
        %v5093 = vsel %vm4930, %v5005, 0
        %v5096 = vsel %vm4930, %v5006, 0
        %v5099 = vsel %vm4930, %v5007, 0
        %v5102 = vsel %vm4930, %v5008, 0
        %v5105 = vsel %vm4930, %v5009, 0
        %v5108 = vsel %vm4930, %v5010, 0
        %v5111 = vsel %vm4930, %v5011, 0
        %v5114 = vsel %vm4930, %v5012, 0
        %v5117 = vsel %vm4930, %v5013, 0
        %v5120 = vsel %vm4930, %v5014, 0
        %v5123 = vsel %vm4930, %v5015, 0
        %v5126 = vsel %vm4930, %v5016, 0
        %v5129 = vsel %vm4930, %v5017, 0
        %v5132 = vsel %vm4930, %v5018, 0
        %v5135 = vsel %vm4930, %v5019, 0
        %v5138 = vsel %vm4930, %v5020, 0
        %v5141 = vsel %vm4930, %v5021, 0
        %v5144 = vsel %vm4930, %v5022, 0
        %v5147 = vsel %vm4930, %v5023, 0
        %v5150 = vsel %vm4930, %v5024, 0
        %v5153 = vsel %vm4930, %v5025, 0
        %v5156 = vsel %vm4930, %v5026, 0
        %5158 = vmatprep.subr.mxu0 0.0
        %5159 = vmatpush1.msra.mxu0 %v5042
        %5160 = vmatprep.subr.mxu0 0.0
        %5161 = vmatpush1.msra.mxu0 %v5041
        %5162 = vmatprep.subr.mxu0 0.0
        %5163 = vmatpush1.msra.mxu0 %v5040
        %5164 = vmatprep.subr.mxu0 0.0
        %5165 = vmatpush1.msra.mxu0 %v5039
        %5166 = vmatprep.subr.mxu0 0.0
        %5167 = vmatpush1.msra.mxu0 %v5038
        %5168 = vmatprep.subr.mxu0 0.0
        %5169 = vmatpush1.msra.mxu0 %v5037
        %5170 = vmatprep.subr.mxu0 0.0
        %5171 = vmatpush1.msra.mxu0 %v5036
        %5172 = vmatprep.subr.mxu0 0.0
        %5173 = vmatpush1.msra.mxu0 %v5035
        %5174 = vmatprep.subr.mxu0 0.0
        %5175 = vmatpush1.msra.mxu0 %v5034
        %5176 = vmatprep.subr.mxu0 0.0
        %5177 = vmatpush1.msra.mxu0 %v5033
        %5178 = vmatprep.subr.mxu0 0.0
        %5179 = vmatpush1.msra.mxu0 %v5032
        %5180 = vmatprep.subr.mxu0 0.0
        %5181 = vmatpush1.msra.mxu0 %v5031
        %5182 = vmatprep.subr.mxu0 0.0
        %5183 = vmatpush1.msra.mxu0 %v5030
        %5184 = vmatprep.subr.mxu0 0.0
        %5185 = vmatpush1.msra.mxu0 %v5029
        %5186 = vmatprep.subr.mxu0 0.0
        %5187 = vmatpush1.msra.mxu0 %v5028
        %5188 = vmatprep.subr.mxu0 0.0
        %5189 = vmatpush1.msra.mxu0 %v5027
        %5190 = vmatprep.subr.mxu0 0.0
        %5191 = vmatpush2.msra.mxu0 0.0
        %5192 = vmatprep.subr.mxu0 0.0
        %5193 = vmatpush2.msra.mxu0 0.0
        %5194 = vmatprep.subr.mxu0 0.0
        %5195 = vmatpush2.msra.mxu0 0.0
        %5196 = vmatprep.subr.mxu0 0.0
        %5197 = vmatpush2.msra.mxu0 0.0
        %5198 = vmatprep.subr.mxu0 0.0
        %5199 = vmatpush2.msra.mxu0 %v5054
        %5200 = vmatprep.subr.mxu0 0.0
        %5201 = vmatpush2.msra.mxu0 %v5053
        %5202 = vmatprep.subr.mxu0 0.0
        %5203 = vmatpush2.msra.mxu0 %v5052
        %5204 = vmatprep.subr.mxu0 0.0
        %5205 = vmatpush2.msra.mxu0 %v5051
        %5206 = vmatprep.subr.mxu0 0.0
        %5207 = vmatpush2.msra.mxu0 %v5050
        %5208 = vmatprep.subr.mxu0 0.0
        %5209 = vmatpush2.msra.mxu0 %v5049
        %5210 = vmatprep.subr.mxu0 0.0
        %5211 = vmatpush2.msra.mxu0 %v5048
        %5212 = vmatprep.subr.mxu0 0.0
        %5213 = vmatpush2.msra.mxu0 %v5047
        %5214 = vmatprep.subr.mxu0 0.0
        %5215 = vmatpush2.msra.mxu0 %v5046
        %5216 = vmatprep.subr.mxu0 0.0
        %5217 = vmatpush2.msra.mxu0 %v5045
        %5218 = vmatprep.subr.mxu0 0.0
        %5219 = vmatpush2.msra.mxu0 %v5044
        %5220 = vmatprep.subr.mxu0 0.0
        %5221 = vmatpush2.msra.mxu0 %v5043
        %5222 = vmatprep.mubr.f32.mxu0 %v5063
        %5223 = vmatmul.mubr.f32.gmra.mxu0 %v4931
        %v5224 = vpop.f32.mrf.mxu0
        %v5225 = vadd.f32 %v5060, %v5224
        %v5226 = vpop.f32.mrf.mxu0
        %5227 = vmatprep.mubr.f32.mxu0 %v5066
        %5228 = vmatmul.mubr.f32.gmra.mxu0 %v4932
        %v5229 = vpop.f32.mrf.mxu0
        %v5230 = vadd.f32 %v5060, %v5229
        %v5231 = vpop.f32.mrf.mxu0
        %5232 = vmatprep.mubr.f32.mxu0 %v5069
        %5233 = vmatmul.mubr.f32.gmra.mxu0 %v4933
        %v5234 = vpop.f32.mrf.mxu0
        %v5235 = vadd.f32 %v5060, %v5234
        %v5236 = vpop.f32.mrf.mxu0
        %5237 = vmatprep.mubr.f32.mxu0 %v5072
        %5238 = vmatmul.mubr.f32.gmra.mxu0 %v4934
        %v5239 = vpop.f32.mrf.mxu0
        %v5240 = vadd.f32 %v5060, %v5239
        %v5241 = vpop.f32.mrf.mxu0
        %5242 = vmatprep.mubr.f32.mxu0 %v5075
        %5243 = vmatmul.mubr.f32.gmra.mxu0 %v4935
        %v5244 = vpop.f32.mrf.mxu0
        %v5245 = vadd.f32 %v5060, %v5244
        %v5246 = vpop.f32.mrf.mxu0
        %5247 = vmatprep.mubr.f32.mxu0 %v5078
        %5248 = vmatmul.mubr.f32.gmra.mxu0 %v4936
        %v5249 = vpop.f32.mrf.mxu0
        %v5250 = vadd.f32 %v5060, %v5249
        %v5251 = vpop.f32.mrf.mxu0
        %5252 = vmatprep.mubr.f32.mxu0 %v5081
        %5253 = vmatmul.mubr.f32.gmra.mxu0 %v4937
        %v5254 = vpop.f32.mrf.mxu0
        %v5255 = vadd.f32 %v5060, %v5254
        %v5256 = vpop.f32.mrf.mxu0
        %5257 = vmatprep.mubr.f32.mxu0 %v5084
        %5258 = vmatmul.mubr.f32.gmra.mxu0 %v4938
        %v5259 = vpop.f32.mrf.mxu0
        %v5260 = vadd.f32 %v5060, %v5259
        %v5261 = vpop.f32.mrf.mxu0
        %5262 = vmatprep.mubr.f32.mxu0 %v5087
        %5263 = vmatmul.mubr.f32.gmra.mxu0 %v4939
        %v5264 = vpop.f32.mrf.mxu0
        %v5265 = vadd.f32 %v5060, %v5264
        %v5266 = vpop.f32.mrf.mxu0
        %5267 = vmatprep.mubr.f32.mxu0 %v5090
        %5268 = vmatmul.mubr.f32.gmra.mxu0 %v4940
        %v5269 = vpop.f32.mrf.mxu0
        %v5270 = vadd.f32 %v5060, %v5269
        %v5271 = vpop.f32.mrf.mxu0
        %5272 = vmatprep.mubr.f32.mxu0 %v5093
        %5273 = vmatmul.mubr.f32.gmra.mxu0 %v4941
        %v5274 = vpop.f32.mrf.mxu0
        %v5275 = vadd.f32 %v5060, %v5274
        %v5276 = vpop.f32.mrf.mxu0
        %5277 = vmatprep.mubr.f32.mxu0 %v5096
        %5278 = vmatmul.mubr.f32.gmra.mxu0 %v4942
        %v5279 = vpop.f32.mrf.mxu0
        %v5280 = vadd.f32 %v5060, %v5279
        %v5281 = vpop.f32.mrf.mxu0
        %5282 = vmatprep.mubr.f32.mxu0 %v5099
        %5283 = vmatmul.mubr.f32.gmra.mxu0 %v4943
        %v5284 = vpop.f32.mrf.mxu0
        %v5285 = vadd.f32 %v5060, %v5284
        %v5286 = vpop.f32.mrf.mxu0
        %5287 = vmatprep.mubr.f32.mxu0 %v5102
        %5288 = vmatmul.mubr.f32.gmra.mxu0 %v4944
        %v5289 = vpop.f32.mrf.mxu0
        %v5290 = vadd.f32 %v5060, %v5289
        %v5291 = vpop.f32.mrf.mxu0
        %5292 = vmatprep.mubr.f32.mxu0 %v5105
        %5293 = vmatmul.mubr.f32.gmra.mxu0 %v4945
        %v5294 = vpop.f32.mrf.mxu0
        %v5295 = vadd.f32 %v5060, %v5294
        %v5296 = vpop.f32.mrf.mxu0
        %5297 = vmatprep.mubr.f32.mxu0 %v5108
        %5298 = vmatmul.mubr.f32.gmra.mxu0 %v4946
        %v5299 = vpop.f32.mrf.mxu0
        %v5300 = vadd.f32 %v5060, %v5299
        %v5301 = vpop.f32.mrf.mxu0
        %5302 = vmatprep.mubr.f32.mxu0 %v5111
        %5303 = vmatmul.mubr.f32.gmra.mxu0 %v4947
        %v5304 = vpop.f32.mrf.mxu0
        %v5305 = vadd.f32 %v5060, %v5304
        %v5306 = vpop.f32.mrf.mxu0
        %5307 = vmatprep.mubr.f32.mxu0 %v5114
        %5308 = vmatmul.mubr.f32.gmra.mxu0 %v4948
        %v5309 = vpop.f32.mrf.mxu0
        %v5310 = vadd.f32 %v5060, %v5309
        %v5311 = vpop.f32.mrf.mxu0
        %5312 = vmatprep.mubr.f32.mxu0 %v5117
        %5313 = vmatmul.mubr.f32.gmra.mxu0 %v4949
        %v5314 = vpop.f32.mrf.mxu0
        %v5315 = vadd.f32 %v5060, %v5314
        %v5316 = vpop.f32.mrf.mxu0
        %5317 = vmatprep.mubr.f32.mxu0 %v5120
        %5318 = vmatmul.mubr.f32.gmra.mxu0 %v4950
        %v5319 = vpop.f32.mrf.mxu0
        %v5320 = vadd.f32 %v5060, %v5319
        %v5321 = vpop.f32.mrf.mxu0
        %5322 = vmatprep.mubr.f32.mxu0 %v5123
        %5323 = vmatmul.mubr.f32.gmra.mxu0 %v4951
        %v5324 = vpop.f32.mrf.mxu0
        %v5325 = vadd.f32 %v5060, %v5324
        %v5326 = vpop.f32.mrf.mxu0
        %5327 = vmatprep.mubr.f32.mxu0 %v5126
        %5328 = vmatmul.mubr.f32.gmra.mxu0 %v4952
        %v5329 = vpop.f32.mrf.mxu0
        %v5330 = vadd.f32 %v5060, %v5329
        %v5331 = vpop.f32.mrf.mxu0
        %5332 = vmatprep.mubr.f32.mxu0 %v5129
        %5333 = vmatmul.mubr.f32.gmra.mxu0 %v4953
        %v5334 = vpop.f32.mrf.mxu0
        %v5335 = vadd.f32 %v5060, %v5334
        %v5336 = vpop.f32.mrf.mxu0
        %5337 = vmatprep.mubr.f32.mxu0 %v5132
        %5338 = vmatmul.mubr.f32.gmra.mxu0 %v4954
        %v5339 = vpop.f32.mrf.mxu0
        %v5340 = vadd.f32 %v5060, %v5339
        %v5341 = vpop.f32.mrf.mxu0
        %5342 = vmatprep.mubr.f32.mxu0 %v5135
        %5343 = vmatmul.mubr.f32.gmra.mxu0 %v4955
        %v5344 = vpop.f32.mrf.mxu0
        %v5345 = vadd.f32 %v5060, %v5344
        %v5346 = vpop.f32.mrf.mxu0
        %5347 = vmatprep.mubr.f32.mxu0 %v5138
        %5348 = vmatmul.mubr.f32.gmra.mxu0 %v4956
        %v5349 = vpop.f32.mrf.mxu0
        %v5350 = vadd.f32 %v5060, %v5349
        %v5351 = vpop.f32.mrf.mxu0
        %5352 = vmatprep.mubr.f32.mxu0 %v5141
        %5353 = vmatmul.mubr.f32.gmra.mxu0 %v4957
        %v5354 = vpop.f32.mrf.mxu0
        %v5355 = vadd.f32 %v5060, %v5354
        %v5356 = vpop.f32.mrf.mxu0
        %5357 = vmatprep.mubr.f32.mxu0 %v5144
        %5358 = vmatmul.mubr.f32.gmra.mxu0 %v4958
        %v5359 = vpop.f32.mrf.mxu0
        %v5360 = vadd.f32 %v5060, %v5359
        %v5361 = vpop.f32.mrf.mxu0
        %5362 = vmatprep.mubr.f32.mxu0 %v5147
        %5363 = vmatmul.mubr.f32.gmra.mxu0 %v4959
        %v5364 = vpop.f32.mrf.mxu0
        %v5365 = vadd.f32 %v5060, %v5364
        %v5366 = vpop.f32.mrf.mxu0
        %5367 = vmatprep.mubr.f32.mxu0 %v5150
        %5368 = vmatmul.mubr.f32.gmra.mxu0 %v4960
        %v5369 = vpop.f32.mrf.mxu0
        %v5370 = vadd.f32 %v5060, %v5369
        %v5371 = vpop.f32.mrf.mxu0
        %5372 = vmatprep.mubr.f32.mxu0 %v5153
        %5373 = vmatmul.mubr.f32.gmra.mxu0 %v4961
        %v5374 = vpop.f32.mrf.mxu0
        %v5375 = vadd.f32 %v5060, %v5374
        %v5376 = vpop.f32.mrf.mxu0
        %5377 = vmatprep.mubr.f32.mxu0 %v5156
        %5378 = vmatmul.mubr.f32.gmra.mxu0 %v4962
        %v5379 = vpop.f32.mrf.mxu0
        %v5380 = vadd.f32 %v5060, %v5379
        %v5381 = vpop.f32.mrf.mxu0
        %5382 = vdwg.mxu0
        %vm5383 = vcmp.gt.f32.partialorder %v5225, 0.0
        %vm5384 = vcmp.gt.f32.partialorder %v5230, 0.0
        %vm5385 = vcmp.gt.f32.partialorder %v5235, 0.0
        %vm5386 = vcmp.gt.f32.partialorder %v5240, 0.0
        %vm5387 = vcmp.gt.f32.partialorder %v5245, 0.0
        %vm5388 = vcmp.gt.f32.partialorder %v5250, 0.0
        %vm5389 = vcmp.gt.f32.partialorder %v5255, 0.0
        %vm5390 = vcmp.gt.f32.partialorder %v5260, 0.0
        %vm5391 = vcmp.gt.f32.partialorder %v5265, 0.0
        %vm5392 = vcmp.gt.f32.partialorder %v5270, 0.0
        %vm5393 = vcmp.gt.f32.partialorder %v5275, 0.0
        %vm5394 = vcmp.gt.f32.partialorder %v5280, 0.0
        %vm5395 = vcmp.gt.f32.partialorder %v5285, 0.0
        %vm5396 = vcmp.gt.f32.partialorder %v5290, 0.0
        %vm5397 = vcmp.gt.f32.partialorder %v5295, 0.0
        %vm5398 = vcmp.gt.f32.partialorder %v5300, 0.0
        %vm5399 = vcmp.gt.f32.partialorder %v5305, 0.0
        %vm5400 = vcmp.gt.f32.partialorder %v5310, 0.0
        %vm5401 = vcmp.gt.f32.partialorder %v5315, 0.0
        %vm5402 = vcmp.gt.f32.partialorder %v5320, 0.0
        %vm5403 = vcmp.gt.f32.partialorder %v5325, 0.0
        %vm5404 = vcmp.gt.f32.partialorder %v5330, 0.0
        %vm5405 = vcmp.gt.f32.partialorder %v5335, 0.0
        %vm5406 = vcmp.gt.f32.partialorder %v5340, 0.0
        %vm5407 = vcmp.gt.f32.partialorder %v5345, 0.0
        %vm5408 = vcmp.gt.f32.partialorder %v5350, 0.0
        %vm5409 = vcmp.gt.f32.partialorder %v5355, 0.0
        %vm5410 = vcmp.gt.f32.partialorder %v5360, 0.0
        %vm5411 = vcmp.gt.f32.partialorder %v5365, 0.0
        %vm5412 = vcmp.gt.f32.partialorder %v5370, 0.0
        %vm5413 = vcmp.gt.f32.partialorder %v5375, 0.0
        %vm5414 = vcmp.gt.f32.partialorder %v5380, 0.0
        %v5415 = vmul.f32 %v5225, 0.3
        %v5416 = vmul.f32 %v5230, 0.3
        %v5417 = vmul.f32 %v5235, 0.3
        %v5418 = vmul.f32 %v5240, 0.3
        %v5419 = vmul.f32 %v5245, 0.3
        %v5420 = vmul.f32 %v5250, 0.3
        %v5421 = vmul.f32 %v5255, 0.3
        %v5422 = vmul.f32 %v5260, 0.3
        %v5423 = vmul.f32 %v5265, 0.3
        %v5424 = vmul.f32 %v5270, 0.3
        %v5425 = vmul.f32 %v5275, 0.3
        %v5426 = vmul.f32 %v5280, 0.3
        %v5427 = vmul.f32 %v5285, 0.3
        %v5428 = vmul.f32 %v5290, 0.3
        %v5429 = vmul.f32 %v5295, 0.3
        %v5430 = vmul.f32 %v5300, 0.3
        %v5431 = vmul.f32 %v5305, 0.3
        %v5432 = vmul.f32 %v5310, 0.3
        %v5433 = vmul.f32 %v5315, 0.3
        %v5434 = vmul.f32 %v5320, 0.3
        %v5435 = vmul.f32 %v5325, 0.3
        %v5436 = vmul.f32 %v5330, 0.3
        %v5437 = vmul.f32 %v5335, 0.3
        %v5438 = vmul.f32 %v5340, 0.3
        %v5439 = vmul.f32 %v5345, 0.3
        %v5440 = vmul.f32 %v5350, 0.3
        %v5441 = vmul.f32 %v5355, 0.3
        %v5442 = vmul.f32 %v5360, 0.3
        %v5443 = vmul.f32 %v5365, 0.3
        %v5444 = vmul.f32 %v5370, 0.3
        %v5445 = vmul.f32 %v5375, 0.3
        %v5446 = vmul.f32 %v5380, 0.3
        %v5447 = vsel %vm5383, %v5225, %v5415
        %v5448 = vsel %vm5384, %v5230, %v5416
        %v5449 = vsel %vm5385, %v5235, %v5417
        %v5450 = vsel %vm5386, %v5240, %v5418
        %v5451 = vsel %vm5387, %v5245, %v5419
        %v5452 = vsel %vm5388, %v5250, %v5420
        %v5453 = vsel %vm5389, %v5255, %v5421
        %v5454 = vsel %vm5390, %v5260, %v5422
        %v5455 = vsel %vm5391, %v5265, %v5423
        %v5456 = vsel %vm5392, %v5270, %v5424
        %v5457 = vsel %vm5393, %v5275, %v5425
        %v5458 = vsel %vm5394, %v5280, %v5426
        %v5459 = vsel %vm5395, %v5285, %v5427
        %v5460 = vsel %vm5396, %v5290, %v5428
        %v5461 = vsel %vm5397, %v5295, %v5429
        %v5462 = vsel %vm5398, %v5300, %v5430
        %v5463 = vsel %vm5399, %v5305, %v5431
        %v5464 = vsel %vm5400, %v5310, %v5432
        %v5465 = vsel %vm5401, %v5315, %v5433
        %v5466 = vsel %vm5402, %v5320, %v5434
        %v5467 = vsel %vm5403, %v5325, %v5435
        %v5468 = vsel %vm5404, %v5330, %v5436
        %v5469 = vsel %vm5405, %v5335, %v5437
        %v5470 = vsel %vm5406, %v5340, %v5438
        %v5471 = vsel %vm5407, %v5345, %v5439
        %v5472 = vsel %vm5408, %v5350, %v5440
        %v5473 = vsel %vm5409, %v5355, %v5441
        %v5474 = vsel %vm5410, %v5360, %v5442
        %v5475 = vsel %vm5411, %v5365, %v5443
        %v5476 = vsel %vm5412, %v5370, %v5444
        %v5477 = vsel %vm5413, %v5375, %v5445
        %v5478 = vsel %vm5414, %v5380, %v5446
        %vm5479 = vcmp.gt.f32.partialorder %v5447, 0.0
        %vm5480 = vcmp.gt.f32.partialorder %v5448, 0.0
        %vm5481 = vcmp.gt.f32.partialorder %v5449, 0.0
        %vm5482 = vcmp.gt.f32.partialorder %v5450, 0.0
        %vm5483 = vcmp.gt.f32.partialorder %v5451, 0.0
        %vm5484 = vcmp.gt.f32.partialorder %v5452, 0.0
        %vm5485 = vcmp.gt.f32.partialorder %v5453, 0.0
        %vm5486 = vcmp.gt.f32.partialorder %v5454, 0.0
        %vm5487 = vcmp.gt.f32.partialorder %v5455, 0.0
        %vm5488 = vcmp.gt.f32.partialorder %v5456, 0.0
        %vm5489 = vcmp.gt.f32.partialorder %v5457, 0.0
        %vm5490 = vcmp.gt.f32.partialorder %v5458, 0.0
        %vm5491 = vcmp.gt.f32.partialorder %v5459, 0.0
        %vm5492 = vcmp.gt.f32.partialorder %v5460, 0.0
        %vm5493 = vcmp.gt.f32.partialorder %v5461, 0.0
        %vm5494 = vcmp.gt.f32.partialorder %v5462, 0.0
        %vm5495 = vcmp.gt.f32.partialorder %v5463, 0.0
        %vm5496 = vcmp.gt.f32.partialorder %v5464, 0.0
        %vm5497 = vcmp.gt.f32.partialorder %v5465, 0.0
        %vm5498 = vcmp.gt.f32.partialorder %v5466, 0.0
        %vm5499 = vcmp.gt.f32.partialorder %v5467, 0.0
        %vm5500 = vcmp.gt.f32.partialorder %v5468, 0.0
        %vm5501 = vcmp.gt.f32.partialorder %v5469, 0.0
        %vm5502 = vcmp.gt.f32.partialorder %v5470, 0.0
        %vm5503 = vcmp.gt.f32.partialorder %v5471, 0.0
        %vm5504 = vcmp.gt.f32.partialorder %v5472, 0.0
        %vm5505 = vcmp.gt.f32.partialorder %v5473, 0.0
        %vm5506 = vcmp.gt.f32.partialorder %v5474, 0.0
        %vm5507 = vcmp.gt.f32.partialorder %v5475, 0.0
        %vm5508 = vcmp.gt.f32.partialorder %v5476, 0.0
        %vm5509 = vcmp.gt.f32.partialorder %v5477, 0.0
        %vm5510 = vcmp.gt.f32.partialorder %v5478, 0.0
        %v5511 = vmul.f32 %v5447, 0.3
        %v5512 = vmul.f32 %v5448, 0.3
        %v5513 = vmul.f32 %v5449, 0.3
        %v5514 = vmul.f32 %v5450, 0.3
        %v5515 = vmul.f32 %v5451, 0.3
        %v5516 = vmul.f32 %v5452, 0.3
        %v5517 = vmul.f32 %v5453, 0.3
        %v5518 = vmul.f32 %v5454, 0.3
        %v5519 = vmul.f32 %v5455, 0.3
        %v5520 = vmul.f32 %v5456, 0.3
        %v5521 = vmul.f32 %v5457, 0.3
        %v5522 = vmul.f32 %v5458, 0.3
        %v5523 = vmul.f32 %v5459, 0.3
        %v5524 = vmul.f32 %v5460, 0.3
        %v5525 = vmul.f32 %v5461, 0.3
        %v5526 = vmul.f32 %v5462, 0.3
        %v5527 = vmul.f32 %v5463, 0.3
        %v5528 = vmul.f32 %v5464, 0.3
        %v5529 = vmul.f32 %v5465, 0.3
        %v5530 = vmul.f32 %v5466, 0.3
        %v5531 = vmul.f32 %v5467, 0.3
        %v5532 = vmul.f32 %v5468, 0.3
        %v5533 = vmul.f32 %v5469, 0.3
        %v5534 = vmul.f32 %v5470, 0.3
        %v5535 = vmul.f32 %v5471, 0.3
        %v5536 = vmul.f32 %v5472, 0.3
        %v5537 = vmul.f32 %v5473, 0.3
        %v5538 = vmul.f32 %v5474, 0.3
        %v5539 = vmul.f32 %v5475, 0.3
        %v5540 = vmul.f32 %v5476, 0.3
        %v5541 = vmul.f32 %v5477, 0.3
        %v5542 = vmul.f32 %v5478, 0.3
        %v5543 = vsel %vm5479, %v5447, %v5511
        %v5544 = vsel %vm5480, %v5448, %v5512
        %v5545 = vsel %vm5481, %v5449, %v5513
        %v5546 = vsel %vm5482, %v5450, %v5514
        %v5547 = vsel %vm5483, %v5451, %v5515
        %v5548 = vsel %vm5484, %v5452, %v5516
        %v5549 = vsel %vm5485, %v5453, %v5517
        %v5550 = vsel %vm5486, %v5454, %v5518
        %v5551 = vsel %vm5487, %v5455, %v5519
        %v5552 = vsel %vm5488, %v5456, %v5520
        %v5553 = vsel %vm5489, %v5457, %v5521
        %v5554 = vsel %vm5490, %v5458, %v5522
        %v5555 = vsel %vm5491, %v5459, %v5523
        %v5556 = vsel %vm5492, %v5460, %v5524
        %v5557 = vsel %vm5493, %v5461, %v5525
        %v5558 = vsel %vm5494, %v5462, %v5526
        %v5559 = vsel %vm5495, %v5463, %v5527
        %v5560 = vsel %vm5496, %v5464, %v5528
        %v5561 = vsel %vm5497, %v5465, %v5529
        %v5562 = vsel %vm5498, %v5466, %v5530
        %v5563 = vsel %vm5499, %v5467, %v5531
        %v5564 = vsel %vm5500, %v5468, %v5532
        %v5565 = vsel %vm5501, %v5469, %v5533
        %v5566 = vsel %vm5502, %v5470, %v5534
        %v5567 = vsel %vm5503, %v5471, %v5535
        %v5568 = vsel %vm5504, %v5472, %v5536
        %v5569 = vsel %vm5505, %v5473, %v5537
        %v5570 = vsel %vm5506, %v5474, %v5538
        %v5571 = vsel %vm5507, %v5475, %v5539
        %v5572 = vsel %vm5508, %v5476, %v5540
        %v5573 = vsel %vm5509, %v5477, %v5541
        %v5574 = vsel %vm5510, %v5478, %v5542
        %5575 = vrot.lane.b32.xlu0 %v3617, 112
        %v5576 = vpop.permute.xlu0 %5575
        %5577 = vrot.lane.b32.xlu0 %v3618, 112
        %v5578 = vpop.permute.xlu0 %5577
        %5579 = vrot.lane.b32.xlu0 %v3619, 112
        %v5580 = vpop.permute.xlu0 %5579
        %5581 = vrot.lane.b32.xlu0 %v3620, 112
        %v5582 = vpop.permute.xlu0 %5581
        %5583 = vrot.lane.b32.xlu0 %v3621, 112
        %v5584 = vpop.permute.xlu0 %5583
        %5585 = vrot.lane.b32.xlu0 %v3622, 112
        %v5586 = vpop.permute.xlu0 %5585
        %5587 = vrot.lane.b32.xlu0 %v3623, 112
        %v5588 = vpop.permute.xlu0 %5587
        %5589 = vrot.lane.b32.xlu0 %v3624, 112
        %v5590 = vpop.permute.xlu0 %5589
        %5591 = vrot.lane.b32.xlu0 %v3625, 112
        %v5592 = vpop.permute.xlu0 %5591
        %5593 = vrot.lane.b32.xlu0 %v3626, 112
        %v5594 = vpop.permute.xlu0 %5593
        %5595 = vrot.lane.b32.xlu0 %v3627, 112
        %v5596 = vpop.permute.xlu0 %5595
        %5597 = vrot.lane.b32.xlu0 %v3628, 112
        %v5598 = vpop.permute.xlu0 %5597
        %5599 = vrot.lane.b32.xlu0 %v3629, 112
        %v5600 = vpop.permute.xlu0 %5599
        %5601 = vrot.lane.b32.xlu0 %v3630, 112
        %v5602 = vpop.permute.xlu0 %5601
        %5603 = vrot.lane.b32.xlu0 %v3631, 112
        %v5604 = vpop.permute.xlu0 %5603
        %5605 = vrot.lane.b32.xlu0 %v3632, 112
        %v5606 = vpop.permute.xlu0 %5605
        %5607 = vrot.lane.b32.xlu0 %v3633, 112
        %v5608 = vpop.permute.xlu0 %5607
        %5609 = vrot.lane.b32.xlu0 %v3634, 112
        %v5610 = vpop.permute.xlu0 %5609
        %5611 = vrot.lane.b32.xlu0 %v3635, 112
        %v5612 = vpop.permute.xlu0 %5611
        %5613 = vrot.lane.b32.xlu0 %v3636, 112
        %v5614 = vpop.permute.xlu0 %5613
        %5615 = vrot.lane.b32.xlu0 %v3637, 112
        %v5616 = vpop.permute.xlu0 %5615
        %5617 = vrot.lane.b32.xlu0 %v3638, 112
        %v5618 = vpop.permute.xlu0 %5617
        %5619 = vrot.lane.b32.xlu0 %v3639, 112
        %v5620 = vpop.permute.xlu0 %5619
        %5621 = vrot.lane.b32.xlu0 %v3640, 112
        %v5622 = vpop.permute.xlu0 %5621
        %5623 = vrot.lane.b32.xlu0 %v3641, 112
        %v5624 = vpop.permute.xlu0 %5623
        %5625 = vrot.lane.b32.xlu0 %v3642, 112
        %v5626 = vpop.permute.xlu0 %5625
        %5627 = vrot.lane.b32.xlu0 %v3643, 112
        %v5628 = vpop.permute.xlu0 %5627
        %5629 = vrot.lane.b32.xlu0 %v3644, 112
        %v5630 = vpop.permute.xlu0 %5629
        %5631 = vrot.lane.b32.xlu0 %v3645, 112
        %v5632 = vpop.permute.xlu0 %5631
        %5633 = vrot.lane.b32.xlu0 %v3646, 112
        %v5634 = vpop.permute.xlu0 %5633
        %5635 = vrot.lane.b32.xlu0 %v3647, 112
        %v5636 = vpop.permute.xlu0 %5635
        %5637 = vrot.lane.b32.xlu0 %v3648, 112
        %v5638 = vpop.permute.xlu0 %5637
        %vm5671 = vcmask 130048
        %v5672 = vsel %vm5671, %v5543, %v5576
        %v5673 = vsel %vm5671, %v5544, %v5578
        %v5674 = vsel %vm5671, %v5545, %v5580
        %v5675 = vsel %vm5671, %v5546, %v5582
        %v5676 = vsel %vm5671, %v5547, %v5584
        %v5677 = vsel %vm5671, %v5548, %v5586
        %v5678 = vsel %vm5671, %v5549, %v5588
        %v5679 = vsel %vm5671, %v5550, %v5590
        %v5680 = vsel %vm5671, %v5551, %v5592
        %v5681 = vsel %vm5671, %v5552, %v5594
        %v5682 = vsel %vm5671, %v5553, %v5596
        %v5683 = vsel %vm5671, %v5554, %v5598
        %v5684 = vsel %vm5671, %v5555, %v5600
        %v5685 = vsel %vm5671, %v5556, %v5602
        %v5686 = vsel %vm5671, %v5557, %v5604
        %v5687 = vsel %vm5671, %v5558, %v5606
        %v5688 = vsel %vm5671, %v5559, %v5608
        %v5689 = vsel %vm5671, %v5560, %v5610
        %v5690 = vsel %vm5671, %v5561, %v5612
        %v5691 = vsel %vm5671, %v5562, %v5614
        %v5692 = vsel %vm5671, %v5563, %v5616
        %v5693 = vsel %vm5671, %v5564, %v5618
        %v5694 = vsel %vm5671, %v5565, %v5620
        %v5695 = vsel %vm5671, %v5566, %v5622
        %v5696 = vsel %vm5671, %v5567, %v5624
        %v5697 = vsel %vm5671, %v5568, %v5626
        %v5698 = vsel %vm5671, %v5569, %v5628
        %v5699 = vsel %vm5671, %v5570, %v5630
        %v5700 = vsel %vm5671, %v5571, %v5632
        %v5701 = vsel %vm5671, %v5572, %v5634
        %v5702 = vsel %vm5671, %v5573, %v5636
        %v5703 = vsel %vm5671, %v5574, %v5638
        %v5704 = vrot.slane %v5672, 5
        %v5705 = vrot.slane %v5673, 5
        %v5706 = vrot.slane %v5674, 5
        %v5707 = vrot.slane %v5675, 5
        %v5708 = vrot.slane %v5676, 5
        %v5709 = vrot.slane %v5677, 5
        %v5710 = vrot.slane %v5678, 5
        %v5711 = vrot.slane %v5679, 5
        %v5712 = vrot.slane %v5680, 5
        %v5713 = vrot.slane %v5681, 5
        %v5714 = vrot.slane %v5682, 5
        %v5715 = vrot.slane %v5683, 5
        %v5716 = vrot.slane %v5684, 5
        %v5717 = vrot.slane %v5685, 5
        %v5718 = vrot.slane %v5686, 5
        %v5719 = vrot.slane %v5687, 5
        %v5720 = vrot.slane %v5688, 5
        %v5721 = vrot.slane %v5689, 5
        %v5722 = vrot.slane %v5690, 5
        %v5723 = vrot.slane %v5691, 5
        %v5724 = vrot.slane %v5692, 5
        %v5725 = vrot.slane %v5693, 5
        %v5726 = vrot.slane %v5694, 5
        %v5727 = vrot.slane %v5695, 5
        %v5728 = vrot.slane %v5696, 5
        %v5729 = vrot.slane %v5697, 5
        %v5730 = vrot.slane %v5698, 5
        %v5731 = vrot.slane %v5699, 5
        %v5732 = vrot.slane %v5700, 5
        %v5733 = vrot.slane %v5701, 5
        %v5734 = vrot.slane %v5702, 5
        %v5735 = vrot.slane %v5703, 5
        %v5736 = vsel %vm1529, %v5734, %v5735
        %v5737 = vsel %vm1529, %v5733, %v5734
        %v5738 = vsel %vm1529, %v5732, %v5733
        %v5739 = vsel %vm1529, %v5731, %v5732
        %v5740 = vsel %vm1529, %v5730, %v5731
        %v5741 = vsel %vm1529, %v5729, %v5730
        %v5742 = vsel %vm1529, %v5728, %v5729
        %v5743 = vsel %vm1529, %v5727, %v5728
        %v5744 = vsel %vm1529, %v5726, %v5727
        %v5745 = vsel %vm1529, %v5725, %v5726
        %v5746 = vsel %vm1529, %v5724, %v5725
        %v5747 = vsel %vm1529, %v5723, %v5724
        %v5748 = vsel %vm1529, %v5722, %v5723
        %v5749 = vsel %vm1529, %v5721, %v5722
        %v5750 = vsel %vm1529, %v5720, %v5721
        %v5751 = vsel %vm1529, %v5719, %v5720
        %v5752 = vsel %vm1529, %v5718, %v5719
        %v5753 = vsel %vm1529, %v5717, %v5718
        %v5754 = vsel %vm1529, %v5716, %v5717
        %v5755 = vsel %vm1529, %v5715, %v5716
        %v5756 = vsel %vm1529, %v5714, %v5715
        %v5757 = vsel %vm1529, %v5713, %v5714
        %v5758 = vsel %vm1529, %v5712, %v5713
        %v5759 = vsel %vm1529, %v5711, %v5712
        %v5760 = vsel %vm1529, %v5710, %v5711
        %v5761 = vsel %vm1529, %v5709, %v5710
        %v5762 = vsel %vm1529, %v5708, %v5709
        %v5763 = vsel %vm1529, %v5707, %v5708
        %v5764 = vsel %vm1529, %v5706, %v5707
        %v5765 = vsel %vm1529, %v5705, %v5706
        %v5766 = vsel %vm1529, %v5704, %v5705
        %v5767 = vsel %vm1529, %v5735, %v5704
        %v5768 = vsel %vm1594, %v5767, 0.0
        %v5769 = vsel %vm1595, %v5766, 0.0
        %v5770 = vsel %vm1596, %v5765, 0.0
        %v5771 = vsel %vm1597, %v5764, 0.0
        %v5772 = vsel %vm1598, %v5763, 0.0
        %v5773 = vsel %vm1599, %v5762, 0.0
        %v5774 = vsel %vm1600, %v5761, 0.0
        %v5775 = vsel %vm1601, %v5760, 0.0
        %v5776 = vsel %vm1602, %v5759, 0.0
        %v5777 = vsel %vm1603, %v5758, 0.0
        %v5778 = vsel %vm1604, %v5757, 0.0
        %v5779 = vsel %vm1605, %v5756, 0.0
        %v5780 = vsel %vm1606, %v5755, 0.0
        %v5781 = vsel %vm1607, %v5754, 0.0
        %v5782 = vsel %vm1608, %v5753, 0.0
        %v5783 = vsel %vm1609, %v5752, 0.0
        %v5784 = vsel %vm1610, %v5751, 0.0
        %v5785 = vsel %vm1611, %v5750, 0.0
        %v5786 = vsel %vm1612, %v5749, 0.0
        %v5787 = vsel %vm1613, %v5748, 0.0
        %v5788 = vsel %vm1614, %v5747, 0.0
        %v5789 = vsel %vm1615, %v5746, 0.0
        %v5790 = vsel %vm1616, %v5745, 0.0
        %v5791 = vsel %vm1617, %v5744, 0.0
        %v5792 = vsel %vm1618, %v5743, 0.0
        %v5793 = vsel %vm1619, %v5742, 0.0
        %v5794 = vsel %vm1620, %v5741, 0.0
        %v5795 = vsel %vm1621, %v5740, 0.0
        %v5796 = vsel %vm1622, %v5739, 0.0
        %v5797 = vsel %vm1623, %v5738, 0.0
        %v5798 = vsel %vm1624, %v5737, 0.0
        %v5799 = vsel %vm1625, %v5736, 0.0
        %v5800 = vrot.slane %v5672, 6
        %v5801 = vrot.slane %v5673, 6
        %v5802 = vrot.slane %v5674, 6
        %v5803 = vrot.slane %v5675, 6
        %v5804 = vrot.slane %v5676, 6
        %v5805 = vrot.slane %v5677, 6
        %v5806 = vrot.slane %v5678, 6
        %v5807 = vrot.slane %v5679, 6
        %v5808 = vrot.slane %v5680, 6
        %v5809 = vrot.slane %v5681, 6
        %v5810 = vrot.slane %v5682, 6
        %v5811 = vrot.slane %v5683, 6
        %v5812 = vrot.slane %v5684, 6
        %v5813 = vrot.slane %v5685, 6
        %v5814 = vrot.slane %v5686, 6
        %v5815 = vrot.slane %v5687, 6
        %v5816 = vrot.slane %v5688, 6
        %v5817 = vrot.slane %v5689, 6
        %v5818 = vrot.slane %v5690, 6
        %v5819 = vrot.slane %v5691, 6
        %v5820 = vrot.slane %v5692, 6
        %v5821 = vrot.slane %v5693, 6
        %v5822 = vrot.slane %v5694, 6
        %v5823 = vrot.slane %v5695, 6
        %v5824 = vrot.slane %v5696, 6
        %v5825 = vrot.slane %v5697, 6
        %v5826 = vrot.slane %v5698, 6
        %v5827 = vrot.slane %v5699, 6
        %v5828 = vrot.slane %v5700, 6
        %v5829 = vrot.slane %v5701, 6
        %v5830 = vrot.slane %v5702, 6
        %v5831 = vrot.slane %v5703, 6
        %v5832 = vsel %vm1690, %v5830, %v5831
        %v5833 = vsel %vm1690, %v5829, %v5830
        %v5834 = vsel %vm1690, %v5828, %v5829
        %v5835 = vsel %vm1690, %v5827, %v5828
        %v5836 = vsel %vm1690, %v5826, %v5827
        %v5837 = vsel %vm1690, %v5825, %v5826
        %v5838 = vsel %vm1690, %v5824, %v5825
        %v5839 = vsel %vm1690, %v5823, %v5824
        %v5840 = vsel %vm1690, %v5822, %v5823
        %v5841 = vsel %vm1690, %v5821, %v5822
        %v5842 = vsel %vm1690, %v5820, %v5821
        %v5843 = vsel %vm1690, %v5819, %v5820
        %v5844 = vsel %vm1690, %v5818, %v5819
        %v5845 = vsel %vm1690, %v5817, %v5818
        %v5846 = vsel %vm1690, %v5816, %v5817
        %v5847 = vsel %vm1690, %v5815, %v5816
        %v5848 = vsel %vm1690, %v5814, %v5815
        %v5849 = vsel %vm1690, %v5813, %v5814
        %v5850 = vsel %vm1690, %v5812, %v5813
        %v5851 = vsel %vm1690, %v5811, %v5812
        %v5852 = vsel %vm1690, %v5810, %v5811
        %v5853 = vsel %vm1690, %v5809, %v5810
        %v5854 = vsel %vm1690, %v5808, %v5809
        %v5855 = vsel %vm1690, %v5807, %v5808
        %v5856 = vsel %vm1690, %v5806, %v5807
        %v5857 = vsel %vm1690, %v5805, %v5806
        %v5858 = vsel %vm1690, %v5804, %v5805
        %v5859 = vsel %vm1690, %v5803, %v5804
        %v5860 = vsel %vm1690, %v5802, %v5803
        %v5861 = vsel %vm1690, %v5801, %v5802
        %v5862 = vsel %vm1690, %v5800, %v5801
        %v5863 = vsel %vm1690, %v5831, %v5800
        %v5864 = vsel %vm1755, %v5863, 0.0
        %v5865 = vsel %vm1756, %v5862, 0.0
        %v5866 = vsel %vm1757, %v5861, 0.0
        %v5867 = vsel %vm1758, %v5860, 0.0
        %v5868 = vsel %vm1759, %v5859, 0.0
        %v5869 = vsel %vm1760, %v5858, 0.0
        %v5870 = vsel %vm1761, %v5857, 0.0
        %v5871 = vsel %vm1762, %v5856, 0.0
        %v5872 = vsel %vm1763, %v5855, 0.0
        %v5873 = vsel %vm1764, %v5854, 0.0
        %v5874 = vsel %vm1765, %v5853, 0.0
        %v5875 = vsel %vm1766, %v5852, 0.0
        %v5876 = vsel %vm1767, %v5851, 0.0
        %v5877 = vsel %vm1768, %v5850, 0.0
        %v5878 = vsel %vm1769, %v5849, 0.0
        %v5879 = vsel %vm1770, %v5848, 0.0
        %v5880 = vsel %vm1771, %v5847, 0.0
        %v5881 = vsel %vm1772, %v5846, 0.0
        %v5882 = vsel %vm1773, %v5845, 0.0
        %v5883 = vsel %vm1774, %v5844, 0.0
        %v5884 = vsel %vm1775, %v5843, 0.0
        %v5885 = vsel %vm1776, %v5842, 0.0
        %v5886 = vsel %vm1777, %v5841, 0.0
        %v5887 = vsel %vm1778, %v5840, 0.0
        %v5888 = vsel %vm1779, %v5839, 0.0
        %v5889 = vsel %vm1780, %v5838, 0.0
        %v5890 = vsel %vm1781, %v5837, 0.0
        %v5891 = vsel %vm1782, %v5836, 0.0
        %v5892 = vsel %vm1783, %v5835, 0.0
        %v5893 = vsel %vm1784, %v5834, 0.0
        %v5894 = vsel %vm1785, %v5833, 0.0
        %v5895 = vsel %vm1786, %v5832, 0.0
        %v5896 = vrot.slane %v5672, 7
        %v5897 = vrot.slane %v5673, 7
        %v5898 = vrot.slane %v5674, 7
        %v5899 = vrot.slane %v5675, 7
        %v5900 = vrot.slane %v5676, 7
        %v5901 = vrot.slane %v5677, 7
        %v5902 = vrot.slane %v5678, 7
        %v5903 = vrot.slane %v5679, 7
        %v5904 = vrot.slane %v5680, 7
        %v5905 = vrot.slane %v5681, 7
        %v5906 = vrot.slane %v5682, 7
        %v5907 = vrot.slane %v5683, 7
        %v5908 = vrot.slane %v5684, 7
        %v5909 = vrot.slane %v5685, 7
        %v5910 = vrot.slane %v5686, 7
        %v5911 = vrot.slane %v5687, 7
        %v5912 = vrot.slane %v5688, 7
        %v5913 = vrot.slane %v5689, 7
        %v5914 = vrot.slane %v5690, 7
        %v5915 = vrot.slane %v5691, 7
        %v5916 = vrot.slane %v5692, 7
        %v5917 = vrot.slane %v5693, 7
        %v5918 = vrot.slane %v5694, 7
        %v5919 = vrot.slane %v5695, 7
        %v5920 = vrot.slane %v5696, 7
        %v5921 = vrot.slane %v5697, 7
        %v5922 = vrot.slane %v5698, 7
        %v5923 = vrot.slane %v5699, 7
        %v5924 = vrot.slane %v5700, 7
        %v5925 = vrot.slane %v5701, 7
        %v5926 = vrot.slane %v5702, 7
        %v5927 = vrot.slane %v5703, 7
        %v5928 = vsel %vm1851, %v5926, %v5927
        %v5929 = vsel %vm1851, %v5925, %v5926
        %v5930 = vsel %vm1851, %v5924, %v5925
        %v5931 = vsel %vm1851, %v5923, %v5924
        %v5932 = vsel %vm1851, %v5922, %v5923
        %v5933 = vsel %vm1851, %v5921, %v5922
        %v5934 = vsel %vm1851, %v5920, %v5921
        %v5935 = vsel %vm1851, %v5919, %v5920
        %v5936 = vsel %vm1851, %v5918, %v5919
        %v5937 = vsel %vm1851, %v5917, %v5918
        %v5938 = vsel %vm1851, %v5916, %v5917
        %v5939 = vsel %vm1851, %v5915, %v5916
        %v5940 = vsel %vm1851, %v5914, %v5915
        %v5941 = vsel %vm1851, %v5913, %v5914
        %v5942 = vsel %vm1851, %v5912, %v5913
        %v5943 = vsel %vm1851, %v5911, %v5912
        %v5944 = vsel %vm1851, %v5910, %v5911
        %v5945 = vsel %vm1851, %v5909, %v5910
        %v5946 = vsel %vm1851, %v5908, %v5909
        %v5947 = vsel %vm1851, %v5907, %v5908
        %v5948 = vsel %vm1851, %v5906, %v5907
        %v5949 = vsel %vm1851, %v5905, %v5906
        %v5950 = vsel %vm1851, %v5904, %v5905
        %v5951 = vsel %vm1851, %v5903, %v5904
        %v5952 = vsel %vm1851, %v5902, %v5903
        %v5953 = vsel %vm1851, %v5901, %v5902
        %v5954 = vsel %vm1851, %v5900, %v5901
        %v5955 = vsel %vm1851, %v5899, %v5900
        %v5956 = vsel %vm1851, %v5898, %v5899
        %v5957 = vsel %vm1851, %v5897, %v5898
        %v5958 = vsel %vm1851, %v5896, %v5897
        %v5959 = vsel %vm1851, %v5927, %v5896
        %v5960 = vsel %vm1916, %v5959, 0.0
        %v5961 = vsel %vm1917, %v5958, 0.0
        %v5962 = vsel %vm1918, %v5957, 0.0
        %v5963 = vsel %vm1919, %v5956, 0.0
        %v5964 = vsel %vm1920, %v5955, 0.0
        %v5965 = vsel %vm1921, %v5954, 0.0
        %v5966 = vsel %vm1922, %v5953, 0.0
        %v5967 = vsel %vm1923, %v5952, 0.0
        %v5968 = vsel %vm1924, %v5951, 0.0
        %v5969 = vsel %vm1925, %v5950, 0.0
        %v5970 = vsel %vm1926, %v5949, 0.0
        %v5971 = vsel %vm1927, %v5948, 0.0
        %v5972 = vsel %vm1928, %v5947, 0.0
        %v5973 = vsel %vm1929, %v5946, 0.0
        %v5974 = vsel %vm1930, %v5945, 0.0
        %v5975 = vsel %vm1931, %v5944, 0.0
        %v5976 = vsel %vm1932, %v5943, 0.0
        %v5977 = vsel %vm1933, %v5942, 0.0
        %v5978 = vsel %vm1934, %v5941, 0.0
        %v5979 = vsel %vm1935, %v5940, 0.0
        %v5980 = vsel %vm1936, %v5939, 0.0
        %v5981 = vsel %vm1937, %v5938, 0.0
        %v5982 = vsel %vm1938, %v5937, 0.0
        %v5983 = vsel %vm1939, %v5936, 0.0
        %v5984 = vsel %vm1940, %v5935, 0.0
        %v5985 = vsel %vm1941, %v5934, 0.0
        %v5986 = vsel %vm1942, %v5933, 0.0
        %v5987 = vsel %vm1943, %v5932, 0.0
        %v5988 = vsel %vm1944, %v5931, 0.0
        %v5989 = vsel %vm1945, %v5930, 0.0
        %v5990 = vsel %vm1946, %v5929, 0.0
        %v5991 = vsel %vm1947, %v5928, 0.0
        %v5992 = vrot.slane %v5672, 1
        %v5993 = vrot.slane %v5673, 1
        %v5994 = vrot.slane %v5674, 1
        %v5995 = vrot.slane %v5675, 1
        %v5996 = vrot.slane %v5676, 1
        %v5997 = vrot.slane %v5677, 1
        %v5998 = vrot.slane %v5678, 1
        %v5999 = vrot.slane %v5679, 1
        %v6000 = vrot.slane %v5680, 1
        %v6001 = vrot.slane %v5681, 1
        %v6002 = vrot.slane %v5682, 1
        %v6003 = vrot.slane %v5683, 1
        %v6004 = vrot.slane %v5684, 1
        %v6005 = vrot.slane %v5685, 1
        %v6006 = vrot.slane %v5686, 1
        %v6007 = vrot.slane %v5687, 1
        %v6008 = vrot.slane %v5688, 1
        %v6009 = vrot.slane %v5689, 1
        %v6010 = vrot.slane %v5690, 1
        %v6011 = vrot.slane %v5691, 1
        %v6012 = vrot.slane %v5692, 1
        %v6013 = vrot.slane %v5693, 1
        %v6014 = vrot.slane %v5694, 1
        %v6015 = vrot.slane %v5695, 1
        %v6016 = vrot.slane %v5696, 1
        %v6017 = vrot.slane %v5697, 1
        %v6018 = vrot.slane %v5698, 1
        %v6019 = vrot.slane %v5699, 1
        %v6020 = vrot.slane %v5700, 1
        %v6021 = vrot.slane %v5701, 1
        %v6022 = vrot.slane %v5702, 1
        %v6023 = vrot.slane %v5703, 1
        %v6024 = vsel %vm2012, %v6022, %v6023
        %v6025 = vsel %vm2012, %v6021, %v6022
        %v6026 = vsel %vm2012, %v6020, %v6021
        %v6027 = vsel %vm2012, %v6019, %v6020
        %v6028 = vsel %vm2012, %v6018, %v6019
        %v6029 = vsel %vm2012, %v6017, %v6018
        %v6030 = vsel %vm2012, %v6016, %v6017
        %v6031 = vsel %vm2012, %v6015, %v6016
        %v6032 = vsel %vm2012, %v6014, %v6015
        %v6033 = vsel %vm2012, %v6013, %v6014
        %v6034 = vsel %vm2012, %v6012, %v6013
        %v6035 = vsel %vm2012, %v6011, %v6012
        %v6036 = vsel %vm2012, %v6010, %v6011
        %v6037 = vsel %vm2012, %v6009, %v6010
        %v6038 = vsel %vm2012, %v6008, %v6009
        %v6039 = vsel %vm2012, %v6007, %v6008
        %v6040 = vsel %vm2012, %v6006, %v6007
        %v6041 = vsel %vm2012, %v6005, %v6006
        %v6042 = vsel %vm2012, %v6004, %v6005
        %v6043 = vsel %vm2012, %v6003, %v6004
        %v6044 = vsel %vm2012, %v6002, %v6003
        %v6045 = vsel %vm2012, %v6001, %v6002
        %v6046 = vsel %vm2012, %v6000, %v6001
        %v6047 = vsel %vm2012, %v5999, %v6000
        %v6048 = vsel %vm2012, %v5998, %v5999
        %v6049 = vsel %vm2012, %v5997, %v5998
        %v6050 = vsel %vm2012, %v5996, %v5997
        %v6051 = vsel %vm2012, %v5995, %v5996
        %v6052 = vsel %vm2012, %v5994, %v5995
        %v6053 = vsel %vm2012, %v5993, %v5994
        %v6054 = vsel %vm2012, %v5992, %v5993
        %v6055 = vsel %vm2012, %v6023, %v5992
        %v6056 = vsel %vm2077, %v6054, 0.0
        %v6057 = vsel %vm2078, %v6053, 0.0
        %v6058 = vsel %vm2079, %v6052, 0.0
        %v6059 = vsel %vm2080, %v6051, 0.0
        %v6060 = vsel %vm2081, %v6050, 0.0
        %v6061 = vsel %vm2082, %v6049, 0.0
        %v6062 = vsel %vm2083, %v6048, 0.0
        %v6063 = vsel %vm2084, %v6047, 0.0
        %v6064 = vsel %vm2085, %v6046, 0.0
        %v6065 = vsel %vm2086, %v6045, 0.0
        %v6066 = vsel %vm2087, %v6044, 0.0
        %v6067 = vsel %vm2088, %v6043, 0.0
        %v6068 = vsel %vm2089, %v6042, 0.0
        %v6069 = vsel %vm2090, %v6041, 0.0
        %v6070 = vsel %vm2091, %v6040, 0.0
        %v6071 = vsel %vm2092, %v6039, 0.0
        %v6072 = vsel %vm2093, %v6038, 0.0
        %v6073 = vsel %vm2094, %v6037, 0.0
        %v6074 = vsel %vm2095, %v6036, 0.0
        %v6075 = vsel %vm2096, %v6035, 0.0
        %v6076 = vsel %vm2097, %v6034, 0.0
        %v6077 = vsel %vm2098, %v6033, 0.0
        %v6078 = vsel %vm2099, %v6032, 0.0
        %v6079 = vsel %vm2100, %v6031, 0.0
        %v6080 = vsel %vm2101, %v6030, 0.0
        %v6081 = vsel %vm2102, %v6029, 0.0
        %v6082 = vsel %vm2103, %v6028, 0.0
        %v6083 = vsel %vm2104, %v6027, 0.0
        %v6084 = vsel %vm2105, %v6026, 0.0
        %v6085 = vsel %vm2106, %v6025, 0.0
        %v6086 = vsel %vm2107, %v6024, 0.0
        %v6087 = vsel %vm2108, %v6055, 0.0
        %v6088 = vrot.slane %v5672, 2
        %v6089 = vrot.slane %v5673, 2
        %v6090 = vrot.slane %v5674, 2
        %v6091 = vrot.slane %v5675, 2
        %v6092 = vrot.slane %v5676, 2
        %v6093 = vrot.slane %v5677, 2
        %v6094 = vrot.slane %v5678, 2
        %v6095 = vrot.slane %v5679, 2
        %v6096 = vrot.slane %v5680, 2
        %v6097 = vrot.slane %v5681, 2
        %v6098 = vrot.slane %v5682, 2
        %v6099 = vrot.slane %v5683, 2
        %v6100 = vrot.slane %v5684, 2
        %v6101 = vrot.slane %v5685, 2
        %v6102 = vrot.slane %v5686, 2
        %v6103 = vrot.slane %v5687, 2
        %v6104 = vrot.slane %v5688, 2
        %v6105 = vrot.slane %v5689, 2
        %v6106 = vrot.slane %v5690, 2
        %v6107 = vrot.slane %v5691, 2
        %v6108 = vrot.slane %v5692, 2
        %v6109 = vrot.slane %v5693, 2
        %v6110 = vrot.slane %v5694, 2
        %v6111 = vrot.slane %v5695, 2
        %v6112 = vrot.slane %v5696, 2
        %v6113 = vrot.slane %v5697, 2
        %v6114 = vrot.slane %v5698, 2
        %v6115 = vrot.slane %v5699, 2
        %v6116 = vrot.slane %v5700, 2
        %v6117 = vrot.slane %v5701, 2
        %v6118 = vrot.slane %v5702, 2
        %v6119 = vrot.slane %v5703, 2
        %v6120 = vsel %vm2173, %v6118, %v6119
        %v6121 = vsel %vm2173, %v6117, %v6118
        %v6122 = vsel %vm2173, %v6116, %v6117
        %v6123 = vsel %vm2173, %v6115, %v6116
        %v6124 = vsel %vm2173, %v6114, %v6115
        %v6125 = vsel %vm2173, %v6113, %v6114
        %v6126 = vsel %vm2173, %v6112, %v6113
        %v6127 = vsel %vm2173, %v6111, %v6112
        %v6128 = vsel %vm2173, %v6110, %v6111
        %v6129 = vsel %vm2173, %v6109, %v6110
        %v6130 = vsel %vm2173, %v6108, %v6109
        %v6131 = vsel %vm2173, %v6107, %v6108
        %v6132 = vsel %vm2173, %v6106, %v6107
        %v6133 = vsel %vm2173, %v6105, %v6106
        %v6134 = vsel %vm2173, %v6104, %v6105
        %v6135 = vsel %vm2173, %v6103, %v6104
        %v6136 = vsel %vm2173, %v6102, %v6103
        %v6137 = vsel %vm2173, %v6101, %v6102
        %v6138 = vsel %vm2173, %v6100, %v6101
        %v6139 = vsel %vm2173, %v6099, %v6100
        %v6140 = vsel %vm2173, %v6098, %v6099
        %v6141 = vsel %vm2173, %v6097, %v6098
        %v6142 = vsel %vm2173, %v6096, %v6097
        %v6143 = vsel %vm2173, %v6095, %v6096
        %v6144 = vsel %vm2173, %v6094, %v6095
        %v6145 = vsel %vm2173, %v6093, %v6094
        %v6146 = vsel %vm2173, %v6092, %v6093
        %v6147 = vsel %vm2173, %v6091, %v6092
        %v6148 = vsel %vm2173, %v6090, %v6091
        %v6149 = vsel %vm2173, %v6089, %v6090
        %v6150 = vsel %vm2173, %v6088, %v6089
        %v6151 = vsel %vm2173, %v6119, %v6088
        %v6152 = vsel %vm2238, %v6150, 0.0
        %v6153 = vsel %vm2239, %v6149, 0.0
        %v6154 = vsel %vm2240, %v6148, 0.0
        %v6155 = vsel %vm2241, %v6147, 0.0
        %v6156 = vsel %vm2242, %v6146, 0.0
        %v6157 = vsel %vm2243, %v6145, 0.0
        %v6158 = vsel %vm2244, %v6144, 0.0
        %v6159 = vsel %vm2245, %v6143, 0.0
        %v6160 = vsel %vm2246, %v6142, 0.0
        %v6161 = vsel %vm2247, %v6141, 0.0
        %v6162 = vsel %vm2248, %v6140, 0.0
        %v6163 = vsel %vm2249, %v6139, 0.0
        %v6164 = vsel %vm2250, %v6138, 0.0
        %v6165 = vsel %vm2251, %v6137, 0.0
        %v6166 = vsel %vm2252, %v6136, 0.0
        %v6167 = vsel %vm2253, %v6135, 0.0
        %v6168 = vsel %vm2254, %v6134, 0.0
        %v6169 = vsel %vm2255, %v6133, 0.0
        %v6170 = vsel %vm2256, %v6132, 0.0
        %v6171 = vsel %vm2257, %v6131, 0.0
        %v6172 = vsel %vm2258, %v6130, 0.0
        %v6173 = vsel %vm2259, %v6129, 0.0
        %v6174 = vsel %vm2260, %v6128, 0.0
        %v6175 = vsel %vm2261, %v6127, 0.0
        %v6176 = vsel %vm2262, %v6126, 0.0
        %v6177 = vsel %vm2263, %v6125, 0.0
        %v6178 = vsel %vm2264, %v6124, 0.0
        %v6179 = vsel %vm2265, %v6123, 0.0
        %v6180 = vsel %vm2266, %v6122, 0.0
        %v6181 = vsel %vm2267, %v6121, 0.0
        %v6182 = vsel %vm2268, %v6120, 0.0
        %v6183 = vsel %vm2269, %v6151, 0.0
        %v6184 = vrot.slane %v5672, 3
        %v6185 = vrot.slane %v5673, 3
        %v6186 = vrot.slane %v5674, 3
        %v6187 = vrot.slane %v5675, 3
        %v6188 = vrot.slane %v5676, 3
        %v6189 = vrot.slane %v5677, 3
        %v6190 = vrot.slane %v5678, 3
        %v6191 = vrot.slane %v5679, 3
        %v6192 = vrot.slane %v5680, 3
        %v6193 = vrot.slane %v5681, 3
        %v6194 = vrot.slane %v5682, 3
        %v6195 = vrot.slane %v5683, 3
        %v6196 = vrot.slane %v5684, 3
        %v6197 = vrot.slane %v5685, 3
        %v6198 = vrot.slane %v5686, 3
        %v6199 = vrot.slane %v5687, 3
        %v6200 = vrot.slane %v5688, 3
        %v6201 = vrot.slane %v5689, 3
        %v6202 = vrot.slane %v5690, 3
        %v6203 = vrot.slane %v5691, 3
        %v6204 = vrot.slane %v5692, 3
        %v6205 = vrot.slane %v5693, 3
        %v6206 = vrot.slane %v5694, 3
        %v6207 = vrot.slane %v5695, 3
        %v6208 = vrot.slane %v5696, 3
        %v6209 = vrot.slane %v5697, 3
        %v6210 = vrot.slane %v5698, 3
        %v6211 = vrot.slane %v5699, 3
        %v6212 = vrot.slane %v5700, 3
        %v6213 = vrot.slane %v5701, 3
        %v6214 = vrot.slane %v5702, 3
        %v6215 = vrot.slane %v5703, 3
        %v6216 = vsel %vm2334, %v6214, %v6215
        %v6217 = vsel %vm2334, %v6213, %v6214
        %v6218 = vsel %vm2334, %v6212, %v6213
        %v6219 = vsel %vm2334, %v6211, %v6212
        %v6220 = vsel %vm2334, %v6210, %v6211
        %v6221 = vsel %vm2334, %v6209, %v6210
        %v6222 = vsel %vm2334, %v6208, %v6209
        %v6223 = vsel %vm2334, %v6207, %v6208
        %v6224 = vsel %vm2334, %v6206, %v6207
        %v6225 = vsel %vm2334, %v6205, %v6206
        %v6226 = vsel %vm2334, %v6204, %v6205
        %v6227 = vsel %vm2334, %v6203, %v6204
        %v6228 = vsel %vm2334, %v6202, %v6203
        %v6229 = vsel %vm2334, %v6201, %v6202
        %v6230 = vsel %vm2334, %v6200, %v6201
        %v6231 = vsel %vm2334, %v6199, %v6200
        %v6232 = vsel %vm2334, %v6198, %v6199
        %v6233 = vsel %vm2334, %v6197, %v6198
        %v6234 = vsel %vm2334, %v6196, %v6197
        %v6235 = vsel %vm2334, %v6195, %v6196
        %v6236 = vsel %vm2334, %v6194, %v6195
        %v6237 = vsel %vm2334, %v6193, %v6194
        %v6238 = vsel %vm2334, %v6192, %v6193
        %v6239 = vsel %vm2334, %v6191, %v6192
        %v6240 = vsel %vm2334, %v6190, %v6191
        %v6241 = vsel %vm2334, %v6189, %v6190
        %v6242 = vsel %vm2334, %v6188, %v6189
        %v6243 = vsel %vm2334, %v6187, %v6188
        %v6244 = vsel %vm2334, %v6186, %v6187
        %v6245 = vsel %vm2334, %v6185, %v6186
        %v6246 = vsel %vm2334, %v6184, %v6185
        %v6247 = vsel %vm2334, %v6215, %v6184
        %v6248 = vsel %vm2399, %v6246, 0.0
        %v6249 = vsel %vm2400, %v6245, 0.0
        %v6250 = vsel %vm2401, %v6244, 0.0
        %v6251 = vsel %vm2402, %v6243, 0.0
        %v6252 = vsel %vm2403, %v6242, 0.0
        %v6253 = vsel %vm2404, %v6241, 0.0
        %v6254 = vsel %vm2405, %v6240, 0.0
        %v6255 = vsel %vm2406, %v6239, 0.0
        %v6256 = vsel %vm2407, %v6238, 0.0
        %v6257 = vsel %vm2408, %v6237, 0.0
        %v6258 = vsel %vm2409, %v6236, 0.0
        %v6259 = vsel %vm2410, %v6235, 0.0
        %v6260 = vsel %vm2411, %v6234, 0.0
        %v6261 = vsel %vm2412, %v6233, 0.0
        %v6262 = vsel %vm2413, %v6232, 0.0
        %v6263 = vsel %vm2414, %v6231, 0.0
        %v6264 = vsel %vm2415, %v6230, 0.0
        %v6265 = vsel %vm2416, %v6229, 0.0
        %v6266 = vsel %vm2417, %v6228, 0.0
        %v6267 = vsel %vm2418, %v6227, 0.0
        %v6268 = vsel %vm2419, %v6226, 0.0
        %v6269 = vsel %vm2420, %v6225, 0.0
        %v6270 = vsel %vm2421, %v6224, 0.0
        %v6271 = vsel %vm2422, %v6223, 0.0
        %v6272 = vsel %vm2423, %v6222, 0.0
        %v6273 = vsel %vm2424, %v6221, 0.0
        %v6274 = vsel %vm2425, %v6220, 0.0
        %v6275 = vsel %vm2426, %v6219, 0.0
        %v6276 = vsel %vm2427, %v6218, 0.0
        %v6277 = vsel %vm2428, %v6217, 0.0
        %v6278 = vsel %vm2429, %v6216, 0.0
        %v6279 = vsel %vm2430, %v6247, 0.0
        %6312 = vrot.lane.b32.xlu0 %v5864, 32
        %v6313 = vpop.permute.xlu0 %6312
        %6314 = vrot.lane.b32.xlu0 %v5865, 32
        %v6315 = vpop.permute.xlu0 %6314
        %6316 = vrot.lane.b32.xlu0 %v5866, 32
        %v6317 = vpop.permute.xlu0 %6316
        %6318 = vrot.lane.b32.xlu0 %v5867, 32
        %v6319 = vpop.permute.xlu0 %6318
        %6320 = vrot.lane.b32.xlu0 %v5868, 32
        %v6321 = vpop.permute.xlu0 %6320
        %6322 = vrot.lane.b32.xlu0 %v5869, 32
        %v6323 = vpop.permute.xlu0 %6322
        %6324 = vrot.lane.b32.xlu0 %v5870, 32
        %v6325 = vpop.permute.xlu0 %6324
        %6326 = vrot.lane.b32.xlu0 %v5871, 32
        %v6327 = vpop.permute.xlu0 %6326
        %6328 = vrot.lane.b32.xlu0 %v5872, 32
        %v6329 = vpop.permute.xlu0 %6328
        %6330 = vrot.lane.b32.xlu0 %v5873, 32
        %v6331 = vpop.permute.xlu0 %6330
        %6332 = vrot.lane.b32.xlu0 %v5874, 32
        %v6333 = vpop.permute.xlu0 %6332
        %6334 = vrot.lane.b32.xlu0 %v5875, 32
        %v6335 = vpop.permute.xlu0 %6334
        %6336 = vrot.lane.b32.xlu0 %v5876, 32
        %v6337 = vpop.permute.xlu0 %6336
        %6338 = vrot.lane.b32.xlu0 %v5877, 32
        %v6339 = vpop.permute.xlu0 %6338
        %6340 = vrot.lane.b32.xlu0 %v5878, 32
        %v6341 = vpop.permute.xlu0 %6340
        %6342 = vrot.lane.b32.xlu0 %v5879, 32
        %v6343 = vpop.permute.xlu0 %6342
        %6344 = vrot.lane.b32.xlu0 %v5880, 32
        %v6345 = vpop.permute.xlu0 %6344
        %6346 = vrot.lane.b32.xlu0 %v5881, 32
        %v6347 = vpop.permute.xlu0 %6346
        %6348 = vrot.lane.b32.xlu0 %v5882, 32
        %v6349 = vpop.permute.xlu0 %6348
        %6350 = vrot.lane.b32.xlu0 %v5883, 32
        %v6351 = vpop.permute.xlu0 %6350
        %6352 = vrot.lane.b32.xlu0 %v5884, 32
        %v6353 = vpop.permute.xlu0 %6352
        %6354 = vrot.lane.b32.xlu0 %v5885, 32
        %v6355 = vpop.permute.xlu0 %6354
        %6356 = vrot.lane.b32.xlu0 %v5886, 32
        %v6357 = vpop.permute.xlu0 %6356
        %6358 = vrot.lane.b32.xlu0 %v5887, 32
        %v6359 = vpop.permute.xlu0 %6358
        %6360 = vrot.lane.b32.xlu0 %v5888, 32
        %v6361 = vpop.permute.xlu0 %6360
        %6362 = vrot.lane.b32.xlu0 %v5889, 32
        %v6363 = vpop.permute.xlu0 %6362
        %6364 = vrot.lane.b32.xlu0 %v5890, 32
        %v6365 = vpop.permute.xlu0 %6364
        %6366 = vrot.lane.b32.xlu0 %v5891, 32
        %v6367 = vpop.permute.xlu0 %6366
        %6368 = vrot.lane.b32.xlu0 %v5892, 32
        %v6369 = vpop.permute.xlu0 %6368
        %6370 = vrot.lane.b32.xlu0 %v5893, 32
        %v6371 = vpop.permute.xlu0 %6370
        %6372 = vrot.lane.b32.xlu0 %v5894, 32
        %v6373 = vpop.permute.xlu0 %6372
        %6374 = vrot.lane.b32.xlu0 %v5895, 32
        %v6375 = vpop.permute.xlu0 %6374
        %6440 = vrot.lane.b32.xlu0 %v5960, 64
        %v6441 = vpop.permute.xlu0 %6440
        %6442 = vrot.lane.b32.xlu0 %v5961, 64
        %v6443 = vpop.permute.xlu0 %6442
        %6444 = vrot.lane.b32.xlu0 %v5962, 64
        %v6445 = vpop.permute.xlu0 %6444
        %6446 = vrot.lane.b32.xlu0 %v5963, 64
        %v6447 = vpop.permute.xlu0 %6446
        %6448 = vrot.lane.b32.xlu0 %v5964, 64
        %v6449 = vpop.permute.xlu0 %6448
        %6450 = vrot.lane.b32.xlu0 %v5965, 64
        %v6451 = vpop.permute.xlu0 %6450
        %6452 = vrot.lane.b32.xlu0 %v5966, 64
        %v6453 = vpop.permute.xlu0 %6452
        %6454 = vrot.lane.b32.xlu0 %v5967, 64
        %v6455 = vpop.permute.xlu0 %6454
        %6456 = vrot.lane.b32.xlu0 %v5968, 64
        %v6457 = vpop.permute.xlu0 %6456
        %6458 = vrot.lane.b32.xlu0 %v5969, 64
        %v6459 = vpop.permute.xlu0 %6458
        %6460 = vrot.lane.b32.xlu0 %v5970, 64
        %v6461 = vpop.permute.xlu0 %6460
        %6462 = vrot.lane.b32.xlu0 %v5971, 64
        %v6463 = vpop.permute.xlu0 %6462
        %6464 = vrot.lane.b32.xlu0 %v5972, 64
        %v6465 = vpop.permute.xlu0 %6464
        %6466 = vrot.lane.b32.xlu0 %v5973, 64
        %v6467 = vpop.permute.xlu0 %6466
        %6468 = vrot.lane.b32.xlu0 %v5974, 64
        %v6469 = vpop.permute.xlu0 %6468
        %6470 = vrot.lane.b32.xlu0 %v5975, 64
        %v6471 = vpop.permute.xlu0 %6470
        %6472 = vrot.lane.b32.xlu0 %v5976, 64
        %v6473 = vpop.permute.xlu0 %6472
        %6474 = vrot.lane.b32.xlu0 %v5977, 64
        %v6475 = vpop.permute.xlu0 %6474
        %6476 = vrot.lane.b32.xlu0 %v5978, 64
        %v6477 = vpop.permute.xlu0 %6476
        %6478 = vrot.lane.b32.xlu0 %v5979, 64
        %v6479 = vpop.permute.xlu0 %6478
        %6480 = vrot.lane.b32.xlu0 %v5980, 64
        %v6481 = vpop.permute.xlu0 %6480
        %6482 = vrot.lane.b32.xlu0 %v5981, 64
        %v6483 = vpop.permute.xlu0 %6482
        %6484 = vrot.lane.b32.xlu0 %v5982, 64
        %v6485 = vpop.permute.xlu0 %6484
        %6486 = vrot.lane.b32.xlu0 %v5983, 64
        %v6487 = vpop.permute.xlu0 %6486
        %6488 = vrot.lane.b32.xlu0 %v5984, 64
        %v6489 = vpop.permute.xlu0 %6488
        %6490 = vrot.lane.b32.xlu0 %v5985, 64
        %v6491 = vpop.permute.xlu0 %6490
        %6492 = vrot.lane.b32.xlu0 %v5986, 64
        %v6493 = vpop.permute.xlu0 %6492
        %6494 = vrot.lane.b32.xlu0 %v5987, 64
        %v6495 = vpop.permute.xlu0 %6494
        %6496 = vrot.lane.b32.xlu0 %v5988, 64
        %v6497 = vpop.permute.xlu0 %6496
        %6498 = vrot.lane.b32.xlu0 %v5989, 64
        %v6499 = vpop.permute.xlu0 %6498
        %6500 = vrot.lane.b32.xlu0 %v5990, 64
        %v6501 = vpop.permute.xlu0 %6500
        %6502 = vrot.lane.b32.xlu0 %v5991, 64
        %v6503 = vpop.permute.xlu0 %6502
        %6568 = vrot.lane.b32.xlu0 %v5672, 96
        %v6569 = vpop.permute.xlu0 %6568
        %6570 = vrot.lane.b32.xlu0 %v5673, 96
        %v6571 = vpop.permute.xlu0 %6570
        %6572 = vrot.lane.b32.xlu0 %v5674, 96
        %v6573 = vpop.permute.xlu0 %6572
        %6574 = vrot.lane.b32.xlu0 %v5675, 96
        %v6575 = vpop.permute.xlu0 %6574
        %6576 = vrot.lane.b32.xlu0 %v5676, 96
        %v6577 = vpop.permute.xlu0 %6576
        %6578 = vrot.lane.b32.xlu0 %v5677, 96
        %v6579 = vpop.permute.xlu0 %6578
        %6580 = vrot.lane.b32.xlu0 %v5678, 96
        %v6581 = vpop.permute.xlu0 %6580
        %6582 = vrot.lane.b32.xlu0 %v5679, 96
        %v6583 = vpop.permute.xlu0 %6582
        %6584 = vrot.lane.b32.xlu0 %v5680, 96
        %v6585 = vpop.permute.xlu0 %6584
        %6586 = vrot.lane.b32.xlu0 %v5681, 96
        %v6587 = vpop.permute.xlu0 %6586
        %6588 = vrot.lane.b32.xlu0 %v5682, 96
        %v6589 = vpop.permute.xlu0 %6588
        %6590 = vrot.lane.b32.xlu0 %v5683, 96
        %v6591 = vpop.permute.xlu0 %6590
        %6592 = vrot.lane.b32.xlu0 %v5684, 96
        %v6593 = vpop.permute.xlu0 %6592
        %6594 = vrot.lane.b32.xlu0 %v5685, 96
        %v6595 = vpop.permute.xlu0 %6594
        %6596 = vrot.lane.b32.xlu0 %v5686, 96
        %v6597 = vpop.permute.xlu0 %6596
        %6598 = vrot.lane.b32.xlu0 %v5687, 96
        %v6599 = vpop.permute.xlu0 %6598
        %6600 = vrot.lane.b32.xlu0 %v5688, 96
        %v6601 = vpop.permute.xlu0 %6600
        %6602 = vrot.lane.b32.xlu0 %v5689, 96
        %v6603 = vpop.permute.xlu0 %6602
        %6604 = vrot.lane.b32.xlu0 %v5690, 96
        %v6605 = vpop.permute.xlu0 %6604
        %6606 = vrot.lane.b32.xlu0 %v5691, 96
        %v6607 = vpop.permute.xlu0 %6606
        %6608 = vrot.lane.b32.xlu0 %v5692, 96
        %v6609 = vpop.permute.xlu0 %6608
        %6610 = vrot.lane.b32.xlu0 %v5693, 96
        %v6611 = vpop.permute.xlu0 %6610
        %6612 = vrot.lane.b32.xlu0 %v5694, 96
        %v6613 = vpop.permute.xlu0 %6612
        %6614 = vrot.lane.b32.xlu0 %v5695, 96
        %v6615 = vpop.permute.xlu0 %6614
        %6616 = vrot.lane.b32.xlu0 %v5696, 96
        %v6617 = vpop.permute.xlu0 %6616
        %6618 = vrot.lane.b32.xlu0 %v5697, 96
        %v6619 = vpop.permute.xlu0 %6618
        %6620 = vrot.lane.b32.xlu0 %v5698, 96
        %v6621 = vpop.permute.xlu0 %6620
        %6622 = vrot.lane.b32.xlu0 %v5699, 96
        %v6623 = vpop.permute.xlu0 %6622
        %6624 = vrot.lane.b32.xlu0 %v5700, 96
        %v6625 = vpop.permute.xlu0 %6624
        %6626 = vrot.lane.b32.xlu0 %v5701, 96
        %v6627 = vpop.permute.xlu0 %6626
        %6628 = vrot.lane.b32.xlu0 %v5702, 96
        %v6629 = vpop.permute.xlu0 %6628
        %6630 = vrot.lane.b32.xlu0 %v5703, 96
        %v6631 = vpop.permute.xlu0 %6630
        %6696 = vrot.lane.b32.xlu0 %v6152, 32
        %v6697 = vpop.permute.xlu0 %6696
        %6698 = vrot.lane.b32.xlu0 %v6153, 32
        %v6699 = vpop.permute.xlu0 %6698
        %6700 = vrot.lane.b32.xlu0 %v6154, 32
        %v6701 = vpop.permute.xlu0 %6700
        %6702 = vrot.lane.b32.xlu0 %v6155, 32
        %v6703 = vpop.permute.xlu0 %6702
        %6704 = vrot.lane.b32.xlu0 %v6156, 32
        %v6705 = vpop.permute.xlu0 %6704
        %6706 = vrot.lane.b32.xlu0 %v6157, 32
        %v6707 = vpop.permute.xlu0 %6706
        %6708 = vrot.lane.b32.xlu0 %v6158, 32
        %v6709 = vpop.permute.xlu0 %6708
        %6710 = vrot.lane.b32.xlu0 %v6159, 32
        %v6711 = vpop.permute.xlu0 %6710
        %6712 = vrot.lane.b32.xlu0 %v6160, 32
        %v6713 = vpop.permute.xlu0 %6712
        %6714 = vrot.lane.b32.xlu0 %v6161, 32
        %v6715 = vpop.permute.xlu0 %6714
        %6716 = vrot.lane.b32.xlu0 %v6162, 32
        %v6717 = vpop.permute.xlu0 %6716
        %6718 = vrot.lane.b32.xlu0 %v6163, 32
        %v6719 = vpop.permute.xlu0 %6718
        %6720 = vrot.lane.b32.xlu0 %v6164, 32
        %v6721 = vpop.permute.xlu0 %6720
        %6722 = vrot.lane.b32.xlu0 %v6165, 32
        %v6723 = vpop.permute.xlu0 %6722
        %6724 = vrot.lane.b32.xlu0 %v6166, 32
        %v6725 = vpop.permute.xlu0 %6724
        %6726 = vrot.lane.b32.xlu0 %v6167, 32
        %v6727 = vpop.permute.xlu0 %6726
        %6728 = vrot.lane.b32.xlu0 %v6168, 32
        %v6729 = vpop.permute.xlu0 %6728
        %6730 = vrot.lane.b32.xlu0 %v6169, 32
        %v6731 = vpop.permute.xlu0 %6730
        %6732 = vrot.lane.b32.xlu0 %v6170, 32
        %v6733 = vpop.permute.xlu0 %6732
        %6734 = vrot.lane.b32.xlu0 %v6171, 32
        %v6735 = vpop.permute.xlu0 %6734
        %6736 = vrot.lane.b32.xlu0 %v6172, 32
        %v6737 = vpop.permute.xlu0 %6736
        %6738 = vrot.lane.b32.xlu0 %v6173, 32
        %v6739 = vpop.permute.xlu0 %6738
        %6740 = vrot.lane.b32.xlu0 %v6174, 32
        %v6741 = vpop.permute.xlu0 %6740
        %6742 = vrot.lane.b32.xlu0 %v6175, 32
        %v6743 = vpop.permute.xlu0 %6742
        %6744 = vrot.lane.b32.xlu0 %v6176, 32
        %v6745 = vpop.permute.xlu0 %6744
        %6746 = vrot.lane.b32.xlu0 %v6177, 32
        %v6747 = vpop.permute.xlu0 %6746
        %6748 = vrot.lane.b32.xlu0 %v6178, 32
        %v6749 = vpop.permute.xlu0 %6748
        %6750 = vrot.lane.b32.xlu0 %v6179, 32
        %v6751 = vpop.permute.xlu0 %6750
        %6752 = vrot.lane.b32.xlu0 %v6180, 32
        %v6753 = vpop.permute.xlu0 %6752
        %6754 = vrot.lane.b32.xlu0 %v6181, 32
        %v6755 = vpop.permute.xlu0 %6754
        %6756 = vrot.lane.b32.xlu0 %v6182, 32
        %v6757 = vpop.permute.xlu0 %6756
        %6758 = vrot.lane.b32.xlu0 %v6183, 32
        %v6759 = vpop.permute.xlu0 %6758
        %6824 = vrot.lane.b32.xlu0 %v6248, 64
        %v6825 = vpop.permute.xlu0 %6824
        %6826 = vrot.lane.b32.xlu0 %v6249, 64
        %v6827 = vpop.permute.xlu0 %6826
        %6828 = vrot.lane.b32.xlu0 %v6250, 64
        %v6829 = vpop.permute.xlu0 %6828
        %6830 = vrot.lane.b32.xlu0 %v6251, 64
        %v6831 = vpop.permute.xlu0 %6830
        %6832 = vrot.lane.b32.xlu0 %v6252, 64
        %v6833 = vpop.permute.xlu0 %6832
        %6834 = vrot.lane.b32.xlu0 %v6253, 64
        %v6835 = vpop.permute.xlu0 %6834
        %6836 = vrot.lane.b32.xlu0 %v6254, 64
        %v6837 = vpop.permute.xlu0 %6836
        %6838 = vrot.lane.b32.xlu0 %v6255, 64
        %v6839 = vpop.permute.xlu0 %6838
        %6840 = vrot.lane.b32.xlu0 %v6256, 64
        %v6841 = vpop.permute.xlu0 %6840
        %6842 = vrot.lane.b32.xlu0 %v6257, 64
        %v6843 = vpop.permute.xlu0 %6842
        %6844 = vrot.lane.b32.xlu0 %v6258, 64
        %v6845 = vpop.permute.xlu0 %6844
        %6846 = vrot.lane.b32.xlu0 %v6259, 64
        %v6847 = vpop.permute.xlu0 %6846
        %6848 = vrot.lane.b32.xlu0 %v6260, 64
        %v6849 = vpop.permute.xlu0 %6848
        %6850 = vrot.lane.b32.xlu0 %v6261, 64
        %v6851 = vpop.permute.xlu0 %6850
        %6852 = vrot.lane.b32.xlu0 %v6262, 64
        %v6853 = vpop.permute.xlu0 %6852
        %6854 = vrot.lane.b32.xlu0 %v6263, 64
        %v6855 = vpop.permute.xlu0 %6854
        %6856 = vrot.lane.b32.xlu0 %v6264, 64
        %v6857 = vpop.permute.xlu0 %6856
        %6858 = vrot.lane.b32.xlu0 %v6265, 64
        %v6859 = vpop.permute.xlu0 %6858
        %6860 = vrot.lane.b32.xlu0 %v6266, 64
        %v6861 = vpop.permute.xlu0 %6860
        %6862 = vrot.lane.b32.xlu0 %v6267, 64
        %v6863 = vpop.permute.xlu0 %6862
        %6864 = vrot.lane.b32.xlu0 %v6268, 64
        %v6865 = vpop.permute.xlu0 %6864
        %6866 = vrot.lane.b32.xlu0 %v6269, 64
        %v6867 = vpop.permute.xlu0 %6866
        %6868 = vrot.lane.b32.xlu0 %v6270, 64
        %v6869 = vpop.permute.xlu0 %6868
        %6870 = vrot.lane.b32.xlu0 %v6271, 64
        %v6871 = vpop.permute.xlu0 %6870
        %6872 = vrot.lane.b32.xlu0 %v6272, 64
        %v6873 = vpop.permute.xlu0 %6872
        %6874 = vrot.lane.b32.xlu0 %v6273, 64
        %v6875 = vpop.permute.xlu0 %6874
        %6876 = vrot.lane.b32.xlu0 %v6274, 64
        %v6877 = vpop.permute.xlu0 %6876
        %6878 = vrot.lane.b32.xlu0 %v6275, 64
        %v6879 = vpop.permute.xlu0 %6878
        %6880 = vrot.lane.b32.xlu0 %v6276, 64
        %v6881 = vpop.permute.xlu0 %6880
        %6882 = vrot.lane.b32.xlu0 %v6277, 64
        %v6883 = vpop.permute.xlu0 %6882
        %6884 = vrot.lane.b32.xlu0 %v6278, 64
        %v6885 = vpop.permute.xlu0 %6884
        %6886 = vrot.lane.b32.xlu0 %v6279, 64
        %v6887 = vpop.permute.xlu0 %6886
        %v6920 = vsel %vm4865, %v5768, %v6313
        %v6921 = vsel %vm4865, %v5769, %v6315
        %v6922 = vsel %vm4865, %v5770, %v6317
        %v6923 = vsel %vm4865, %v5771, %v6319
        %v6924 = vsel %vm4865, %v5772, %v6321
        %v6925 = vsel %vm4865, %v5773, %v6323
        %v6926 = vsel %vm4865, %v5774, %v6325
        %v6927 = vsel %vm4865, %v5775, %v6327
        %v6928 = vsel %vm4865, %v5776, %v6329
        %v6929 = vsel %vm4865, %v5777, %v6331
        %v6930 = vsel %vm4865, %v5778, %v6333
        %v6931 = vsel %vm4865, %v5779, %v6335
        %v6932 = vsel %vm4865, %v5780, %v6337
        %v6933 = vsel %vm4865, %v5781, %v6339
        %v6934 = vsel %vm4865, %v5782, %v6341
        %v6935 = vsel %vm4865, %v5783, %v6343
        %v6936 = vsel %vm4865, %v5784, %v6345
        %v6937 = vsel %vm4865, %v5785, %v6347
        %v6938 = vsel %vm4865, %v5786, %v6349
        %v6939 = vsel %vm4865, %v5787, %v6351
        %v6940 = vsel %vm4865, %v5788, %v6353
        %v6941 = vsel %vm4865, %v5789, %v6355
        %v6942 = vsel %vm4865, %v5790, %v6357
        %v6943 = vsel %vm4865, %v5791, %v6359
        %v6944 = vsel %vm4865, %v5792, %v6361
        %v6945 = vsel %vm4865, %v5793, %v6363
        %v6946 = vsel %vm4865, %v5794, %v6365
        %v6947 = vsel %vm4865, %v5795, %v6367
        %v6948 = vsel %vm4865, %v5796, %v6369
        %v6949 = vsel %vm4865, %v5797, %v6371
        %v6950 = vsel %vm4865, %v5798, %v6373
        %v6951 = vsel %vm4865, %v5799, %v6375
        %v6952 = vsel %vm2847, %v6920, %v6441
        %v6953 = vsel %vm2847, %v6921, %v6443
        %v6954 = vsel %vm2847, %v6922, %v6445
        %v6955 = vsel %vm2847, %v6923, %v6447
        %v6956 = vsel %vm2847, %v6924, %v6449
        %v6957 = vsel %vm2847, %v6925, %v6451
        %v6958 = vsel %vm2847, %v6926, %v6453
        %v6959 = vsel %vm2847, %v6927, %v6455
        %v6960 = vsel %vm2847, %v6928, %v6457
        %v6961 = vsel %vm2847, %v6929, %v6459
        %v6962 = vsel %vm2847, %v6930, %v6461
        %v6963 = vsel %vm2847, %v6931, %v6463
        %v6964 = vsel %vm2847, %v6932, %v6465
        %v6965 = vsel %vm2847, %v6933, %v6467
        %v6966 = vsel %vm2847, %v6934, %v6469
        %v6967 = vsel %vm2847, %v6935, %v6471
        %v6968 = vsel %vm2847, %v6936, %v6473
        %v6969 = vsel %vm2847, %v6937, %v6475
        %v6970 = vsel %vm2847, %v6938, %v6477
        %v6971 = vsel %vm2847, %v6939, %v6479
        %v6972 = vsel %vm2847, %v6940, %v6481
        %v6973 = vsel %vm2847, %v6941, %v6483
        %v6974 = vsel %vm2847, %v6942, %v6485
        %v6975 = vsel %vm2847, %v6943, %v6487
        %v6976 = vsel %vm2847, %v6944, %v6489
        %v6977 = vsel %vm2847, %v6945, %v6491
        %v6978 = vsel %vm2847, %v6946, %v6493
        %v6979 = vsel %vm2847, %v6947, %v6495
        %v6980 = vsel %vm2847, %v6948, %v6497
        %v6981 = vsel %vm2847, %v6949, %v6499
        %v6982 = vsel %vm2847, %v6950, %v6501
        %v6983 = vsel %vm2847, %v6951, %v6503
        %v6984 = vsel %vm4930, %v6952, %v6569
        %v6985 = vsel %vm4930, %v6953, %v6571
        %v6986 = vsel %vm4930, %v6954, %v6573
        %v6987 = vsel %vm4930, %v6955, %v6575
        %v6988 = vsel %vm4930, %v6956, %v6577
        %v6989 = vsel %vm4930, %v6957, %v6579
        %v6990 = vsel %vm4930, %v6958, %v6581
        %v6991 = vsel %vm4930, %v6959, %v6583
        %v6992 = vsel %vm4930, %v6960, %v6585
        %v6993 = vsel %vm4930, %v6961, %v6587
        %v6994 = vsel %vm4930, %v6962, %v6589
        %v6995 = vsel %vm4930, %v6963, %v6591
        %v6996 = vsel %vm4930, %v6964, %v6593
        %v6997 = vsel %vm4930, %v6965, %v6595
        %v6998 = vsel %vm4930, %v6966, %v6597
        %v6999 = vsel %vm4930, %v6967, %v6599
        %v7000 = vsel %vm4930, %v6968, %v6601
        %v7001 = vsel %vm4930, %v6969, %v6603
        %v7002 = vsel %vm4930, %v6970, %v6605
        %v7003 = vsel %vm4930, %v6971, %v6607
        %v7004 = vsel %vm4930, %v6972, %v6609
        %v7005 = vsel %vm4930, %v6973, %v6611
        %v7006 = vsel %vm4930, %v6974, %v6613
        %v7007 = vsel %vm4930, %v6975, %v6615
        %v7008 = vsel %vm4930, %v6976, %v6617
        %v7009 = vsel %vm4930, %v6977, %v6619
        %v7010 = vsel %vm4930, %v6978, %v6621
        %v7011 = vsel %vm4930, %v6979, %v6623
        %v7012 = vsel %vm4930, %v6980, %v6625
        %v7013 = vsel %vm4930, %v6981, %v6627
        %v7014 = vsel %vm4930, %v6982, %v6629
        %v7015 = vsel %vm4930, %v6983, %v6631
        %v7016 = vsel %vm4865, %v6056, %v6697
        %v7017 = vsel %vm4865, %v6057, %v6699
        %v7018 = vsel %vm4865, %v6058, %v6701
        %v7019 = vsel %vm4865, %v6059, %v6703
        %v7020 = vsel %vm4865, %v6060, %v6705
        %v7021 = vsel %vm4865, %v6061, %v6707
        %v7022 = vsel %vm4865, %v6062, %v6709
        %v7023 = vsel %vm4865, %v6063, %v6711
        %v7024 = vsel %vm4865, %v6064, %v6713
        %v7025 = vsel %vm4865, %v6065, %v6715
        %v7026 = vsel %vm4865, %v6066, %v6717
        %v7027 = vsel %vm4865, %v6067, %v6719
        %v7028 = vsel %vm4865, %v6068, %v6721
        %v7029 = vsel %vm4865, %v6069, %v6723
        %v7030 = vsel %vm4865, %v6070, %v6725
        %v7031 = vsel %vm4865, %v6071, %v6727
        %v7032 = vsel %vm4865, %v6072, %v6729
        %v7033 = vsel %vm4865, %v6073, %v6731
        %v7034 = vsel %vm4865, %v6074, %v6733
        %v7035 = vsel %vm4865, %v6075, %v6735
        %v7036 = vsel %vm4865, %v6076, %v6737
        %v7037 = vsel %vm4865, %v6077, %v6739
        %v7038 = vsel %vm4865, %v6078, %v6741
        %v7039 = vsel %vm4865, %v6079, %v6743
        %v7040 = vsel %vm4865, %v6080, %v6745
        %v7041 = vsel %vm4865, %v6081, %v6747
        %v7042 = vsel %vm4865, %v6082, %v6749
        %v7043 = vsel %vm4865, %v6083, %v6751
        %v7044 = vsel %vm4865, %v6084, %v6753
        %v7045 = vsel %vm4865, %v6085, %v6755
        %v7046 = vsel %vm4865, %v6086, %v6757
        %v7047 = vsel %vm4865, %v6087, %v6759
        %v7048 = vsel %vm2847, %v7016, %v6825
        %v7049 = vsel %vm2847, %v7017, %v6827
        %v7050 = vsel %vm2847, %v7018, %v6829
        %v7051 = vsel %vm2847, %v7019, %v6831
        %v7052 = vsel %vm2847, %v7020, %v6833
        %v7053 = vsel %vm2847, %v7021, %v6835
        %v7054 = vsel %vm2847, %v7022, %v6837
        %v7055 = vsel %vm2847, %v7023, %v6839
        %v7056 = vsel %vm2847, %v7024, %v6841
        %v7057 = vsel %vm2847, %v7025, %v6843
        %v7058 = vsel %vm2847, %v7026, %v6845
        %v7059 = vsel %vm2847, %v7027, %v6847
        %v7060 = vsel %vm2847, %v7028, %v6849
        %v7061 = vsel %vm2847, %v7029, %v6851
        %v7062 = vsel %vm2847, %v7030, %v6853
        %v7063 = vsel %vm2847, %v7031, %v6855
        %v7064 = vsel %vm2847, %v7032, %v6857
        %v7065 = vsel %vm2847, %v7033, %v6859
        %v7066 = vsel %vm2847, %v7034, %v6861
        %v7067 = vsel %vm2847, %v7035, %v6863
        %v7068 = vsel %vm2847, %v7036, %v6865
        %v7069 = vsel %vm2847, %v7037, %v6867
        %v7070 = vsel %vm2847, %v7038, %v6869
        %v7071 = vsel %vm2847, %v7039, %v6871
        %v7072 = vsel %vm2847, %v7040, %v6873
        %v7073 = vsel %vm2847, %v7041, %v6875
        %v7074 = vsel %vm2847, %v7042, %v6877
        %v7075 = vsel %vm2847, %v7043, %v6879
        %v7076 = vsel %vm2847, %v7044, %v6881
        %v7077 = vsel %vm2847, %v7045, %v6883
        %v7078 = vsel %vm2847, %v7046, %v6885
        %v7079 = vsel %vm2847, %v7047, %v6887
        %v7080 = vld [vmem:[%s5] sm:$0xff]
        %v7081 = vld [vmem:[%s5 + $0x8] sm:$0xff]
        %v7082 = vld [vmem:[%s5 + $0x10] sm:$0xff]
        %v7083 = vld [vmem:[%s5 + $0x18] sm:$0xff]
        %v7084 = vld [vmem:[%s5 + $0x20] sm:$0xff]
        %v7085 = vld [vmem:[%s5 + $0x28] sm:$0xff]
        %v7086 = vld [vmem:[%s5 + $0x30] sm:$0xff]
        %v7087 = vld [vmem:[%s5 + $0x38] sm:$0xff]
        %v7088 = vld [vmem:[%s5 + $0x40] sm:$0xff]
        %v7089 = vld [vmem:[%s5 + $0x48] sm:$0xff]
        %v7090 = vld [vmem:[%s5 + $0x50] sm:$0xff]
        %v7091 = vld [vmem:[%s5 + $0x58] sm:$0xff]
        %v7092 = vld [vmem:[%s5 + $0x60] sm:$0xff]
        %v7093 = vld [vmem:[%s5 + $0x68] sm:$0xff]
        %v7094 = vld [vmem:[%s5 + $0x70] sm:$0xff]
        %v7095 = vld [vmem:[%s5 + $0x78] sm:$0xff]
        %v7096 = vld [vmem:[%s5 + $0x80] sm:$0xff]
        %v7097 = vld [vmem:[%s5 + $0x88] sm:$0xff]
        %v7098 = vld [vmem:[%s5 + $0x90] sm:$0xff]
        %v7099 = vld [vmem:[%s5 + $0x98] sm:$0xff]
        %v7100 = vld [vmem:[%s5 + $0xa0] sm:$0xff]
        %v7101 = vld [vmem:[%s5 + $0xa8] sm:$0xff]
        %v7102 = vld [vmem:[%s5 + $0xb0] sm:$0xff]
        %v7103 = vld [vmem:[%s5 + $0xb8] sm:$0xff]
        %v7104 = vld [vmem:[%s5 + $0xc0] sm:$0xff]
        %v7105 = vld [vmem:[%s5 + $0xc8] sm:$0xff]
        %v7106 = vld [vmem:[%s5 + $0xd0] sm:$0xff]
        %v7107 = vld [vmem:[%s5 + $0xd8] sm:$0xff]
        %v7108 = vld [vmem:[%s6] sm:$0x1]
        %v7110 = vlaneseq
        %v7111 = vshrl.u32 %v7110, 7
        %v7112 = vsub.s32 0, %v7111
        %v7113 = vrot.slane %v7108, %v7112
        %v7116 = vsel %vm4930, %v7048, 0
        %v7119 = vsel %vm4930, %v7049, 0
        %v7122 = vsel %vm4930, %v7050, 0
        %v7125 = vsel %vm4930, %v7051, 0
        %v7128 = vsel %vm4930, %v7052, 0
        %v7131 = vsel %vm4930, %v7053, 0
        %v7134 = vsel %vm4930, %v7054, 0
        %v7137 = vsel %vm4930, %v7055, 0
        %v7140 = vsel %vm4930, %v7056, 0
        %v7143 = vsel %vm4930, %v7057, 0
        %v7146 = vsel %vm4930, %v7058, 0
        %v7149 = vsel %vm4930, %v7059, 0
        %v7152 = vsel %vm4930, %v7060, 0
        %v7155 = vsel %vm4930, %v7061, 0
        %v7158 = vsel %vm4930, %v7062, 0
        %v7161 = vsel %vm4930, %v7063, 0
        %v7164 = vsel %vm4930, %v7064, 0
        %v7167 = vsel %vm4930, %v7065, 0
        %v7170 = vsel %vm4930, %v7066, 0
        %v7173 = vsel %vm4930, %v7067, 0
        %v7176 = vsel %vm4930, %v7068, 0
        %v7179 = vsel %vm4930, %v7069, 0
        %v7182 = vsel %vm4930, %v7070, 0
        %v7185 = vsel %vm4930, %v7071, 0
        %v7188 = vsel %vm4930, %v7072, 0
        %v7191 = vsel %vm4930, %v7073, 0
        %v7194 = vsel %vm4930, %v7074, 0
        %v7197 = vsel %vm4930, %v7075, 0
        %v7200 = vsel %vm4930, %v7076, 0
        %v7203 = vsel %vm4930, %v7077, 0
        %v7206 = vsel %vm4930, %v7078, 0
        %v7209 = vsel %vm4930, %v7079, 0
        %7211 = vmatprep.subr.mxu0 0.0
        %7212 = vmatpush1.msra.mxu0 %v7095
        %7213 = vmatprep.subr.mxu0 0.0
        %7214 = vmatpush1.msra.mxu0 %v7094
        %7215 = vmatprep.subr.mxu0 0.0
        %7216 = vmatpush1.msra.mxu0 %v7093
        %7217 = vmatprep.subr.mxu0 0.0
        %7218 = vmatpush1.msra.mxu0 %v7092
        %7219 = vmatprep.subr.mxu0 0.0
        %7220 = vmatpush1.msra.mxu0 %v7091
        %7221 = vmatprep.subr.mxu0 0.0
        %7222 = vmatpush1.msra.mxu0 %v7090
        %7223 = vmatprep.subr.mxu0 0.0
        %7224 = vmatpush1.msra.mxu0 %v7089
        %7225 = vmatprep.subr.mxu0 0.0
        %7226 = vmatpush1.msra.mxu0 %v7088
        %7227 = vmatprep.subr.mxu0 0.0
        %7228 = vmatpush1.msra.mxu0 %v7087
        %7229 = vmatprep.subr.mxu0 0.0
        %7230 = vmatpush1.msra.mxu0 %v7086
        %7231 = vmatprep.subr.mxu0 0.0
        %7232 = vmatpush1.msra.mxu0 %v7085
        %7233 = vmatprep.subr.mxu0 0.0
        %7234 = vmatpush1.msra.mxu0 %v7084
        %7235 = vmatprep.subr.mxu0 0.0
        %7236 = vmatpush1.msra.mxu0 %v7083
        %7237 = vmatprep.subr.mxu0 0.0
        %7238 = vmatpush1.msra.mxu0 %v7082
        %7239 = vmatprep.subr.mxu0 0.0
        %7240 = vmatpush1.msra.mxu0 %v7081
        %7241 = vmatprep.subr.mxu0 0.0
        %7242 = vmatpush1.msra.mxu0 %v7080
        %7243 = vmatprep.subr.mxu0 0.0
        %7244 = vmatpush2.msra.mxu0 0.0
        %7245 = vmatprep.subr.mxu0 0.0
        %7246 = vmatpush2.msra.mxu0 0.0
        %7247 = vmatprep.subr.mxu0 0.0
        %7248 = vmatpush2.msra.mxu0 0.0
        %7249 = vmatprep.subr.mxu0 0.0
        %7250 = vmatpush2.msra.mxu0 0.0
        %7251 = vmatprep.subr.mxu0 0.0
        %7252 = vmatpush2.msra.mxu0 %v7107
        %7253 = vmatprep.subr.mxu0 0.0
        %7254 = vmatpush2.msra.mxu0 %v7106
        %7255 = vmatprep.subr.mxu0 0.0
        %7256 = vmatpush2.msra.mxu0 %v7105
        %7257 = vmatprep.subr.mxu0 0.0
        %7258 = vmatpush2.msra.mxu0 %v7104
        %7259 = vmatprep.subr.mxu0 0.0
        %7260 = vmatpush2.msra.mxu0 %v7103
        %7261 = vmatprep.subr.mxu0 0.0
        %7262 = vmatpush2.msra.mxu0 %v7102
        %7263 = vmatprep.subr.mxu0 0.0
        %7264 = vmatpush2.msra.mxu0 %v7101
        %7265 = vmatprep.subr.mxu0 0.0
        %7266 = vmatpush2.msra.mxu0 %v7100
        %7267 = vmatprep.subr.mxu0 0.0
        %7268 = vmatpush2.msra.mxu0 %v7099
        %7269 = vmatprep.subr.mxu0 0.0
        %7270 = vmatpush2.msra.mxu0 %v7098
        %7271 = vmatprep.subr.mxu0 0.0
        %7272 = vmatpush2.msra.mxu0 %v7097
        %7273 = vmatprep.subr.mxu0 0.0
        %7274 = vmatpush2.msra.mxu0 %v7096
        %7275 = vmatprep.mubr.f32.mxu0 %v7116
        %7276 = vmatmul.mubr.f32.gmra.mxu0 %v6984
        %v7277 = vpop.f32.mrf.mxu0
        %v7278 = vadd.f32 %v7113, %v7277
        %v7279 = vpop.f32.mrf.mxu0
        %7280 = vmatprep.mubr.f32.mxu0 %v7119
        %7281 = vmatmul.mubr.f32.gmra.mxu0 %v6985
        %v7282 = vpop.f32.mrf.mxu0
        %v7283 = vadd.f32 %v7113, %v7282
        %v7284 = vpop.f32.mrf.mxu0
        %7285 = vmatprep.mubr.f32.mxu0 %v7122
        %7286 = vmatmul.mubr.f32.gmra.mxu0 %v6986
        %v7287 = vpop.f32.mrf.mxu0
        %v7288 = vadd.f32 %v7113, %v7287
        %v7289 = vpop.f32.mrf.mxu0
        %7290 = vmatprep.mubr.f32.mxu0 %v7125
        %7291 = vmatmul.mubr.f32.gmra.mxu0 %v6987
        %v7292 = vpop.f32.mrf.mxu0
        %v7293 = vadd.f32 %v7113, %v7292
        %v7294 = vpop.f32.mrf.mxu0
        %7295 = vmatprep.mubr.f32.mxu0 %v7128
        %7296 = vmatmul.mubr.f32.gmra.mxu0 %v6988
        %v7297 = vpop.f32.mrf.mxu0
        %v7298 = vadd.f32 %v7113, %v7297
        %v7299 = vpop.f32.mrf.mxu0
        %7300 = vmatprep.mubr.f32.mxu0 %v7131
        %7301 = vmatmul.mubr.f32.gmra.mxu0 %v6989
        %v7302 = vpop.f32.mrf.mxu0
        %v7303 = vadd.f32 %v7113, %v7302
        %v7304 = vpop.f32.mrf.mxu0
        %7305 = vmatprep.mubr.f32.mxu0 %v7134
        %7306 = vmatmul.mubr.f32.gmra.mxu0 %v6990
        %v7307 = vpop.f32.mrf.mxu0
        %v7308 = vadd.f32 %v7113, %v7307
        %v7309 = vpop.f32.mrf.mxu0
        %7310 = vmatprep.mubr.f32.mxu0 %v7137
        %7311 = vmatmul.mubr.f32.gmra.mxu0 %v6991
        %v7312 = vpop.f32.mrf.mxu0
        %v7313 = vadd.f32 %v7113, %v7312
        %v7314 = vpop.f32.mrf.mxu0
        %7315 = vmatprep.mubr.f32.mxu0 %v7140
        %7316 = vmatmul.mubr.f32.gmra.mxu0 %v6992
        %v7317 = vpop.f32.mrf.mxu0
        %v7318 = vadd.f32 %v7113, %v7317
        %v7319 = vpop.f32.mrf.mxu0
        %7320 = vmatprep.mubr.f32.mxu0 %v7143
        %7321 = vmatmul.mubr.f32.gmra.mxu0 %v6993
        %v7322 = vpop.f32.mrf.mxu0
        %v7323 = vadd.f32 %v7113, %v7322
        %v7324 = vpop.f32.mrf.mxu0
        %7325 = vmatprep.mubr.f32.mxu0 %v7146
        %7326 = vmatmul.mubr.f32.gmra.mxu0 %v6994
        %v7327 = vpop.f32.mrf.mxu0
        %v7328 = vadd.f32 %v7113, %v7327
        %v7329 = vpop.f32.mrf.mxu0
        %7330 = vmatprep.mubr.f32.mxu0 %v7149
        %7331 = vmatmul.mubr.f32.gmra.mxu0 %v6995
        %v7332 = vpop.f32.mrf.mxu0
        %v7333 = vadd.f32 %v7113, %v7332
        %v7334 = vpop.f32.mrf.mxu0
        %7335 = vmatprep.mubr.f32.mxu0 %v7152
        %7336 = vmatmul.mubr.f32.gmra.mxu0 %v6996
        %v7337 = vpop.f32.mrf.mxu0
        %v7338 = vadd.f32 %v7113, %v7337
        %v7339 = vpop.f32.mrf.mxu0
        %7340 = vmatprep.mubr.f32.mxu0 %v7155
        %7341 = vmatmul.mubr.f32.gmra.mxu0 %v6997
        %v7342 = vpop.f32.mrf.mxu0
        %v7343 = vadd.f32 %v7113, %v7342
        %v7344 = vpop.f32.mrf.mxu0
        %7345 = vmatprep.mubr.f32.mxu0 %v7158
        %7346 = vmatmul.mubr.f32.gmra.mxu0 %v6998
        %v7347 = vpop.f32.mrf.mxu0
        %v7348 = vadd.f32 %v7113, %v7347
        %v7349 = vpop.f32.mrf.mxu0
        %7350 = vmatprep.mubr.f32.mxu0 %v7161
        %7351 = vmatmul.mubr.f32.gmra.mxu0 %v6999
        %v7352 = vpop.f32.mrf.mxu0
        %v7353 = vadd.f32 %v7113, %v7352
        %v7354 = vpop.f32.mrf.mxu0
        %7355 = vmatprep.mubr.f32.mxu0 %v7164
        %7356 = vmatmul.mubr.f32.gmra.mxu0 %v7000
        %v7357 = vpop.f32.mrf.mxu0
        %v7358 = vadd.f32 %v7113, %v7357
        %v7359 = vpop.f32.mrf.mxu0
        %7360 = vmatprep.mubr.f32.mxu0 %v7167
        %7361 = vmatmul.mubr.f32.gmra.mxu0 %v7001
        %v7362 = vpop.f32.mrf.mxu0
        %v7363 = vadd.f32 %v7113, %v7362
        %v7364 = vpop.f32.mrf.mxu0
        %7365 = vmatprep.mubr.f32.mxu0 %v7170
        %7366 = vmatmul.mubr.f32.gmra.mxu0 %v7002
        %v7367 = vpop.f32.mrf.mxu0
        %v7368 = vadd.f32 %v7113, %v7367
        %v7369 = vpop.f32.mrf.mxu0
        %7370 = vmatprep.mubr.f32.mxu0 %v7173
        %7371 = vmatmul.mubr.f32.gmra.mxu0 %v7003
        %v7372 = vpop.f32.mrf.mxu0
        %v7373 = vadd.f32 %v7113, %v7372
        %v7374 = vpop.f32.mrf.mxu0
        %7375 = vmatprep.mubr.f32.mxu0 %v7176
        %7376 = vmatmul.mubr.f32.gmra.mxu0 %v7004
        %v7377 = vpop.f32.mrf.mxu0
        %v7378 = vadd.f32 %v7113, %v7377
        %v7379 = vpop.f32.mrf.mxu0
        %7380 = vmatprep.mubr.f32.mxu0 %v7179
        %7381 = vmatmul.mubr.f32.gmra.mxu0 %v7005
        %v7382 = vpop.f32.mrf.mxu0
        %v7383 = vadd.f32 %v7113, %v7382
        %v7384 = vpop.f32.mrf.mxu0
        %7385 = vmatprep.mubr.f32.mxu0 %v7182
        %7386 = vmatmul.mubr.f32.gmra.mxu0 %v7006
        %v7387 = vpop.f32.mrf.mxu0
        %v7388 = vadd.f32 %v7113, %v7387
        %v7389 = vpop.f32.mrf.mxu0
        %7390 = vmatprep.mubr.f32.mxu0 %v7185
        %7391 = vmatmul.mubr.f32.gmra.mxu0 %v7007
        %v7392 = vpop.f32.mrf.mxu0
        %v7393 = vadd.f32 %v7113, %v7392
        %v7394 = vpop.f32.mrf.mxu0
        %7395 = vmatprep.mubr.f32.mxu0 %v7188
        %7396 = vmatmul.mubr.f32.gmra.mxu0 %v7008
        %v7397 = vpop.f32.mrf.mxu0
        %v7398 = vadd.f32 %v7113, %v7397
        %v7399 = vpop.f32.mrf.mxu0
        %7400 = vmatprep.mubr.f32.mxu0 %v7191
        %7401 = vmatmul.mubr.f32.gmra.mxu0 %v7009
        %v7402 = vpop.f32.mrf.mxu0
        %v7403 = vadd.f32 %v7113, %v7402
        %v7404 = vpop.f32.mrf.mxu0
        %7405 = vmatprep.mubr.f32.mxu0 %v7194
        %7406 = vmatmul.mubr.f32.gmra.mxu0 %v7010
        %v7407 = vpop.f32.mrf.mxu0
        %v7408 = vadd.f32 %v7113, %v7407
        %v7409 = vpop.f32.mrf.mxu0
        %7410 = vmatprep.mubr.f32.mxu0 %v7197
        %7411 = vmatmul.mubr.f32.gmra.mxu0 %v7011
        %v7412 = vpop.f32.mrf.mxu0
        %v7413 = vadd.f32 %v7113, %v7412
        %v7414 = vpop.f32.mrf.mxu0
        %7415 = vmatprep.mubr.f32.mxu0 %v7200
        %7416 = vmatmul.mubr.f32.gmra.mxu0 %v7012
        %v7417 = vpop.f32.mrf.mxu0
        %v7418 = vadd.f32 %v7113, %v7417
        %v7419 = vpop.f32.mrf.mxu0
        %7420 = vmatprep.mubr.f32.mxu0 %v7203
        %7421 = vmatmul.mubr.f32.gmra.mxu0 %v7013
        %v7422 = vpop.f32.mrf.mxu0
        %v7423 = vadd.f32 %v7113, %v7422
        %v7424 = vpop.f32.mrf.mxu0
        %7425 = vmatprep.mubr.f32.mxu0 %v7206
        %7426 = vmatmul.mubr.f32.gmra.mxu0 %v7014
        %v7427 = vpop.f32.mrf.mxu0
        %v7428 = vadd.f32 %v7113, %v7427
        %v7429 = vpop.f32.mrf.mxu0
        %7430 = vmatprep.mubr.f32.mxu0 %v7209
        %7431 = vmatmul.mubr.f32.gmra.mxu0 %v7015
        %v7432 = vpop.f32.mrf.mxu0
        %v7433 = vadd.f32 %v7113, %v7432
        %v7434 = vpop.f32.mrf.mxu0
        %7435 = vdwg.mxu0
        %vm7436 = vcmp.gt.f32.partialorder %v7278, 0.0
        %vm7437 = vcmp.gt.f32.partialorder %v7283, 0.0
        %vm7438 = vcmp.gt.f32.partialorder %v7288, 0.0
        %vm7439 = vcmp.gt.f32.partialorder %v7293, 0.0
        %vm7440 = vcmp.gt.f32.partialorder %v7298, 0.0
        %vm7441 = vcmp.gt.f32.partialorder %v7303, 0.0
        %vm7442 = vcmp.gt.f32.partialorder %v7308, 0.0
        %vm7443 = vcmp.gt.f32.partialorder %v7313, 0.0
        %vm7444 = vcmp.gt.f32.partialorder %v7318, 0.0
        %vm7445 = vcmp.gt.f32.partialorder %v7323, 0.0
        %vm7446 = vcmp.gt.f32.partialorder %v7328, 0.0
        %vm7447 = vcmp.gt.f32.partialorder %v7333, 0.0
        %vm7448 = vcmp.gt.f32.partialorder %v7338, 0.0
        %vm7449 = vcmp.gt.f32.partialorder %v7343, 0.0
        %vm7450 = vcmp.gt.f32.partialorder %v7348, 0.0
        %vm7451 = vcmp.gt.f32.partialorder %v7353, 0.0
        %vm7452 = vcmp.gt.f32.partialorder %v7358, 0.0
        %vm7453 = vcmp.gt.f32.partialorder %v7363, 0.0
        %vm7454 = vcmp.gt.f32.partialorder %v7368, 0.0
        %vm7455 = vcmp.gt.f32.partialorder %v7373, 0.0
        %vm7456 = vcmp.gt.f32.partialorder %v7378, 0.0
        %vm7457 = vcmp.gt.f32.partialorder %v7383, 0.0
        %vm7458 = vcmp.gt.f32.partialorder %v7388, 0.0
        %vm7459 = vcmp.gt.f32.partialorder %v7393, 0.0
        %vm7460 = vcmp.gt.f32.partialorder %v7398, 0.0
        %vm7461 = vcmp.gt.f32.partialorder %v7403, 0.0
        %vm7462 = vcmp.gt.f32.partialorder %v7408, 0.0
        %vm7463 = vcmp.gt.f32.partialorder %v7413, 0.0
        %vm7464 = vcmp.gt.f32.partialorder %v7418, 0.0
        %vm7465 = vcmp.gt.f32.partialorder %v7423, 0.0
        %vm7466 = vcmp.gt.f32.partialorder %v7428, 0.0
        %vm7467 = vcmp.gt.f32.partialorder %v7433, 0.0
        %v7468 = vmul.f32 %v7278, 0.3
        %v7469 = vmul.f32 %v7283, 0.3
        %v7470 = vmul.f32 %v7288, 0.3
        %v7471 = vmul.f32 %v7293, 0.3
        %v7472 = vmul.f32 %v7298, 0.3
        %v7473 = vmul.f32 %v7303, 0.3
        %v7474 = vmul.f32 %v7308, 0.3
        %v7475 = vmul.f32 %v7313, 0.3
        %v7476 = vmul.f32 %v7318, 0.3
        %v7477 = vmul.f32 %v7323, 0.3
        %v7478 = vmul.f32 %v7328, 0.3
        %v7479 = vmul.f32 %v7333, 0.3
        %v7480 = vmul.f32 %v7338, 0.3
        %v7481 = vmul.f32 %v7343, 0.3
        %v7482 = vmul.f32 %v7348, 0.3
        %v7483 = vmul.f32 %v7353, 0.3
        %v7484 = vmul.f32 %v7358, 0.3
        %v7485 = vmul.f32 %v7363, 0.3
        %v7486 = vmul.f32 %v7368, 0.3
        %v7487 = vmul.f32 %v7373, 0.3
        %v7488 = vmul.f32 %v7378, 0.3
        %v7489 = vmul.f32 %v7383, 0.3
        %v7490 = vmul.f32 %v7388, 0.3
        %v7491 = vmul.f32 %v7393, 0.3
        %v7492 = vmul.f32 %v7398, 0.3
        %v7493 = vmul.f32 %v7403, 0.3
        %v7494 = vmul.f32 %v7408, 0.3
        %v7495 = vmul.f32 %v7413, 0.3
        %v7496 = vmul.f32 %v7418, 0.3
        %v7497 = vmul.f32 %v7423, 0.3
        %v7498 = vmul.f32 %v7428, 0.3
        %v7499 = vmul.f32 %v7433, 0.3
        %v7500 = vsel %vm7436, %v7278, %v7468
        %v7501 = vsel %vm7437, %v7283, %v7469
        %v7502 = vsel %vm7438, %v7288, %v7470
        %v7503 = vsel %vm7439, %v7293, %v7471
        %v7504 = vsel %vm7440, %v7298, %v7472
        %v7505 = vsel %vm7441, %v7303, %v7473
        %v7506 = vsel %vm7442, %v7308, %v7474
        %v7507 = vsel %vm7443, %v7313, %v7475
        %v7508 = vsel %vm7444, %v7318, %v7476
        %v7509 = vsel %vm7445, %v7323, %v7477
        %v7510 = vsel %vm7446, %v7328, %v7478
        %v7511 = vsel %vm7447, %v7333, %v7479
        %v7512 = vsel %vm7448, %v7338, %v7480
        %v7513 = vsel %vm7449, %v7343, %v7481
        %v7514 = vsel %vm7450, %v7348, %v7482
        %v7515 = vsel %vm7451, %v7353, %v7483
        %v7516 = vsel %vm7452, %v7358, %v7484
        %v7517 = vsel %vm7453, %v7363, %v7485
        %v7518 = vsel %vm7454, %v7368, %v7486
        %v7519 = vsel %vm7455, %v7373, %v7487
        %v7520 = vsel %vm7456, %v7378, %v7488
        %v7521 = vsel %vm7457, %v7383, %v7489
        %v7522 = vsel %vm7458, %v7388, %v7490
        %v7523 = vsel %vm7459, %v7393, %v7491
        %v7524 = vsel %vm7460, %v7398, %v7492
        %v7525 = vsel %vm7461, %v7403, %v7493
        %v7526 = vsel %vm7462, %v7408, %v7494
        %v7527 = vsel %vm7463, %v7413, %v7495
        %v7528 = vsel %vm7464, %v7418, %v7496
        %v7529 = vsel %vm7465, %v7423, %v7497
        %v7530 = vsel %vm7466, %v7428, %v7498
        %v7531 = vsel %vm7467, %v7433, %v7499
        %v7548 = vrot.slane %v7502, 7
        %vm7549 = vcmask 1041409
        %v7550 = vsel %vm7549, %v7548, %v7500
        %v7551 = vrot.slane %v7504, 6
        %vm7552 = vcmask 1042434
        %v7553 = vsel %vm7552, %v7551, %v7550
        %v7554 = vrot.slane %v7506, 5
        %vm7555 = vcmask 1043459
        %v7556 = vsel %vm7555, %v7554, %v7553
        %v7557 = vrot.slane %v7508, 4
        %vm7558 = vcmask 1044484
        %v7559 = vsel %vm7558, %v7557, %v7556
        %v7560 = vrot.slane %v7510, 3
        %vm7561 = vcmask 1045509
        %v7562 = vsel %vm7561, %v7560, %v7559
        %v7563 = vrot.slane %v7512, 2
        %vm7564 = vcmask 1046534
        %v7565 = vsel %vm7564, %v7563, %v7562
        %v7566 = vrot.slane %v7514, 1
        %vm7567 = vcmask 1047559
        %v7568 = vsel %vm7567, %v7566, %v7565
        %v7569 = vrot.slane %v7518, 7
        %v7570 = vsel %vm7549, %v7569, %v7516
        %v7571 = vrot.slane %v7520, 6
        %v7572 = vsel %vm7552, %v7571, %v7570
        %v7573 = vrot.slane %v7522, 5
        %v7574 = vsel %vm7555, %v7573, %v7572
        %v7575 = vrot.slane %v7524, 4
        %v7576 = vsel %vm7558, %v7575, %v7574
        %v7577 = vrot.slane %v7526, 3
        %v7578 = vsel %vm7561, %v7577, %v7576
        %v7579 = vrot.slane %v7528, 2
        %v7580 = vsel %vm7564, %v7579, %v7578
        %v7581 = vrot.slane %v7530, 1
        %v7582 = vsel %vm7567, %v7581, %v7580
        %v7585 = vrot.slane %v7500, 1
        %v7586 = vsel %vm7549, %v7502, %v7585
        %v7587 = vrot.slane %v7504, 7
        %v7588 = vsel %vm7552, %v7587, %v7586
        %v7589 = vrot.slane %v7506, 6
        %v7590 = vsel %vm7555, %v7589, %v7588
        %v7591 = vrot.slane %v7508, 5
        %v7592 = vsel %vm7558, %v7591, %v7590
        %v7593 = vrot.slane %v7510, 4
        %v7594 = vsel %vm7561, %v7593, %v7592
        %v7595 = vrot.slane %v7512, 3
        %v7596 = vsel %vm7564, %v7595, %v7594
        %v7597 = vrot.slane %v7514, 2
        %v7598 = vsel %vm7567, %v7597, %v7596
        %v7599 = vrot.slane %v7516, 1
        %v7600 = vsel %vm7549, %v7518, %v7599
        %v7601 = vrot.slane %v7520, 7
        %v7602 = vsel %vm7552, %v7601, %v7600
        %v7603 = vrot.slane %v7522, 6
        %v7604 = vsel %vm7555, %v7603, %v7602
        %v7605 = vrot.slane %v7524, 5
        %v7606 = vsel %vm7558, %v7605, %v7604
        %v7607 = vrot.slane %v7526, 4
        %v7608 = vsel %vm7561, %v7607, %v7606
        %v7609 = vrot.slane %v7528, 3
        %v7610 = vsel %vm7564, %v7609, %v7608
        %v7611 = vrot.slane %v7530, 2
        %v7612 = vsel %vm7567, %v7611, %v7610
        %7613 = vrot.lane.b32.xlu0 %v7598, 16
        %v7614 = vpop.permute.xlu0 %7613
        %7615 = vrot.lane.b32.xlu0 %v7612, 16
        %v7616 = vpop.permute.xlu0 %7615
        %v7619 = vrot.slane %v7500, 2
        %v7620 = vrot.slane %v7502, 1
        %v7621 = vsel %vm7549, %v7620, %v7619
        %v7622 = vsel %vm7552, %v7504, %v7621
        %v7623 = vrot.slane %v7506, 7
        %v7624 = vsel %vm7555, %v7623, %v7622
        %v7625 = vrot.slane %v7508, 6
        %v7626 = vsel %vm7558, %v7625, %v7624
        %v7627 = vrot.slane %v7510, 5
        %v7628 = vsel %vm7561, %v7627, %v7626
        %v7629 = vrot.slane %v7512, 4
        %v7630 = vsel %vm7564, %v7629, %v7628
        %v7631 = vrot.slane %v7514, 3
        %v7632 = vsel %vm7567, %v7631, %v7630
        %v7633 = vrot.slane %v7516, 2
        %v7634 = vrot.slane %v7518, 1
        %v7635 = vsel %vm7549, %v7634, %v7633
        %v7636 = vsel %vm7552, %v7520, %v7635
        %v7637 = vrot.slane %v7522, 7
        %v7638 = vsel %vm7555, %v7637, %v7636
        %v7639 = vrot.slane %v7524, 6
        %v7640 = vsel %vm7558, %v7639, %v7638
        %v7641 = vrot.slane %v7526, 5
        %v7642 = vsel %vm7561, %v7641, %v7640
        %v7643 = vrot.slane %v7528, 4
        %v7644 = vsel %vm7564, %v7643, %v7642
        %v7645 = vrot.slane %v7530, 3
        %v7646 = vsel %vm7567, %v7645, %v7644
        %7647 = vrot.lane.b32.xlu0 %v7632, 32
        %v7648 = vpop.permute.xlu0 %7647
        %7649 = vrot.lane.b32.xlu0 %v7646, 32
        %v7650 = vpop.permute.xlu0 %7649
        %v7653 = vrot.slane %v7500, 3
        %v7654 = vrot.slane %v7502, 2
        %v7655 = vsel %vm7549, %v7654, %v7653
        %v7656 = vrot.slane %v7504, 1
        %v7657 = vsel %vm7552, %v7656, %v7655
        %v7658 = vsel %vm7555, %v7506, %v7657
        %v7659 = vrot.slane %v7508, 7
        %v7660 = vsel %vm7558, %v7659, %v7658
        %v7661 = vrot.slane %v7510, 6
        %v7662 = vsel %vm7561, %v7661, %v7660
        %v7663 = vrot.slane %v7512, 5
        %v7664 = vsel %vm7564, %v7663, %v7662
        %v7665 = vrot.slane %v7514, 4
        %v7666 = vsel %vm7567, %v7665, %v7664
        %v7667 = vrot.slane %v7516, 3
        %v7668 = vrot.slane %v7518, 2
        %v7669 = vsel %vm7549, %v7668, %v7667
        %v7670 = vrot.slane %v7520, 1
        %v7671 = vsel %vm7552, %v7670, %v7669
        %v7672 = vsel %vm7555, %v7522, %v7671
        %v7673 = vrot.slane %v7524, 7
        %v7674 = vsel %vm7558, %v7673, %v7672
        %v7675 = vrot.slane %v7526, 6
        %v7676 = vsel %vm7561, %v7675, %v7674
        %v7677 = vrot.slane %v7528, 5
        %v7678 = vsel %vm7564, %v7677, %v7676
        %v7679 = vrot.slane %v7530, 4
        %v7680 = vsel %vm7567, %v7679, %v7678
        %7681 = vrot.lane.b32.xlu0 %v7666, 48
        %v7682 = vpop.permute.xlu0 %7681
        %7683 = vrot.lane.b32.xlu0 %v7680, 48
        %v7684 = vpop.permute.xlu0 %7683
        %v7687 = vrot.slane %v7500, 4
        %v7688 = vrot.slane %v7502, 3
        %v7689 = vsel %vm7549, %v7688, %v7687
        %v7690 = vrot.slane %v7504, 2
        %v7691 = vsel %vm7552, %v7690, %v7689
        %v7692 = vrot.slane %v7506, 1
        %v7693 = vsel %vm7555, %v7692, %v7691
        %v7694 = vsel %vm7558, %v7508, %v7693
        %v7695 = vrot.slane %v7510, 7
        %v7696 = vsel %vm7561, %v7695, %v7694
        %v7697 = vrot.slane %v7512, 6
        %v7698 = vsel %vm7564, %v7697, %v7696
        %v7699 = vrot.slane %v7514, 5
        %v7700 = vsel %vm7567, %v7699, %v7698
        %v7701 = vrot.slane %v7516, 4
        %v7702 = vrot.slane %v7518, 3
        %v7703 = vsel %vm7549, %v7702, %v7701
        %v7704 = vrot.slane %v7520, 2
        %v7705 = vsel %vm7552, %v7704, %v7703
        %v7706 = vrot.slane %v7522, 1
        %v7707 = vsel %vm7555, %v7706, %v7705
        %v7708 = vsel %vm7558, %v7524, %v7707
        %v7709 = vrot.slane %v7526, 7
        %v7710 = vsel %vm7561, %v7709, %v7708
        %v7711 = vrot.slane %v7528, 6
        %v7712 = vsel %vm7564, %v7711, %v7710
        %v7713 = vrot.slane %v7530, 5
        %v7714 = vsel %vm7567, %v7713, %v7712
        %7715 = vrot.lane.b32.xlu0 %v7700, 64
        %v7716 = vpop.permute.xlu0 %7715
        %7717 = vrot.lane.b32.xlu0 %v7714, 64
        %v7718 = vpop.permute.xlu0 %7717
        %v7721 = vrot.slane %v7500, 5
        %v7722 = vrot.slane %v7502, 4
        %v7723 = vsel %vm7549, %v7722, %v7721
        %v7724 = vrot.slane %v7504, 3
        %v7725 = vsel %vm7552, %v7724, %v7723
        %v7726 = vrot.slane %v7506, 2
        %v7727 = vsel %vm7555, %v7726, %v7725
        %v7728 = vrot.slane %v7508, 1
        %v7729 = vsel %vm7558, %v7728, %v7727
        %v7730 = vsel %vm7561, %v7510, %v7729
        %v7731 = vrot.slane %v7512, 7
        %v7732 = vsel %vm7564, %v7731, %v7730
        %v7733 = vrot.slane %v7514, 6
        %v7734 = vsel %vm7567, %v7733, %v7732
        %v7735 = vrot.slane %v7516, 5
        %v7736 = vrot.slane %v7518, 4
        %v7737 = vsel %vm7549, %v7736, %v7735
        %v7738 = vrot.slane %v7520, 3
        %v7739 = vsel %vm7552, %v7738, %v7737
        %v7740 = vrot.slane %v7522, 2
        %v7741 = vsel %vm7555, %v7740, %v7739
        %v7742 = vrot.slane %v7524, 1
        %v7743 = vsel %vm7558, %v7742, %v7741
        %v7744 = vsel %vm7561, %v7526, %v7743
        %v7745 = vrot.slane %v7528, 7
        %v7746 = vsel %vm7564, %v7745, %v7744
        %v7747 = vrot.slane %v7530, 6
        %v7748 = vsel %vm7567, %v7747, %v7746
        %7749 = vrot.lane.b32.xlu0 %v7734, 80
        %v7750 = vpop.permute.xlu0 %7749
        %7751 = vrot.lane.b32.xlu0 %v7748, 80
        %v7752 = vpop.permute.xlu0 %7751
        %v7755 = vrot.slane %v7500, 6
        %v7756 = vrot.slane %v7502, 5
        %v7757 = vsel %vm7549, %v7756, %v7755
        %v7758 = vrot.slane %v7504, 4
        %v7759 = vsel %vm7552, %v7758, %v7757
        %v7760 = vrot.slane %v7506, 3
        %v7761 = vsel %vm7555, %v7760, %v7759
        %v7762 = vrot.slane %v7508, 2
        %v7763 = vsel %vm7558, %v7762, %v7761
        %v7764 = vrot.slane %v7510, 1
        %v7765 = vsel %vm7561, %v7764, %v7763
        %v7766 = vsel %vm7564, %v7512, %v7765
        %v7767 = vrot.slane %v7514, 7
        %v7768 = vsel %vm7567, %v7767, %v7766
        %v7769 = vrot.slane %v7516, 6
        %v7770 = vrot.slane %v7518, 5
        %v7771 = vsel %vm7549, %v7770, %v7769
        %v7772 = vrot.slane %v7520, 4
        %v7773 = vsel %vm7552, %v7772, %v7771
        %v7774 = vrot.slane %v7522, 3
        %v7775 = vsel %vm7555, %v7774, %v7773
        %v7776 = vrot.slane %v7524, 2
        %v7777 = vsel %vm7558, %v7776, %v7775
        %v7778 = vrot.slane %v7526, 1
        %v7779 = vsel %vm7561, %v7778, %v7777
        %v7780 = vsel %vm7564, %v7528, %v7779
        %v7781 = vrot.slane %v7530, 7
        %v7782 = vsel %vm7567, %v7781, %v7780
        %7783 = vrot.lane.b32.xlu0 %v7768, 96
        %v7784 = vpop.permute.xlu0 %7783
        %7785 = vrot.lane.b32.xlu0 %v7782, 96
        %v7786 = vpop.permute.xlu0 %7785
        %v7789 = vrot.slane %v7500, 7
        %v7790 = vrot.slane %v7502, 6
        %v7791 = vsel %vm7549, %v7790, %v7789
        %v7792 = vrot.slane %v7504, 5
        %v7793 = vsel %vm7552, %v7792, %v7791
        %v7794 = vrot.slane %v7506, 4
        %v7795 = vsel %vm7555, %v7794, %v7793
        %v7796 = vrot.slane %v7508, 3
        %v7797 = vsel %vm7558, %v7796, %v7795
        %v7798 = vrot.slane %v7510, 2
        %v7799 = vsel %vm7561, %v7798, %v7797
        %v7800 = vrot.slane %v7512, 1
        %v7801 = vsel %vm7564, %v7800, %v7799
        %v7802 = vsel %vm7567, %v7514, %v7801
        %v7803 = vrot.slane %v7516, 7
        %v7804 = vrot.slane %v7518, 6
        %v7805 = vsel %vm7549, %v7804, %v7803
        %v7806 = vrot.slane %v7520, 5
        %v7807 = vsel %vm7552, %v7806, %v7805
        %v7808 = vrot.slane %v7522, 4
        %v7809 = vsel %vm7555, %v7808, %v7807
        %v7810 = vrot.slane %v7524, 3
        %v7811 = vsel %vm7558, %v7810, %v7809
        %v7812 = vrot.slane %v7526, 2
        %v7813 = vsel %vm7561, %v7812, %v7811
        %v7814 = vrot.slane %v7528, 1
        %v7815 = vsel %vm7564, %v7814, %v7813
        %v7816 = vsel %vm7567, %v7530, %v7815
        %7817 = vrot.lane.b32.xlu0 %v7802, 112
        %v7818 = vpop.permute.xlu0 %7817
        %7819 = vrot.lane.b32.xlu0 %v7816, 112
        %v7820 = vpop.permute.xlu0 %7819
        %v7839 = vrot.slane %v7503, 7
        %v7840 = vsel %vm7549, %v7839, %v7501
        %v7841 = vrot.slane %v7505, 6
        %v7842 = vsel %vm7552, %v7841, %v7840
        %v7843 = vrot.slane %v7507, 5
        %v7844 = vsel %vm7555, %v7843, %v7842
        %v7845 = vrot.slane %v7509, 4
        %v7846 = vsel %vm7558, %v7845, %v7844
        %v7847 = vrot.slane %v7511, 3
        %v7848 = vsel %vm7561, %v7847, %v7846
        %v7849 = vrot.slane %v7513, 2
        %v7850 = vsel %vm7564, %v7849, %v7848
        %v7851 = vrot.slane %v7515, 1
        %v7852 = vsel %vm7567, %v7851, %v7850
        %v7853 = vrot.slane %v7519, 7
        %v7854 = vsel %vm7549, %v7853, %v7517
        %v7855 = vrot.slane %v7521, 6
        %v7856 = vsel %vm7552, %v7855, %v7854
        %v7857 = vrot.slane %v7523, 5
        %v7858 = vsel %vm7555, %v7857, %v7856
        %v7859 = vrot.slane %v7525, 4
        %v7860 = vsel %vm7558, %v7859, %v7858
        %v7861 = vrot.slane %v7527, 3
        %v7862 = vsel %vm7561, %v7861, %v7860
        %v7863 = vrot.slane %v7529, 2
        %v7864 = vsel %vm7564, %v7863, %v7862
        %v7865 = vrot.slane %v7531, 1
        %v7866 = vsel %vm7567, %v7865, %v7864
        %v7869 = vrot.slane %v7501, 1
        %v7870 = vsel %vm7549, %v7503, %v7869
        %v7871 = vrot.slane %v7505, 7
        %v7872 = vsel %vm7552, %v7871, %v7870
        %v7873 = vrot.slane %v7507, 6
        %v7874 = vsel %vm7555, %v7873, %v7872
        %v7875 = vrot.slane %v7509, 5
        %v7876 = vsel %vm7558, %v7875, %v7874
        %v7877 = vrot.slane %v7511, 4
        %v7878 = vsel %vm7561, %v7877, %v7876
        %v7879 = vrot.slane %v7513, 3
        %v7880 = vsel %vm7564, %v7879, %v7878
        %v7881 = vrot.slane %v7515, 2
        %v7882 = vsel %vm7567, %v7881, %v7880
        %v7883 = vrot.slane %v7517, 1
        %v7884 = vsel %vm7549, %v7519, %v7883
        %v7885 = vrot.slane %v7521, 7
        %v7886 = vsel %vm7552, %v7885, %v7884
        %v7887 = vrot.slane %v7523, 6
        %v7888 = vsel %vm7555, %v7887, %v7886
        %v7889 = vrot.slane %v7525, 5
        %v7890 = vsel %vm7558, %v7889, %v7888
        %v7891 = vrot.slane %v7527, 4
        %v7892 = vsel %vm7561, %v7891, %v7890
        %v7893 = vrot.slane %v7529, 3
        %v7894 = vsel %vm7564, %v7893, %v7892
        %v7895 = vrot.slane %v7531, 2
        %v7896 = vsel %vm7567, %v7895, %v7894
        %7897 = vrot.lane.b32.xlu0 %v7882, 16
        %v7898 = vpop.permute.xlu0 %7897
        %7899 = vrot.lane.b32.xlu0 %v7896, 16
        %v7900 = vpop.permute.xlu0 %7899
        %v7903 = vrot.slane %v7501, 2
        %v7904 = vrot.slane %v7503, 1
        %v7905 = vsel %vm7549, %v7904, %v7903
        %v7906 = vsel %vm7552, %v7505, %v7905
        %v7907 = vrot.slane %v7507, 7
        %v7908 = vsel %vm7555, %v7907, %v7906
        %v7909 = vrot.slane %v7509, 6
        %v7910 = vsel %vm7558, %v7909, %v7908
        %v7911 = vrot.slane %v7511, 5
        %v7912 = vsel %vm7561, %v7911, %v7910
        %v7913 = vrot.slane %v7513, 4
        %v7914 = vsel %vm7564, %v7913, %v7912
        %v7915 = vrot.slane %v7515, 3
        %v7916 = vsel %vm7567, %v7915, %v7914
        %v7917 = vrot.slane %v7517, 2
        %v7918 = vrot.slane %v7519, 1
        %v7919 = vsel %vm7549, %v7918, %v7917
        %v7920 = vsel %vm7552, %v7521, %v7919
        %v7921 = vrot.slane %v7523, 7
        %v7922 = vsel %vm7555, %v7921, %v7920
        %v7923 = vrot.slane %v7525, 6
        %v7924 = vsel %vm7558, %v7923, %v7922
        %v7925 = vrot.slane %v7527, 5
        %v7926 = vsel %vm7561, %v7925, %v7924
        %v7927 = vrot.slane %v7529, 4
        %v7928 = vsel %vm7564, %v7927, %v7926
        %v7929 = vrot.slane %v7531, 3
        %v7930 = vsel %vm7567, %v7929, %v7928
        %7931 = vrot.lane.b32.xlu0 %v7916, 32
        %v7932 = vpop.permute.xlu0 %7931
        %7933 = vrot.lane.b32.xlu0 %v7930, 32
        %v7934 = vpop.permute.xlu0 %7933
        %v7937 = vrot.slane %v7501, 3
        %v7938 = vrot.slane %v7503, 2
        %v7939 = vsel %vm7549, %v7938, %v7937
        %v7940 = vrot.slane %v7505, 1
        %v7941 = vsel %vm7552, %v7940, %v7939
        %v7942 = vsel %vm7555, %v7507, %v7941
        %v7943 = vrot.slane %v7509, 7
        %v7944 = vsel %vm7558, %v7943, %v7942
        %v7945 = vrot.slane %v7511, 6
        %v7946 = vsel %vm7561, %v7945, %v7944
        %v7947 = vrot.slane %v7513, 5
        %v7948 = vsel %vm7564, %v7947, %v7946
        %v7949 = vrot.slane %v7515, 4
        %v7950 = vsel %vm7567, %v7949, %v7948
        %v7951 = vrot.slane %v7517, 3
        %v7952 = vrot.slane %v7519, 2
        %v7953 = vsel %vm7549, %v7952, %v7951
        %v7954 = vrot.slane %v7521, 1
        %v7955 = vsel %vm7552, %v7954, %v7953
        %v7956 = vsel %vm7555, %v7523, %v7955
        %v7957 = vrot.slane %v7525, 7
        %v7958 = vsel %vm7558, %v7957, %v7956
        %v7959 = vrot.slane %v7527, 6
        %v7960 = vsel %vm7561, %v7959, %v7958
        %v7961 = vrot.slane %v7529, 5
        %v7962 = vsel %vm7564, %v7961, %v7960
        %v7963 = vrot.slane %v7531, 4
        %v7964 = vsel %vm7567, %v7963, %v7962
        %7965 = vrot.lane.b32.xlu0 %v7950, 48
        %v7966 = vpop.permute.xlu0 %7965
        %7967 = vrot.lane.b32.xlu0 %v7964, 48
        %v7968 = vpop.permute.xlu0 %7967
        %v7971 = vrot.slane %v7501, 4
        %v7972 = vrot.slane %v7503, 3
        %v7973 = vsel %vm7549, %v7972, %v7971
        %v7974 = vrot.slane %v7505, 2
        %v7975 = vsel %vm7552, %v7974, %v7973
        %v7976 = vrot.slane %v7507, 1
        %v7977 = vsel %vm7555, %v7976, %v7975
        %v7978 = vsel %vm7558, %v7509, %v7977
        %v7979 = vrot.slane %v7511, 7
        %v7980 = vsel %vm7561, %v7979, %v7978
        %v7981 = vrot.slane %v7513, 6
        %v7982 = vsel %vm7564, %v7981, %v7980
        %v7983 = vrot.slane %v7515, 5
        %v7984 = vsel %vm7567, %v7983, %v7982
        %v7985 = vrot.slane %v7517, 4
        %v7986 = vrot.slane %v7519, 3
        %v7987 = vsel %vm7549, %v7986, %v7985
        %v7988 = vrot.slane %v7521, 2
        %v7989 = vsel %vm7552, %v7988, %v7987
        %v7990 = vrot.slane %v7523, 1
        %v7991 = vsel %vm7555, %v7990, %v7989
        %v7992 = vsel %vm7558, %v7525, %v7991
        %v7993 = vrot.slane %v7527, 7
        %v7994 = vsel %vm7561, %v7993, %v7992
        %v7995 = vrot.slane %v7529, 6
        %v7996 = vsel %vm7564, %v7995, %v7994
        %v7997 = vrot.slane %v7531, 5
        %v7998 = vsel %vm7567, %v7997, %v7996
        %7999 = vrot.lane.b32.xlu0 %v7984, 64
        %v8000 = vpop.permute.xlu0 %7999
        %8001 = vrot.lane.b32.xlu0 %v7998, 64
        %v8002 = vpop.permute.xlu0 %8001
        %v8005 = vrot.slane %v7501, 5
        %v8006 = vrot.slane %v7503, 4
        %v8007 = vsel %vm7549, %v8006, %v8005
        %v8008 = vrot.slane %v7505, 3
        %v8009 = vsel %vm7552, %v8008, %v8007
        %v8010 = vrot.slane %v7507, 2
        %v8011 = vsel %vm7555, %v8010, %v8009
        %v8012 = vrot.slane %v7509, 1
        %v8013 = vsel %vm7558, %v8012, %v8011
        %v8014 = vsel %vm7561, %v7511, %v8013
        %v8015 = vrot.slane %v7513, 7
        %v8016 = vsel %vm7564, %v8015, %v8014
        %v8017 = vrot.slane %v7515, 6
        %v8018 = vsel %vm7567, %v8017, %v8016
        %v8019 = vrot.slane %v7517, 5
        %v8020 = vrot.slane %v7519, 4
        %v8021 = vsel %vm7549, %v8020, %v8019
        %v8022 = vrot.slane %v7521, 3
        %v8023 = vsel %vm7552, %v8022, %v8021
        %v8024 = vrot.slane %v7523, 2
        %v8025 = vsel %vm7555, %v8024, %v8023
        %v8026 = vrot.slane %v7525, 1
        %v8027 = vsel %vm7558, %v8026, %v8025
        %v8028 = vsel %vm7561, %v7527, %v8027
        %v8029 = vrot.slane %v7529, 7
        %v8030 = vsel %vm7564, %v8029, %v8028
        %v8031 = vrot.slane %v7531, 6
        %v8032 = vsel %vm7567, %v8031, %v8030
        %8033 = vrot.lane.b32.xlu0 %v8018, 80
        %v8034 = vpop.permute.xlu0 %8033
        %8035 = vrot.lane.b32.xlu0 %v8032, 80
        %v8036 = vpop.permute.xlu0 %8035
        %v8039 = vrot.slane %v7501, 6
        %v8040 = vrot.slane %v7503, 5
        %v8041 = vsel %vm7549, %v8040, %v8039
        %v8042 = vrot.slane %v7505, 4
        %v8043 = vsel %vm7552, %v8042, %v8041
        %v8044 = vrot.slane %v7507, 3
        %v8045 = vsel %vm7555, %v8044, %v8043
        %v8046 = vrot.slane %v7509, 2
        %v8047 = vsel %vm7558, %v8046, %v8045
        %v8048 = vrot.slane %v7511, 1
        %v8049 = vsel %vm7561, %v8048, %v8047
        %v8050 = vsel %vm7564, %v7513, %v8049
        %v8051 = vrot.slane %v7515, 7
        %v8052 = vsel %vm7567, %v8051, %v8050
        %v8053 = vrot.slane %v7517, 6
        %v8054 = vrot.slane %v7519, 5
        %v8055 = vsel %vm7549, %v8054, %v8053
        %v8056 = vrot.slane %v7521, 4
        %v8057 = vsel %vm7552, %v8056, %v8055
        %v8058 = vrot.slane %v7523, 3
        %v8059 = vsel %vm7555, %v8058, %v8057
        %v8060 = vrot.slane %v7525, 2
        %v8061 = vsel %vm7558, %v8060, %v8059
        %v8062 = vrot.slane %v7527, 1
        %v8063 = vsel %vm7561, %v8062, %v8061
        %v8064 = vsel %vm7564, %v7529, %v8063
        %v8065 = vrot.slane %v7531, 7
        %v8066 = vsel %vm7567, %v8065, %v8064
        %8067 = vrot.lane.b32.xlu0 %v8052, 96
        %v8068 = vpop.permute.xlu0 %8067
        %8069 = vrot.lane.b32.xlu0 %v8066, 96
        %v8070 = vpop.permute.xlu0 %8069
        %v8073 = vrot.slane %v7501, 7
        %v8074 = vrot.slane %v7503, 6
        %v8075 = vsel %vm7549, %v8074, %v8073
        %v8076 = vrot.slane %v7505, 5
        %v8077 = vsel %vm7552, %v8076, %v8075
        %v8078 = vrot.slane %v7507, 4
        %v8079 = vsel %vm7555, %v8078, %v8077
        %v8080 = vrot.slane %v7509, 3
        %v8081 = vsel %vm7558, %v8080, %v8079
        %v8082 = vrot.slane %v7511, 2
        %v8083 = vsel %vm7561, %v8082, %v8081
        %v8084 = vrot.slane %v7513, 1
        %v8085 = vsel %vm7564, %v8084, %v8083
        %v8086 = vsel %vm7567, %v7515, %v8085
        %v8087 = vrot.slane %v7517, 7
        %v8088 = vrot.slane %v7519, 6
        %v8089 = vsel %vm7549, %v8088, %v8087
        %v8090 = vrot.slane %v7521, 5
        %v8091 = vsel %vm7552, %v8090, %v8089
        %v8092 = vrot.slane %v7523, 4
        %v8093 = vsel %vm7555, %v8092, %v8091
        %v8094 = vrot.slane %v7525, 3
        %v8095 = vsel %vm7558, %v8094, %v8093
        %v8096 = vrot.slane %v7527, 2
        %v8097 = vsel %vm7561, %v8096, %v8095
        %v8098 = vrot.slane %v7529, 1
        %v8099 = vsel %vm7564, %v8098, %v8097
        %v8100 = vsel %vm7567, %v7531, %v8099
        %8101 = vrot.lane.b32.xlu0 %v8086, 112
        %v8102 = vpop.permute.xlu0 %8101
        %8103 = vrot.lane.b32.xlu0 %v8100, 112
        %v8104 = vpop.permute.xlu0 %8103
        %v8107 = vsel %vm5671, %v7568, %v7614
        %v8108 = vsel %vm5671, %v7582, %v7616
        %v8109 = vsel %vm4865, %v8107, %v7648
        %v8110 = vsel %vm4865, %v8108, %v7650
        %vm8111 = vcmask 392192
        %v8112 = vsel %vm8111, %v8109, %v7682
        %v8113 = vsel %vm8111, %v8110, %v7684
        %v8114 = vsel %vm2847, %v8112, %v7716
        %v8115 = vsel %vm2847, %v8113, %v7718
        %vm8116 = vcmask 654336
        %v8117 = vsel %vm8116, %v8114, %v7750
        %v8118 = vsel %vm8116, %v8115, %v7752
        %v8119 = vsel %vm4930, %v8117, %v7784
        %v8120 = vsel %vm4930, %v8118, %v7786
        %vm8121 = vcmask 916480
        %v8122 = vsel %vm8121, %v8119, %v7818
        %v8123 = vsel %vm8121, %v8120, %v7820
        %v8124 = vsel %vm5671, %v7852, %v7898
        %v8125 = vsel %vm5671, %v7866, %v7900
        %v8126 = vsel %vm4865, %v8124, %v7932
        %v8127 = vsel %vm4865, %v8125, %v7934
        %v8128 = vsel %vm8111, %v8126, %v7966
        %v8129 = vsel %vm8111, %v8127, %v7968
        %v8130 = vsel %vm2847, %v8128, %v8000
        %v8131 = vsel %vm2847, %v8129, %v8002
        %v8132 = vsel %vm8116, %v8130, %v8034
        %v8133 = vsel %vm8116, %v8131, %v8036
        %v8134 = vsel %vm4930, %v8132, %v8068
        %v8135 = vsel %vm4930, %v8133, %v8070
        %v8136 = vsel %vm8121, %v8134, %v8102
        %v8137 = vsel %vm8121, %v8135, %v8104
        %8138 = vst [vmem:[%s272] sm:$0xff] %v8122
        %8139 = vst [vmem:[%s272 + $0x8] sm:$0xff] %v8136
        %8140 = vst [vmem:[%s272 + $0x10] sm:$0xff] %v8123
        %8141 = vst [vmem:[%s272 + $0x18] sm:$0xff] %v8137
        %s8142 = sand.u32 %s181, 1
        %s8143 = scalar_lea.sflag [#allocation3], %s8142
        %s8144 = sand.u32 %s181, 1
        %s8145 = smul.addr %s8144, 32
        %s8146 = scalar_lea.vmem [#allocation2], %s8145
        // Predicated region
        $region49: #{tpu_custom_call.1} parent=47 // pred_check
          %p8147 = pneg %p191
        $region50: #{tpu_custom_call.1} parent=47 // pred_check_branch
          %8149 = sbr.rel (%p8147) target = $region52
        $region51: #{tpu_custom_call.1} parent=47 // pred_region
          %s8150 = smul.u32 2, %s21
          %s8152 = ssub.s32 512, 512
          %8153 = vsyncadd %s8143, %s8152
          %s8154 = smul.addr %s8150, 2
          %s8155 = smul.addr %s8154, 128
          %s8156 = scalar_lea.hbm %s7, %s8155
          %s8157 = sshll.u32 %s8146, 4
          %s8158 = int_to_ptr.vmem [resolvable:$true] %s8157
          %8163 = dma.vmem_to_hbm [thread:$0]  %s8158, 512, %s8156, %s8143, 256, 256, 16
        $region52: #{tpu_custom_call.1} parent=47 // pred_fallthru
          _
      $region48: #{tpu_custom_call.1} parent=5 // pred_fallthru
        _
      %p8164 = scmp.le.s32.totalorder 2, %s16
      // Predicated region
      $region53: #{tpu_custom_call.1} parent=5 // pred_check
        %p8165 = pneg %p8164
      $region54: #{tpu_custom_call.1} parent=5 // pred_check_branch
        %8167 = sbr.rel (%p8165) target = $region56
      $region55: #{tpu_custom_call.1} parent=5 // pred_region
        %s8168 = ssub.s32 %s16, 2
        // Predicated region
        $region57: #{tpu_custom_call.1} parent=55 // pred_check
          %p8169 = pneg %p197
        $region58: #{tpu_custom_call.1} parent=55 // pred_check_branch
          %8171 = sbr.rel (%p8169) target = $region60
        $region59: #{tpu_custom_call.1} parent=55 // pred_region
          %s8172 = sand.u32 %s182, 1
          %s8173 = scalar_lea.sflag [#allocation3], %s8172
          %s8174 = sand.u32 %s182, 1
          %s8175 = smul.addr %s8174, 32
          %s8176 = scalar_lea.vmem [#allocation2], %s8175
          %8177 = dma.done %s8173, 512
        $region60: #{tpu_custom_call.1} parent=55 // pred_fallthru
          _
      $region56: #{tpu_custom_call.1} parent=5 // pred_fallthru
        _
    $region6: #{tpu_custom_call.1} parent=1 // loop_footer
      %s20 = sadd.s32 1, %s16
    $region7: #{tpu_custom_call.1} parent=1 // loop_footer_branch
      %15 = sbr.rel target = $region3
    $region8: #{tpu_custom_call.1} parent=1 // loop_exit
      _
    %8178 = vsyncpa [#allocation3], 1
    %s8179 = scalar_lea.sflag [#allocation3], 1
    %8180 = vsyncpa %s8179, 1

</llo_original>
